<compile_context>
chip_gen: v7x
topology: tpu7x:2x2x1
jax: 0.10.0
libtpu: 0.0.40
codegen_flags: <defaults>
</compile_context>

<pallas_src>
import jax
import jax.numpy as jnp
from jax import lax
from jax.experimental import pallas as pl
from jax.experimental.pallas import tpu as pltpu

_GN_EPS = 1e-5


def _vmem_limit_bytes():
    # Per-generation VMEM budget: ~3/4 of physical (v5e/v6e: 128 MiB -> 96 MiB, v7x: 64 -> 48 MiB).
    # Falls back to a conservative 48 MiB if the query is unavailable.
    try:
        cap = pltpu.get_tpu_info().vmem_capacity_bytes
    except Exception:
        cap = 64 * 1024 * 1024
    return int(min(cap * 3 // 4, 100 * 1024 * 1024))


_VMEM_LIMIT = _vmem_limit_bytes()


def _probe_single_buffer():
    # pipeline_mode=pl.Buffered(1) keeps grid-constant operands (weights, biases, group
    # matrices) single-buffered instead of double-buffered.  Probe once; fall back cleanly.
    try:
        def k(x_ref, o_ref):
            o_ref[...] = x_ref[...] + 1.0

        f = pl.pallas_call(
            k,
            out_shape=jax.ShapeDtypeStruct((8, 128), jnp.float32),
            grid=(1,),
            in_specs=[pl.BlockSpec((8, 128), lambda i: (0, 0),
                                   pipeline_mode=pl.Buffered(1))],
            out_specs=pl.BlockSpec((8, 128), lambda i: (0, 0)),
        )
        jax.block_until_ready(f(jnp.zeros((8, 128), jnp.float32)))
        return True
    except Exception:
        return False


_SINGLE_BUFFER_OK = _probe_single_buffer()


def _const_spec(shape):
    """BlockSpec for an operand whose block never changes across the grid."""
    index_map = lambda *_: (0,) * len(shape)
    if _SINGLE_BUFFER_OK:
        return pl.BlockSpec(shape, index_map, pipeline_mode=pl.Buffered(1))
    return pl.BlockSpec(shape, index_map)


def _compiler_params(semantics):
    return pltpu.CompilerParams(dimension_semantics=semantics,
                                vmem_limit_bytes=_VMEM_LIMIT)


def _gelu_tanh(x):
    # TODO(synk): PyTorch nn.GELU() defaults to exact erf GELU; tanh approximation used here.
    c = 0.7978845608028654  # sqrt(2/pi)
    return 0.5 * x * (1.0 + jnp.tanh(c * (x + 0.044715 * x * x * x)))


# ----------------------------- Pallas kernels ------------------------------


def _scale_to_int_kernel(x_ref, o_ref):
    # y = 255*((x+1)/2) emitted directly as int32 (single fused pass, no extra HBM round trip).
    o_ref[...] = (x_ref[...] * 127.5 + 127.5).astype(jnp.int32)


def _gn_relu_epilogue(y, gnw, gnb, gsum, gbc):
    # GroupNorm(16) + ReLU on an (M, C) tile; group stats via tiny (C,G)/(G,C) matmuls
    # (1/(M*gsize) baked into gsum); affine folded into one scale+shift (2 VPU ops/element).
    s = jnp.sum(y, axis=0, keepdims=True)            # (1, C) per-channel sum over spatial
    ss = jnp.sum(y * y, axis=0, keepdims=True)       # (1, C) per-channel sum of squares
    mean_g = jnp.dot(s, gsum, preferred_element_type=jnp.float32)     # (1, G)
    ex2_g = jnp.dot(ss, gsum, preferred_element_type=jnp.float32)     # (1, G)
    mean_c = jnp.dot(mean_g, gbc, preferred_element_type=jnp.float32)  # (1, C)
    ex2_c = jnp.dot(ex2_g, gbc, preferred_element_type=jnp.float32)    # (1, C)
    inv = lax.rsqrt(ex2_c - mean_c * mean_c + _GN_EPS)
    a = inv * gnw
    b = gnb - mean_c * a
    return jnp.maximum(y * a + b, 0.0)


def _conv3x3_acc(x_ref, w_ref, m, wo):
    # x_ref: (1, 3, 2, (Ho+1)*Wo, Cin) bf16 (dx-shifted, row-parity split, spatially flattened).
    # w_ref: (3, 3, Cin, Cout) bf16.  Nine 2-D MXU dots accumulated in f32 -- no im2col in HBM.
    cout = w_ref.shape[-1]
    acc = jnp.zeros((m, cout), jnp.float32)
    for dy in range(3):
        for dx in range(3):
            r0 = (dy // 2) * wo
            lhs = x_ref[0, dx, dy % 2, r0:r0 + m, :]          # (M, Cin), contiguous slice
            acc = acc + jnp.dot(lhs, w_ref[dy, dx], preferred_element_type=jnp.float32)
    return acc


def _conv3x3_bias_kernel(x_ref, w_ref, b_ref, o_ref):
    m = o_ref.shape[1]
    wo = x_ref.shape[3] - m
    y = _conv3x3_acc(x_ref, w_ref, m, wo) + b_ref[...]
    o_ref[0] = y.astype(o_ref.dtype)


def _conv3x3_gn_relu_kernel(x_ref, w_ref, b_ref, gnw_ref, gnb_ref, gsum_ref, gbc_ref, o_ref):
    m = o_ref.shape[1]
    wo = x_ref.shape[3] - m
    y = _conv3x3_acc(x_ref, w_ref, m, wo) + b_ref[...]
    o_ref[0] = _gn_relu_epilogue(y, gnw_ref[...], gnb_ref[...],
                                 gsum_ref[...], gbc_ref[...]).astype(o_ref.dtype)


def _matmul_bias_gn_relu_kernel(x_ref, w_ref, b_ref, gnw_ref, gnb_ref, gsum_ref, gbc_ref, o_ref):
    # One batch sample: (M, K) @ (K, C) + b, fused GroupNorm + ReLU (out_layer 1x1 conv).
    y = jnp.dot(x_ref[0], w_ref[...], preferred_element_type=jnp.float32) + b_ref[...]
    o_ref[0] = _gn_relu_epilogue(y, gnw_ref[...], gnb_ref[...],
                                 gsum_ref[...], gbc_ref[...]).astype(o_ref.dtype)


def _cide_head_kernel(logits_ref, w1_ref, b1_ref, w2_ref, b2_ref, emb_ref, out_ref):
    # fc -> GELU -> fc -> softmax -> probs @ embeddings, fused; bf16 MXU inputs, f32 math.
    h = jnp.dot(logits_ref[...], w1_ref[...], preferred_element_type=jnp.float32) + b1_ref[...]
    h = _gelu_tanh(h)
    z = jnp.dot(h.astype(jnp.bfloat16), w2_ref[...],
                preferred_element_type=jnp.float32) + b2_ref[...]
    z = z - jnp.max(z, axis=-1, keepdims=True)
    e = jnp.exp(z)
    probs = e * pl.reciprocal(jnp.sum(e, axis=-1, keepdims=True), approx=True)
    out_ref[...] = jnp.dot(probs.astype(jnp.bfloat16), emb_ref[...],
                           preferred_element_type=jnp.float32).astype(out_ref.dtype)


# ------------------------------ wrappers ------------------------------------


def _scaled_image_int(x):
    """255*((x+1)/2) -> int32 over a lane-dense 2-D view (1024-wide blocks)."""
    flat = x.reshape(-1)
    n = flat.shape[0]
    lane = 1024
    rows = -(-n // lane)
    block_rows = min(rows, 512)
    rows_p = -(-rows // block_rows) * block_rows
    flat = jnp.pad(flat, (0, rows_p * lane - n))
    x2 = flat.reshape(rows_p, lane)
    y2 = pl.pallas_call(
        _scale_to_int_kernel,
        out_shape=jax.ShapeDtypeStruct((rows_p, lane), jnp.int32),
        grid=(rows_p // block_rows,),
        in_specs=[pl.BlockSpec((block_rows, lane), lambda i: (i, 0))],
        out_specs=pl.BlockSpec((block_rows, lane), lambda i: (i, 0)),
        compiler_params=_compiler_params(("parallel",)),
    )(x2)
    return y2.reshape(-1)[:n].reshape(x.shape)


def _group_mats(c, groups, m):
    gsize = c // groups
    gid = jnp.arange(c) // gsize
    gix = jnp.arange(groups)
    gsum = (gid[:, None] == gix[None, :]).astype(jnp.float32) / float(m * gsize)  # (C, G)
    gbc = (gix[:, None] == gid[None, :]).astype(jnp.float32)                      # (G, C)
    return gsum, gbc


def _conv3x3_view(x_nhwc):
    """Column-shifted (dx=0,1,2) / row-parity-split bf16 view of the padded input.

    Pure layout plumbing (~1.5x input bytes in bf16 vs 9x for a materialized f32 im2col);
    every 3x3/stride-2 tap becomes a contiguous 2-D (M, Cin) slice inside the kernel.
    """
    b, h, w, c = x_nhwc.shape
    assert h % 2 == 0 and w % 2 == 0, "stride-2 conv expects even spatial dims"
    ho, wo = h // 2, w // 2
    xp = jnp.pad(x_nhwc.astype(jnp.bfloat16), ((0, 0), (1, 1), (1, 1), (0, 0)))  # (B,H+2,W+2,C)
    cols = [xp[:, :, dx:dx + 2 * wo:2, :] for dx in range(3)]                    # (B,H+2,Wo,C)
    v = jnp.stack(cols, axis=1)                                                  # (B,3,H+2,Wo,C)
    v = v.reshape(b, 3, ho + 1, 2, wo, c).transpose(0, 1, 3, 2, 4, 5)            # row parity split
    v = v.reshape(b, 3, 2, (ho + 1) * wo, c)
    return v, ho, wo


def conv3x3_s2(x_nhwc, w_hwio, bias, gn=None):
    """3x3 / stride-2 / pad-1 conv (+ optional GroupNorm+ReLU), gridded over batch."""
    b = x_nhwc.shape[0]
    cin = x_nhwc.shape[-1]
    cout = w_hwio.shape[-1]
    v, ho, wo = _conv3x3_view(x_nhwc)
    m, mx = ho * wo, (ho + 1) * wo
    args = [v, w_hwio.astype(jnp.bfloat16), bias.reshape(1, cout).astype(jnp.float32)]
    in_specs = [
        pl.BlockSpec((1, 3, 2, mx, cin), lambda i: (i, 0, 0, 0, 0)),
        _const_spec((3, 3, cin, cout)),
        _const_spec((1, cout)),
    ]
    if gn is None:
        kernel = _conv3x3_bias_kernel
    else:
        gnw, gnb, groups = gn
        gsum, gbc = _group_mats(cout, groups, m)
        kernel = _conv3x3_gn_relu_kernel
        in_specs += [_const_spec((1, cout)), _const_spec((1, cout)),
                     _const_spec((cout, groups)), _const_spec((groups, cout))]
        args += [gnw.reshape(1, cout).astype(jnp.float32),
                 gnb.reshape(1, cout).astype(jnp.float32), gsum, gbc]
    # TODO(synk): at production shapes on v7x, add grid axes over spatial-row tiles (and K with
    #             a pl.when-initialized accumulator) to bound per-step VMEM and feed both cores.
    y = pl.pallas_call(
        kernel,
        out_shape=jax.ShapeDtypeStruct((b, m, cout), jnp.float32),
        grid=(b,),
        in_specs=in_specs,
        out_specs=pl.BlockSpec((1, m, cout), lambda i: (i, 0, 0)),
        compiler_params=_compiler_params(("parallel",)),
    )(*args)
    return y.reshape(b, ho, wo, cout)


def conv1x1_gn_relu(x_nhwc, w_io, bias, gnw, gnb, groups):
    b, h, w, cin = x_nhwc.shape
    cout = w_io.shape[-1]
    m = h * w
    gsum, gbc = _group_mats(cout, groups, m)
    y = pl.pallas_call(
        _matmul_bias_gn_relu_kernel,
        out_shape=jax.ShapeDtypeStruct((b, m, cout), jnp.float32),
        grid=(b,),
        in_specs=[
            pl.BlockSpec((1, m, cin), lambda i: (i, 0, 0)),
            _const_spec((cin, cout)),
            _const_spec((1, cout)),
            _const_spec((1, cout)),
            _const_spec((1, cout)),
            _const_spec((cout, groups)),
            _const_spec((groups, cout)),
        ],
        out_specs=pl.BlockSpec((1, m, cout), lambda i: (i, 0, 0)),
        compiler_params=_compiler_params(("parallel",)),
    )(x_nhwc.reshape(b, m, cin).astype(jnp.bfloat16),
      w_io.astype(jnp.bfloat16),
      bias.reshape(1, cout).astype(jnp.float32),
      gnw.reshape(1, cout).astype(jnp.float32),
      gnb.reshape(1, cout).astype(jnp.float32),
      gsum, gbc)
    return y.reshape(b, h, w, cout)


def cide_class_embeddings(vit_logits, p):
    b, d = vit_logits.shape
    dh = p["fc1_w"].shape[1]
    ncls = p["fc2_w"].shape[1]
    t = p["embeddings"].shape[1]
    return pl.pallas_call(
        _cide_head_kernel,
        out_shape=jax.ShapeDtypeStruct((b, t), jnp.float32),
        grid=(1,),
        in_specs=[
            pl.BlockSpec((b, d), lambda i: (0, 0)),
            _const_spec((d, dh)),
            _const_spec((1, dh)),
            _const_spec((dh, ncls)),
            _const_spec((1, ncls)),
            _const_spec((ncls, t)),
        ],
        out_specs=pl.BlockSpec((b, t), lambda i: (0, 0)),
        compiler_params=_compiler_params(("arbitrary",)),
    )(vit_logits.astype(jnp.bfloat16),
      p["fc1_w"].astype(jnp.bfloat16), p["fc1_b"].reshape(1, dh).astype(jnp.float32),
      p["fc2_w"].astype(jnp.bfloat16), p["fc2_b"].reshape(1, ncls).astype(jnp.float32),
      p["embeddings"].astype(jnp.bfloat16))


def eco_depth_encoder_forward(params, x, vit_logits, unet_outs):
    """EcoDepthEncoder.forward with the external frozen networks stubbed.

    x          : (B, 3, H, W) image in [-1, 1] (NCHW, as in PyTorch).
    vit_logits : (B, 1000) stand-in for the frozen ViT classifier logits.
    unet_outs  : 4 NCHW feature maps standing in for the frozen SD-UNet outputs.
    """
    # TODO(synk): self.encoder_vq.encode(x) (frozen Stable-Diffusion VAE) is an external
    #             pretrained network; its latents are only consumed by the (also external) UNet.
    bsz, _, h, w = x.shape
    assert w >= h, "pad_to_make_square pads rows only (requires w >= h)"

    # pad_to_make_square: scale + int cast in one Pallas kernel; permute / pad are layout only.
    y_int = jnp.transpose(_scaled_image_int(x), (0, 2, 3, 1))
    y_square = jnp.concatenate([y_int, jnp.zeros((bsz, w - h, w, 3), jnp.int32)], axis=1)
    # TODO(synk): self.vit_processor / self.vit_model (frozen pretrained ViT) are external;
    #             `vit_logits` stands in for vit_outputs.logits.

    # CIDE: fc -> GELU -> fc -> softmax -> probs @ embeddings (one fused Pallas kernel).
    class_embeddings = cide_class_embeddings(vit_logits, params)
    # TODO(synk): self.text_adapter (TextAdapterDepth, with self.gamma) and the SD UNet
    #             cross-attention that consumes c_crossattn are external modules.
    c_crossattn = class_embeddings

    o0, o1, o2, o3 = unet_outs
    f0 = jnp.transpose(o0, (0, 2, 3, 1))
    f1 = jnp.transpose(o1, (0, 2, 3, 1))
    f2a = jnp.transpose(o2, (0, 2, 3, 1))
    f2b = jnp.transpose(o3, (0, 2, 3, 1))
    # F.interpolate(outs[3], scale_factor=2) (nearest): zero-FLOP data movement, wrapper-side.
    f2b = jnp.repeat(jnp.repeat(f2b, 2, axis=1), 2, axis=2)
    feats2 = jnp.concatenate([f2a, f2b], axis=-1)

    # layer1: Conv3x3/s2 -> GroupNorm(16) -> ReLU -> Conv3x3/s2
    t = conv3x3_s2(f0, params["l1_conv1_w"], params["l1_conv1_b"],
                   gn=(params["l1_gn_w"], params["l1_gn_b"], 16))
    t = conv3x3_s2(t, params["l1_conv2_w"], params["l1_conv2_b"])
    # layer2: Conv3x3/s2
    u = conv3x3_s2(f1, params["l2_conv_w"], params["l2_conv_b"])

    cat = jnp.concatenate([t, u, feats2], axis=-1)
    # out_layer: Conv1x1 -> GroupNorm(16) -> ReLU
    out = conv1x1_gn_relu(cat, params["out_w"], params["out_b"],
                          params["out_gn_w"], params["out_gn_b"], 16)
    return jnp.transpose(out, (0, 3, 1, 2)), c_crossattn, y_square


# --------------------------- pure-JAX reference ------------------------------


def _ref_group_norm(x_nhwc, gnw, gnb, groups, eps=_GN_EPS):
    B, H, W, C = x_nhwc.shape
    gs = C // groups
    xg = x_nhwc.reshape(B, H, W, groups, gs)
    mean = jnp.mean(xg, axis=(1, 2, 4), keepdims=True)
    var = jnp.mean(jnp.square(xg - mean), axis=(1, 2, 4), keepdims=True)
    xn = ((xg - mean) * lax.rsqrt(var + eps)).reshape(B, H, W, C)
    return xn * gnw.reshape(1, 1, 1, C) + gnb.reshape(1, 1, 1, C)


def _ref_conv3(x_nhwc, w_hwio, b):
    y = lax.conv_general_dilated(x_nhwc, w_hwio, window_strides=(2, 2),
                                 padding=((1, 1), (1, 1)),
                                 dimension_numbers=("NHWC", "HWIO", "NHWC"))
    return y + b.reshape(1, 1, 1, -1)


def ref_forward(params, x, vit_logits, unet_outs):
    y = jnp.transpose((x + 1.0) * 0.5 * 255.0, (0, 2, 3, 1))
    bsz, _, h, w = x.shape
    y_square = jnp.concatenate(
        [y, jnp.zeros((bsz, w - h, w, 3), y.dtype)], axis=1).astype(jnp.int32)

    hh = _gelu_tanh(vit_logits @ params["fc1_w"] + params["fc1_b"])
    z = hh @ params["fc2_w"] + params["fc2_b"]
    e = jnp.exp(z - jnp.max(z, axis=1, keepdims=True))
    probs = e / jnp.sum(e, axis=1, keepdims=True)
    c_crossattn = probs @ params["embeddings"]

    o0, o1, o2, o3 = unet_outs
    f0 = jnp.transpose(o0, (0, 2, 3, 1))
    f1 = jnp.transpose(o1, (0, 2, 3, 1))
    f2a = jnp.transpose(o2, (0, 2, 3, 1))
    f2b = jnp.repeat(jnp.repeat(jnp.transpose(o3, (0, 2, 3, 1)), 2, axis=1), 2, axis=2)
    feats2 = jnp.concatenate([f2a, f2b], axis=-1)

    t = _ref_conv3(f0, params["l1_conv1_w"], params["l1_conv1_b"])
    t = jnp.maximum(_ref_group_norm(t, params["l1_gn_w"], params["l1_gn_b"], 16), 0.0)
    t = _ref_conv3(t, params["l1_conv2_w"], params["l1_conv2_b"])
    u = _ref_conv3(f1, params["l2_conv_w"], params["l2_conv_b"])

    cat = jnp.concatenate([t, u, feats2], axis=-1)
    out = jnp.einsum("bhwc,co->bhwo", cat, params["out_w"]) + params["out_b"].reshape(1, 1, 1, -1)
    out = jnp.maximum(_ref_group_norm(out, params["out_gn_w"], params["out_gn_b"], 16), 0.0)
    return jnp.transpose(out, (0, 3, 1, 2)), c_crossattn, y_square


# ---------------------------------- test -------------------------------------

if __name__ == "__main__":
    key = jax.random.PRNGKey(0)
    ks = jax.random.split(key, 24)

    B = 2
    ldm_prior = (32, 64, 128 + 128)   # scaled-down from (320, 640, 1280+1280)
    out_dim = 128                     # scaled-down from 1024 (multiple of 16 for GroupNorm)
    text_dim = 768
    n_classes = 100                   # args.no_of_classes
    vit_logit_dim = 1000
    h_img = 16                        # square test image (pad_to_make_square patch is empty)
    h0 = 16                           # UNet-feature resolutions: 16 / 8 / 4 / 2
    c0, c1, c2 = ldm_prior[0], ldm_prior[1], ldm_prior[2] // 2
    std = 0.02

    params = {
        "embeddings": jax.random.normal(ks[0], (n_classes, text_dim), jnp.float32),
        "fc1_w": std * jax.random.normal(ks[1], (vit_logit_dim, 400), jnp.float32),
        "fc1_b": std * jax.random.normal(ks[2], (400,), jnp.float32),
        "fc2_w": std * jax.random.normal(ks[3], (400, n_classes), jnp.float32),
        "fc2_b": std * jax.random.normal(ks[4], (n_classes,), jnp.float32),
        "l1_conv1_w": std * jax.random.normal(ks[5], (3, 3, c0, c0), jnp.float32),
        "l1_conv1_b": std * jax.random.normal(ks[6], (c0,), jnp.float32),
        "l1_gn_w": 1.0 + std * jax.random.normal(ks[7], (c0,), jnp.float32),
        "l1_gn_b": std * jax.random.normal(ks[8], (c0,), jnp.float32),
        "l1_conv2_w": std * jax.random.normal(ks[9], (3, 3, c0, c0), jnp.float32),
        "l1_conv2_b": std * jax.random.normal(ks[10], (c0,), jnp.float32),
        "l2_conv_w": std * jax.random.normal(ks[11], (3, 3, c1, c1), jnp.float32),
        "l2_conv_b": std * jax.random.normal(ks[12], (c1,), jnp.float32),
        "out_w": std * jax.random.normal(ks[13], (sum(ldm_prior), out_dim), jnp.float32),
        "out_b": std * jax.random.normal(ks[14], (out_dim,), jnp.float32),
        "out_gn_w": 1.0 + std * jax.random.normal(ks[15], (out_dim,), jnp.float32),
        "out_gn_b": std * jax.random.normal(ks[16], (out_dim,), jnp.float32),
        "gamma": 1e-4 * jnp.ones((text_dim,), jnp.float32),  # unused: text_adapter is external
    }

    x = jnp.tanh(jax.random.normal(ks[17], (B, 3, h_img, h_img), jnp.float32))  # values in [-1, 1]
    vit_logits = jax.random.normal(ks[18], (B, vit_logit_dim), jnp.float32)
    unet_outs = (
        jax.random.normal(ks[19], (B, c0, h0, h0), jnp.float32),
        jax.random.normal(ks[20], (B, c1, h0 // 2, h0 // 2), jnp.float32),
        jax.random.normal(ks[21], (B, c2, h0 // 4, h0 // 4), jnp.float32),
        jax.random.normal(ks[22], (B, c2, h0 // 8, h0 // 8), jnp.float32),
    )

    out, c_emb, y_sq = jax.block_until_ready(
        jax.jit(eco_depth_encoder_forward)(params, x, vit_logits, unet_outs))
    r_out, r_c, r_y = jax.block_until_ready(
        jax.jit(ref_forward)(params, x, vit_logits, unet_outs))

    assert out.shape == (B, out_dim, h0 // 4, h0 // 4), out.shape
    assert c_emb.shape == (B, text_dim), c_emb.shape
    assert y_sq.shape == (B, h_img, h_img, 3) and y_sq.dtype == jnp.int32
    # bf16 MXU operands with f32 accumulation vs f32 reference.
    assert bool(jnp.allclose(out, r_out, rtol=2e-2, atol=2e-2))
    assert bool(jnp.allclose(c_emb, r_c, rtol=2e-2, atol=2e-2))
    assert int(jnp.max(jnp.abs(y_sq - r_y))) <= 1
    print("KERNEL_OK")
</pallas_src>

<mosaic_0001>
module attributes {stable_mosaic.version = 11 : i64} {
  func.func @k(%arg0: i32, %arg1: memref<8x128xf32, #tpu.memory_space<vmem>>, %arg2: memref<8x128xf32, #tpu.memory_space<vmem>>) attributes {dimension_semantics = [#tpu.dimension_semantics<arbitrary>], iteration_bounds = array<i64: 1>, scalar_prefetch = 0 : i64, scratch_operands = 0 : i64, tpu.core_type = #tpu.core_type<tc>, window_params = [{pipeline_mode = #tpu.pipeline_mode<synchronous>, transform_indices = @transform_0, window_bounds = array<i64: 8, 128>}, {pipeline_mode = #tpu.pipeline_mode<synchronous>, transform_indices = @transform_1, window_bounds = array<i64: 8, 128>}]} {
    %c0 = arith.constant 0 : index
    %c0_0 = arith.constant 0 : index
    %0 = vector.load %arg1[%c0, %c0_0] : memref<8x128xf32, #tpu.memory_space<vmem>>, vector<8x128xf32>
    %cst = arith.constant 1.000000e+00 : f32
    %1 = vector.broadcast %cst : f32 to vector<8x128xf32>
    %2 = arith.addf %0, %1 : vector<8x128xf32>
    %c0_1 = arith.constant 0 : index
    %c0_2 = arith.constant 0 : index
    %3 = vector.load %arg2[%c0_1, %c0_2] : memref<8x128xf32, #tpu.memory_space<vmem>>, vector<8x128xf32>
    tpu.vector_store %arg2[%c0_1, %c0_2], %2 {strides = array<i32>} : memref<8x128xf32, #tpu.memory_space<vmem>>, vector<8x128xf32>,
    return
  }
  func.func @transform_0(%arg0: i32) -> (i32, i32) {
    %c0_i32 = arith.constant 0 : i32
    %c0_i32_0 = arith.constant 0 : i32
    %c0_i32_1 = arith.constant 0 : i32
    return %c0_i32, %c0_i32_0 : i32, i32
  }
  func.func @transform_1(%arg0: i32) -> (i32, i32) {
    %c0_i32 = arith.constant 0 : i32
    %c0_i32_0 = arith.constant 0 : i32
    %c0_i32_1 = arith.constant 0 : i32
    return %c0_i32, %c0_i32_0 : i32, i32
  }
}

module attributes {stable_mosaic.version = 11 : i64} {
  func.func @_conv3x3_gn_relu_kernel(%arg0: i32, %arg1: memref<1x3x2x72x32xbf16, #tpu.memory_space<vmem>>, %arg2: memref<3x3x32x32xbf16, #tpu.memory_space<vmem>>, %arg3: memref<1x32xf32, #tpu.memory_space<vmem>>, %arg4: memref<1x32xf32, #tpu.memory_space<vmem>>, %arg5: memref<1x32xf32, #tpu.memory_space<vmem>>, %arg6: memref<32x16xf32, #tpu.memory_space<vmem>>, %arg7: memref<16x32xf32, #tpu.memory_space<vmem>>, %arg8: memref<1x64x32xf32, #tpu.memory_space<vmem>>) attributes {dimension_semantics = [#tpu.dimension_semantics<parallel>], iteration_bounds = array<i64: 2>, scalar_prefetch = 0 : i64, scratch_operands = 0 : i64, tpu.core_type = #tpu.core_type<tc>, window_params = [{transform_indices = @transform_0, window_bounds = array<i64: 1, 3, 2, 72, 32>}, {pipeline_mode = #tpu.pipeline_mode<synchronous>, transform_indices = @transform_1, window_bounds = array<i64: 3, 3, 32, 32>}, {pipeline_mode = #tpu.pipeline_mode<synchronous>, transform_indices = @transform_2, window_bounds = array<i64: 1, 32>}, {pipeline_mode = #tpu.pipeline_mode<synchronous>, transform_indices = @transform_3, window_bounds = array<i64: 1, 32>}, {pipeline_mode = #tpu.pipeline_mode<synchronous>, transform_indices = @transform_4, window_bounds = array<i64: 1, 32>}, {pipeline_mode = #tpu.pipeline_mode<synchronous>, transform_indices = @transform_5, window_bounds = array<i64: 32, 16>}, {pipeline_mode = #tpu.pipeline_mode<synchronous>, transform_indices = @transform_6, window_bounds = array<i64: 16, 32>}, {transform_indices = @transform_7, window_bounds = array<i64: 1, 64, 32>}]} {
    %cst = arith.constant 0.000000e+00 : f32
    %0 = vector.broadcast %cst : f32 to vector<64x32xf32>
    %c0 = arith.constant 0 : index
    %c0_0 = arith.constant 0 : index
    %c0_1 = arith.constant 0 : index
    %c0_2 = arith.constant 0 : index
    %c0_3 = arith.constant 0 : index
    %1 = vector.load %arg1[%c0, %c0_0, %c0_1, %c0_2, %c0_3] : memref<1x3x2x72x32xbf16, #tpu.memory_space<vmem>>, vector<1x1x1x64x32xbf16>
    %2 = vector.shape_cast %1 : vector<1x1x1x64x32xbf16> to vector<64x32xbf16>
    %c0_4 = arith.constant 0 : index
    %c0_5 = arith.constant 0 : index
    %c0_6 = arith.constant 0 : index
    %c0_7 = arith.constant 0 : index
    %3 = vector.load %arg2[%c0_4, %c0_5, %c0_6, %c0_7] : memref<3x3x32x32xbf16, #tpu.memory_space<vmem>>, vector<1x1x32x32xbf16>
    %4 = vector.shape_cast %3 : vector<1x1x32x32xbf16> to vector<32x32xbf16>
    %cst_8 = arith.constant dense<0.000000e+00> : vector<64x32xf32>
    %5 = tpu.matmul %2, %4, %cst_8 {dimension_numbers = #tpu.dot_dimension_numbers<[1], [0], [0], [1], [0, 0, 1, 1], [], []>} : vector<64x32xbf16>, vector<32x32xbf16>, vector<64x32xf32> -> vector<64x32xf32>
    %6 = arith.addf %0, %5 : vector<64x32xf32>
    %c0_9 = arith.constant 0 : index
    %c1 = arith.constant 1 : index
    %c0_10 = arith.constant 0 : index
    %c0_11 = arith.constant 0 : index
    %c0_12 = arith.constant 0 : index
    %7 = vector.load %arg1[%c0_9, %c1, %c0_10, %c0_11, %c0_12] : memref<1x3x2x72x32xbf16, #tpu.memory_space<vmem>>, vector<1x1x1x64x32xbf16>
    %8 = vector.shape_cast %7 : vector<1x1x1x64x32xbf16> to vector<64x32xbf16>
    %c0_13 = arith.constant 0 : index
    %c1_14 = arith.constant 1 : index
    %c0_15 = arith.constant 0 : index
    %c0_16 = arith.constant 0 : index
    %9 = vector.load %arg2[%c0_13, %c1_14, %c0_15, %c0_16] : memref<3x3x32x32xbf16, #tpu.memory_space<vmem>>, vector<1x1x32x32xbf16>
    %10 = vector.shape_cast %9 : vector<1x1x32x32xbf16> to vector<32x32xbf16>
    %cst_17 = arith.constant dense<0.000000e+00> : vector<64x32xf32>
    %11 = tpu.matmul %8, %10, %cst_17 {dimension_numbers = #tpu.dot_dimension_numbers<[1], [0], [0], [1], [0, 0, 1, 1], [], []>} : vector<64x32xbf16>, vector<32x32xbf16>, vector<64x32xf32> -> vector<64x32xf32>
    %12 = arith.addf %6, %11 : vector<64x32xf32>
    %c0_18 = arith.constant 0 : index
    %c2 = arith.constant 2 : index
    %c0_19 = arith.constant 0 : index
    %c0_20 = arith.constant 0 : index
    %c0_21 = arith.constant 0 : index
    %13 = vector.load %arg1[%c0_18, %c2, %c0_19, %c0_20, %c0_21] : memref<1x3x2x72x32xbf16, #tpu.memory_space<vmem>>, vector<1x1x1x64x32xbf16>
    %14 = vector.shape_cast %13 : vector<1x1x1x64x32xbf16> to vector<64x32xbf16>
    %c0_22 = arith.constant 0 : index
    %c2_23 = arith.constant 2 : index
    %c0_24 = arith.constant 0 : index
    %c0_25 = arith.constant 0 : index
    %15 = vector.load %arg2[%c0_22, %c2_23, %c0_24, %c0_25] : memref<3x3x32x32xbf16, #tpu.memory_space<vmem>>, vector<1x1x32x32xbf16>
    %16 = vector.shape_cast %15 : vector<1x1x32x32xbf16> to vector<32x32xbf16>
    %cst_26 = arith.constant dense<0.000000e+00> : vector<64x32xf32>
    %17 = tpu.matmul %14, %16, %cst_26 {dimension_numbers = #tpu.dot_dimension_numbers<[1], [0], [0], [1], [0, 0, 1, 1], [], []>} : vector<64x32xbf16>, vector<32x32xbf16>, vector<64x32xf32> -> vector<64x32xf32>
    %18 = arith.addf %12, %17 : vector<64x32xf32>
    %c0_27 = arith.constant 0 : index
    %c0_28 = arith.constant 0 : index
    %c1_29 = arith.constant 1 : index
    %c0_30 = arith.constant 0 : index
    %c0_31 = arith.constant 0 : index
    %19 = vector.load %arg1[%c0_27, %c0_28, %c1_29, %c0_30, %c0_31] : memref<1x3x2x72x32xbf16, #tpu.memory_space<vmem>>, vector<1x1x1x64x32xbf16>
    %20 = vector.shape_cast %19 : vector<1x1x1x64x32xbf16> to vector<64x32xbf16>
    %c1_32 = arith.constant 1 : index
    %c0_33 = arith.constant 0 : index
    %c0_34 = arith.constant 0 : index
    %c0_35 = arith.constant 0 : index
    %21 = vector.load %arg2[%c1_32, %c0_33, %c0_34, %c0_35] : memref<3x3x32x32xbf16, #tpu.memory_space<vmem>>, vector<1x1x32x32xbf16>
    %22 = vector.shape_cast %21 : vector<1x1x32x32xbf16> to vector<32x32xbf16>
    %cst_36 = arith.constant dense<0.000000e+00> : vector<64x32xf32>
    %23 = tpu.matmul %20, %22, %cst_36 {dimension_numbers = #tpu.dot_dimension_numbers<[1], [0], [0], [1], [0, 0, 1, 1], [], []>} : vector<64x32xbf16>, vector<32x32xbf16>, vector<64x32xf32> -> vector<64x32xf32>
    %24 = arith.addf %18, %23 : vector<64x32xf32>
    %c0_37 = arith.constant 0 : index
    %c1_38 = arith.constant 1 : index
    %c1_39 = arith.constant 1 : index
    %c0_40 = arith.constant 0 : index
    %c0_41 = arith.constant 0 : index
    %25 = vector.load %arg1[%c0_37, %c1_38, %c1_39, %c0_40, %c0_41] : memref<1x3x2x72x32xbf16, #tpu.memory_space<vmem>>, vector<1x1x1x64x32xbf16>
    %26 = vector.shape_cast %25 : vector<1x1x1x64x32xbf16> to vector<64x32xbf16>
    %c1_42 = arith.constant 1 : index
    %c1_43 = arith.constant 1 : index
    %c0_44 = arith.constant 0 : index
    %c0_45 = arith.constant 0 : index
    %27 = vector.load %arg2[%c1_42, %c1_43, %c0_44, %c0_45] : memref<3x3x32x32xbf16, #tpu.memory_space<vmem>>, vector<1x1x32x32xbf16>
    %28 = vector.shape_cast %27 : vector<1x1x32x32xbf16> to vector<32x32xbf16>
    %cst_46 = arith.constant dense<0.000000e+00> : vector<64x32xf32>
    %29 = tpu.matmul %26, %28, %cst_46 {dimension_numbers = #tpu.dot_dimension_numbers<[1], [0], [0], [1], [0, 0, 1, 1], [], []>} : vector<64x32xbf16>, vector<32x32xbf16>, vector<64x32xf32> -> vector<64x32xf32>
    %30 = arith.addf %24, %29 : vector<64x32xf32>
    %c0_47 = arith.constant 0 : index
    %c2_48 = arith.constant 2 : index
    %c1_49 = arith.constant 1 : index
    %c0_50 = arith.constant 0 : index
    %c0_51 = arith.constant 0 : index
    %31 = vector.load %arg1[%c0_47, %c2_48, %c1_49, %c0_50, %c0_51] : memref<1x3x2x72x32xbf16, #tpu.memory_space<vmem>>, vector<1x1x1x64x32xbf16>
    %32 = vector.shape_cast %31 : vector<1x1x1x64x32xbf16> to vector<64x32xbf16>
    %c1_52 = arith.constant 1 : index
    %c2_53 = arith.constant 2 : index
    %c0_54 = arith.constant 0 : index
    %c0_55 = arith.constant 0 : index
    %33 = vector.load %arg2[%c1_52, %c2_53, %c0_54, %c0_55] : memref<3x3x32x32xbf16, #tpu.memory_space<vmem>>, vector<1x1x32x32xbf16>
    %34 = vector.shape_cast %33 : vector<1x1x32x32xbf16> to vector<32x32xbf16>
    %cst_56 = arith.constant dense<0.000000e+00> : vector<64x32xf32>
    %35 = tpu.matmul %32, %34, %cst_56 {dimension_numbers = #tpu.dot_dimension_numbers<[1], [0], [0], [1], [0, 0, 1, 1], [], []>} : vector<64x32xbf16>, vector<32x32xbf16>, vector<64x32xf32> -> vector<64x32xf32>
    %36 = arith.addf %30, %35 : vector<64x32xf32>
    %c0_57 = arith.constant 0 : index
    %c0_58 = arith.constant 0 : index
    %c0_59 = arith.constant 0 : index
    %c8 = arith.constant 8 : index
    %c0_60 = arith.constant 0 : index
    %37 = vector.load %arg1[%c0_57, %c0_58, %c0_59, %c8, %c0_60] : memref<1x3x2x72x32xbf16, #tpu.memory_space<vmem>>, vector<1x1x1x64x32xbf16>
    %38 = vector.shape_cast %37 : vector<1x1x1x64x32xbf16> to vector<64x32xbf16>
    %c2_61 = arith.constant 2 : index
    %c0_62 = arith.constant 0 : index
    %c0_63 = arith.constant 0 : index
    %c0_64 = arith.constant 0 : index
    %39 = vector.load %arg2[%c2_61, %c0_62, %c0_63, %c0_64] : memref<3x3x32x32xbf16, #tpu.memory_space<vmem>>, vector<1x1x32x32xbf16>
    %40 = vector.shape_cast %39 : vector<1x1x32x32xbf16> to vector<32x32xbf16>
    %cst_65 = arith.constant dense<0.000000e+00> : vector<64x32xf32>
    %41 = tpu.matmul %38, %40, %cst_65 {dimension_numbers = #tpu.dot_dimension_numbers<[1], [0], [0], [1], [0, 0, 1, 1], [], []>} : vector<64x32xbf16>, vector<32x32xbf16>, vector<64x32xf32> -> vector<64x32xf32>
    %42 = arith.addf %36, %41 : vector<64x32xf32>
    %c0_66 = arith.constant 0 : index
    %c1_67 = arith.constant 1 : index
    %c0_68 = arith.constant 0 : index
    %c8_69 = arith.constant 8 : index
    %c0_70 = arith.constant 0 : index
    %43 = vector.load %arg1[%c0_66, %c1_67, %c0_68, %c8_69, %c0_70] : memref<1x3x2x72x32xbf16, #tpu.memory_space<vmem>>, vector<1x1x1x64x32xbf16>
    %44 = vector.shape_cast %43 : vector<1x1x1x64x32xbf16> to vector<64x32xbf16>
    %c2_71 = arith.constant 2 : index
    %c1_72 = arith.constant 1 : index
    %c0_73 = arith.constant 0 : index
    %c0_74 = arith.constant 0 : index
    %45 = vector.load %arg2[%c2_71, %c1_72, %c0_73, %c0_74] : memref<3x3x32x32xbf16, #tpu.memory_space<vmem>>, vector<1x1x32x32xbf16>
    %46 = vector.shape_cast %45 : vector<1x1x32x32xbf16> to vector<32x32xbf16>
    %cst_75 = arith.constant dense<0.000000e+00> : vector<64x32xf32>
    %47 = tpu.matmul %44, %46, %cst_75 {dimension_numbers = #tpu.dot_dimension_numbers<[1], [0], [0], [1], [0, 0, 1, 1], [], []>} : vector<64x32xbf16>, vector<32x32xbf16>, vector<64x32xf32> -> vector<64x32xf32>
    %48 = arith.addf %42, %47 : vector<64x32xf32>
    %c0_76 = arith.constant 0 : index
    %c2_77 = arith.constant 2 : index
    %c0_78 = arith.constant 0 : index
    %c8_79 = arith.constant 8 : index
    %c0_80 = arith.constant 0 : index
    %49 = vector.load %arg1[%c0_76, %c2_77, %c0_78, %c8_79, %c0_80] : memref<1x3x2x72x32xbf16, #tpu.memory_space<vmem>>, vector<1x1x1x64x32xbf16>
    %50 = vector.shape_cast %49 : vector<1x1x1x64x32xbf16> to vector<64x32xbf16>
    %c2_81 = arith.constant 2 : index
    %c2_82 = arith.constant 2 : index
    %c0_83 = arith.constant 0 : index
    %c0_84 = arith.constant 0 : index
    %51 = vector.load %arg2[%c2_81, %c2_82, %c0_83, %c0_84] : memref<3x3x32x32xbf16, #tpu.memory_space<vmem>>, vector<1x1x32x32xbf16>
    %52 = vector.shape_cast %51 : vector<1x1x32x32xbf16> to vector<32x32xbf16>
    %cst_85 = arith.constant dense<0.000000e+00> : vector<64x32xf32>
    %53 = tpu.matmul %50, %52, %cst_85 {dimension_numbers = #tpu.dot_dimension_numbers<[1], [0], [0], [1], [0, 0, 1, 1], [], []>} : vector<64x32xbf16>, vector<32x32xbf16>, vector<64x32xf32> -> vector<64x32xf32>
    %54 = arith.addf %48, %53 : vector<64x32xf32>
    %c0_86 = arith.constant 0 : index
    %c0_87 = arith.constant 0 : index
    %55 = vector.load %arg3[%c0_86, %c0_87] : memref<1x32xf32, #tpu.memory_space<vmem>>, vector<1x32xf32>
    %56 = vector.broadcast %55 : vector<1x32xf32> to vector<64x32xf32>
    %57 = arith.addf %54, %56 : vector<64x32xf32>
    %c0_88 = arith.constant 0 : index
    %c0_89 = arith.constant 0 : index
    %58 = vector.load %arg4[%c0_88, %c0_89] : memref<1x32xf32, #tpu.memory_space<vmem>>, vector<1x32xf32>
    %c0_90 = arith.constant 0 : index
    %c0_91 = arith.constant 0 : index
    %59 = vector.load %arg5[%c0_90, %c0_91] : memref<1x32xf32, #tpu.memory_space<vmem>>, vector<1x32xf32>
    %c0_92 = arith.constant 0 : index
    %c0_93 = arith.constant 0 : index
    %60 = vector.load %arg6[%c0_92, %c0_93] : memref<32x16xf32, #tpu.memory_space<vmem>>, vector<32x16xf32>
    %c0_94 = arith.constant 0 : index
    %c0_95 = arith.constant 0 : index
    %61 = vector.load %arg7[%c0_94, %c0_95] : memref<16x32xf32, #tpu.memory_space<vmem>>, vector<16x32xf32>
    %cst_96 = arith.constant dense<0.000000e+00> : vector<32xf32>
    %62 = vector.multi_reduction <add>, %57, %cst_96 [0] : vector<64x32xf32> to vector<32xf32>
    %63 = vector.shape_cast %62 : vector<32xf32> to vector<1x32xf32>
    %64 = arith.mulf %57, %57 : vector<64x32xf32>
    %cst_97 = arith.constant dense<0.000000e+00> : vector<32xf32>
    %65 = vector.multi_reduction <add>, %64, %cst_97 [0] : vector<64x32xf32> to vector<32xf32>
    %66 = vector.shape_cast %65 : vector<32xf32> to vector<1x32xf32>
    %cst_98 = arith.constant dense<0.000000e+00> : vector<1x16xf32>
    %67 = tpu.matmul %63, %60, %cst_98 {dimension_numbers = #tpu.dot_dimension_numbers<[1], [0], [0], [1], [0, 0, 1, 1], [], []>} : vector<1x32xf32>, vector<32x16xf32>, vector<1x16xf32> -> vector<1x16xf32>
    %cst_99 = arith.constant dense<0.000000e+00> : vector<1x16xf32>
    %68 = tpu.matmul %66, %60, %cst_99 {dimension_numbers = #tpu.dot_dimension_numbers<[1], [0], [0], [1], [0, 0, 1, 1], [], []>} : vector<1x32xf32>, vector<32x16xf32>, vector<1x16xf32> -> vector<1x16xf32>
    %cst_100 = arith.constant dense<0.000000e+00> : vector<1x32xf32>
    %69 = tpu.matmul %67, %61, %cst_100 {dimension_numbers = #tpu.dot_dimension_numbers<[1], [0], [0], [1], [0, 0, 1, 1], [], []>} : vector<1x16xf32>, vector<16x32xf32>, vector<1x32xf32> -> vector<1x32xf32>
    %cst_101 = arith.constant dense<0.000000e+00> : vector<1x32xf32>
    %70 = tpu.matmul %68, %61, %cst_101 {dimension_numbers = #tpu.dot_dimension_numbers<[1], [0], [0], [1], [0, 0, 1, 1], [], []>} : vector<1x16xf32>, vector<16x32xf32>, vector<1x32xf32> -> vector<1x32xf32>
    %71 = arith.mulf %69, %69 : vector<1x32xf32>
    %72 = arith.subf %70, %71 : vector<1x32xf32>
    %cst_102 = arith.constant 9.99999974E-6 : f32
    %73 = vector.broadcast %cst_102 : f32 to vector<1x32xf32>
    %74 = arith.addf %72, %73 : vector<1x32xf32>
    %75 = math.rsqrt %74 : vector<1x32xf32>
    %76 = arith.mulf %75, %58 : vector<1x32xf32>
    %77 = arith.mulf %69, %76 : vector<1x32xf32>
    %78 = arith.subf %59, %77 : vector<1x32xf32>
    %79 = vector.broadcast %76 : vector<1x32xf32> to vector<64x32xf32>
    %80 = arith.mulf %57, %79 : vector<64x32xf32>
    %81 = vector.broadcast %78 : vector<1x32xf32> to vector<64x32xf32>
    %82 = arith.addf %80, %81 : vector<64x32xf32>
    %cst_103 = arith.constant 0.000000e+00 : f32
    %83 = vector.broadcast %cst_103 : f32 to vector<64x32xf32>
    %84 = arith.maximumf %82, %83 : vector<64x32xf32>
    %c0_104 = arith.constant 0 : index
    %c0_105 = arith.constant 0 : index
    %c0_106 = arith.constant 0 : index
    %85 = vector.load %arg8[%c0_104, %c0_105, %c0_106] : memref<1x64x32xf32, #tpu.memory_space<vmem>>, vector<1x64x32xf32>
    %86 = vector.shape_cast %85 : vector<1x64x32xf32> to vector<64x32xf32>
    %87 = vector.shape_cast %84 : vector<64x32xf32> to vector<1x64x32xf32>
    tpu.vector_store %arg8[%c0_104, %c0_105, %c0_106], %87 {strides = array<i32>} : memref<1x64x32xf32, #tpu.memory_space<vmem>>, vector<1x64x32xf32>,
    return
  }
  func.func @transform_0(%arg0: i32) -> (i32, i32, i32, i32, i32) {
    %c0_i32 = arith.constant 0 : i32
    %c0_i32_0 = arith.constant 0 : i32
    %c0_i32_1 = arith.constant 0 : i32
    %c0_i32_2 = arith.constant 0 : i32
    %c0_i32_3 = arith.constant 0 : i32
    return %arg0, %c0_i32, %c0_i32_0, %c0_i32_1, %c0_i32_2 : i32, i32, i32, i32, i32
  }
  func.func @transform_1(%arg0: i32) -> (i32, i32, i32, i32) {
    %c0_i32 = arith.constant 0 : i32
    %c0_i32_0 = arith.constant 0 : i32
    %c0_i32_1 = arith.constant 0 : i32
    %c0_i32_2 = arith.constant 0 : i32
    %c0_i32_3 = arith.constant 0 : i32
    return %c0_i32, %c0_i32_0, %c0_i32_1, %c0_i32_2 : i32, i32, i32, i32
  }
  func.func @transform_2(%arg0: i32) -> (i32, i32) {
    %c0_i32 = arith.constant 0 : i32
    %c0_i32_0 = arith.constant 0 : i32
    %c0_i32_1 = arith.constant 0 : i32
    return %c0_i32, %c0_i32_0 : i32, i32
  }
  func.func @transform_3(%arg0: i32) -> (i32, i32) {
    %c0_i32 = arith.constant 0 : i32
    %c0_i32_0 = arith.constant 0 : i32
    %c0_i32_1 = arith.constant 0 : i32
    return %c0_i32, %c0_i32_0 : i32, i32
  }
  func.func @transform_4(%arg0: i32) -> (i32, i32) {
    %c0_i32 = arith.constant 0 : i32
    %c0_i32_0 = arith.constant 0 : i32
    %c0_i32_1 = arith.constant 0 : i32
    return %c0_i32, %c0_i32_0 : i32, i32
  }
  func.func @transform_5(%arg0: i32) -> (i32, i32) {
    %c0_i32 = arith.constant 0 : i32
    %c0_i32_0 = arith.constant 0 : i32
    %c0_i32_1 = arith.constant 0 : i32
    return %c0_i32, %c0_i32_0 : i32, i32
  }
  func.func @transform_6(%arg0: i32) -> (i32, i32) {
    %c0_i32 = arith.constant 0 : i32
    %c0_i32_0 = arith.constant 0 : i32
    %c0_i32_1 = arith.constant 0 : i32
    return %c0_i32, %c0_i32_0 : i32, i32
  }
  func.func @transform_7(%arg0: i32) -> (i32, i32, i32) {
    %c0_i32 = arith.constant 0 : i32
    %c0_i32_0 = arith.constant 0 : i32
    %c0_i32_1 = arith.constant 0 : i32
    return %arg0, %c0_i32, %c0_i32_0 : i32, i32, i32
  }
}

module attributes {stable_mosaic.version = 11 : i64} {
  func.func @_conv3x3_bias_kernel(%arg0: i32, %arg1: memref<1x3x2x20x32xbf16, #tpu.memory_space<vmem>>, %arg2: memref<3x3x32x32xbf16, #tpu.memory_space<vmem>>, %arg3: memref<1x32xf32, #tpu.memory_space<vmem>>, %arg4: memref<1x16x32xf32, #tpu.memory_space<vmem>>) attributes {dimension_semantics = [#tpu.dimension_semantics<parallel>], iteration_bounds = array<i64: 2>, scalar_prefetch = 0 : i64, scratch_operands = 0 : i64, tpu.core_type = #tpu.core_type<tc>, window_params = [{transform_indices = @transform_0, window_bounds = array<i64: 1, 3, 2, 20, 32>}, {pipeline_mode = #tpu.pipeline_mode<synchronous>, transform_indices = @transform_1, window_bounds = array<i64: 3, 3, 32, 32>}, {pipeline_mode = #tpu.pipeline_mode<synchronous>, transform_indices = @transform_2, window_bounds = array<i64: 1, 32>}, {transform_indices = @transform_3, window_bounds = array<i64: 1, 16, 32>}]} {
    %cst = arith.constant 0.000000e+00 : f32
    %0 = vector.broadcast %cst : f32 to vector<16x32xf32>
    %c0 = arith.constant 0 : index
    %c0_0 = arith.constant 0 : index
    %c0_1 = arith.constant 0 : index
    %c0_2 = arith.constant 0 : index
    %c0_3 = arith.constant 0 : index
    %1 = vector.load %arg1[%c0, %c0_0, %c0_1, %c0_2, %c0_3] : memref<1x3x2x20x32xbf16, #tpu.memory_space<vmem>>, vector<1x1x1x16x32xbf16>
    %2 = vector.shape_cast %1 : vector<1x1x1x16x32xbf16> to vector<16x32xbf16>
    %c0_4 = arith.constant 0 : index
    %c0_5 = arith.constant 0 : index
    %c0_6 = arith.constant 0 : index
    %c0_7 = arith.constant 0 : index
    %3 = vector.load %arg2[%c0_4, %c0_5, %c0_6, %c0_7] : memref<3x3x32x32xbf16, #tpu.memory_space<vmem>>, vector<1x1x32x32xbf16>
    %4 = vector.shape_cast %3 : vector<1x1x32x32xbf16> to vector<32x32xbf16>
    %cst_8 = arith.constant dense<0.000000e+00> : vector<16x32xf32>
    %5 = tpu.matmul %2, %4, %cst_8 {dimension_numbers = #tpu.dot_dimension_numbers<[1], [0], [0], [1], [0, 0, 1, 1], [], []>} : vector<16x32xbf16>, vector<32x32xbf16>, vector<16x32xf32> -> vector<16x32xf32>
    %6 = arith.addf %0, %5 : vector<16x32xf32>
    %c0_9 = arith.constant 0 : index
    %c1 = arith.constant 1 : index
    %c0_10 = arith.constant 0 : index
    %c0_11 = arith.constant 0 : index
    %c0_12 = arith.constant 0 : index
    %7 = vector.load %arg1[%c0_9, %c1, %c0_10, %c0_11, %c0_12] : memref<1x3x2x20x32xbf16, #tpu.memory_space<vmem>>, vector<1x1x1x16x32xbf16>
    %8 = vector.shape_cast %7 : vector<1x1x1x16x32xbf16> to vector<16x32xbf16>
    %c0_13 = arith.constant 0 : index
    %c1_14 = arith.constant 1 : index
    %c0_15 = arith.constant 0 : index
    %c0_16 = arith.constant 0 : index
    %9 = vector.load %arg2[%c0_13, %c1_14, %c0_15, %c0_16] : memref<3x3x32x32xbf16, #tpu.memory_space<vmem>>, vector<1x1x32x32xbf16>
    %10 = vector.shape_cast %9 : vector<1x1x32x32xbf16> to vector<32x32xbf16>
    %cst_17 = arith.constant dense<0.000000e+00> : vector<16x32xf32>
    %11 = tpu.matmul %8, %10, %cst_17 {dimension_numbers = #tpu.dot_dimension_numbers<[1], [0], [0], [1], [0, 0, 1, 1], [], []>} : vector<16x32xbf16>, vector<32x32xbf16>, vector<16x32xf32> -> vector<16x32xf32>
    %12 = arith.addf %6, %11 : vector<16x32xf32>
    %c0_18 = arith.constant 0 : index
    %c2 = arith.constant 2 : index
    %c0_19 = arith.constant 0 : index
    %c0_20 = arith.constant 0 : index
    %c0_21 = arith.constant 0 : index
    %13 = vector.load %arg1[%c0_18, %c2, %c0_19, %c0_20, %c0_21] : memref<1x3x2x20x32xbf16, #tpu.memory_space<vmem>>, vector<1x1x1x16x32xbf16>
    %14 = vector.shape_cast %13 : vector<1x1x1x16x32xbf16> to vector<16x32xbf16>
    %c0_22 = arith.constant 0 : index
    %c2_23 = arith.constant 2 : index
    %c0_24 = arith.constant 0 : index
    %c0_25 = arith.constant 0 : index
    %15 = vector.load %arg2[%c0_22, %c2_23, %c0_24, %c0_25] : memref<3x3x32x32xbf16, #tpu.memory_space<vmem>>, vector<1x1x32x32xbf16>
    %16 = vector.shape_cast %15 : vector<1x1x32x32xbf16> to vector<32x32xbf16>
    %cst_26 = arith.constant dense<0.000000e+00> : vector<16x32xf32>
    %17 = tpu.matmul %14, %16, %cst_26 {dimension_numbers = #tpu.dot_dimension_numbers<[1], [0], [0], [1], [0, 0, 1, 1], [], []>} : vector<16x32xbf16>, vector<32x32xbf16>, vector<16x32xf32> -> vector<16x32xf32>
    %18 = arith.addf %12, %17 : vector<16x32xf32>
    %c0_27 = arith.constant 0 : index
    %c0_28 = arith.constant 0 : index
    %c1_29 = arith.constant 1 : index
    %c0_30 = arith.constant 0 : index
    %c0_31 = arith.constant 0 : index
    %19 = vector.load %arg1[%c0_27, %c0_28, %c1_29, %c0_30, %c0_31] : memref<1x3x2x20x32xbf16, #tpu.memory_space<vmem>>, vector<1x1x1x16x32xbf16>
    %20 = vector.shape_cast %19 : vector<1x1x1x16x32xbf16> to vector<16x32xbf16>
    %c1_32 = arith.constant 1 : index
    %c0_33 = arith.constant 0 : index
    %c0_34 = arith.constant 0 : index
    %c0_35 = arith.constant 0 : index
    %21 = vector.load %arg2[%c1_32, %c0_33, %c0_34, %c0_35] : memref<3x3x32x32xbf16, #tpu.memory_space<vmem>>, vector<1x1x32x32xbf16>
    %22 = vector.shape_cast %21 : vector<1x1x32x32xbf16> to vector<32x32xbf16>
    %cst_36 = arith.constant dense<0.000000e+00> : vector<16x32xf32>
    %23 = tpu.matmul %20, %22, %cst_36 {dimension_numbers = #tpu.dot_dimension_numbers<[1], [0], [0], [1], [0, 0, 1, 1], [], []>} : vector<16x32xbf16>, vector<32x32xbf16>, vector<16x32xf32> -> vector<16x32xf32>
    %24 = arith.addf %18, %23 : vector<16x32xf32>
    %c0_37 = arith.constant 0 : index
    %c1_38 = arith.constant 1 : index
    %c1_39 = arith.constant 1 : index
    %c0_40 = arith.constant 0 : index
    %c0_41 = arith.constant 0 : index
    %25 = vector.load %arg1[%c0_37, %c1_38, %c1_39, %c0_40, %c0_41] : memref<1x3x2x20x32xbf16, #tpu.memory_space<vmem>>, vector<1x1x1x16x32xbf16>
    %26 = vector.shape_cast %25 : vector<1x1x1x16x32xbf16> to vector<16x32xbf16>
    %c1_42 = arith.constant 1 : index
    %c1_43 = arith.constant 1 : index
    %c0_44 = arith.constant 0 : index
    %c0_45 = arith.constant 0 : index
    %27 = vector.load %arg2[%c1_42, %c1_43, %c0_44, %c0_45] : memref<3x3x32x32xbf16, #tpu.memory_space<vmem>>, vector<1x1x32x32xbf16>
    %28 = vector.shape_cast %27 : vector<1x1x32x32xbf16> to vector<32x32xbf16>
    %cst_46 = arith.constant dense<0.000000e+00> : vector<16x32xf32>
    %29 = tpu.matmul %26, %28, %cst_46 {dimension_numbers = #tpu.dot_dimension_numbers<[1], [0], [0], [1], [0, 0, 1, 1], [], []>} : vector<16x32xbf16>, vector<32x32xbf16>, vector<16x32xf32> -> vector<16x32xf32>
    %30 = arith.addf %24, %29 : vector<16x32xf32>
    %c0_47 = arith.constant 0 : index
    %c2_48 = arith.constant 2 : index
    %c1_49 = arith.constant 1 : index
    %c0_50 = arith.constant 0 : index
    %c0_51 = arith.constant 0 : index
    %31 = vector.load %arg1[%c0_47, %c2_48, %c1_49, %c0_50, %c0_51] : memref<1x3x2x20x32xbf16, #tpu.memory_space<vmem>>, vector<1x1x1x16x32xbf16>
    %32 = vector.shape_cast %31 : vector<1x1x1x16x32xbf16> to vector<16x32xbf16>
    %c1_52 = arith.constant 1 : index
    %c2_53 = arith.constant 2 : index
    %c0_54 = arith.constant 0 : index
    %c0_55 = arith.constant 0 : index
    %33 = vector.load %arg2[%c1_52, %c2_53, %c0_54, %c0_55] : memref<3x3x32x32xbf16, #tpu.memory_space<vmem>>, vector<1x1x32x32xbf16>
    %34 = vector.shape_cast %33 : vector<1x1x32x32xbf16> to vector<32x32xbf16>
    %cst_56 = arith.constant dense<0.000000e+00> : vector<16x32xf32>
    %35 = tpu.matmul %32, %34, %cst_56 {dimension_numbers = #tpu.dot_dimension_numbers<[1], [0], [0], [1], [0, 0, 1, 1], [], []>} : vector<16x32xbf16>, vector<32x32xbf16>, vector<16x32xf32> -> vector<16x32xf32>
    %36 = arith.addf %30, %35 : vector<16x32xf32>
    %c0_57 = arith.constant 0 : index
    %c0_58 = arith.constant 0 : index
    %c0_59 = arith.constant 0 : index
    %c4 = arith.constant 4 : index
    %c0_60 = arith.constant 0 : index
    %37 = vector.load %arg1[%c0_57, %c0_58, %c0_59, %c4, %c0_60] : memref<1x3x2x20x32xbf16, #tpu.memory_space<vmem>>, vector<1x1x1x16x32xbf16>
    %38 = vector.shape_cast %37 : vector<1x1x1x16x32xbf16> to vector<16x32xbf16>
    %c2_61 = arith.constant 2 : index
    %c0_62 = arith.constant 0 : index
    %c0_63 = arith.constant 0 : index
    %c0_64 = arith.constant 0 : index
    %39 = vector.load %arg2[%c2_61, %c0_62, %c0_63, %c0_64] : memref<3x3x32x32xbf16, #tpu.memory_space<vmem>>, vector<1x1x32x32xbf16>
    %40 = vector.shape_cast %39 : vector<1x1x32x32xbf16> to vector<32x32xbf16>
    %cst_65 = arith.constant dense<0.000000e+00> : vector<16x32xf32>
    %41 = tpu.matmul %38, %40, %cst_65 {dimension_numbers = #tpu.dot_dimension_numbers<[1], [0], [0], [1], [0, 0, 1, 1], [], []>} : vector<16x32xbf16>, vector<32x32xbf16>, vector<16x32xf32> -> vector<16x32xf32>
    %42 = arith.addf %36, %41 : vector<16x32xf32>
    %c0_66 = arith.constant 0 : index
    %c1_67 = arith.constant 1 : index
    %c0_68 = arith.constant 0 : index
    %c4_69 = arith.constant 4 : index
    %c0_70 = arith.constant 0 : index
    %43 = vector.load %arg1[%c0_66, %c1_67, %c0_68, %c4_69, %c0_70] : memref<1x3x2x20x32xbf16, #tpu.memory_space<vmem>>, vector<1x1x1x16x32xbf16>
    %44 = vector.shape_cast %43 : vector<1x1x1x16x32xbf16> to vector<16x32xbf16>
    %c2_71 = arith.constant 2 : index
    %c1_72 = arith.constant 1 : index
    %c0_73 = arith.constant 0 : index
    %c0_74 = arith.constant 0 : index
    %45 = vector.load %arg2[%c2_71, %c1_72, %c0_73, %c0_74] : memref<3x3x32x32xbf16, #tpu.memory_space<vmem>>, vector<1x1x32x32xbf16>
    %46 = vector.shape_cast %45 : vector<1x1x32x32xbf16> to vector<32x32xbf16>
    %cst_75 = arith.constant dense<0.000000e+00> : vector<16x32xf32>
    %47 = tpu.matmul %44, %46, %cst_75 {dimension_numbers = #tpu.dot_dimension_numbers<[1], [0], [0], [1], [0, 0, 1, 1], [], []>} : vector<16x32xbf16>, vector<32x32xbf16>, vector<16x32xf32> -> vector<16x32xf32>
    %48 = arith.addf %42, %47 : vector<16x32xf32>
    %c0_76 = arith.constant 0 : index
    %c2_77 = arith.constant 2 : index
    %c0_78 = arith.constant 0 : index
    %c4_79 = arith.constant 4 : index
    %c0_80 = arith.constant 0 : index
    %49 = vector.load %arg1[%c0_76, %c2_77, %c0_78, %c4_79, %c0_80] : memref<1x3x2x20x32xbf16, #tpu.memory_space<vmem>>, vector<1x1x1x16x32xbf16>
    %50 = vector.shape_cast %49 : vector<1x1x1x16x32xbf16> to vector<16x32xbf16>
    %c2_81 = arith.constant 2 : index
    %c2_82 = arith.constant 2 : index
    %c0_83 = arith.constant 0 : index
    %c0_84 = arith.constant 0 : index
    %51 = vector.load %arg2[%c2_81, %c2_82, %c0_83, %c0_84] : memref<3x3x32x32xbf16, #tpu.memory_space<vmem>>, vector<1x1x32x32xbf16>
    %52 = vector.shape_cast %51 : vector<1x1x32x32xbf16> to vector<32x32xbf16>
    %cst_85 = arith.constant dense<0.000000e+00> : vector<16x32xf32>
    %53 = tpu.matmul %50, %52, %cst_85 {dimension_numbers = #tpu.dot_dimension_numbers<[1], [0], [0], [1], [0, 0, 1, 1], [], []>} : vector<16x32xbf16>, vector<32x32xbf16>, vector<16x32xf32> -> vector<16x32xf32>
    %54 = arith.addf %48, %53 : vector<16x32xf32>
    %c0_86 = arith.constant 0 : index
    %c0_87 = arith.constant 0 : index
    %55 = vector.load %arg3[%c0_86, %c0_87] : memref<1x32xf32, #tpu.memory_space<vmem>>, vector<1x32xf32>
    %56 = vector.broadcast %55 : vector<1x32xf32> to vector<16x32xf32>
    %57 = arith.addf %54, %56 : vector<16x32xf32>
    %c0_88 = arith.constant 0 : index
    %c0_89 = arith.constant 0 : index
    %c0_90 = arith.constant 0 : index
    %58 = vector.load %arg4[%c0_88, %c0_89, %c0_90] : memref<1x16x32xf32, #tpu.memory_space<vmem>>, vector<1x16x32xf32>
    %59 = vector.shape_cast %58 : vector<1x16x32xf32> to vector<16x32xf32>
    %60 = vector.shape_cast %57 : vector<16x32xf32> to vector<1x16x32xf32>
    tpu.vector_store %arg4[%c0_88, %c0_89, %c0_90], %60 {strides = array<i32>} : memref<1x16x32xf32, #tpu.memory_space<vmem>>, vector<1x16x32xf32>,
    return
  }
  func.func @transform_0(%arg0: i32) -> (i32, i32, i32, i32, i32) {
    %c0_i32 = arith.constant 0 : i32
    %c0_i32_0 = arith.constant 0 : i32
    %c0_i32_1 = arith.constant 0 : i32
    %c0_i32_2 = arith.constant 0 : i32
    %c0_i32_3 = arith.constant 0 : i32
    return %arg0, %c0_i32, %c0_i32_0, %c0_i32_1, %c0_i32_2 : i32, i32, i32, i32, i32
  }
  func.func @transform_1(%arg0: i32) -> (i32, i32, i32, i32) {
    %c0_i32 = arith.constant 0 : i32
    %c0_i32_0 = arith.constant 0 : i32
    %c0_i32_1 = arith.constant 0 : i32
    %c0_i32_2 = arith.constant 0 : i32
    %c0_i32_3 = arith.constant 0 : i32
    return %c0_i32, %c0_i32_0, %c0_i32_1, %c0_i32_2 : i32, i32, i32, i32
  }
  func.func @transform_2(%arg0: i32) -> (i32, i32) {
    %c0_i32 = arith.constant 0 : i32
    %c0_i32_0 = arith.constant 0 : i32
    %c0_i32_1 = arith.constant 0 : i32
    return %c0_i32, %c0_i32_0 : i32, i32
  }
  func.func @transform_3(%arg0: i32) -> (i32, i32, i32) {
    %c0_i32 = arith.constant 0 : i32
    %c0_i32_0 = arith.constant 0 : i32
    %c0_i32_1 = arith.constant 0 : i32
    return %arg0, %c0_i32, %c0_i32_0 : i32, i32, i32
  }
}

module attributes {stable_mosaic.version = 11 : i64} {
  func.func @_conv3x3_bias_kernel(%arg0: i32, %arg1: memref<1x3x2x20x64xbf16, #tpu.memory_space<vmem>>, %arg2: memref<3x3x64x64xbf16, #tpu.memory_space<vmem>>, %arg3: memref<1x64xf32, #tpu.memory_space<vmem>>, %arg4: memref<1x16x64xf32, #tpu.memory_space<vmem>>) attributes {dimension_semantics = [#tpu.dimension_semantics<parallel>], iteration_bounds = array<i64: 2>, scalar_prefetch = 0 : i64, scratch_operands = 0 : i64, tpu.core_type = #tpu.core_type<tc>, window_params = [{transform_indices = @transform_0, window_bounds = array<i64: 1, 3, 2, 20, 64>}, {pipeline_mode = #tpu.pipeline_mode<synchronous>, transform_indices = @transform_1, window_bounds = array<i64: 3, 3, 64, 64>}, {pipeline_mode = #tpu.pipeline_mode<synchronous>, transform_indices = @transform_2, window_bounds = array<i64: 1, 64>}, {transform_indices = @transform_3, window_bounds = array<i64: 1, 16, 64>}]} {
    %cst = arith.constant 0.000000e+00 : f32
    %0 = vector.broadcast %cst : f32 to vector<16x64xf32>
    %c0 = arith.constant 0 : index
    %c0_0 = arith.constant 0 : index
    %c0_1 = arith.constant 0 : index
    %c0_2 = arith.constant 0 : index
    %c0_3 = arith.constant 0 : index
    %1 = vector.load %arg1[%c0, %c0_0, %c0_1, %c0_2, %c0_3] : memref<1x3x2x20x64xbf16, #tpu.memory_space<vmem>>, vector<1x1x1x16x64xbf16>
    %2 = vector.shape_cast %1 : vector<1x1x1x16x64xbf16> to vector<16x64xbf16>
    %c0_4 = arith.constant 0 : index
    %c0_5 = arith.constant 0 : index
    %c0_6 = arith.constant 0 : index
    %c0_7 = arith.constant 0 : index
    %3 = vector.load %arg2[%c0_4, %c0_5, %c0_6, %c0_7] : memref<3x3x64x64xbf16, #tpu.memory_space<vmem>>, vector<1x1x64x64xbf16>
    %4 = vector.shape_cast %3 : vector<1x1x64x64xbf16> to vector<64x64xbf16>
    %cst_8 = arith.constant dense<0.000000e+00> : vector<16x64xf32>
    %5 = tpu.matmul %2, %4, %cst_8 {dimension_numbers = #tpu.dot_dimension_numbers<[1], [0], [0], [1], [0, 0, 1, 1], [], []>} : vector<16x64xbf16>, vector<64x64xbf16>, vector<16x64xf32> -> vector<16x64xf32>
    %6 = arith.addf %0, %5 : vector<16x64xf32>
    %c0_9 = arith.constant 0 : index
    %c1 = arith.constant 1 : index
    %c0_10 = arith.constant 0 : index
    %c0_11 = arith.constant 0 : index
    %c0_12 = arith.constant 0 : index
    %7 = vector.load %arg1[%c0_9, %c1, %c0_10, %c0_11, %c0_12] : memref<1x3x2x20x64xbf16, #tpu.memory_space<vmem>>, vector<1x1x1x16x64xbf16>
    %8 = vector.shape_cast %7 : vector<1x1x1x16x64xbf16> to vector<16x64xbf16>
    %c0_13 = arith.constant 0 : index
    %c1_14 = arith.constant 1 : index
    %c0_15 = arith.constant 0 : index
    %c0_16 = arith.constant 0 : index
    %9 = vector.load %arg2[%c0_13, %c1_14, %c0_15, %c0_16] : memref<3x3x64x64xbf16, #tpu.memory_space<vmem>>, vector<1x1x64x64xbf16>
    %10 = vector.shape_cast %9 : vector<1x1x64x64xbf16> to vector<64x64xbf16>
    %cst_17 = arith.constant dense<0.000000e+00> : vector<16x64xf32>
    %11 = tpu.matmul %8, %10, %cst_17 {dimension_numbers = #tpu.dot_dimension_numbers<[1], [0], [0], [1], [0, 0, 1, 1], [], []>} : vector<16x64xbf16>, vector<64x64xbf16>, vector<16x64xf32> -> vector<16x64xf32>
    %12 = arith.addf %6, %11 : vector<16x64xf32>
    %c0_18 = arith.constant 0 : index
    %c2 = arith.constant 2 : index
    %c0_19 = arith.constant 0 : index
    %c0_20 = arith.constant 0 : index
    %c0_21 = arith.constant 0 : index
    %13 = vector.load %arg1[%c0_18, %c2, %c0_19, %c0_20, %c0_21] : memref<1x3x2x20x64xbf16, #tpu.memory_space<vmem>>, vector<1x1x1x16x64xbf16>
    %14 = vector.shape_cast %13 : vector<1x1x1x16x64xbf16> to vector<16x64xbf16>
    %c0_22 = arith.constant 0 : index
    %c2_23 = arith.constant 2 : index
    %c0_24 = arith.constant 0 : index
    %c0_25 = arith.constant 0 : index
    %15 = vector.load %arg2[%c0_22, %c2_23, %c0_24, %c0_25] : memref<3x3x64x64xbf16, #tpu.memory_space<vmem>>, vector<1x1x64x64xbf16>
    %16 = vector.shape_cast %15 : vector<1x1x64x64xbf16> to vector<64x64xbf16>
    %cst_26 = arith.constant dense<0.000000e+00> : vector<16x64xf32>
    %17 = tpu.matmul %14, %16, %cst_26 {dimension_numbers = #tpu.dot_dimension_numbers<[1], [0], [0], [1], [0, 0, 1, 1], [], []>} : vector<16x64xbf16>, vector<64x64xbf16>, vector<16x64xf32> -> vector<16x64xf32>
    %18 = arith.addf %12, %17 : vector<16x64xf32>
    %c0_27 = arith.constant 0 : index
    %c0_28 = arith.constant 0 : index
    %c1_29 = arith.constant 1 : index
    %c0_30 = arith.constant 0 : index
    %c0_31 = arith.constant 0 : index
    %19 = vector.load %arg1[%c0_27, %c0_28, %c1_29, %c0_30, %c0_31] : memref<1x3x2x20x64xbf16, #tpu.memory_space<vmem>>, vector<1x1x1x16x64xbf16>
    %20 = vector.shape_cast %19 : vector<1x1x1x16x64xbf16> to vector<16x64xbf16>
    %c1_32 = arith.constant 1 : index
    %c0_33 = arith.constant 0 : index
    %c0_34 = arith.constant 0 : index
    %c0_35 = arith.constant 0 : index
    %21 = vector.load %arg2[%c1_32, %c0_33, %c0_34, %c0_35] : memref<3x3x64x64xbf16, #tpu.memory_space<vmem>>, vector<1x1x64x64xbf16>
    %22 = vector.shape_cast %21 : vector<1x1x64x64xbf16> to vector<64x64xbf16>
    %cst_36 = arith.constant dense<0.000000e+00> : vector<16x64xf32>
    %23 = tpu.matmul %20, %22, %cst_36 {dimension_numbers = #tpu.dot_dimension_numbers<[1], [0], [0], [1], [0, 0, 1, 1], [], []>} : vector<16x64xbf16>, vector<64x64xbf16>, vector<16x64xf32> -> vector<16x64xf32>
    %24 = arith.addf %18, %23 : vector<16x64xf32>
    %c0_37 = arith.constant 0 : index
    %c1_38 = arith.constant 1 : index
    %c1_39 = arith.constant 1 : index
    %c0_40 = arith.constant 0 : index
    %c0_41 = arith.constant 0 : index
    %25 = vector.load %arg1[%c0_37, %c1_38, %c1_39, %c0_40, %c0_41] : memref<1x3x2x20x64xbf16, #tpu.memory_space<vmem>>, vector<1x1x1x16x64xbf16>
    %26 = vector.shape_cast %25 : vector<1x1x1x16x64xbf16> to vector<16x64xbf16>
    %c1_42 = arith.constant 1 : index
    %c1_43 = arith.constant 1 : index
    %c0_44 = arith.constant 0 : index
    %c0_45 = arith.constant 0 : index
    %27 = vector.load %arg2[%c1_42, %c1_43, %c0_44, %c0_45] : memref<3x3x64x64xbf16, #tpu.memory_space<vmem>>, vector<1x1x64x64xbf16>
    %28 = vector.shape_cast %27 : vector<1x1x64x64xbf16> to vector<64x64xbf16>
    %cst_46 = arith.constant dense<0.000000e+00> : vector<16x64xf32>
    %29 = tpu.matmul %26, %28, %cst_46 {dimension_numbers = #tpu.dot_dimension_numbers<[1], [0], [0], [1], [0, 0, 1, 1], [], []>} : vector<16x64xbf16>, vector<64x64xbf16>, vector<16x64xf32> -> vector<16x64xf32>
    %30 = arith.addf %24, %29 : vector<16x64xf32>
    %c0_47 = arith.constant 0 : index
    %c2_48 = arith.constant 2 : index
    %c1_49 = arith.constant 1 : index
    %c0_50 = arith.constant 0 : index
    %c0_51 = arith.constant 0 : index
    %31 = vector.load %arg1[%c0_47, %c2_48, %c1_49, %c0_50, %c0_51] : memref<1x3x2x20x64xbf16, #tpu.memory_space<vmem>>, vector<1x1x1x16x64xbf16>
    %32 = vector.shape_cast %31 : vector<1x1x1x16x64xbf16> to vector<16x64xbf16>
    %c1_52 = arith.constant 1 : index
    %c2_53 = arith.constant 2 : index
    %c0_54 = arith.constant 0 : index
    %c0_55 = arith.constant 0 : index
    %33 = vector.load %arg2[%c1_52, %c2_53, %c0_54, %c0_55] : memref<3x3x64x64xbf16, #tpu.memory_space<vmem>>, vector<1x1x64x64xbf16>
    %34 = vector.shape_cast %33 : vector<1x1x64x64xbf16> to vector<64x64xbf16>
    %cst_56 = arith.constant dense<0.000000e+00> : vector<16x64xf32>
    %35 = tpu.matmul %32, %34, %cst_56 {dimension_numbers = #tpu.dot_dimension_numbers<[1], [0], [0], [1], [0, 0, 1, 1], [], []>} : vector<16x64xbf16>, vector<64x64xbf16>, vector<16x64xf32> -> vector<16x64xf32>
    %36 = arith.addf %30, %35 : vector<16x64xf32>
    %c0_57 = arith.constant 0 : index
    %c0_58 = arith.constant 0 : index
    %c0_59 = arith.constant 0 : index
    %c4 = arith.constant 4 : index
    %c0_60 = arith.constant 0 : index
    %37 = vector.load %arg1[%c0_57, %c0_58, %c0_59, %c4, %c0_60] : memref<1x3x2x20x64xbf16, #tpu.memory_space<vmem>>, vector<1x1x1x16x64xbf16>
    %38 = vector.shape_cast %37 : vector<1x1x1x16x64xbf16> to vector<16x64xbf16>
    %c2_61 = arith.constant 2 : index
    %c0_62 = arith.constant 0 : index
    %c0_63 = arith.constant 0 : index
    %c0_64 = arith.constant 0 : index
    %39 = vector.load %arg2[%c2_61, %c0_62, %c0_63, %c0_64] : memref<3x3x64x64xbf16, #tpu.memory_space<vmem>>, vector<1x1x64x64xbf16>
    %40 = vector.shape_cast %39 : vector<1x1x64x64xbf16> to vector<64x64xbf16>
    %cst_65 = arith.constant dense<0.000000e+00> : vector<16x64xf32>
    %41 = tpu.matmul %38, %40, %cst_65 {dimension_numbers = #tpu.dot_dimension_numbers<[1], [0], [0], [1], [0, 0, 1, 1], [], []>} : vector<16x64xbf16>, vector<64x64xbf16>, vector<16x64xf32> -> vector<16x64xf32>
    %42 = arith.addf %36, %41 : vector<16x64xf32>
    %c0_66 = arith.constant 0 : index
    %c1_67 = arith.constant 1 : index
    %c0_68 = arith.constant 0 : index
    %c4_69 = arith.constant 4 : index
    %c0_70 = arith.constant 0 : index
    %43 = vector.load %arg1[%c0_66, %c1_67, %c0_68, %c4_69, %c0_70] : memref<1x3x2x20x64xbf16, #tpu.memory_space<vmem>>, vector<1x1x1x16x64xbf16>
    %44 = vector.shape_cast %43 : vector<1x1x1x16x64xbf16> to vector<16x64xbf16>
    %c2_71 = arith.constant 2 : index
    %c1_72 = arith.constant 1 : index
    %c0_73 = arith.constant 0 : index
    %c0_74 = arith.constant 0 : index
    %45 = vector.load %arg2[%c2_71, %c1_72, %c0_73, %c0_74] : memref<3x3x64x64xbf16, #tpu.memory_space<vmem>>, vector<1x1x64x64xbf16>
    %46 = vector.shape_cast %45 : vector<1x1x64x64xbf16> to vector<64x64xbf16>
    %cst_75 = arith.constant dense<0.000000e+00> : vector<16x64xf32>
    %47 = tpu.matmul %44, %46, %cst_75 {dimension_numbers = #tpu.dot_dimension_numbers<[1], [0], [0], [1], [0, 0, 1, 1], [], []>} : vector<16x64xbf16>, vector<64x64xbf16>, vector<16x64xf32> -> vector<16x64xf32>
    %48 = arith.addf %42, %47 : vector<16x64xf32>
    %c0_76 = arith.constant 0 : index
    %c2_77 = arith.constant 2 : index
    %c0_78 = arith.constant 0 : index
    %c4_79 = arith.constant 4 : index
    %c0_80 = arith.constant 0 : index
    %49 = vector.load %arg1[%c0_76, %c2_77, %c0_78, %c4_79, %c0_80] : memref<1x3x2x20x64xbf16, #tpu.memory_space<vmem>>, vector<1x1x1x16x64xbf16>
    %50 = vector.shape_cast %49 : vector<1x1x1x16x64xbf16> to vector<16x64xbf16>
    %c2_81 = arith.constant 2 : index
    %c2_82 = arith.constant 2 : index
    %c0_83 = arith.constant 0 : index
    %c0_84 = arith.constant 0 : index
    %51 = vector.load %arg2[%c2_81, %c2_82, %c0_83, %c0_84] : memref<3x3x64x64xbf16, #tpu.memory_space<vmem>>, vector<1x1x64x64xbf16>
    %52 = vector.shape_cast %51 : vector<1x1x64x64xbf16> to vector<64x64xbf16>
    %cst_85 = arith.constant dense<0.000000e+00> : vector<16x64xf32>
    %53 = tpu.matmul %50, %52, %cst_85 {dimension_numbers = #tpu.dot_dimension_numbers<[1], [0], [0], [1], [0, 0, 1, 1], [], []>} : vector<16x64xbf16>, vector<64x64xbf16>, vector<16x64xf32> -> vector<16x64xf32>
    %54 = arith.addf %48, %53 : vector<16x64xf32>
    %c0_86 = arith.constant 0 : index
    %c0_87 = arith.constant 0 : index
    %55 = vector.load %arg3[%c0_86, %c0_87] : memref<1x64xf32, #tpu.memory_space<vmem>>, vector<1x64xf32>
    %56 = vector.broadcast %55 : vector<1x64xf32> to vector<16x64xf32>
    %57 = arith.addf %54, %56 : vector<16x64xf32>
    %c0_88 = arith.constant 0 : index
    %c0_89 = arith.constant 0 : index
    %c0_90 = arith.constant 0 : index
    %58 = vector.load %arg4[%c0_88, %c0_89, %c0_90] : memref<1x16x64xf32, #tpu.memory_space<vmem>>, vector<1x16x64xf32>
    %59 = vector.shape_cast %58 : vector<1x16x64xf32> to vector<16x64xf32>
    %60 = vector.shape_cast %57 : vector<16x64xf32> to vector<1x16x64xf32>
    tpu.vector_store %arg4[%c0_88, %c0_89, %c0_90], %60 {strides = array<i32>} : memref<1x16x64xf32, #tpu.memory_space<vmem>>, vector<1x16x64xf32>,
    return
  }
  func.func @transform_0(%arg0: i32) -> (i32, i32, i32, i32, i32) {
    %c0_i32 = arith.constant 0 : i32
    %c0_i32_0 = arith.constant 0 : i32
    %c0_i32_1 = arith.constant 0 : i32
    %c0_i32_2 = arith.constant 0 : i32
    %c0_i32_3 = arith.constant 0 : i32
    return %arg0, %c0_i32, %c0_i32_0, %c0_i32_1, %c0_i32_2 : i32, i32, i32, i32, i32
  }
  func.func @transform_1(%arg0: i32) -> (i32, i32, i32, i32) {
    %c0_i32 = arith.constant 0 : i32
    %c0_i32_0 = arith.constant 0 : i32
    %c0_i32_1 = arith.constant 0 : i32
    %c0_i32_2 = arith.constant 0 : i32
    %c0_i32_3 = arith.constant 0 : i32
    return %c0_i32, %c0_i32_0, %c0_i32_1, %c0_i32_2 : i32, i32, i32, i32
  }
  func.func @transform_2(%arg0: i32) -> (i32, i32) {
    %c0_i32 = arith.constant 0 : i32
    %c0_i32_0 = arith.constant 0 : i32
    %c0_i32_1 = arith.constant 0 : i32
    return %c0_i32, %c0_i32_0 : i32, i32
  }
  func.func @transform_3(%arg0: i32) -> (i32, i32, i32) {
    %c0_i32 = arith.constant 0 : i32
    %c0_i32_0 = arith.constant 0 : i32
    %c0_i32_1 = arith.constant 0 : i32
    return %arg0, %c0_i32, %c0_i32_0 : i32, i32, i32
  }
}

module attributes {stable_mosaic.version = 11 : i64} {
  func.func @_matmul_bias_gn_relu_kernel(%arg0: i32, %arg1: memref<1x16x352xbf16, #tpu.memory_space<vmem>>, %arg2: memref<352x128xbf16, #tpu.memory_space<vmem>>, %arg3: memref<1x128xf32, #tpu.memory_space<vmem>>, %arg4: memref<1x128xf32, #tpu.memory_space<vmem>>, %arg5: memref<1x128xf32, #tpu.memory_space<vmem>>, %arg6: memref<128x16xf32, #tpu.memory_space<vmem>>, %arg7: memref<16x128xf32, #tpu.memory_space<vmem>>, %arg8: memref<1x16x128xf32, #tpu.memory_space<vmem>>) attributes {dimension_semantics = [#tpu.dimension_semantics<parallel>], iteration_bounds = array<i64: 2>, scalar_prefetch = 0 : i64, scratch_operands = 0 : i64, tpu.core_type = #tpu.core_type<tc>, window_params = [{transform_indices = @transform_0, window_bounds = array<i64: 1, 16, 352>}, {pipeline_mode = #tpu.pipeline_mode<synchronous>, transform_indices = @transform_1, window_bounds = array<i64: 352, 128>}, {pipeline_mode = #tpu.pipeline_mode<synchronous>, transform_indices = @transform_2, window_bounds = array<i64: 1, 128>}, {pipeline_mode = #tpu.pipeline_mode<synchronous>, transform_indices = @transform_3, window_bounds = array<i64: 1, 128>}, {pipeline_mode = #tpu.pipeline_mode<synchronous>, transform_indices = @transform_4, window_bounds = array<i64: 1, 128>}, {pipeline_mode = #tpu.pipeline_mode<synchronous>, transform_indices = @transform_5, window_bounds = array<i64: 128, 16>}, {pipeline_mode = #tpu.pipeline_mode<synchronous>, transform_indices = @transform_6, window_bounds = array<i64: 16, 128>}, {transform_indices = @transform_7, window_bounds = array<i64: 1, 16, 128>}]} {
    %c0 = arith.constant 0 : index
    %c0_0 = arith.constant 0 : index
    %c0_1 = arith.constant 0 : index
    %0 = vector.load %arg1[%c0, %c0_0, %c0_1] : memref<1x16x352xbf16, #tpu.memory_space<vmem>>, vector<1x16x352xbf16>
    %1 = vector.shape_cast %0 : vector<1x16x352xbf16> to vector<16x352xbf16>
    %c0_2 = arith.constant 0 : index
    %c0_3 = arith.constant 0 : index
    %2 = vector.load %arg2[%c0_2, %c0_3] : memref<352x128xbf16, #tpu.memory_space<vmem>>, vector<352x128xbf16>
    %cst = arith.constant dense<0.000000e+00> : vector<16x128xf32>
    %3 = tpu.matmul %1, %2, %cst {dimension_numbers = #tpu.dot_dimension_numbers<[1], [0], [0], [1], [0, 0, 1, 1], [], []>} : vector<16x352xbf16>, vector<352x128xbf16>, vector<16x128xf32> -> vector<16x128xf32>
    %c0_4 = arith.constant 0 : index
    %c0_5 = arith.constant 0 : index
    %4 = vector.load %arg3[%c0_4, %c0_5] : memref<1x128xf32, #tpu.memory_space<vmem>>, vector<1x128xf32>
    %5 = vector.broadcast %4 : vector<1x128xf32> to vector<16x128xf32>
    %6 = arith.addf %3, %5 : vector<16x128xf32>
    %c0_6 = arith.constant 0 : index
    %c0_7 = arith.constant 0 : index
    %7 = vector.load %arg4[%c0_6, %c0_7] : memref<1x128xf32, #tpu.memory_space<vmem>>, vector<1x128xf32>
    %c0_8 = arith.constant 0 : index
    %c0_9 = arith.constant 0 : index
    %8 = vector.load %arg5[%c0_8, %c0_9] : memref<1x128xf32, #tpu.memory_space<vmem>>, vector<1x128xf32>
    %c0_10 = arith.constant 0 : index
    %c0_11 = arith.constant 0 : index
    %9 = vector.load %arg6[%c0_10, %c0_11] : memref<128x16xf32, #tpu.memory_space<vmem>>, vector<128x16xf32>
    %c0_12 = arith.constant 0 : index
    %c0_13 = arith.constant 0 : index
    %10 = vector.load %arg7[%c0_12, %c0_13] : memref<16x128xf32, #tpu.memory_space<vmem>>, vector<16x128xf32>
    %cst_14 = arith.constant dense<0.000000e+00> : vector<128xf32>
    %11 = vector.multi_reduction <add>, %6, %cst_14 [0] : vector<16x128xf32> to vector<128xf32>
    %12 = vector.shape_cast %11 : vector<128xf32> to vector<1x128xf32>
    %13 = arith.mulf %6, %6 : vector<16x128xf32>
    %cst_15 = arith.constant dense<0.000000e+00> : vector<128xf32>
    %14 = vector.multi_reduction <add>, %13, %cst_15 [0] : vector<16x128xf32> to vector<128xf32>
    %15 = vector.shape_cast %14 : vector<128xf32> to vector<1x128xf32>
    %cst_16 = arith.constant dense<0.000000e+00> : vector<1x16xf32>
    %16 = tpu.matmul %12, %9, %cst_16 {dimension_numbers = #tpu.dot_dimension_numbers<[1], [0], [0], [1], [0, 0, 1, 1], [], []>} : vector<1x128xf32>, vector<128x16xf32>, vector<1x16xf32> -> vector<1x16xf32>
    %cst_17 = arith.constant dense<0.000000e+00> : vector<1x16xf32>
    %17 = tpu.matmul %15, %9, %cst_17 {dimension_numbers = #tpu.dot_dimension_numbers<[1], [0], [0], [1], [0, 0, 1, 1], [], []>} : vector<1x128xf32>, vector<128x16xf32>, vector<1x16xf32> -> vector<1x16xf32>
    %cst_18 = arith.constant dense<0.000000e+00> : vector<1x128xf32>
    %18 = tpu.matmul %16, %10, %cst_18 {dimension_numbers = #tpu.dot_dimension_numbers<[1], [0], [0], [1], [0, 0, 1, 1], [], []>} : vector<1x16xf32>, vector<16x128xf32>, vector<1x128xf32> -> vector<1x128xf32>
    %cst_19 = arith.constant dense<0.000000e+00> : vector<1x128xf32>
    %19 = tpu.matmul %17, %10, %cst_19 {dimension_numbers = #tpu.dot_dimension_numbers<[1], [0], [0], [1], [0, 0, 1, 1], [], []>} : vector<1x16xf32>, vector<16x128xf32>, vector<1x128xf32> -> vector<1x128xf32>
    %20 = arith.mulf %18, %18 : vector<1x128xf32>
    %21 = arith.subf %19, %20 : vector<1x128xf32>
    %cst_20 = arith.constant 9.99999974E-6 : f32
    %22 = vector.broadcast %cst_20 : f32 to vector<1x128xf32>
    %23 = arith.addf %21, %22 : vector<1x128xf32>
    %24 = math.rsqrt %23 : vector<1x128xf32>
    %25 = arith.mulf %24, %7 : vector<1x128xf32>
    %26 = arith.mulf %18, %25 : vector<1x128xf32>
    %27 = arith.subf %8, %26 : vector<1x128xf32>
    %28 = vector.broadcast %25 : vector<1x128xf32> to vector<16x128xf32>
    %29 = arith.mulf %6, %28 : vector<16x128xf32>
    %30 = vector.broadcast %27 : vector<1x128xf32> to vector<16x128xf32>
    %31 = arith.addf %29, %30 : vector<16x128xf32>
    %cst_21 = arith.constant 0.000000e+00 : f32
    %32 = vector.broadcast %cst_21 : f32 to vector<16x128xf32>
    %33 = arith.maximumf %31, %32 : vector<16x128xf32>
    %c0_22 = arith.constant 0 : index
    %c0_23 = arith.constant 0 : index
    %c0_24 = arith.constant 0 : index
    %34 = vector.load %arg8[%c0_22, %c0_23, %c0_24] : memref<1x16x128xf32, #tpu.memory_space<vmem>>, vector<1x16x128xf32>
    %35 = vector.shape_cast %34 : vector<1x16x128xf32> to vector<16x128xf32>
    %36 = vector.shape_cast %33 : vector<16x128xf32> to vector<1x16x128xf32>
    tpu.vector_store %arg8[%c0_22, %c0_23, %c0_24], %36 {strides = array<i32>} : memref<1x16x128xf32, #tpu.memory_space<vmem>>, vector<1x16x128xf32>,
    return
  }
  func.func @transform_0(%arg0: i32) -> (i32, i32, i32) {
    %c0_i32 = arith.constant 0 : i32
    %c0_i32_0 = arith.constant 0 : i32
    %c0_i32_1 = arith.constant 0 : i32
    return %arg0, %c0_i32, %c0_i32_0 : i32, i32, i32
  }
  func.func @transform_1(%arg0: i32) -> (i32, i32) {
    %c0_i32 = arith.constant 0 : i32
    %c0_i32_0 = arith.constant 0 : i32
    %c0_i32_1 = arith.constant 0 : i32
    return %c0_i32, %c0_i32_0 : i32, i32
  }
  func.func @transform_2(%arg0: i32) -> (i32, i32) {
    %c0_i32 = arith.constant 0 : i32
    %c0_i32_0 = arith.constant 0 : i32
    %c0_i32_1 = arith.constant 0 : i32
    return %c0_i32, %c0_i32_0 : i32, i32
  }
  func.func @transform_3(%arg0: i32) -> (i32, i32) {
    %c0_i32 = arith.constant 0 : i32
    %c0_i32_0 = arith.constant 0 : i32
    %c0_i32_1 = arith.constant 0 : i32
    return %c0_i32, %c0_i32_0 : i32, i32
  }
  func.func @transform_4(%arg0: i32) -> (i32, i32) {
    %c0_i32 = arith.constant 0 : i32
    %c0_i32_0 = arith.constant 0 : i32
    %c0_i32_1 = arith.constant 0 : i32
    return %c0_i32, %c0_i32_0 : i32, i32
  }
  func.func @transform_5(%arg0: i32) -> (i32, i32) {
    %c0_i32 = arith.constant 0 : i32
    %c0_i32_0 = arith.constant 0 : i32
    %c0_i32_1 = arith.constant 0 : i32
    return %c0_i32, %c0_i32_0 : i32, i32
  }
  func.func @transform_6(%arg0: i32) -> (i32, i32) {
    %c0_i32 = arith.constant 0 : i32
    %c0_i32_0 = arith.constant 0 : i32
    %c0_i32_1 = arith.constant 0 : i32
    return %c0_i32, %c0_i32_0 : i32, i32
  }
  func.func @transform_7(%arg0: i32) -> (i32, i32, i32) {
    %c0_i32 = arith.constant 0 : i32
    %c0_i32_0 = arith.constant 0 : i32
    %c0_i32_1 = arith.constant 0 : i32
    return %arg0, %c0_i32, %c0_i32_0 : i32, i32, i32
  }
}

module attributes {stable_mosaic.version = 11 : i64} {
  func.func @_cide_head_kernel(%arg0: i32, %arg1: memref<2x1000xbf16, #tpu.memory_space<vmem>>, %arg2: memref<1000x400xbf16, #tpu.memory_space<vmem>>, %arg3: memref<1x400xf32, #tpu.memory_space<vmem>>, %arg4: memref<400x100xbf16, #tpu.memory_space<vmem>>, %arg5: memref<1x100xf32, #tpu.memory_space<vmem>>, %arg6: memref<100x768xbf16, #tpu.memory_space<vmem>>, %arg7: memref<2x768xf32, #tpu.memory_space<vmem>>) attributes {dimension_semantics = [#tpu.dimension_semantics<arbitrary>], iteration_bounds = array<i64: 1>, scalar_prefetch = 0 : i64, scratch_operands = 0 : i64, tpu.core_type = #tpu.core_type<tc>, window_params = [{pipeline_mode = #tpu.pipeline_mode<synchronous>, transform_indices = @transform_0, window_bounds = array<i64: 2, 1000>}, {pipeline_mode = #tpu.pipeline_mode<synchronous>, transform_indices = @transform_1, window_bounds = array<i64: 1000, 400>}, {pipeline_mode = #tpu.pipeline_mode<synchronous>, transform_indices = @transform_2, window_bounds = array<i64: 1, 400>}, {pipeline_mode = #tpu.pipeline_mode<synchronous>, transform_indices = @transform_3, window_bounds = array<i64: 400, 100>}, {pipeline_mode = #tpu.pipeline_mode<synchronous>, transform_indices = @transform_4, window_bounds = array<i64: 1, 100>}, {pipeline_mode = #tpu.pipeline_mode<synchronous>, transform_indices = @transform_5, window_bounds = array<i64: 100, 768>}, {pipeline_mode = #tpu.pipeline_mode<synchronous>, transform_indices = @transform_6, window_bounds = array<i64: 2, 768>}]} {
    %c0 = arith.constant 0 : index
    %c0_0 = arith.constant 0 : index
    %0 = vector.load %arg1[%c0, %c0_0] : memref<2x1000xbf16, #tpu.memory_space<vmem>>, vector<2x1000xbf16>
    %c0_1 = arith.constant 0 : index
    %c0_2 = arith.constant 0 : index
    %1 = vector.load %arg2[%c0_1, %c0_2] : memref<1000x400xbf16, #tpu.memory_space<vmem>>, vector<1000x400xbf16>
    %cst = arith.constant dense<0.000000e+00> : vector<2x400xf32>
    %2 = tpu.matmul %0, %1, %cst {dimension_numbers = #tpu.dot_dimension_numbers<[1], [0], [0], [1], [0, 0, 1, 1], [], []>} : vector<2x1000xbf16>, vector<1000x400xbf16>, vector<2x400xf32> -> vector<2x400xf32>
    %c0_3 = arith.constant 0 : index
    %c0_4 = arith.constant 0 : index
    %3 = vector.load %arg3[%c0_3, %c0_4] : memref<1x400xf32, #tpu.memory_space<vmem>>, vector<1x400xf32>
    %4 = vector.broadcast %3 : vector<1x400xf32> to vector<2x400xf32>
    %5 = arith.addf %2, %4 : vector<2x400xf32>
    %cst_5 = arith.constant 5.000000e-01 : f32
    %6 = vector.broadcast %cst_5 : f32 to vector<2x400xf32>
    %7 = arith.mulf %6, %5 : vector<2x400xf32>
    %cst_6 = arith.constant 4.471500e-02 : f32
    %8 = vector.broadcast %cst_6 : f32 to vector<2x400xf32>
    %9 = arith.mulf %8, %5 : vector<2x400xf32>
    %10 = arith.mulf %9, %5 : vector<2x400xf32>
    %11 = arith.mulf %10, %5 : vector<2x400xf32>
    %12 = arith.addf %5, %11 : vector<2x400xf32>
    %cst_7 = arith.constant 0.797884583 : f32
    %13 = vector.broadcast %cst_7 : f32 to vector<2x400xf32>
    %14 = arith.mulf %13, %12 : vector<2x400xf32>
    %15 = math.tanh %14 : vector<2x400xf32>
    %cst_8 = arith.constant 1.000000e+00 : f32
    %16 = vector.broadcast %cst_8 : f32 to vector<2x400xf32>
    %17 = arith.addf %16, %15 : vector<2x400xf32>
    %18 = arith.mulf %7, %17 : vector<2x400xf32>
    %19 = arith.truncf %18 : vector<2x400xf32> to vector<2x400xbf16>
    %c0_9 = arith.constant 0 : index
    %c0_10 = arith.constant 0 : index
    %20 = vector.load %arg4[%c0_9, %c0_10] : memref<400x100xbf16, #tpu.memory_space<vmem>>, vector<400x100xbf16>
    %cst_11 = arith.constant dense<0.000000e+00> : vector<2x100xf32>
    %21 = tpu.matmul %19, %20, %cst_11 {dimension_numbers = #tpu.dot_dimension_numbers<[1], [0], [0], [1], [0, 0, 1, 1], [], []>} : vector<2x400xbf16>, vector<400x100xbf16>, vector<2x100xf32> -> vector<2x100xf32>
    %c0_12 = arith.constant 0 : index
    %c0_13 = arith.constant 0 : index
    %22 = vector.load %arg5[%c0_12, %c0_13] : memref<1x100xf32, #tpu.memory_space<vmem>>, vector<1x100xf32>
    %23 = vector.broadcast %22 : vector<1x100xf32> to vector<2x100xf32>
    %24 = arith.addf %21, %23 : vector<2x100xf32>
    %cst_14 = arith.constant dense<0xFF800000> : vector<2xf32>
    %25 = vector.multi_reduction <maximumf>, %24, %cst_14 [1] : vector<2x100xf32> to vector<2xf32>
    %26 = vector.shape_cast %25 : vector<2xf32> to vector<2x1xf32>
    %27 = vector.broadcast %26 : vector<2x1xf32> to vector<2x100xf32>
    %28 = arith.subf %24, %27 : vector<2x100xf32>
    %29 = math.exp %28 : vector<2x100xf32>
    %cst_15 = arith.constant dense<0.000000e+00> : vector<2xf32>
    %30 = vector.multi_reduction <add>, %29, %cst_15 [1] : vector<2x100xf32> to vector<2xf32>
    %31 = vector.shape_cast %30 : vector<2xf32> to vector<2x1xf32>
    %32 = tpu.reciprocal %31 {approx = true} : vector<2x1xf32> -> vector<2x1xf32>
    %33 = vector.broadcast %32 : vector<2x1xf32> to vector<2x100xf32>
    %34 = arith.mulf %29, %33 : vector<2x100xf32>
    %35 = arith.truncf %34 : vector<2x100xf32> to vector<2x100xbf16>
    %c0_16 = arith.constant 0 : index
    %c0_17 = arith.constant 0 : index
    %36 = vector.load %arg6[%c0_16, %c0_17] : memref<100x768xbf16, #tpu.memory_space<vmem>>, vector<100x768xbf16>
    %cst_18 = arith.constant dense<0.000000e+00> : vector<2x768xf32>
    %37 = tpu.matmul %35, %36, %cst_18 {dimension_numbers = #tpu.dot_dimension_numbers<[1], [0], [0], [1], [0, 0, 1, 1], [], []>} : vector<2x100xbf16>, vector<100x768xbf16>, vector<2x768xf32> -> vector<2x768xf32>
    %c0_19 = arith.constant 0 : index
    %c0_20 = arith.constant 0 : index
    %38 = vector.load %arg7[%c0_19, %c0_20] : memref<2x768xf32, #tpu.memory_space<vmem>>, vector<2x768xf32>
    tpu.vector_store %arg7[%c0_19, %c0_20], %37 {strides = array<i32>} : memref<2x768xf32, #tpu.memory_space<vmem>>, vector<2x768xf32>,
    return
  }
  func.func @transform_0(%arg0: i32) -> (i32, i32) {
    %c0_i32 = arith.constant 0 : i32
    %c0_i32_0 = arith.constant 0 : i32
    %c0_i32_1 = arith.constant 0 : i32
    return %c0_i32, %c0_i32_0 : i32, i32
  }
  func.func @transform_1(%arg0: i32) -> (i32, i32) {
    %c0_i32 = arith.constant 0 : i32
    %c0_i32_0 = arith.constant 0 : i32
    %c0_i32_1 = arith.constant 0 : i32
    return %c0_i32, %c0_i32_0 : i32, i32
  }
  func.func @transform_2(%arg0: i32) -> (i32, i32) {
    %c0_i32 = arith.constant 0 : i32
    %c0_i32_0 = arith.constant 0 : i32
    %c0_i32_1 = arith.constant 0 : i32
    return %c0_i32, %c0_i32_0 : i32, i32
  }
  func.func @transform_3(%arg0: i32) -> (i32, i32) {
    %c0_i32 = arith.constant 0 : i32
    %c0_i32_0 = arith.constant 0 : i32
    %c0_i32_1 = arith.constant 0 : i32
    return %c0_i32, %c0_i32_0 : i32, i32
  }
  func.func @transform_4(%arg0: i32) -> (i32, i32) {
    %c0_i32 = arith.constant 0 : i32
    %c0_i32_0 = arith.constant 0 : i32
    %c0_i32_1 = arith.constant 0 : i32
    return %c0_i32, %c0_i32_0 : i32, i32
  }
  func.func @transform_5(%arg0: i32) -> (i32, i32) {
    %c0_i32 = arith.constant 0 : i32
    %c0_i32_0 = arith.constant 0 : i32
    %c0_i32_1 = arith.constant 0 : i32
    return %c0_i32, %c0_i32_0 : i32, i32
  }
  func.func @transform_6(%arg0: i32) -> (i32, i32) {
    %c0_i32 = arith.constant 0 : i32
    %c0_i32_0 = arith.constant 0 : i32
    %c0_i32_1 = arith.constant 0 : i32
    return %c0_i32, %c0_i32_0 : i32, i32
  }
}

module attributes {stable_mosaic.version = 11 : i64} {
  func.func @_scale_to_int_kernel(%arg0: i32, %arg1: memref<2x1024xf32, #tpu.memory_space<vmem>>, %arg2: memref<2x1024xi32, #tpu.memory_space<vmem>>) attributes {dimension_semantics = [#tpu.dimension_semantics<parallel>], iteration_bounds = array<i64: 1>, scalar_prefetch = 0 : i64, scratch_operands = 0 : i64, tpu.core_type = #tpu.core_type<tc>, window_params = [{transform_indices = @transform_0, window_bounds = array<i64: 2, 1024>}, {transform_indices = @transform_1, window_bounds = array<i64: 2, 1024>}]} {
    %c0 = arith.constant 0 : index
    %c0_0 = arith.constant 0 : index
    %0 = vector.load %arg1[%c0, %c0_0] : memref<2x1024xf32, #tpu.memory_space<vmem>>, vector<2x1024xf32>
    %cst = arith.constant 1.275000e+02 : f32
    %1 = vector.broadcast %cst : f32 to vector<2x1024xf32>
    %2 = arith.mulf %0, %1 : vector<2x1024xf32>
    %cst_1 = arith.constant 1.275000e+02 : f32
    %3 = vector.broadcast %cst_1 : f32 to vector<2x1024xf32>
    %4 = arith.addf %2, %3 : vector<2x1024xf32>
    %5 = arith.fptosi %4 : vector<2x1024xf32> to vector<2x1024xi32>
    %c0_2 = arith.constant 0 : index
    %c0_3 = arith.constant 0 : index
    %6 = vector.load %arg2[%c0_2, %c0_3] : memref<2x1024xi32, #tpu.memory_space<vmem>>, vector<2x1024xi32>
    tpu.vector_store %arg2[%c0_2, %c0_3], %5 {strides = array<i32>} : memref<2x1024xi32, #tpu.memory_space<vmem>>, vector<2x1024xi32>,
    return
  }
  func.func @transform_0(%arg0: i32) -> (i32, i32) {
    %c0_i32 = arith.constant 0 : i32
    %c0_i32_0 = arith.constant 0 : i32
    return %arg0, %c0_i32 : i32, i32
  }
  func.func @transform_1(%arg0: i32) -> (i32, i32) {
    %c0_i32 = arith.constant 0 : i32
    %c0_i32_0 = arith.constant 0 : i32
    return %arg0, %c0_i32 : i32, i32
  }
}

</mosaic_0001>

<llo_original>
// kernel: tpu_custom_call.1
$region0: #{tpu_custom_call.1}
  #allocation0 [shape = 'u32[]', space=smem, size = 0x4, offset = 0x4, fixed_abs, tag = 'smem constant byte address 0x4 - core index']
  #allocation1 [shape = 'u32[144,128]{1,0:T(1,128)}', space=vmem, size = 0x12000, scoped, tag = 'internal scratch']
  %s0 = inlined_call_operand.hbm [shape: f32[8,128], index: 0, kind: input, shape index: {}]
  %s1 = inlined_call_operand.hbm [shape: f32[8,128], index: 1, kind: output, shape index: {}]
  %s2 = sld [smem:[#allocation0]]
  $region18: #{tpu_custom_call.1} parent=0
    _
  %s4 = ssub.s32 1, %s2
  %s5 = scalar_select 0, %s4, %s2
  $region1: #{tpu_custom_call.1} parent=0
    #allocation2 [shape = 'u8[4096]{0}', space=vmem, size = 0x1000, scoped, tag = 'input window, operand 0, single buffered']
    #allocation3 [shape = 's32[1]{0}', space=sflag, size = 0x4, scoped, tag = 'scoped memory for tpu_custom_call.1']
    #allocation4 [shape = 's32[1]{0}', space=sflag, size = 0x4, scoped, tag = 'scoped memory for tpu_custom_call.1']
    #allocation5 [shape = 'u8[4096]{0}', space=vmem, size = 0x1000, scoped, tag = 'output window, operand 0, single buffered']
    %6 = vsyncpa [#allocation3], 0
    %7 = vsyncpa [#allocation4], 0
    // Predicated region
    $region2: #{tpu_custom_call.1} parent=1 // pred_check
      _
    $region3: #{tpu_custom_call.1} parent=1 // pred_check_branch
      %9 = sbr.rel (0) target = $region5
    $region4: #{tpu_custom_call.1} parent=1 // pred_region
      %s11 = ssub.s32 128, 128
      %12 = vsyncadd [#allocation3], %s11
      %s14 = sshll.u32 [#allocation2], 4
      %s15 = int_to_ptr.vmem [resolvable:$true] %s14
      %17 = dma.hbm_to_vmem [thread:$0]  %s0, 128, %s15, [#allocation3]
    $region5: #{tpu_custom_call.1} parent=1 // pred_fallthru
      _
    // Predicated region
    $region6: #{tpu_custom_call.1} parent=1 // pred_check
      _
    $region7: #{tpu_custom_call.1} parent=1 // pred_check_branch
      %19 = sbr.rel (0) target = $region9
    $region8: #{tpu_custom_call.1} parent=1 // pred_region
      %20 = dma.done [#allocation3], 128
    $region9: #{tpu_custom_call.1} parent=1 // pred_fallthru
      _
    %v21 = vld [vmem:[#allocation2] sm:$0xff]
    %v22 = vadd.f32 %v21, 1.0
    %23 = vst [vmem:[#allocation5] sm:$0xff] %v22
    // Predicated region
    $region10: #{tpu_custom_call.1} parent=1 // pred_check
      _
    $region11: #{tpu_custom_call.1} parent=1 // pred_check_branch
      %25 = sbr.rel (0) target = $region13
    $region12: #{tpu_custom_call.1} parent=1 // pred_region
      %s27 = ssub.s32 128, 128
      %28 = vsyncadd [#allocation4], %s27
      %s30 = sshll.u32 [#allocation5], 4
      %s31 = int_to_ptr.vmem [resolvable:$true] %s30
      %33 = dma.vmem_to_hbm [thread:$0]  %s31, 128, %s1, [#allocation4]
    $region13: #{tpu_custom_call.1} parent=1 // pred_fallthru
      _
    // Predicated region
    $region14: #{tpu_custom_call.1} parent=1 // pred_check
      _
    $region15: #{tpu_custom_call.1} parent=1 // pred_check_branch
      %35 = sbr.rel (0) target = $region17
    $region16: #{tpu_custom_call.1} parent=1 // pred_region
      %36 = dma.done [#allocation4], 128
    $region17: #{tpu_custom_call.1} parent=1 // pred_fallthru
      _
    %37 = vsyncpa [#allocation3], 1
    %38 = vsyncpa [#allocation4], 1

// kernel: eco_depth_encoder_forward.9
$region0: #{eco_depth_encoder_forward.9}
  #allocation0 [shape = 'u32[]', space=smem, size = 0x4, offset = 0x4, fixed_abs, tag = 'smem constant byte address 0x4 - core index']
  #allocation1 [shape = 'u32[144,128]{1,0:T(1,128)}', space=vmem, size = 0x12000, scoped, tag = 'internal scratch']
  %s0 = inlined_call_operand.vmem [shape: bf16[2,3,2,20,32], index: 0, kind: input, shape index: {}]
  %s1 = inlined_call_operand.vmem [shape: bf16[3,3,32,32], index: 1, kind: input, shape index: {}]
  %s2 = inlined_call_operand.vmem [shape: f32[1,32], index: 2, kind: input, shape index: {}]
  %s3 = inlined_call_operand.vmem [shape: f32[2,16,32], index: 3, kind: output, shape index: {}]
  %s4 = sld [smem:[#allocation0]]
  $region45: #{eco_depth_encoder_forward.9} parent=0
    _
  %s6 = ssub.s32 1, %s4
  %s7 = scalar_select 0, %s6, %s4
  loop: start=0, step=1, limit=4
  $region2: #{eco_depth_encoder_forward.9} parent=0 // loop_pre_header
    _
  $region3: #{eco_depth_encoder_forward.9} parent=0 // loop_header
    %s9 = sphi 0, %s13
    %p10 = scmp.ge.s32.totalorder %s9, 4
    %s19 = sphi 0, %s21
    %s22 = sphi 0, %s19
    %s23 = sphi 0, %s22
    %s39 = sphi 0, %s23
    %s43 = sphi 0, %s43
    %s45 = sphi 0, %s43
    %s46 = sphi 0, %s45
    %s60 = sphi 0, %s46
    %s64 = sphi 0, %s64
    %s66 = sphi 0, %s64
    %s67 = sphi 0, %s66
    %s81 = sphi 0, %s67
    %s87 = sphi 0, %s89
    %s90 = sphi 0, %s87
    %s91 = sphi 0, %s90
    %s107 = sphi 0, %s91
  $region4: #{eco_depth_encoder_forward.9} parent=0 // loop_header_branch
    %12 = sbr.rel (%p10) target = $region8
  $region5: #{eco_depth_encoder_forward.9} parent=0 // loop_body
    %s14 = ssub.s32 %s9, 1
    %s15 = ssub.s32 %s9, 2
    %s16 = sadd.s32 %s9, 1
    %s17 = ssub.s32 %s9, %s16
    %p18 = scmp.eq.s32.totalorder %s17, 0
    %s20 = sadd.s32 %s19, 1
    %s21 = scalar_select %p18, %s19, %s20
    %p24 = pneg %p18
    %p25 = scmp.eq.s32.totalorder %s9, 1
    %p26 = por %p24, %p25
    %p27 = scmp.ne.s32.totalorder %s19, %s22
    %p28 = scmp.eq.s32.totalorder %s9, 0
    %p29 = por %p27, %p28
    %p30 = scmp.ne.s32.totalorder %s19, %s22
    %p31 = scmp.eq.s32.totalorder %s14, 1
    %p32 = por %p30, %p31
    %p33 = scmp.ne.s32.totalorder %s22, %s23
    %p34 = scmp.eq.s32.totalorder %s14, 0
    %p35 = por %p33, %p34
    %p36 = scmp.ne.s32.totalorder %s22, %s23
    %p37 = scmp.eq.s32.totalorder %s15, 1
    %p38 = por %p36, %p37
    %p40 = scmp.ne.s32.totalorder %s23, %s39
    %p41 = scmp.eq.s32.totalorder %s15, 0
    %p42 = por %p40, %p41
    %s44 = sadd.s32 %s43, 1
    %p47 = scmp.eq.s32.totalorder %s9, 1
    %p48 = scmp.ne.s32.totalorder %s43, %s45
    %p49 = scmp.eq.s32.totalorder %s9, 0
    %p50 = por %p48, %p49
    %p51 = scmp.ne.s32.totalorder %s43, %s45
    %p52 = scmp.eq.s32.totalorder %s14, 1
    %p53 = por %p51, %p52
    %p54 = scmp.ne.s32.totalorder %s45, %s46
    %p55 = scmp.eq.s32.totalorder %s14, 0
    %p56 = por %p54, %p55
    %p57 = scmp.ne.s32.totalorder %s45, %s46
    %p58 = scmp.eq.s32.totalorder %s15, 1
    %p59 = por %p57, %p58
    %p61 = scmp.ne.s32.totalorder %s46, %s60
    %p62 = scmp.eq.s32.totalorder %s15, 0
    %p63 = por %p61, %p62
    %s65 = sadd.s32 %s64, 1
    %p68 = scmp.eq.s32.totalorder %s9, 1
    %p69 = scmp.ne.s32.totalorder %s64, %s66
    %p70 = scmp.eq.s32.totalorder %s9, 0
    %p71 = por %p69, %p70
    %p72 = scmp.ne.s32.totalorder %s64, %s66
    %p73 = scmp.eq.s32.totalorder %s14, 1
    %p74 = por %p72, %p73
    %p75 = scmp.ne.s32.totalorder %s66, %s67
    %p76 = scmp.eq.s32.totalorder %s14, 0
    %p77 = por %p75, %p76
    %p78 = scmp.ne.s32.totalorder %s66, %s67
    %p79 = scmp.eq.s32.totalorder %s15, 1
    %p80 = por %p78, %p79
    %p82 = scmp.ne.s32.totalorder %s67, %s81
    %p83 = scmp.eq.s32.totalorder %s15, 0
    %p84 = por %p82, %p83
    %s85 = ssub.s32 %s9, %s16
    %p86 = scmp.eq.s32.totalorder %s85, 0
    %s88 = sadd.s32 %s87, 1
    %s89 = scalar_select %p86, %s87, %s88
    %p92 = pneg %p86
    %p93 = scmp.eq.s32.totalorder %s9, 1
    %p94 = por %p92, %p93
    %p95 = scmp.ne.s32.totalorder %s87, %s90
    %p96 = scmp.eq.s32.totalorder %s9, 0
    %p97 = por %p95, %p96
    %p98 = scmp.ne.s32.totalorder %s87, %s90
    %p99 = scmp.eq.s32.totalorder %s14, 1
    %p100 = por %p98, %p99
    %p101 = scmp.ne.s32.totalorder %s90, %s91
    %p102 = scmp.eq.s32.totalorder %s14, 0
    %p103 = por %p101, %p102
    %p104 = scmp.ne.s32.totalorder %s90, %s91
    %p105 = scmp.eq.s32.totalorder %s15, 1
    %p106 = por %p104, %p105
    %p108 = scmp.ne.s32.totalorder %s91, %s107
    %p109 = scmp.eq.s32.totalorder %s15, 0
    %p110 = por %p108, %p109
    %p111 = scmp.le.s32.totalorder 1, %s9
    %p112 = scmp.lt.s32.totalorder %s9, 3
    %p113 = pnand %p111, %p112
    %p114 = pneg %p113
    // Predicated region
    $region9: #{eco_depth_encoder_forward.9} parent=5 // pred_check
      _
    $region10: #{eco_depth_encoder_forward.9} parent=5 // pred_check_branch
      %116 = sbr.rel (%p113) target = $region12
    $region11: #{eco_depth_encoder_forward.9} parent=5 // pred_region
      %s117 = ssub.s32 %s9, 1
      // Predicated region
      $region13: #{eco_depth_encoder_forward.9} parent=11 // pred_check
        %p118 = pneg %p56
      $region14: #{eco_depth_encoder_forward.9} parent=11 // pred_check_branch
        %120 = sbr.rel (%p118) target = $region16
      $region15: #{eco_depth_encoder_forward.9} parent=11 // pred_region
        _
      $region16: #{eco_depth_encoder_forward.9} parent=11 // pred_fallthru
        _
      // Predicated region
      $region17: #{eco_depth_encoder_forward.9} parent=11 // pred_check
        %p121 = pneg %p77
      $region18: #{eco_depth_encoder_forward.9} parent=11 // pred_check_branch
        %123 = sbr.rel (%p121) target = $region20
      $region19: #{eco_depth_encoder_forward.9} parent=11 // pred_region
        _
      $region20: #{eco_depth_encoder_forward.9} parent=11 // pred_fallthru
        _
    $region12: #{eco_depth_encoder_forward.9} parent=5 // pred_fallthru
      _
    %p124 = scmp.lt.s32.totalorder %s9, 2
    // Predicated region
    $region21: #{eco_depth_encoder_forward.9} parent=5 // pred_check
      %p125 = pneg %p124
    $region22: #{eco_depth_encoder_forward.9} parent=5 // pred_check_branch
      %127 = sbr.rel (%p125) target = $region24
    $region23: #{eco_depth_encoder_forward.9} parent=5 // pred_region
      // Predicated region
      $region25: #{eco_depth_encoder_forward.9} parent=23 // pred_check
        %p128 = pneg %p29
      $region26: #{eco_depth_encoder_forward.9} parent=23 // pred_check_branch
        %130 = sbr.rel (%p128) target = $region28
      $region27: #{eco_depth_encoder_forward.9} parent=23 // pred_region
        %p131 = scmp.lt.s32.totalorder %s9, 1
        %s132 = scalar_select %p131, %s9, 1
        %s133 = smul.addr %s132, 18
        %s134 = smul.addr %s133, 4
        %s135 = scalar_lea.vmem %s0, %s134
      $region28: #{eco_depth_encoder_forward.9} parent=23 // pred_fallthru
        _
    $region24: #{eco_depth_encoder_forward.9} parent=5 // pred_fallthru
      _
    %p136 = scmp.le.s32.totalorder 1, %s9
    %p137 = scmp.lt.s32.totalorder %s9, 3
    %p138 = pnand %p136, %p137
    %p139 = pneg %p138
    // Predicated region
    $region29: #{eco_depth_encoder_forward.9} parent=5 // pred_check
      _
    $region30: #{eco_depth_encoder_forward.9} parent=5 // pred_check_branch
      %141 = sbr.rel (%p138) target = $region32
    $region31: #{eco_depth_encoder_forward.9} parent=5 // pred_region
      %s142 = ssub.s32 %s9, 1
      %p143 = scmp.lt.s32.totalorder %s14, 1
      %s144 = scalar_select %p143, %s14, 1
      %s145 = smul.addr %s144, 18
      %s146 = smul.addr %s145, 4
      %s147 = scalar_lea.vmem %s0, %s146
      %p148 = pneg %p35
      %p149 = pneg %p32
      %p150 = pneg %p56
      %p151 = pneg %p53
      %p152 = pneg %p77
      %p153 = pneg %p74
      %p154 = pneg %p103
      %p155 = pneg %p100
      %p156 = scmp.lt.s32.totalorder %s14, 1
      %s157 = scalar_select %p156, %s14, 1
      %s158 = smul.addr %s157, 2
      %s159 = smul.addr %s158, 8
      %s160 = scalar_lea.vmem %s3, %s159
      %p161 = scmp.lt.s32.totalorder %s14, 1
      %s162 = scalar_select %p161, %s14, 1
      %s163 = smul.addr %s162, 18
      %s164 = smul.addr %s163, 4
      %s165 = scalar_lea.vmem %s0, %s164
      %p166 = scmp.lt.s32.totalorder %s14, 1
      %s167 = scalar_select %p166, %s14, 1
      %s168 = smul.addr %s167, 2
      %s169 = smul.addr %s168, 8
      %s170 = scalar_lea.vmem %s3, %s169
      %v172 = vld [vmem:[%s165] sm:$0xf]
      %v173 = vld [vmem:[%s165 + $0x4] sm:$0xf]
      %v174 = vld [vmem:[%s1] sm:$0xf]
      %v175 = vld [vmem:[%s1 + $0x4] sm:$0xf]
      %v176 = vld [vmem:[%s1 + $0x8] sm:$0xf]
      %v177 = vld [vmem:[%s1 + $0xc] sm:$0xf]
      %s178 = scalar_lea.vmem %s165, 24
      %v179 = vld [vmem:[%s178] sm:$0xf]
      %v180 = vld [vmem:[%s178 + $0x4] sm:$0xf]
      %s181 = scalar_lea.vmem %s1, 16
      %v182 = vld [vmem:[%s181] sm:$0xf]
      %v183 = vld [vmem:[%s181 + $0x4] sm:$0xf]
      %v184 = vld [vmem:[%s181 + $0x8] sm:$0xf]
      %v185 = vld [vmem:[%s181 + $0xc] sm:$0xf]
      %v188 = vunpack.c.l.b16 %v179
      %v189 = vunpack.c.l.b16 %v180
      %v190 = vpack.c.b16 %v189, %v188
      %v195 = vunpack.c.l.b16 %v182
      %v196 = vunpack.c.l.b16 %v183
      %v197 = vunpack.c.l.b16 %v184
      %v198 = vunpack.c.l.b16 %v185
      %v199 = vpack.c.b16 %v196, %v195
      %v200 = vpack.c.b16 %v198, %v197
      %vm203 = vcmask 261120
      %v205 = vsel %vm203, %v190, 0
      %207 = vmatprep.subr.bf16.mxu0 0
      %208 = vmatpush1.bf16.msra.mxu0 %v199
      %209 = vmatprep.subr.bf16.mxu0 0
      %210 = vmatpush1.bf16.msra.mxu0 %v200
      %211 = vmatprep.subr.bf16.mxu0 0
      %212 = vmatpush1.bf16.msra.mxu0 0
      %213 = vmatprep.subr.bf16.mxu0 0
      %214 = vmatpush1.bf16.msra.mxu0 0
      %215 = vmatprep.subr.bf16.mxu0 0
      %216 = vmatpush1.bf16.msra.mxu0 0
      %217 = vmatprep.subr.bf16.mxu0 0
      %218 = vmatpush1.bf16.msra.mxu0 0
      %219 = vmatprep.subr.bf16.mxu0 0
      %220 = vmatpush1.bf16.msra.mxu0 0
      %221 = vmatprep.subr.bf16.mxu0 0
      %222 = vmatpush1.bf16.msra.mxu0 0
      %223 = vmatprep.subr.bf16.mxu0 0
      %224 = vmatpush1.bf16.msra.mxu0 0
      %225 = vmatprep.subr.bf16.mxu0 0
      %226 = vmatpush1.bf16.msra.mxu0 0
      %227 = vmatprep.subr.bf16.mxu0 0
      %228 = vmatpush1.bf16.msra.mxu0 0
      %229 = vmatprep.subr.bf16.mxu0 0
      %230 = vmatpush1.bf16.msra.mxu0 0
      %231 = vmatprep.subr.bf16.mxu0 0
      %232 = vmatpush1.bf16.msra.mxu0 0
      %233 = vmatprep.subr.bf16.mxu0 0
      %234 = vmatpush1.bf16.msra.mxu0 0
      %235 = vmatprep.subr.bf16.mxu0 0
      %236 = vmatpush1.bf16.msra.mxu0 0
      %237 = vmatprep.subr.bf16.mxu0 0
      %238 = vmatpush1.bf16.msra.mxu0 0
      %239 = vmatprep.mubr.bf16.mxu0 0
      %240 = vmatmul.mubr.bf16.gmra.mrb[0].mxu0 %v205
      %v241 = vpop.f32.mrb[0].mxu0
      %v242 = vadd.f32 0.0, %v241
      %v243 = vpop.f32.mrb[0].mxu0
      %v244 = vpop.f32.mrb[0].mxu0
      %v245 = vadd.f32 0.0, %v244
      %v246 = vpop.f32.mrb[0].mxu0
      %247 = vdwg.mxu0
      %v250 = vunpack.c.l.b16 %v172
      %v251 = vunpack.c.l.b16 %v173
      %v252 = vpack.c.b16 %v251, %v250
      %v257 = vunpack.c.l.b16 %v174
      %v258 = vunpack.c.l.b16 %v175
      %v259 = vunpack.c.l.b16 %v176
      %v260 = vunpack.c.l.b16 %v177
      %v261 = vpack.c.b16 %v258, %v257
      %v262 = vpack.c.b16 %v260, %v259
      %v266 = vsel %vm203, %v252, 0
      %268 = vmatprep.subr.bf16.mxu0 0
      %269 = vmatpush1.bf16.msra.mxu0 %v261
      %270 = vmatprep.subr.bf16.mxu0 0
      %271 = vmatpush1.bf16.msra.mxu0 %v262
      %272 = vmatprep.subr.bf16.mxu0 0
      %273 = vmatpush1.bf16.msra.mxu0 0
      %274 = vmatprep.subr.bf16.mxu0 0
      %275 = vmatpush1.bf16.msra.mxu0 0
      %276 = vmatprep.subr.bf16.mxu0 0
      %277 = vmatpush1.bf16.msra.mxu0 0
      %278 = vmatprep.subr.bf16.mxu0 0
      %279 = vmatpush1.bf16.msra.mxu0 0
      %280 = vmatprep.subr.bf16.mxu0 0
      %281 = vmatpush1.bf16.msra.mxu0 0
      %282 = vmatprep.subr.bf16.mxu0 0
      %283 = vmatpush1.bf16.msra.mxu0 0
      %284 = vmatprep.subr.bf16.mxu0 0
      %285 = vmatpush1.bf16.msra.mxu0 0
      %286 = vmatprep.subr.bf16.mxu0 0
      %287 = vmatpush1.bf16.msra.mxu0 0
      %288 = vmatprep.subr.bf16.mxu0 0
      %289 = vmatpush1.bf16.msra.mxu0 0
      %290 = vmatprep.subr.bf16.mxu0 0
      %291 = vmatpush1.bf16.msra.mxu0 0
      %292 = vmatprep.subr.bf16.mxu0 0
      %293 = vmatpush1.bf16.msra.mxu0 0
      %294 = vmatprep.subr.bf16.mxu0 0
      %295 = vmatpush1.bf16.msra.mxu0 0
      %296 = vmatprep.subr.bf16.mxu0 0
      %297 = vmatpush1.bf16.msra.mxu0 0
      %298 = vmatprep.subr.bf16.mxu0 0
      %299 = vmatpush1.bf16.msra.mxu0 0
      %300 = vmatprep.mubr.bf16.mxu0 0
      %301 = vmatmul.mubr.bf16.gmra.mrb[0].mxu0 %v266
      %v302 = vpop.f32.mrb[0].mxu0
      %v303 = vadd.f32 %v242, %v302
      %v304 = vpop.f32.mrb[0].mxu0
      %v305 = vpop.f32.mrb[0].mxu0
      %v306 = vadd.f32 %v245, %v305
      %v307 = vpop.f32.mrb[0].mxu0
      %308 = vdwg.mxu0
      %s309 = scalar_lea.vmem %s165, 48
      %v310 = vld [vmem:[%s309] sm:$0xf]
      %v311 = vld [vmem:[%s309 + $0x4] sm:$0xf]
      %s312 = scalar_lea.vmem %s1, 32
      %v313 = vld [vmem:[%s312] sm:$0xf]
      %v314 = vld [vmem:[%s312 + $0x4] sm:$0xf]
      %v315 = vld [vmem:[%s312 + $0x8] sm:$0xf]
      %v316 = vld [vmem:[%s312 + $0xc] sm:$0xf]
      %v319 = vunpack.c.l.b16 %v310
      %v320 = vunpack.c.l.b16 %v311
      %v321 = vpack.c.b16 %v320, %v319
      %v326 = vunpack.c.l.b16 %v313
      %v327 = vunpack.c.l.b16 %v314
      %v328 = vunpack.c.l.b16 %v315
      %v329 = vunpack.c.l.b16 %v316
      %v330 = vpack.c.b16 %v327, %v326
      %v331 = vpack.c.b16 %v329, %v328
      %v335 = vsel %vm203, %v321, 0
      %337 = vmatprep.subr.bf16.mxu0 0
      %338 = vmatpush1.bf16.msra.mxu0 %v330
      %339 = vmatprep.subr.bf16.mxu0 0
      %340 = vmatpush1.bf16.msra.mxu0 %v331
      %341 = vmatprep.subr.bf16.mxu0 0
      %342 = vmatpush1.bf16.msra.mxu0 0
      %343 = vmatprep.subr.bf16.mxu0 0
      %344 = vmatpush1.bf16.msra.mxu0 0
      %345 = vmatprep.subr.bf16.mxu0 0
      %346 = vmatpush1.bf16.msra.mxu0 0
      %347 = vmatprep.subr.bf16.mxu0 0
      %348 = vmatpush1.bf16.msra.mxu0 0
      %349 = vmatprep.subr.bf16.mxu0 0
      %350 = vmatpush1.bf16.msra.mxu0 0
      %351 = vmatprep.subr.bf16.mxu0 0
      %352 = vmatpush1.bf16.msra.mxu0 0
      %353 = vmatprep.subr.bf16.mxu0 0
      %354 = vmatpush1.bf16.msra.mxu0 0
      %355 = vmatprep.subr.bf16.mxu0 0
      %356 = vmatpush1.bf16.msra.mxu0 0
      %357 = vmatprep.subr.bf16.mxu0 0
      %358 = vmatpush1.bf16.msra.mxu0 0
      %359 = vmatprep.subr.bf16.mxu0 0
      %360 = vmatpush1.bf16.msra.mxu0 0
      %361 = vmatprep.subr.bf16.mxu0 0
      %362 = vmatpush1.bf16.msra.mxu0 0
      %363 = vmatprep.subr.bf16.mxu0 0
      %364 = vmatpush1.bf16.msra.mxu0 0
      %365 = vmatprep.subr.bf16.mxu0 0
      %366 = vmatpush1.bf16.msra.mxu0 0
      %367 = vmatprep.subr.bf16.mxu0 0
      %368 = vmatpush1.bf16.msra.mxu0 0
      %369 = vmatprep.mubr.bf16.mxu0 0
      %370 = vmatmul.mubr.bf16.gmra.mrb[0].mxu0 %v335
      %v371 = vpop.f32.mrb[0].mxu0
      %v372 = vadd.f32 0.0, %v371
      %v373 = vpop.f32.mrb[0].mxu0
      %v374 = vpop.f32.mrb[0].mxu0
      %v375 = vadd.f32 0.0, %v374
      %v376 = vpop.f32.mrb[0].mxu0
      %377 = vdwg.mxu0
      %v378 = vadd.f32 %v303, %v372
      %v379 = vadd.f32 %v306, %v375
      %s380 = scalar_lea.vmem %s165, 12
      %v381 = vld [vmem:[%s380] sm:$0xf]
      %v382 = vld [vmem:[%s380 + $0x4] sm:$0xf]
      %s383 = scalar_lea.vmem %s1, 48
      %v384 = vld [vmem:[%s383] sm:$0xf]
      %v385 = vld [vmem:[%s383 + $0x4] sm:$0xf]
      %v386 = vld [vmem:[%s383 + $0x8] sm:$0xf]
      %v387 = vld [vmem:[%s383 + $0xc] sm:$0xf]
      %v390 = vunpack.c.l.b16 %v381
      %v391 = vunpack.c.l.b16 %v382
      %v392 = vpack.c.b16 %v391, %v390
      %v397 = vunpack.c.l.b16 %v384
      %v398 = vunpack.c.l.b16 %v385
      %v399 = vunpack.c.l.b16 %v386
      %v400 = vunpack.c.l.b16 %v387
      %v401 = vpack.c.b16 %v398, %v397
      %v402 = vpack.c.b16 %v400, %v399
      %v406 = vsel %vm203, %v392, 0
      %408 = vmatprep.subr.bf16.mxu0 0
      %409 = vmatpush1.bf16.msra.mxu0 %v401
      %410 = vmatprep.subr.bf16.mxu0 0
      %411 = vmatpush1.bf16.msra.mxu0 %v402
      %412 = vmatprep.subr.bf16.mxu0 0
      %413 = vmatpush1.bf16.msra.mxu0 0
      %414 = vmatprep.subr.bf16.mxu0 0
      %415 = vmatpush1.bf16.msra.mxu0 0
      %416 = vmatprep.subr.bf16.mxu0 0
      %417 = vmatpush1.bf16.msra.mxu0 0
      %418 = vmatprep.subr.bf16.mxu0 0
      %419 = vmatpush1.bf16.msra.mxu0 0
      %420 = vmatprep.subr.bf16.mxu0 0
      %421 = vmatpush1.bf16.msra.mxu0 0
      %422 = vmatprep.subr.bf16.mxu0 0
      %423 = vmatpush1.bf16.msra.mxu0 0
      %424 = vmatprep.subr.bf16.mxu0 0
      %425 = vmatpush1.bf16.msra.mxu0 0
      %426 = vmatprep.subr.bf16.mxu0 0
      %427 = vmatpush1.bf16.msra.mxu0 0
      %428 = vmatprep.subr.bf16.mxu0 0
      %429 = vmatpush1.bf16.msra.mxu0 0
      %430 = vmatprep.subr.bf16.mxu0 0
      %431 = vmatpush1.bf16.msra.mxu0 0
      %432 = vmatprep.subr.bf16.mxu0 0
      %433 = vmatpush1.bf16.msra.mxu0 0
      %434 = vmatprep.subr.bf16.mxu0 0
      %435 = vmatpush1.bf16.msra.mxu0 0
      %436 = vmatprep.subr.bf16.mxu0 0
      %437 = vmatpush1.bf16.msra.mxu0 0
      %438 = vmatprep.subr.bf16.mxu0 0
      %439 = vmatpush1.bf16.msra.mxu0 0
      %440 = vmatprep.mubr.bf16.mxu0 0
      %441 = vmatmul.mubr.bf16.gmra.mrb[0].mxu0 %v406
      %v442 = vpop.f32.mrb[0].mxu0
      %v443 = vadd.f32 0.0, %v442
      %v444 = vpop.f32.mrb[0].mxu0
      %v445 = vpop.f32.mrb[0].mxu0
      %v446 = vadd.f32 0.0, %v445
      %v447 = vpop.f32.mrb[0].mxu0
      %448 = vdwg.mxu0
      %v449 = vadd.f32 %v378, %v443
      %v450 = vadd.f32 %v379, %v446
      %s451 = scalar_lea.vmem %s165, 36
      %v452 = vld [vmem:[%s451] sm:$0xf]
      %v453 = vld [vmem:[%s451 + $0x4] sm:$0xf]
      %s454 = scalar_lea.vmem %s1, 64
      %v455 = vld [vmem:[%s454] sm:$0xf]
      %v456 = vld [vmem:[%s454 + $0x4] sm:$0xf]
      %v457 = vld [vmem:[%s454 + $0x8] sm:$0xf]
      %v458 = vld [vmem:[%s454 + $0xc] sm:$0xf]
      %v461 = vunpack.c.l.b16 %v452
      %v462 = vunpack.c.l.b16 %v453
      %v463 = vpack.c.b16 %v462, %v461
      %v468 = vunpack.c.l.b16 %v455
      %v469 = vunpack.c.l.b16 %v456
      %v470 = vunpack.c.l.b16 %v457
      %v471 = vunpack.c.l.b16 %v458
      %v472 = vpack.c.b16 %v469, %v468
      %v473 = vpack.c.b16 %v471, %v470
      %v477 = vsel %vm203, %v463, 0
      %479 = vmatprep.subr.bf16.mxu0 0
      %480 = vmatpush1.bf16.msra.mxu0 %v472
      %481 = vmatprep.subr.bf16.mxu0 0
      %482 = vmatpush1.bf16.msra.mxu0 %v473
      %483 = vmatprep.subr.bf16.mxu0 0
      %484 = vmatpush1.bf16.msra.mxu0 0
      %485 = vmatprep.subr.bf16.mxu0 0
      %486 = vmatpush1.bf16.msra.mxu0 0
      %487 = vmatprep.subr.bf16.mxu0 0
      %488 = vmatpush1.bf16.msra.mxu0 0
      %489 = vmatprep.subr.bf16.mxu0 0
      %490 = vmatpush1.bf16.msra.mxu0 0
      %491 = vmatprep.subr.bf16.mxu0 0
      %492 = vmatpush1.bf16.msra.mxu0 0
      %493 = vmatprep.subr.bf16.mxu0 0
      %494 = vmatpush1.bf16.msra.mxu0 0
      %495 = vmatprep.subr.bf16.mxu0 0
      %496 = vmatpush1.bf16.msra.mxu0 0
      %497 = vmatprep.subr.bf16.mxu0 0
      %498 = vmatpush1.bf16.msra.mxu0 0
      %499 = vmatprep.subr.bf16.mxu0 0
      %500 = vmatpush1.bf16.msra.mxu0 0
      %501 = vmatprep.subr.bf16.mxu0 0
      %502 = vmatpush1.bf16.msra.mxu0 0
      %503 = vmatprep.subr.bf16.mxu0 0
      %504 = vmatpush1.bf16.msra.mxu0 0
      %505 = vmatprep.subr.bf16.mxu0 0
      %506 = vmatpush1.bf16.msra.mxu0 0
      %507 = vmatprep.subr.bf16.mxu0 0
      %508 = vmatpush1.bf16.msra.mxu0 0
      %509 = vmatprep.subr.bf16.mxu0 0
      %510 = vmatpush1.bf16.msra.mxu0 0
      %511 = vmatprep.mubr.bf16.mxu0 0
      %512 = vmatmul.mubr.bf16.gmra.mrb[0].mxu0 %v477
      %v513 = vpop.f32.mrb[0].mxu0
      %v514 = vadd.f32 0.0, %v513
      %v515 = vpop.f32.mrb[0].mxu0
      %v516 = vpop.f32.mrb[0].mxu0
      %v517 = vadd.f32 0.0, %v516
      %v518 = vpop.f32.mrb[0].mxu0
      %519 = vdwg.mxu0
      %v520 = vadd.f32 %v449, %v514
      %v521 = vadd.f32 %v450, %v517
      %s522 = scalar_lea.vmem %s165, 60
      %v523 = vld [vmem:[%s522] sm:$0xf]
      %v524 = vld [vmem:[%s522 + $0x4] sm:$0xf]
      %s525 = scalar_lea.vmem %s1, 80
      %v526 = vld [vmem:[%s525] sm:$0xf]
      %v527 = vld [vmem:[%s525 + $0x4] sm:$0xf]
      %v528 = vld [vmem:[%s525 + $0x8] sm:$0xf]
      %v529 = vld [vmem:[%s525 + $0xc] sm:$0xf]
      %v532 = vunpack.c.l.b16 %v523
      %v533 = vunpack.c.l.b16 %v524
      %v534 = vpack.c.b16 %v533, %v532
      %v539 = vunpack.c.l.b16 %v526
      %v540 = vunpack.c.l.b16 %v527
      %v541 = vunpack.c.l.b16 %v528
      %v542 = vunpack.c.l.b16 %v529
      %v543 = vpack.c.b16 %v540, %v539
      %v544 = vpack.c.b16 %v542, %v541
      %v548 = vsel %vm203, %v534, 0
      %550 = vmatprep.subr.bf16.mxu0 0
      %551 = vmatpush1.bf16.msra.mxu0 %v543
      %552 = vmatprep.subr.bf16.mxu0 0
      %553 = vmatpush1.bf16.msra.mxu0 %v544
      %554 = vmatprep.subr.bf16.mxu0 0
      %555 = vmatpush1.bf16.msra.mxu0 0
      %556 = vmatprep.subr.bf16.mxu0 0
      %557 = vmatpush1.bf16.msra.mxu0 0
      %558 = vmatprep.subr.bf16.mxu0 0
      %559 = vmatpush1.bf16.msra.mxu0 0
      %560 = vmatprep.subr.bf16.mxu0 0
      %561 = vmatpush1.bf16.msra.mxu0 0
      %562 = vmatprep.subr.bf16.mxu0 0
      %563 = vmatpush1.bf16.msra.mxu0 0
      %564 = vmatprep.subr.bf16.mxu0 0
      %565 = vmatpush1.bf16.msra.mxu0 0
      %566 = vmatprep.subr.bf16.mxu0 0
      %567 = vmatpush1.bf16.msra.mxu0 0
      %568 = vmatprep.subr.bf16.mxu0 0
      %569 = vmatpush1.bf16.msra.mxu0 0
      %570 = vmatprep.subr.bf16.mxu0 0
      %571 = vmatpush1.bf16.msra.mxu0 0
      %572 = vmatprep.subr.bf16.mxu0 0
      %573 = vmatpush1.bf16.msra.mxu0 0
      %574 = vmatprep.subr.bf16.mxu0 0
      %575 = vmatpush1.bf16.msra.mxu0 0
      %576 = vmatprep.subr.bf16.mxu0 0
      %577 = vmatpush1.bf16.msra.mxu0 0
      %578 = vmatprep.subr.bf16.mxu0 0
      %579 = vmatpush1.bf16.msra.mxu0 0
      %580 = vmatprep.subr.bf16.mxu0 0
      %581 = vmatpush1.bf16.msra.mxu0 0
      %582 = vmatprep.mubr.bf16.mxu0 0
      %583 = vmatmul.mubr.bf16.gmra.mrb[0].mxu0 %v548
      %v584 = vpop.f32.mrb[0].mxu0
      %v585 = vadd.f32 0.0, %v584
      %v586 = vpop.f32.mrb[0].mxu0
      %v587 = vpop.f32.mrb[0].mxu0
      %v588 = vadd.f32 0.0, %v587
      %v589 = vpop.f32.mrb[0].mxu0
      %590 = vdwg.mxu0
      %v591 = vadd.f32 %v520, %v585
      %v592 = vadd.f32 %v521, %v588
      %v593 = vld [vmem:[%s165] sm:$0xc]
      %v594 = vld [vmem:[%s165 + $0x4] sm:$0xf]
      %v595 = vld [vmem:[%s165 + $0x8] sm:$0x3]
      %s596 = scalar_lea.vmem %s1, 96
      %v597 = vld [vmem:[%s596] sm:$0xf]
      %v598 = vld [vmem:[%s596 + $0x4] sm:$0xf]
      %v599 = vld [vmem:[%s596 + $0x8] sm:$0xf]
      %v600 = vld [vmem:[%s596 + $0xc] sm:$0xf]
      %v604 = vunpack.c.l.b16 %v593
      %v605 = vunpack.c.l.b16 %v594
      %v606 = vunpack.c.l.b16 %v595
      %v607 = vpack.c.b16 %v605, %v604
      %v608 = vpack.c.b16 %v606, %v606
      %vm609 = vcmask 1045504
      %v610 = vrot.slane %v607, 2
      %v611 = vrot.slane %v608, 2
      %v612 = vsel %vm609, %v610, %v611
      %v617 = vunpack.c.l.b16 %v597
      %v618 = vunpack.c.l.b16 %v598
      %v619 = vunpack.c.l.b16 %v599
      %v620 = vunpack.c.l.b16 %v600
      %v621 = vpack.c.b16 %v618, %v617
      %v622 = vpack.c.b16 %v620, %v619
      %v626 = vsel %vm203, %v612, 0
      %628 = vmatprep.subr.bf16.mxu0 0
      %629 = vmatpush1.bf16.msra.mxu0 %v621
      %630 = vmatprep.subr.bf16.mxu0 0
      %631 = vmatpush1.bf16.msra.mxu0 %v622
      %632 = vmatprep.subr.bf16.mxu0 0
      %633 = vmatpush1.bf16.msra.mxu0 0
      %634 = vmatprep.subr.bf16.mxu0 0
      %635 = vmatpush1.bf16.msra.mxu0 0
      %636 = vmatprep.subr.bf16.mxu0 0
      %637 = vmatpush1.bf16.msra.mxu0 0
      %638 = vmatprep.subr.bf16.mxu0 0
      %639 = vmatpush1.bf16.msra.mxu0 0
      %640 = vmatprep.subr.bf16.mxu0 0
      %641 = vmatpush1.bf16.msra.mxu0 0
      %642 = vmatprep.subr.bf16.mxu0 0
      %643 = vmatpush1.bf16.msra.mxu0 0
      %644 = vmatprep.subr.bf16.mxu0 0
      %645 = vmatpush1.bf16.msra.mxu0 0
      %646 = vmatprep.subr.bf16.mxu0 0
      %647 = vmatpush1.bf16.msra.mxu0 0
      %648 = vmatprep.subr.bf16.mxu0 0
      %649 = vmatpush1.bf16.msra.mxu0 0
      %650 = vmatprep.subr.bf16.mxu0 0
      %651 = vmatpush1.bf16.msra.mxu0 0
      %652 = vmatprep.subr.bf16.mxu0 0
      %653 = vmatpush1.bf16.msra.mxu0 0
      %654 = vmatprep.subr.bf16.mxu0 0
      %655 = vmatpush1.bf16.msra.mxu0 0
      %656 = vmatprep.subr.bf16.mxu0 0
      %657 = vmatpush1.bf16.msra.mxu0 0
      %658 = vmatprep.subr.bf16.mxu0 0
      %659 = vmatpush1.bf16.msra.mxu0 0
      %660 = vmatprep.mubr.bf16.mxu0 0
      %661 = vmatmul.mubr.bf16.gmra.mrb[0].mxu0 %v626
      %v662 = vpop.f32.mrb[0].mxu0
      %v663 = vadd.f32 0.0, %v662
      %v664 = vpop.f32.mrb[0].mxu0
      %v665 = vpop.f32.mrb[0].mxu0
      %v666 = vadd.f32 0.0, %v665
      %v667 = vpop.f32.mrb[0].mxu0
      %668 = vdwg.mxu0
      %v669 = vadd.f32 %v591, %v663
      %v670 = vadd.f32 %v592, %v666
      %v671 = vld [vmem:[%s178] sm:$0xc]
      %v672 = vld [vmem:[%s178 + $0x4] sm:$0xf]
      %v673 = vld [vmem:[%s178 + $0x8] sm:$0x3]
      %s674 = scalar_lea.vmem %s1, 112
      %v675 = vld [vmem:[%s674] sm:$0xf]
      %v676 = vld [vmem:[%s674 + $0x4] sm:$0xf]
      %v677 = vld [vmem:[%s674 + $0x8] sm:$0xf]
      %v678 = vld [vmem:[%s674 + $0xc] sm:$0xf]
      %v682 = vunpack.c.l.b16 %v671
      %v683 = vunpack.c.l.b16 %v672
      %v684 = vunpack.c.l.b16 %v673
      %v685 = vpack.c.b16 %v683, %v682
      %v686 = vpack.c.b16 %v684, %v684
      %v687 = vrot.slane %v685, 2
      %v688 = vrot.slane %v686, 2
      %v689 = vsel %vm609, %v687, %v688
      %v694 = vunpack.c.l.b16 %v675
      %v695 = vunpack.c.l.b16 %v676
      %v696 = vunpack.c.l.b16 %v677
      %v697 = vunpack.c.l.b16 %v678
      %v698 = vpack.c.b16 %v695, %v694
      %v699 = vpack.c.b16 %v697, %v696
      %v703 = vsel %vm203, %v689, 0
      %705 = vmatprep.subr.bf16.mxu0 0
      %706 = vmatpush1.bf16.msra.mxu0 %v698
      %707 = vmatprep.subr.bf16.mxu0 0
      %708 = vmatpush1.bf16.msra.mxu0 %v699
      %709 = vmatprep.subr.bf16.mxu0 0
      %710 = vmatpush1.bf16.msra.mxu0 0
      %711 = vmatprep.subr.bf16.mxu0 0
      %712 = vmatpush1.bf16.msra.mxu0 0
      %713 = vmatprep.subr.bf16.mxu0 0
      %714 = vmatpush1.bf16.msra.mxu0 0
      %715 = vmatprep.subr.bf16.mxu0 0
      %716 = vmatpush1.bf16.msra.mxu0 0
      %717 = vmatprep.subr.bf16.mxu0 0
      %718 = vmatpush1.bf16.msra.mxu0 0
      %719 = vmatprep.subr.bf16.mxu0 0
      %720 = vmatpush1.bf16.msra.mxu0 0
      %721 = vmatprep.subr.bf16.mxu0 0
      %722 = vmatpush1.bf16.msra.mxu0 0
      %723 = vmatprep.subr.bf16.mxu0 0
      %724 = vmatpush1.bf16.msra.mxu0 0
      %725 = vmatprep.subr.bf16.mxu0 0
      %726 = vmatpush1.bf16.msra.mxu0 0
      %727 = vmatprep.subr.bf16.mxu0 0
      %728 = vmatpush1.bf16.msra.mxu0 0
      %729 = vmatprep.subr.bf16.mxu0 0
      %730 = vmatpush1.bf16.msra.mxu0 0
      %731 = vmatprep.subr.bf16.mxu0 0
      %732 = vmatpush1.bf16.msra.mxu0 0
      %733 = vmatprep.subr.bf16.mxu0 0
      %734 = vmatpush1.bf16.msra.mxu0 0
      %735 = vmatprep.subr.bf16.mxu0 0
      %736 = vmatpush1.bf16.msra.mxu0 0
      %737 = vmatprep.mubr.bf16.mxu0 0
      %738 = vmatmul.mubr.bf16.gmra.mrb[0].mxu0 %v703
      %v739 = vpop.f32.mrb[0].mxu0
      %v740 = vadd.f32 0.0, %v739
      %v741 = vpop.f32.mrb[0].mxu0
      %v742 = vpop.f32.mrb[0].mxu0
      %v743 = vadd.f32 0.0, %v742
      %v744 = vpop.f32.mrb[0].mxu0
      %745 = vdwg.mxu0
      %v746 = vadd.f32 %v669, %v740
      %v747 = vadd.f32 %v670, %v743
      %v748 = vld [vmem:[%s309] sm:$0xc]
      %v749 = vld [vmem:[%s309 + $0x4] sm:$0xf]
      %v750 = vld [vmem:[%s309 + $0x8] sm:$0x3]
      %s751 = scalar_lea.vmem %s1, 128
      %v752 = vld [vmem:[%s751] sm:$0xf]
      %v753 = vld [vmem:[%s751 + $0x4] sm:$0xf]
      %v754 = vld [vmem:[%s751 + $0x8] sm:$0xf]
      %v755 = vld [vmem:[%s751 + $0xc] sm:$0xf]
      %v759 = vunpack.c.l.b16 %v748
      %v760 = vunpack.c.l.b16 %v749
      %v761 = vunpack.c.l.b16 %v750
      %v762 = vpack.c.b16 %v760, %v759
      %v763 = vpack.c.b16 %v761, %v761
      %v764 = vrot.slane %v762, 2
      %v765 = vrot.slane %v763, 2
      %v766 = vsel %vm609, %v764, %v765
      %v771 = vunpack.c.l.b16 %v752
      %v772 = vunpack.c.l.b16 %v753
      %v773 = vunpack.c.l.b16 %v754
      %v774 = vunpack.c.l.b16 %v755
      %v775 = vpack.c.b16 %v772, %v771
      %v776 = vpack.c.b16 %v774, %v773
      %v780 = vsel %vm203, %v766, 0
      %782 = vmatprep.subr.bf16.mxu0 0
      %783 = vmatpush1.bf16.msra.mxu0 %v775
      %784 = vmatprep.subr.bf16.mxu0 0
      %785 = vmatpush1.bf16.msra.mxu0 %v776
      %786 = vmatprep.subr.bf16.mxu0 0
      %787 = vmatpush1.bf16.msra.mxu0 0
      %788 = vmatprep.subr.bf16.mxu0 0
      %789 = vmatpush1.bf16.msra.mxu0 0
      %790 = vmatprep.subr.bf16.mxu0 0
      %791 = vmatpush1.bf16.msra.mxu0 0
      %792 = vmatprep.subr.bf16.mxu0 0
      %793 = vmatpush1.bf16.msra.mxu0 0
      %794 = vmatprep.subr.bf16.mxu0 0
      %795 = vmatpush1.bf16.msra.mxu0 0
      %796 = vmatprep.subr.bf16.mxu0 0
      %797 = vmatpush1.bf16.msra.mxu0 0
      %798 = vmatprep.subr.bf16.mxu0 0
      %799 = vmatpush1.bf16.msra.mxu0 0
      %800 = vmatprep.subr.bf16.mxu0 0
      %801 = vmatpush1.bf16.msra.mxu0 0
      %802 = vmatprep.subr.bf16.mxu0 0
      %803 = vmatpush1.bf16.msra.mxu0 0
      %804 = vmatprep.subr.bf16.mxu0 0
      %805 = vmatpush1.bf16.msra.mxu0 0
      %806 = vmatprep.subr.bf16.mxu0 0
      %807 = vmatpush1.bf16.msra.mxu0 0
      %808 = vmatprep.subr.bf16.mxu0 0
      %809 = vmatpush1.bf16.msra.mxu0 0
      %810 = vmatprep.subr.bf16.mxu0 0
      %811 = vmatpush1.bf16.msra.mxu0 0
      %812 = vmatprep.subr.bf16.mxu0 0
      %813 = vmatpush1.bf16.msra.mxu0 0
      %814 = vmatprep.mubr.bf16.mxu0 0
      %815 = vmatmul.mubr.bf16.gmra.mrb[0].mxu0 %v780
      %v816 = vpop.f32.mrb[0].mxu0
      %v817 = vadd.f32 0.0, %v816
      %v818 = vpop.f32.mrb[0].mxu0
      %v819 = vpop.f32.mrb[0].mxu0
      %v820 = vadd.f32 0.0, %v819
      %v821 = vpop.f32.mrb[0].mxu0
      %822 = vdwg.mxu0
      %v823 = vadd.f32 %v746, %v817
      %v824 = vadd.f32 %v747, %v820
      %v825 = vld [vmem:[%s2] sm:$0x1]
      %v827 = vlaneseq
      %v828 = vshrl.u32 %v827, 7
      %v829 = vsub.s32 0, %v828
      %v830 = vrot.slane %v825, %v829
      %v832 = vadd.f32 %v823, %v830
      %v833 = vadd.f32 %v824, %v830
      %834 = vst.msk [vmem:[%s170] sm:$0xff] %vm203, %v832
      %835 = vst.msk [vmem:[%s170 + $0x8] sm:$0xff] %vm203, %v833
      %p836 = scmp.lt.s32.totalorder %s14, 1
      %s837 = scalar_select %p836, %s14, 1
      %s838 = smul.addr %s837, 2
      %s839 = smul.addr %s838, 8
      %s840 = scalar_lea.vmem %s3, %s839
      // Predicated region
      $region33: #{eco_depth_encoder_forward.9} parent=31 // pred_check
        %p841 = pneg %p100
      $region34: #{eco_depth_encoder_forward.9} parent=31 // pred_check_branch
        %843 = sbr.rel (%p841) target = $region36
      $region35: #{eco_depth_encoder_forward.9} parent=31 // pred_region
        _
      $region36: #{eco_depth_encoder_forward.9} parent=31 // pred_fallthru
        _
    $region32: #{eco_depth_encoder_forward.9} parent=5 // pred_fallthru
      _
    %p844 = scmp.le.s32.totalorder 2, %s9
    // Predicated region
    $region37: #{eco_depth_encoder_forward.9} parent=5 // pred_check
      %p845 = pneg %p844
    $region38: #{eco_depth_encoder_forward.9} parent=5 // pred_check_branch
      %847 = sbr.rel (%p845) target = $region40
    $region39: #{eco_depth_encoder_forward.9} parent=5 // pred_region
      %s848 = ssub.s32 %s9, 2
      // Predicated region
      $region41: #{eco_depth_encoder_forward.9} parent=39 // pred_check
        %p849 = pneg %p106
      $region42: #{eco_depth_encoder_forward.9} parent=39 // pred_check_branch
        %851 = sbr.rel (%p849) target = $region44
      $region43: #{eco_depth_encoder_forward.9} parent=39 // pred_region
        %p852 = scmp.lt.s32.totalorder %s15, 1
        %s853 = scalar_select %p852, %s15, 1
        %s854 = smul.addr %s853, 2
        %s855 = smul.addr %s854, 8
        %s856 = scalar_lea.vmem %s3, %s855
      $region44: #{eco_depth_encoder_forward.9} parent=39 // pred_fallthru
        _
    $region40: #{eco_depth_encoder_forward.9} parent=5 // pred_fallthru
      _
  $region6: #{eco_depth_encoder_forward.9} parent=0 // loop_footer
    %s13 = sadd.s32 1, %s9
  $region7: #{eco_depth_encoder_forward.9} parent=0 // loop_footer_branch
    %8 = sbr.rel target = $region3
  $region8: #{eco_depth_encoder_forward.9} parent=0 // loop_exit
    _

// kernel: eco_depth_encoder_forward.8
$region0: #{eco_depth_encoder_forward.8}
  #allocation0 [shape = 'u32[]', space=smem, size = 0x4, offset = 0x4, fixed_abs, tag = 'smem constant byte address 0x4 - core index']
  #allocation1 [shape = 'u32[144,128]{1,0:T(1,128)}', space=vmem, size = 0x12000, scoped, tag = 'internal scratch']
  %s0 = inlined_call_operand.vmem [shape: bf16[2,3,2,72,32], index: 0, kind: input, shape index: {}]
  %s1 = inlined_call_operand.vmem [shape: bf16[3,3,32,32], index: 1, kind: input, shape index: {}]
  %s2 = inlined_call_operand.vmem [shape: f32[1,32], index: 2, kind: input, shape index: {}]
  %s3 = inlined_call_operand.vmem [shape: f32[1,32], index: 3, kind: input, shape index: {}]
  %s4 = inlined_call_operand.vmem [shape: f32[1,32], index: 4, kind: input, shape index: {}]
  %s5 = inlined_call_operand.vmem [shape: f32[32,16], index: 5, kind: input, shape index: {}]
  %s6 = inlined_call_operand.vmem [shape: f32[16,32], index: 6, kind: input, shape index: {}]
  %s7 = inlined_call_operand.vmem [shape: f32[2,64,32], index: 7, kind: output, shape index: {}]
  %s8 = sld [smem:[#allocation0]]
  $region61: #{eco_depth_encoder_forward.8} parent=0
    _
  %s10 = ssub.s32 1, %s8
  %s11 = scalar_select 0, %s10, %s8
  loop: start=0, step=1, limit=4
  $region2: #{eco_depth_encoder_forward.8} parent=0 // loop_pre_header
    _
  $region3: #{eco_depth_encoder_forward.8} parent=0 // loop_header
    %s13 = sphi 0, %s17
    %p14 = scmp.ge.s32.totalorder %s13, 4
    %s23 = sphi 0, %s25
    %s26 = sphi 0, %s23
    %s27 = sphi 0, %s26
    %s43 = sphi 0, %s27
    %s47 = sphi 0, %s47
    %s49 = sphi 0, %s47
    %s50 = sphi 0, %s49
    %s64 = sphi 0, %s50
    %s68 = sphi 0, %s68
    %s70 = sphi 0, %s68
    %s71 = sphi 0, %s70
    %s85 = sphi 0, %s71
    %s89 = sphi 0, %s89
    %s91 = sphi 0, %s89
    %s92 = sphi 0, %s91
    %s106 = sphi 0, %s92
    %s110 = sphi 0, %s110
    %s112 = sphi 0, %s110
    %s113 = sphi 0, %s112
    %s127 = sphi 0, %s113
    %s131 = sphi 0, %s131
    %s133 = sphi 0, %s131
    %s134 = sphi 0, %s133
    %s148 = sphi 0, %s134
    %s152 = sphi 0, %s152
    %s154 = sphi 0, %s152
    %s155 = sphi 0, %s154
    %s169 = sphi 0, %s155
    %s175 = sphi 0, %s177
    %s178 = sphi 0, %s175
    %s179 = sphi 0, %s178
    %s195 = sphi 0, %s179
  $region4: #{eco_depth_encoder_forward.8} parent=0 // loop_header_branch
    %16 = sbr.rel (%p14) target = $region8
  $region5: #{eco_depth_encoder_forward.8} parent=0 // loop_body
    %s18 = ssub.s32 %s13, 1
    %s19 = ssub.s32 %s13, 2
    %s20 = sadd.s32 %s13, 1
    %s21 = ssub.s32 %s13, %s20
    %p22 = scmp.eq.s32.totalorder %s21, 0
    %s24 = sadd.s32 %s23, 1
    %s25 = scalar_select %p22, %s23, %s24
    %p28 = pneg %p22
    %p29 = scmp.eq.s32.totalorder %s13, 1
    %p30 = por %p28, %p29
    %p31 = scmp.ne.s32.totalorder %s23, %s26
    %p32 = scmp.eq.s32.totalorder %s13, 0
    %p33 = por %p31, %p32
    %p34 = scmp.ne.s32.totalorder %s23, %s26
    %p35 = scmp.eq.s32.totalorder %s18, 1
    %p36 = por %p34, %p35
    %p37 = scmp.ne.s32.totalorder %s26, %s27
    %p38 = scmp.eq.s32.totalorder %s18, 0
    %p39 = por %p37, %p38
    %p40 = scmp.ne.s32.totalorder %s26, %s27
    %p41 = scmp.eq.s32.totalorder %s19, 1
    %p42 = por %p40, %p41
    %p44 = scmp.ne.s32.totalorder %s27, %s43
    %p45 = scmp.eq.s32.totalorder %s19, 0
    %p46 = por %p44, %p45
    %s48 = sadd.s32 %s47, 1
    %p51 = scmp.eq.s32.totalorder %s13, 1
    %p52 = scmp.ne.s32.totalorder %s47, %s49
    %p53 = scmp.eq.s32.totalorder %s13, 0
    %p54 = por %p52, %p53
    %p55 = scmp.ne.s32.totalorder %s47, %s49
    %p56 = scmp.eq.s32.totalorder %s18, 1
    %p57 = por %p55, %p56
    %p58 = scmp.ne.s32.totalorder %s49, %s50
    %p59 = scmp.eq.s32.totalorder %s18, 0
    %p60 = por %p58, %p59
    %p61 = scmp.ne.s32.totalorder %s49, %s50
    %p62 = scmp.eq.s32.totalorder %s19, 1
    %p63 = por %p61, %p62
    %p65 = scmp.ne.s32.totalorder %s50, %s64
    %p66 = scmp.eq.s32.totalorder %s19, 0
    %p67 = por %p65, %p66
    %s69 = sadd.s32 %s68, 1
    %p72 = scmp.eq.s32.totalorder %s13, 1
    %p73 = scmp.ne.s32.totalorder %s68, %s70
    %p74 = scmp.eq.s32.totalorder %s13, 0
    %p75 = por %p73, %p74
    %p76 = scmp.ne.s32.totalorder %s68, %s70
    %p77 = scmp.eq.s32.totalorder %s18, 1
    %p78 = por %p76, %p77
    %p79 = scmp.ne.s32.totalorder %s70, %s71
    %p80 = scmp.eq.s32.totalorder %s18, 0
    %p81 = por %p79, %p80
    %p82 = scmp.ne.s32.totalorder %s70, %s71
    %p83 = scmp.eq.s32.totalorder %s19, 1
    %p84 = por %p82, %p83
    %p86 = scmp.ne.s32.totalorder %s71, %s85
    %p87 = scmp.eq.s32.totalorder %s19, 0
    %p88 = por %p86, %p87
    %s90 = sadd.s32 %s89, 1
    %p93 = scmp.eq.s32.totalorder %s13, 1
    %p94 = scmp.ne.s32.totalorder %s89, %s91
    %p95 = scmp.eq.s32.totalorder %s13, 0
    %p96 = por %p94, %p95
    %p97 = scmp.ne.s32.totalorder %s89, %s91
    %p98 = scmp.eq.s32.totalorder %s18, 1
    %p99 = por %p97, %p98
    %p100 = scmp.ne.s32.totalorder %s91, %s92
    %p101 = scmp.eq.s32.totalorder %s18, 0
    %p102 = por %p100, %p101
    %p103 = scmp.ne.s32.totalorder %s91, %s92
    %p104 = scmp.eq.s32.totalorder %s19, 1
    %p105 = por %p103, %p104
    %p107 = scmp.ne.s32.totalorder %s92, %s106
    %p108 = scmp.eq.s32.totalorder %s19, 0
    %p109 = por %p107, %p108
    %s111 = sadd.s32 %s110, 1
    %p114 = scmp.eq.s32.totalorder %s13, 1
    %p115 = scmp.ne.s32.totalorder %s110, %s112
    %p116 = scmp.eq.s32.totalorder %s13, 0
    %p117 = por %p115, %p116
    %p118 = scmp.ne.s32.totalorder %s110, %s112
    %p119 = scmp.eq.s32.totalorder %s18, 1
    %p120 = por %p118, %p119
    %p121 = scmp.ne.s32.totalorder %s112, %s113
    %p122 = scmp.eq.s32.totalorder %s18, 0
    %p123 = por %p121, %p122
    %p124 = scmp.ne.s32.totalorder %s112, %s113
    %p125 = scmp.eq.s32.totalorder %s19, 1
    %p126 = por %p124, %p125
    %p128 = scmp.ne.s32.totalorder %s113, %s127
    %p129 = scmp.eq.s32.totalorder %s19, 0
    %p130 = por %p128, %p129
    %s132 = sadd.s32 %s131, 1
    %p135 = scmp.eq.s32.totalorder %s13, 1
    %p136 = scmp.ne.s32.totalorder %s131, %s133
    %p137 = scmp.eq.s32.totalorder %s13, 0
    %p138 = por %p136, %p137
    %p139 = scmp.ne.s32.totalorder %s131, %s133
    %p140 = scmp.eq.s32.totalorder %s18, 1
    %p141 = por %p139, %p140
    %p142 = scmp.ne.s32.totalorder %s133, %s134
    %p143 = scmp.eq.s32.totalorder %s18, 0
    %p144 = por %p142, %p143
    %p145 = scmp.ne.s32.totalorder %s133, %s134
    %p146 = scmp.eq.s32.totalorder %s19, 1
    %p147 = por %p145, %p146
    %p149 = scmp.ne.s32.totalorder %s134, %s148
    %p150 = scmp.eq.s32.totalorder %s19, 0
    %p151 = por %p149, %p150
    %s153 = sadd.s32 %s152, 1
    %p156 = scmp.eq.s32.totalorder %s13, 1
    %p157 = scmp.ne.s32.totalorder %s152, %s154
    %p158 = scmp.eq.s32.totalorder %s13, 0
    %p159 = por %p157, %p158
    %p160 = scmp.ne.s32.totalorder %s152, %s154
    %p161 = scmp.eq.s32.totalorder %s18, 1
    %p162 = por %p160, %p161
    %p163 = scmp.ne.s32.totalorder %s154, %s155
    %p164 = scmp.eq.s32.totalorder %s18, 0
    %p165 = por %p163, %p164
    %p166 = scmp.ne.s32.totalorder %s154, %s155
    %p167 = scmp.eq.s32.totalorder %s19, 1
    %p168 = por %p166, %p167
    %p170 = scmp.ne.s32.totalorder %s155, %s169
    %p171 = scmp.eq.s32.totalorder %s19, 0
    %p172 = por %p170, %p171
    %s173 = ssub.s32 %s13, %s20
    %p174 = scmp.eq.s32.totalorder %s173, 0
    %s176 = sadd.s32 %s175, 1
    %s177 = scalar_select %p174, %s175, %s176
    %p180 = pneg %p174
    %p181 = scmp.eq.s32.totalorder %s13, 1
    %p182 = por %p180, %p181
    %p183 = scmp.ne.s32.totalorder %s175, %s178
    %p184 = scmp.eq.s32.totalorder %s13, 0
    %p185 = por %p183, %p184
    %p186 = scmp.ne.s32.totalorder %s175, %s178
    %p187 = scmp.eq.s32.totalorder %s18, 1
    %p188 = por %p186, %p187
    %p189 = scmp.ne.s32.totalorder %s178, %s179
    %p190 = scmp.eq.s32.totalorder %s18, 0
    %p191 = por %p189, %p190
    %p192 = scmp.ne.s32.totalorder %s178, %s179
    %p193 = scmp.eq.s32.totalorder %s19, 1
    %p194 = por %p192, %p193
    %p196 = scmp.ne.s32.totalorder %s179, %s195
    %p197 = scmp.eq.s32.totalorder %s19, 0
    %p198 = por %p196, %p197
    %p199 = scmp.le.s32.totalorder 1, %s13
    %p200 = scmp.lt.s32.totalorder %s13, 3
    %p201 = pnand %p199, %p200
    %p202 = pneg %p201
    // Predicated region
    $region9: #{eco_depth_encoder_forward.8} parent=5 // pred_check
      _
    $region10: #{eco_depth_encoder_forward.8} parent=5 // pred_check_branch
      %204 = sbr.rel (%p201) target = $region12
    $region11: #{eco_depth_encoder_forward.8} parent=5 // pred_region
      %s205 = ssub.s32 %s13, 1
      // Predicated region
      $region13: #{eco_depth_encoder_forward.8} parent=11 // pred_check
        %p206 = pneg %p60
      $region14: #{eco_depth_encoder_forward.8} parent=11 // pred_check_branch
        %208 = sbr.rel (%p206) target = $region16
      $region15: #{eco_depth_encoder_forward.8} parent=11 // pred_region
        _
      $region16: #{eco_depth_encoder_forward.8} parent=11 // pred_fallthru
        _
      // Predicated region
      $region17: #{eco_depth_encoder_forward.8} parent=11 // pred_check
        %p209 = pneg %p81
      $region18: #{eco_depth_encoder_forward.8} parent=11 // pred_check_branch
        %211 = sbr.rel (%p209) target = $region20
      $region19: #{eco_depth_encoder_forward.8} parent=11 // pred_region
        _
      $region20: #{eco_depth_encoder_forward.8} parent=11 // pred_fallthru
        _
      // Predicated region
      $region21: #{eco_depth_encoder_forward.8} parent=11 // pred_check
        %p212 = pneg %p102
      $region22: #{eco_depth_encoder_forward.8} parent=11 // pred_check_branch
        %214 = sbr.rel (%p212) target = $region24
      $region23: #{eco_depth_encoder_forward.8} parent=11 // pred_region
        _
      $region24: #{eco_depth_encoder_forward.8} parent=11 // pred_fallthru
        _
      // Predicated region
      $region25: #{eco_depth_encoder_forward.8} parent=11 // pred_check
        %p215 = pneg %p123
      $region26: #{eco_depth_encoder_forward.8} parent=11 // pred_check_branch
        %217 = sbr.rel (%p215) target = $region28
      $region27: #{eco_depth_encoder_forward.8} parent=11 // pred_region
        _
      $region28: #{eco_depth_encoder_forward.8} parent=11 // pred_fallthru
        _
      // Predicated region
      $region29: #{eco_depth_encoder_forward.8} parent=11 // pred_check
        %p218 = pneg %p144
      $region30: #{eco_depth_encoder_forward.8} parent=11 // pred_check_branch
        %220 = sbr.rel (%p218) target = $region32
      $region31: #{eco_depth_encoder_forward.8} parent=11 // pred_region
        _
      $region32: #{eco_depth_encoder_forward.8} parent=11 // pred_fallthru
        _
      // Predicated region
      $region33: #{eco_depth_encoder_forward.8} parent=11 // pred_check
        %p221 = pneg %p165
      $region34: #{eco_depth_encoder_forward.8} parent=11 // pred_check_branch
        %223 = sbr.rel (%p221) target = $region36
      $region35: #{eco_depth_encoder_forward.8} parent=11 // pred_region
        _
      $region36: #{eco_depth_encoder_forward.8} parent=11 // pred_fallthru
        _
    $region12: #{eco_depth_encoder_forward.8} parent=5 // pred_fallthru
      _
    %p224 = scmp.lt.s32.totalorder %s13, 2
    // Predicated region
    $region37: #{eco_depth_encoder_forward.8} parent=5 // pred_check
      %p225 = pneg %p224
    $region38: #{eco_depth_encoder_forward.8} parent=5 // pred_check_branch
      %227 = sbr.rel (%p225) target = $region40
    $region39: #{eco_depth_encoder_forward.8} parent=5 // pred_region
      // Predicated region
      $region41: #{eco_depth_encoder_forward.8} parent=39 // pred_check
        %p228 = pneg %p33
      $region42: #{eco_depth_encoder_forward.8} parent=39 // pred_check_branch
        %230 = sbr.rel (%p228) target = $region44
      $region43: #{eco_depth_encoder_forward.8} parent=39 // pred_region
        %p231 = scmp.lt.s32.totalorder %s13, 1
        %s232 = scalar_select %p231, %s13, 1
        %s233 = smul.addr %s232, 54
        %s234 = smul.addr %s233, 4
        %s235 = scalar_lea.vmem %s0, %s234
      $region44: #{eco_depth_encoder_forward.8} parent=39 // pred_fallthru
        _
    $region40: #{eco_depth_encoder_forward.8} parent=5 // pred_fallthru
      _
    %p236 = scmp.le.s32.totalorder 1, %s13
    %p237 = scmp.lt.s32.totalorder %s13, 3
    %p238 = pnand %p236, %p237
    %p239 = pneg %p238
    // Predicated region
    $region45: #{eco_depth_encoder_forward.8} parent=5 // pred_check
      _
    $region46: #{eco_depth_encoder_forward.8} parent=5 // pred_check_branch
      %241 = sbr.rel (%p238) target = $region48
    $region47: #{eco_depth_encoder_forward.8} parent=5 // pred_region
      %s242 = ssub.s32 %s13, 1
      %p243 = scmp.lt.s32.totalorder %s18, 1
      %s244 = scalar_select %p243, %s18, 1
      %s245 = smul.addr %s244, 54
      %s246 = smul.addr %s245, 4
      %s247 = scalar_lea.vmem %s0, %s246
      %p248 = pneg %p39
      %p249 = pneg %p36
      %p250 = pneg %p60
      %p251 = pneg %p57
      %p252 = pneg %p81
      %p253 = pneg %p78
      %p254 = pneg %p102
      %p255 = pneg %p99
      %p256 = pneg %p123
      %p257 = pneg %p120
      %p258 = pneg %p144
      %p259 = pneg %p141
      %p260 = pneg %p165
      %p261 = pneg %p162
      %p262 = pneg %p191
      %p263 = pneg %p188
      %p264 = scmp.lt.s32.totalorder %s18, 1
      %s265 = scalar_select %p264, %s18, 1
      %s266 = smul.addr %s265, 8
      %s267 = smul.addr %s266, 8
      %s268 = scalar_lea.vmem %s7, %s267
      %p269 = scmp.lt.s32.totalorder %s18, 1
      %s270 = scalar_select %p269, %s18, 1
      %s271 = smul.addr %s270, 54
      %s272 = smul.addr %s271, 4
      %s273 = scalar_lea.vmem %s0, %s272
      %p274 = scmp.lt.s32.totalorder %s18, 1
      %s275 = scalar_select %p274, %s18, 1
      %s276 = smul.addr %s275, 8
      %s277 = smul.addr %s276, 8
      %s278 = scalar_lea.vmem %s7, %s277
      %v280 = vld [vmem:[%s273] sm:$0xf]
      %v281 = vld [vmem:[%s273 + $0x4] sm:$0xf]
      %v282 = vld [vmem:[%s273 + $0x8] sm:$0xf]
      %v283 = vld [vmem:[%s273 + $0xc] sm:$0xf]
      %v284 = vld [vmem:[%s273 + $0x10] sm:$0xf]
      %v285 = vld [vmem:[%s273 + $0x14] sm:$0xf]
      %v286 = vld [vmem:[%s273 + $0x18] sm:$0xf]
      %v287 = vld [vmem:[%s273 + $0x1c] sm:$0xf]
      %v288 = vld [vmem:[%s1] sm:$0xf]
      %v289 = vld [vmem:[%s1 + $0x4] sm:$0xf]
      %v290 = vld [vmem:[%s1 + $0x8] sm:$0xf]
      %v291 = vld [vmem:[%s1 + $0xc] sm:$0xf]
      %s292 = scalar_lea.vmem %s273, 72
      %v293 = vld [vmem:[%s292] sm:$0xf]
      %v294 = vld [vmem:[%s292 + $0x4] sm:$0xf]
      %v295 = vld [vmem:[%s292 + $0x8] sm:$0xf]
      %v296 = vld [vmem:[%s292 + $0xc] sm:$0xf]
      %v297 = vld [vmem:[%s292 + $0x10] sm:$0xf]
      %v298 = vld [vmem:[%s292 + $0x14] sm:$0xf]
      %v299 = vld [vmem:[%s292 + $0x18] sm:$0xf]
      %v300 = vld [vmem:[%s292 + $0x1c] sm:$0xf]
      %s301 = scalar_lea.vmem %s1, 16
      %v302 = vld [vmem:[%s301] sm:$0xf]
      %v303 = vld [vmem:[%s301 + $0x4] sm:$0xf]
      %v304 = vld [vmem:[%s301 + $0x8] sm:$0xf]
      %v305 = vld [vmem:[%s301 + $0xc] sm:$0xf]
      %v314 = vunpack.c.l.b16 %v293
      %v315 = vunpack.c.l.b16 %v294
      %v316 = vunpack.c.l.b16 %v295
      %v317 = vunpack.c.l.b16 %v296
      %v318 = vunpack.c.l.b16 %v297
      %v319 = vunpack.c.l.b16 %v298
      %v320 = vunpack.c.l.b16 %v299
      %v321 = vunpack.c.l.b16 %v300
      %v322 = vpack.c.b16 %v315, %v314
      %v323 = vpack.c.b16 %v317, %v316
      %v324 = vpack.c.b16 %v319, %v318
      %v325 = vpack.c.b16 %v321, %v320
      %v330 = vunpack.c.l.b16 %v302
      %v331 = vunpack.c.l.b16 %v303
      %v332 = vunpack.c.l.b16 %v304
      %v333 = vunpack.c.l.b16 %v305
      %v334 = vpack.c.b16 %v331, %v330
      %v335 = vpack.c.b16 %v333, %v332
      %vm338 = vcmask 261120
      %v340 = vsel %vm338, %v322, 0
      %v343 = vsel %vm338, %v323, 0
      %v346 = vsel %vm338, %v324, 0
      %v349 = vsel %vm338, %v325, 0
      %351 = vmatprep.subr.bf16.mxu0 0
      %352 = vmatpush1.bf16.msra.mxu0 %v334
      %353 = vmatprep.subr.bf16.mxu0 0
      %354 = vmatpush1.bf16.msra.mxu0 %v335
      %355 = vmatprep.subr.bf16.mxu0 0
      %356 = vmatpush1.bf16.msra.mxu0 0
      %357 = vmatprep.subr.bf16.mxu0 0
      %358 = vmatpush1.bf16.msra.mxu0 0
      %359 = vmatprep.subr.bf16.mxu0 0
      %360 = vmatpush1.bf16.msra.mxu0 0
      %361 = vmatprep.subr.bf16.mxu0 0
      %362 = vmatpush1.bf16.msra.mxu0 0
      %363 = vmatprep.subr.bf16.mxu0 0
      %364 = vmatpush1.bf16.msra.mxu0 0
      %365 = vmatprep.subr.bf16.mxu0 0
      %366 = vmatpush1.bf16.msra.mxu0 0
      %367 = vmatprep.subr.bf16.mxu0 0
      %368 = vmatpush1.bf16.msra.mxu0 0
      %369 = vmatprep.subr.bf16.mxu0 0
      %370 = vmatpush1.bf16.msra.mxu0 0
      %371 = vmatprep.subr.bf16.mxu0 0
      %372 = vmatpush1.bf16.msra.mxu0 0
      %373 = vmatprep.subr.bf16.mxu0 0
      %374 = vmatpush1.bf16.msra.mxu0 0
      %375 = vmatprep.subr.bf16.mxu0 0
      %376 = vmatpush1.bf16.msra.mxu0 0
      %377 = vmatprep.subr.bf16.mxu0 0
      %378 = vmatpush1.bf16.msra.mxu0 0
      %379 = vmatprep.subr.bf16.mxu0 0
      %380 = vmatpush1.bf16.msra.mxu0 0
      %381 = vmatprep.subr.bf16.mxu0 0
      %382 = vmatpush1.bf16.msra.mxu0 0
      %383 = vmatprep.mubr.bf16.mxu0 0
      %384 = vmatmul.mubr.bf16.gmra.mrb[0].mxu0 %v340
      %v385 = vpop.f32.mrb[0].mxu0
      %v386 = vadd.f32 0.0, %v385
      %v387 = vpop.f32.mrb[0].mxu0
      %v388 = vpop.f32.mrb[0].mxu0
      %v389 = vadd.f32 0.0, %v388
      %v390 = vpop.f32.mrb[0].mxu0
      %391 = vmatprep.mubr.bf16.mxu0 0
      %392 = vmatmul.mubr.bf16.gmra.mrb[0].mxu0 %v343
      %v393 = vpop.f32.mrb[0].mxu0
      %v394 = vadd.f32 0.0, %v393
      %v395 = vpop.f32.mrb[0].mxu0
      %v396 = vpop.f32.mrb[0].mxu0
      %v397 = vadd.f32 0.0, %v396
      %v398 = vpop.f32.mrb[0].mxu0
      %399 = vmatprep.mubr.bf16.mxu0 0
      %400 = vmatmul.mubr.bf16.gmra.mrb[0].mxu0 %v346
      %v401 = vpop.f32.mrb[0].mxu0
      %v402 = vadd.f32 0.0, %v401
      %v403 = vpop.f32.mrb[0].mxu0
      %v404 = vpop.f32.mrb[0].mxu0
      %v405 = vadd.f32 0.0, %v404
      %v406 = vpop.f32.mrb[0].mxu0
      %407 = vmatprep.mubr.bf16.mxu0 0
      %408 = vmatmul.mubr.bf16.gmra.mrb[0].mxu0 %v349
      %v409 = vpop.f32.mrb[0].mxu0
      %v410 = vadd.f32 0.0, %v409
      %v411 = vpop.f32.mrb[0].mxu0
      %v412 = vpop.f32.mrb[0].mxu0
      %v413 = vadd.f32 0.0, %v412
      %v414 = vpop.f32.mrb[0].mxu0
      %415 = vdwg.mxu0
      %v424 = vunpack.c.l.b16 %v280
      %v425 = vunpack.c.l.b16 %v281
      %v426 = vunpack.c.l.b16 %v282
      %v427 = vunpack.c.l.b16 %v283
      %v428 = vunpack.c.l.b16 %v284
      %v429 = vunpack.c.l.b16 %v285
      %v430 = vunpack.c.l.b16 %v286
      %v431 = vunpack.c.l.b16 %v287
      %v432 = vpack.c.b16 %v425, %v424
      %v433 = vpack.c.b16 %v427, %v426
      %v434 = vpack.c.b16 %v429, %v428
      %v435 = vpack.c.b16 %v431, %v430
      %v440 = vunpack.c.l.b16 %v288
      %v441 = vunpack.c.l.b16 %v289
      %v442 = vunpack.c.l.b16 %v290
      %v443 = vunpack.c.l.b16 %v291
      %v444 = vpack.c.b16 %v441, %v440
      %v445 = vpack.c.b16 %v443, %v442
      %v449 = vsel %vm338, %v432, 0
      %v452 = vsel %vm338, %v433, 0
      %v455 = vsel %vm338, %v434, 0
      %v458 = vsel %vm338, %v435, 0
      %460 = vmatprep.subr.bf16.mxu0 0
      %461 = vmatpush1.bf16.msra.mxu0 %v444
      %462 = vmatprep.subr.bf16.mxu0 0
      %463 = vmatpush1.bf16.msra.mxu0 %v445
      %464 = vmatprep.subr.bf16.mxu0 0
      %465 = vmatpush1.bf16.msra.mxu0 0
      %466 = vmatprep.subr.bf16.mxu0 0
      %467 = vmatpush1.bf16.msra.mxu0 0
      %468 = vmatprep.subr.bf16.mxu0 0
      %469 = vmatpush1.bf16.msra.mxu0 0
      %470 = vmatprep.subr.bf16.mxu0 0
      %471 = vmatpush1.bf16.msra.mxu0 0
      %472 = vmatprep.subr.bf16.mxu0 0
      %473 = vmatpush1.bf16.msra.mxu0 0
      %474 = vmatprep.subr.bf16.mxu0 0
      %475 = vmatpush1.bf16.msra.mxu0 0
      %476 = vmatprep.subr.bf16.mxu0 0
      %477 = vmatpush1.bf16.msra.mxu0 0
      %478 = vmatprep.subr.bf16.mxu0 0
      %479 = vmatpush1.bf16.msra.mxu0 0
      %480 = vmatprep.subr.bf16.mxu0 0
      %481 = vmatpush1.bf16.msra.mxu0 0
      %482 = vmatprep.subr.bf16.mxu0 0
      %483 = vmatpush1.bf16.msra.mxu0 0
      %484 = vmatprep.subr.bf16.mxu0 0
      %485 = vmatpush1.bf16.msra.mxu0 0
      %486 = vmatprep.subr.bf16.mxu0 0
      %487 = vmatpush1.bf16.msra.mxu0 0
      %488 = vmatprep.subr.bf16.mxu0 0
      %489 = vmatpush1.bf16.msra.mxu0 0
      %490 = vmatprep.subr.bf16.mxu0 0
      %491 = vmatpush1.bf16.msra.mxu0 0
      %492 = vmatprep.mubr.bf16.mxu0 0
      %493 = vmatmul.mubr.bf16.gmra.mrb[0].mxu0 %v449
      %v494 = vpop.f32.mrb[0].mxu0
      %v495 = vadd.f32 %v386, %v494
      %v496 = vpop.f32.mrb[0].mxu0
      %v497 = vpop.f32.mrb[0].mxu0
      %v498 = vadd.f32 %v389, %v497
      %v499 = vpop.f32.mrb[0].mxu0
      %500 = vmatprep.mubr.bf16.mxu0 0
      %501 = vmatmul.mubr.bf16.gmra.mrb[0].mxu0 %v452
      %v502 = vpop.f32.mrb[0].mxu0
      %v503 = vadd.f32 %v394, %v502
      %v504 = vpop.f32.mrb[0].mxu0
      %v505 = vpop.f32.mrb[0].mxu0
      %v506 = vadd.f32 %v397, %v505
      %v507 = vpop.f32.mrb[0].mxu0
      %508 = vmatprep.mubr.bf16.mxu0 0
      %509 = vmatmul.mubr.bf16.gmra.mrb[0].mxu0 %v455
      %v510 = vpop.f32.mrb[0].mxu0
      %v511 = vadd.f32 %v402, %v510
      %v512 = vpop.f32.mrb[0].mxu0
      %v513 = vpop.f32.mrb[0].mxu0
      %v514 = vadd.f32 %v405, %v513
      %v515 = vpop.f32.mrb[0].mxu0
      %516 = vmatprep.mubr.bf16.mxu0 0
      %517 = vmatmul.mubr.bf16.gmra.mrb[0].mxu0 %v458
      %v518 = vpop.f32.mrb[0].mxu0
      %v519 = vadd.f32 %v410, %v518
      %v520 = vpop.f32.mrb[0].mxu0
      %v521 = vpop.f32.mrb[0].mxu0
      %v522 = vadd.f32 %v413, %v521
      %v523 = vpop.f32.mrb[0].mxu0
      %524 = vdwg.mxu0
      %s525 = scalar_lea.vmem %s273, 144
      %v526 = vld [vmem:[%s525] sm:$0xf]
      %v527 = vld [vmem:[%s525 + $0x4] sm:$0xf]
      %v528 = vld [vmem:[%s525 + $0x8] sm:$0xf]
      %v529 = vld [vmem:[%s525 + $0xc] sm:$0xf]
      %v530 = vld [vmem:[%s525 + $0x10] sm:$0xf]
      %v531 = vld [vmem:[%s525 + $0x14] sm:$0xf]
      %v532 = vld [vmem:[%s525 + $0x18] sm:$0xf]
      %v533 = vld [vmem:[%s525 + $0x1c] sm:$0xf]
      %s534 = scalar_lea.vmem %s1, 32
      %v535 = vld [vmem:[%s534] sm:$0xf]
      %v536 = vld [vmem:[%s534 + $0x4] sm:$0xf]
      %v537 = vld [vmem:[%s534 + $0x8] sm:$0xf]
      %v538 = vld [vmem:[%s534 + $0xc] sm:$0xf]
      %v547 = vunpack.c.l.b16 %v526
      %v548 = vunpack.c.l.b16 %v527
      %v549 = vunpack.c.l.b16 %v528
      %v550 = vunpack.c.l.b16 %v529
      %v551 = vunpack.c.l.b16 %v530
      %v552 = vunpack.c.l.b16 %v531
      %v553 = vunpack.c.l.b16 %v532
      %v554 = vunpack.c.l.b16 %v533
      %v555 = vpack.c.b16 %v548, %v547
      %v556 = vpack.c.b16 %v550, %v549
      %v557 = vpack.c.b16 %v552, %v551
      %v558 = vpack.c.b16 %v554, %v553
      %v563 = vunpack.c.l.b16 %v535
      %v564 = vunpack.c.l.b16 %v536
      %v565 = vunpack.c.l.b16 %v537
      %v566 = vunpack.c.l.b16 %v538
      %v567 = vpack.c.b16 %v564, %v563
      %v568 = vpack.c.b16 %v566, %v565
      %v572 = vsel %vm338, %v555, 0
      %v575 = vsel %vm338, %v556, 0
      %v578 = vsel %vm338, %v557, 0
      %v581 = vsel %vm338, %v558, 0
      %583 = vmatprep.subr.bf16.mxu0 0
      %584 = vmatpush1.bf16.msra.mxu0 %v567
      %585 = vmatprep.subr.bf16.mxu0 0
      %586 = vmatpush1.bf16.msra.mxu0 %v568
      %587 = vmatprep.subr.bf16.mxu0 0
      %588 = vmatpush1.bf16.msra.mxu0 0
      %589 = vmatprep.subr.bf16.mxu0 0
      %590 = vmatpush1.bf16.msra.mxu0 0
      %591 = vmatprep.subr.bf16.mxu0 0
      %592 = vmatpush1.bf16.msra.mxu0 0
      %593 = vmatprep.subr.bf16.mxu0 0
      %594 = vmatpush1.bf16.msra.mxu0 0
      %595 = vmatprep.subr.bf16.mxu0 0
      %596 = vmatpush1.bf16.msra.mxu0 0
      %597 = vmatprep.subr.bf16.mxu0 0
      %598 = vmatpush1.bf16.msra.mxu0 0
      %599 = vmatprep.subr.bf16.mxu0 0
      %600 = vmatpush1.bf16.msra.mxu0 0
      %601 = vmatprep.subr.bf16.mxu0 0
      %602 = vmatpush1.bf16.msra.mxu0 0
      %603 = vmatprep.subr.bf16.mxu0 0
      %604 = vmatpush1.bf16.msra.mxu0 0
      %605 = vmatprep.subr.bf16.mxu0 0
      %606 = vmatpush1.bf16.msra.mxu0 0
      %607 = vmatprep.subr.bf16.mxu0 0
      %608 = vmatpush1.bf16.msra.mxu0 0
      %609 = vmatprep.subr.bf16.mxu0 0
      %610 = vmatpush1.bf16.msra.mxu0 0
      %611 = vmatprep.subr.bf16.mxu0 0
      %612 = vmatpush1.bf16.msra.mxu0 0
      %613 = vmatprep.subr.bf16.mxu0 0
      %614 = vmatpush1.bf16.msra.mxu0 0
      %615 = vmatprep.mubr.bf16.mxu0 0
      %616 = vmatmul.mubr.bf16.gmra.mrb[0].mxu0 %v572
      %v617 = vpop.f32.mrb[0].mxu0
      %v618 = vadd.f32 0.0, %v617
      %v619 = vpop.f32.mrb[0].mxu0
      %v620 = vpop.f32.mrb[0].mxu0
      %v621 = vadd.f32 0.0, %v620
      %v622 = vpop.f32.mrb[0].mxu0
      %623 = vmatprep.mubr.bf16.mxu0 0
      %624 = vmatmul.mubr.bf16.gmra.mrb[0].mxu0 %v575
      %v625 = vpop.f32.mrb[0].mxu0
      %v626 = vadd.f32 0.0, %v625
      %v627 = vpop.f32.mrb[0].mxu0
      %v628 = vpop.f32.mrb[0].mxu0
      %v629 = vadd.f32 0.0, %v628
      %v630 = vpop.f32.mrb[0].mxu0
      %631 = vmatprep.mubr.bf16.mxu0 0
      %632 = vmatmul.mubr.bf16.gmra.mrb[0].mxu0 %v578
      %v633 = vpop.f32.mrb[0].mxu0
      %v634 = vadd.f32 0.0, %v633
      %v635 = vpop.f32.mrb[0].mxu0
      %v636 = vpop.f32.mrb[0].mxu0
      %v637 = vadd.f32 0.0, %v636
      %v638 = vpop.f32.mrb[0].mxu0
      %639 = vmatprep.mubr.bf16.mxu0 0
      %640 = vmatmul.mubr.bf16.gmra.mrb[0].mxu0 %v581
      %v641 = vpop.f32.mrb[0].mxu0
      %v642 = vadd.f32 0.0, %v641
      %v643 = vpop.f32.mrb[0].mxu0
      %v644 = vpop.f32.mrb[0].mxu0
      %v645 = vadd.f32 0.0, %v644
      %v646 = vpop.f32.mrb[0].mxu0
      %647 = vdwg.mxu0
      %v648 = vadd.f32 %v495, %v618
      %v649 = vadd.f32 %v498, %v621
      %v650 = vadd.f32 %v503, %v626
      %v651 = vadd.f32 %v506, %v629
      %v652 = vadd.f32 %v511, %v634
      %v653 = vadd.f32 %v514, %v637
      %v654 = vadd.f32 %v519, %v642
      %v655 = vadd.f32 %v522, %v645
      %s656 = scalar_lea.vmem %s273, 36
      %v657 = vld [vmem:[%s656] sm:$0xf]
      %v658 = vld [vmem:[%s656 + $0x4] sm:$0xf]
      %v659 = vld [vmem:[%s656 + $0x8] sm:$0xf]
      %v660 = vld [vmem:[%s656 + $0xc] sm:$0xf]
      %v661 = vld [vmem:[%s656 + $0x10] sm:$0xf]
      %v662 = vld [vmem:[%s656 + $0x14] sm:$0xf]
      %v663 = vld [vmem:[%s656 + $0x18] sm:$0xf]
      %v664 = vld [vmem:[%s656 + $0x1c] sm:$0xf]
      %s665 = scalar_lea.vmem %s1, 48
      %v666 = vld [vmem:[%s665] sm:$0xf]
      %v667 = vld [vmem:[%s665 + $0x4] sm:$0xf]
      %v668 = vld [vmem:[%s665 + $0x8] sm:$0xf]
      %v669 = vld [vmem:[%s665 + $0xc] sm:$0xf]
      %v678 = vunpack.c.l.b16 %v657
      %v679 = vunpack.c.l.b16 %v658
      %v680 = vunpack.c.l.b16 %v659
      %v681 = vunpack.c.l.b16 %v660
      %v682 = vunpack.c.l.b16 %v661
      %v683 = vunpack.c.l.b16 %v662
      %v684 = vunpack.c.l.b16 %v663
      %v685 = vunpack.c.l.b16 %v664
      %v686 = vpack.c.b16 %v679, %v678
      %v687 = vpack.c.b16 %v681, %v680
      %v688 = vpack.c.b16 %v683, %v682
      %v689 = vpack.c.b16 %v685, %v684
      %v694 = vunpack.c.l.b16 %v666
      %v695 = vunpack.c.l.b16 %v667
      %v696 = vunpack.c.l.b16 %v668
      %v697 = vunpack.c.l.b16 %v669
      %v698 = vpack.c.b16 %v695, %v694
      %v699 = vpack.c.b16 %v697, %v696
      %v703 = vsel %vm338, %v686, 0
      %v706 = vsel %vm338, %v687, 0
      %v709 = vsel %vm338, %v688, 0
      %v712 = vsel %vm338, %v689, 0
      %714 = vmatprep.subr.bf16.mxu0 0
      %715 = vmatpush1.bf16.msra.mxu0 %v698
      %716 = vmatprep.subr.bf16.mxu0 0
      %717 = vmatpush1.bf16.msra.mxu0 %v699
      %718 = vmatprep.subr.bf16.mxu0 0
      %719 = vmatpush1.bf16.msra.mxu0 0
      %720 = vmatprep.subr.bf16.mxu0 0
      %721 = vmatpush1.bf16.msra.mxu0 0
      %722 = vmatprep.subr.bf16.mxu0 0
      %723 = vmatpush1.bf16.msra.mxu0 0
      %724 = vmatprep.subr.bf16.mxu0 0
      %725 = vmatpush1.bf16.msra.mxu0 0
      %726 = vmatprep.subr.bf16.mxu0 0
      %727 = vmatpush1.bf16.msra.mxu0 0
      %728 = vmatprep.subr.bf16.mxu0 0
      %729 = vmatpush1.bf16.msra.mxu0 0
      %730 = vmatprep.subr.bf16.mxu0 0
      %731 = vmatpush1.bf16.msra.mxu0 0
      %732 = vmatprep.subr.bf16.mxu0 0
      %733 = vmatpush1.bf16.msra.mxu0 0
      %734 = vmatprep.subr.bf16.mxu0 0
      %735 = vmatpush1.bf16.msra.mxu0 0
      %736 = vmatprep.subr.bf16.mxu0 0
      %737 = vmatpush1.bf16.msra.mxu0 0
      %738 = vmatprep.subr.bf16.mxu0 0
      %739 = vmatpush1.bf16.msra.mxu0 0
      %740 = vmatprep.subr.bf16.mxu0 0
      %741 = vmatpush1.bf16.msra.mxu0 0
      %742 = vmatprep.subr.bf16.mxu0 0
      %743 = vmatpush1.bf16.msra.mxu0 0
      %744 = vmatprep.subr.bf16.mxu0 0
      %745 = vmatpush1.bf16.msra.mxu0 0
      %746 = vmatprep.mubr.bf16.mxu0 0
      %747 = vmatmul.mubr.bf16.gmra.mrb[0].mxu0 %v703
      %v748 = vpop.f32.mrb[0].mxu0
      %v749 = vadd.f32 0.0, %v748
      %v750 = vpop.f32.mrb[0].mxu0
      %v751 = vpop.f32.mrb[0].mxu0
      %v752 = vadd.f32 0.0, %v751
      %v753 = vpop.f32.mrb[0].mxu0
      %754 = vmatprep.mubr.bf16.mxu0 0
      %755 = vmatmul.mubr.bf16.gmra.mrb[0].mxu0 %v706
      %v756 = vpop.f32.mrb[0].mxu0
      %v757 = vadd.f32 0.0, %v756
      %v758 = vpop.f32.mrb[0].mxu0
      %v759 = vpop.f32.mrb[0].mxu0
      %v760 = vadd.f32 0.0, %v759
      %v761 = vpop.f32.mrb[0].mxu0
      %762 = vmatprep.mubr.bf16.mxu0 0
      %763 = vmatmul.mubr.bf16.gmra.mrb[0].mxu0 %v709
      %v764 = vpop.f32.mrb[0].mxu0
      %v765 = vadd.f32 0.0, %v764
      %v766 = vpop.f32.mrb[0].mxu0
      %v767 = vpop.f32.mrb[0].mxu0
      %v768 = vadd.f32 0.0, %v767
      %v769 = vpop.f32.mrb[0].mxu0
      %770 = vmatprep.mubr.bf16.mxu0 0
      %771 = vmatmul.mubr.bf16.gmra.mrb[0].mxu0 %v712
      %v772 = vpop.f32.mrb[0].mxu0
      %v773 = vadd.f32 0.0, %v772
      %v774 = vpop.f32.mrb[0].mxu0
      %v775 = vpop.f32.mrb[0].mxu0
      %v776 = vadd.f32 0.0, %v775
      %v777 = vpop.f32.mrb[0].mxu0
      %778 = vdwg.mxu0
      %v779 = vadd.f32 %v648, %v749
      %v780 = vadd.f32 %v649, %v752
      %v781 = vadd.f32 %v650, %v757
      %v782 = vadd.f32 %v651, %v760
      %v783 = vadd.f32 %v652, %v765
      %v784 = vadd.f32 %v653, %v768
      %v785 = vadd.f32 %v654, %v773
      %v786 = vadd.f32 %v655, %v776
      %s787 = scalar_lea.vmem %s273, 108
      %v788 = vld [vmem:[%s787] sm:$0xf]
      %v789 = vld [vmem:[%s787 + $0x4] sm:$0xf]
      %v790 = vld [vmem:[%s787 + $0x8] sm:$0xf]
      %v791 = vld [vmem:[%s787 + $0xc] sm:$0xf]
      %v792 = vld [vmem:[%s787 + $0x10] sm:$0xf]
      %v793 = vld [vmem:[%s787 + $0x14] sm:$0xf]
      %v794 = vld [vmem:[%s787 + $0x18] sm:$0xf]
      %v795 = vld [vmem:[%s787 + $0x1c] sm:$0xf]
      %s796 = scalar_lea.vmem %s1, 64
      %v797 = vld [vmem:[%s796] sm:$0xf]
      %v798 = vld [vmem:[%s796 + $0x4] sm:$0xf]
      %v799 = vld [vmem:[%s796 + $0x8] sm:$0xf]
      %v800 = vld [vmem:[%s796 + $0xc] sm:$0xf]
      %v809 = vunpack.c.l.b16 %v788
      %v810 = vunpack.c.l.b16 %v789
      %v811 = vunpack.c.l.b16 %v790
      %v812 = vunpack.c.l.b16 %v791
      %v813 = vunpack.c.l.b16 %v792
      %v814 = vunpack.c.l.b16 %v793
      %v815 = vunpack.c.l.b16 %v794
      %v816 = vunpack.c.l.b16 %v795
      %v817 = vpack.c.b16 %v810, %v809
      %v818 = vpack.c.b16 %v812, %v811
      %v819 = vpack.c.b16 %v814, %v813
      %v820 = vpack.c.b16 %v816, %v815
      %v825 = vunpack.c.l.b16 %v797
      %v826 = vunpack.c.l.b16 %v798
      %v827 = vunpack.c.l.b16 %v799
      %v828 = vunpack.c.l.b16 %v800
      %v829 = vpack.c.b16 %v826, %v825
      %v830 = vpack.c.b16 %v828, %v827
      %v834 = vsel %vm338, %v817, 0
      %v837 = vsel %vm338, %v818, 0
      %v840 = vsel %vm338, %v819, 0
      %v843 = vsel %vm338, %v820, 0
      %845 = vmatprep.subr.bf16.mxu0 0
      %846 = vmatpush1.bf16.msra.mxu0 %v829
      %847 = vmatprep.subr.bf16.mxu0 0
      %848 = vmatpush1.bf16.msra.mxu0 %v830
      %849 = vmatprep.subr.bf16.mxu0 0
      %850 = vmatpush1.bf16.msra.mxu0 0
      %851 = vmatprep.subr.bf16.mxu0 0
      %852 = vmatpush1.bf16.msra.mxu0 0
      %853 = vmatprep.subr.bf16.mxu0 0
      %854 = vmatpush1.bf16.msra.mxu0 0
      %855 = vmatprep.subr.bf16.mxu0 0
      %856 = vmatpush1.bf16.msra.mxu0 0
      %857 = vmatprep.subr.bf16.mxu0 0
      %858 = vmatpush1.bf16.msra.mxu0 0
      %859 = vmatprep.subr.bf16.mxu0 0
      %860 = vmatpush1.bf16.msra.mxu0 0
      %861 = vmatprep.subr.bf16.mxu0 0
      %862 = vmatpush1.bf16.msra.mxu0 0
      %863 = vmatprep.subr.bf16.mxu0 0
      %864 = vmatpush1.bf16.msra.mxu0 0
      %865 = vmatprep.subr.bf16.mxu0 0
      %866 = vmatpush1.bf16.msra.mxu0 0
      %867 = vmatprep.subr.bf16.mxu0 0
      %868 = vmatpush1.bf16.msra.mxu0 0
      %869 = vmatprep.subr.bf16.mxu0 0
      %870 = vmatpush1.bf16.msra.mxu0 0
      %871 = vmatprep.subr.bf16.mxu0 0
      %872 = vmatpush1.bf16.msra.mxu0 0
      %873 = vmatprep.subr.bf16.mxu0 0
      %874 = vmatpush1.bf16.msra.mxu0 0
      %875 = vmatprep.subr.bf16.mxu0 0
      %876 = vmatpush1.bf16.msra.mxu0 0
      %877 = vmatprep.mubr.bf16.mxu0 0
      %878 = vmatmul.mubr.bf16.gmra.mrb[0].mxu0 %v834
      %v879 = vpop.f32.mrb[0].mxu0
      %v880 = vadd.f32 0.0, %v879
      %v881 = vpop.f32.mrb[0].mxu0
      %v882 = vpop.f32.mrb[0].mxu0
      %v883 = vadd.f32 0.0, %v882
      %v884 = vpop.f32.mrb[0].mxu0
      %885 = vmatprep.mubr.bf16.mxu0 0
      %886 = vmatmul.mubr.bf16.gmra.mrb[0].mxu0 %v837
      %v887 = vpop.f32.mrb[0].mxu0
      %v888 = vadd.f32 0.0, %v887
      %v889 = vpop.f32.mrb[0].mxu0
      %v890 = vpop.f32.mrb[0].mxu0
      %v891 = vadd.f32 0.0, %v890
      %v892 = vpop.f32.mrb[0].mxu0
      %893 = vmatprep.mubr.bf16.mxu0 0
      %894 = vmatmul.mubr.bf16.gmra.mrb[0].mxu0 %v840
      %v895 = vpop.f32.mrb[0].mxu0
      %v896 = vadd.f32 0.0, %v895
      %v897 = vpop.f32.mrb[0].mxu0
      %v898 = vpop.f32.mrb[0].mxu0
      %v899 = vadd.f32 0.0, %v898
      %v900 = vpop.f32.mrb[0].mxu0
      %901 = vmatprep.mubr.bf16.mxu0 0
      %902 = vmatmul.mubr.bf16.gmra.mrb[0].mxu0 %v843
      %v903 = vpop.f32.mrb[0].mxu0
      %v904 = vadd.f32 0.0, %v903
      %v905 = vpop.f32.mrb[0].mxu0
      %v906 = vpop.f32.mrb[0].mxu0
      %v907 = vadd.f32 0.0, %v906
      %v908 = vpop.f32.mrb[0].mxu0
      %909 = vdwg.mxu0
      %v910 = vadd.f32 %v779, %v880
      %v911 = vadd.f32 %v780, %v883
      %v912 = vadd.f32 %v781, %v888
      %v913 = vadd.f32 %v782, %v891
      %v914 = vadd.f32 %v783, %v896
      %v915 = vadd.f32 %v784, %v899
      %v916 = vadd.f32 %v785, %v904
      %v917 = vadd.f32 %v786, %v907
      %s918 = scalar_lea.vmem %s273, 180
      %v919 = vld [vmem:[%s918] sm:$0xf]
      %v920 = vld [vmem:[%s918 + $0x4] sm:$0xf]
      %v921 = vld [vmem:[%s918 + $0x8] sm:$0xf]
      %v922 = vld [vmem:[%s918 + $0xc] sm:$0xf]
      %v923 = vld [vmem:[%s918 + $0x10] sm:$0xf]
      %v924 = vld [vmem:[%s918 + $0x14] sm:$0xf]
      %v925 = vld [vmem:[%s918 + $0x18] sm:$0xf]
      %v926 = vld [vmem:[%s918 + $0x1c] sm:$0xf]
      %s927 = scalar_lea.vmem %s1, 80
      %v928 = vld [vmem:[%s927] sm:$0xf]
      %v929 = vld [vmem:[%s927 + $0x4] sm:$0xf]
      %v930 = vld [vmem:[%s927 + $0x8] sm:$0xf]
      %v931 = vld [vmem:[%s927 + $0xc] sm:$0xf]
      %v940 = vunpack.c.l.b16 %v919
      %v941 = vunpack.c.l.b16 %v920
      %v942 = vunpack.c.l.b16 %v921
      %v943 = vunpack.c.l.b16 %v922
      %v944 = vunpack.c.l.b16 %v923
      %v945 = vunpack.c.l.b16 %v924
      %v946 = vunpack.c.l.b16 %v925
      %v947 = vunpack.c.l.b16 %v926
      %v948 = vpack.c.b16 %v941, %v940
      %v949 = vpack.c.b16 %v943, %v942
      %v950 = vpack.c.b16 %v945, %v944
      %v951 = vpack.c.b16 %v947, %v946
      %v956 = vunpack.c.l.b16 %v928
      %v957 = vunpack.c.l.b16 %v929
      %v958 = vunpack.c.l.b16 %v930
      %v959 = vunpack.c.l.b16 %v931
      %v960 = vpack.c.b16 %v957, %v956
      %v961 = vpack.c.b16 %v959, %v958
      %v965 = vsel %vm338, %v948, 0
      %v968 = vsel %vm338, %v949, 0
      %v971 = vsel %vm338, %v950, 0
      %v974 = vsel %vm338, %v951, 0
      %976 = vmatprep.subr.bf16.mxu0 0
      %977 = vmatpush1.bf16.msra.mxu0 %v960
      %978 = vmatprep.subr.bf16.mxu0 0
      %979 = vmatpush1.bf16.msra.mxu0 %v961
      %980 = vmatprep.subr.bf16.mxu0 0
      %981 = vmatpush1.bf16.msra.mxu0 0
      %982 = vmatprep.subr.bf16.mxu0 0
      %983 = vmatpush1.bf16.msra.mxu0 0
      %984 = vmatprep.subr.bf16.mxu0 0
      %985 = vmatpush1.bf16.msra.mxu0 0
      %986 = vmatprep.subr.bf16.mxu0 0
      %987 = vmatpush1.bf16.msra.mxu0 0
      %988 = vmatprep.subr.bf16.mxu0 0
      %989 = vmatpush1.bf16.msra.mxu0 0
      %990 = vmatprep.subr.bf16.mxu0 0
      %991 = vmatpush1.bf16.msra.mxu0 0
      %992 = vmatprep.subr.bf16.mxu0 0
      %993 = vmatpush1.bf16.msra.mxu0 0
      %994 = vmatprep.subr.bf16.mxu0 0
      %995 = vmatpush1.bf16.msra.mxu0 0
      %996 = vmatprep.subr.bf16.mxu0 0
      %997 = vmatpush1.bf16.msra.mxu0 0
      %998 = vmatprep.subr.bf16.mxu0 0
      %999 = vmatpush1.bf16.msra.mxu0 0
      %1000 = vmatprep.subr.bf16.mxu0 0
      %1001 = vmatpush1.bf16.msra.mxu0 0
      %1002 = vmatprep.subr.bf16.mxu0 0
      %1003 = vmatpush1.bf16.msra.mxu0 0
      %1004 = vmatprep.subr.bf16.mxu0 0
      %1005 = vmatpush1.bf16.msra.mxu0 0
      %1006 = vmatprep.subr.bf16.mxu0 0
      %1007 = vmatpush1.bf16.msra.mxu0 0
      %1008 = vmatprep.mubr.bf16.mxu0 0
      %1009 = vmatmul.mubr.bf16.gmra.mrb[0].mxu0 %v965
      %v1010 = vpop.f32.mrb[0].mxu0
      %v1011 = vadd.f32 0.0, %v1010
      %v1012 = vpop.f32.mrb[0].mxu0
      %v1013 = vpop.f32.mrb[0].mxu0
      %v1014 = vadd.f32 0.0, %v1013
      %v1015 = vpop.f32.mrb[0].mxu0
      %1016 = vmatprep.mubr.bf16.mxu0 0
      %1017 = vmatmul.mubr.bf16.gmra.mrb[0].mxu0 %v968
      %v1018 = vpop.f32.mrb[0].mxu0
      %v1019 = vadd.f32 0.0, %v1018
      %v1020 = vpop.f32.mrb[0].mxu0
      %v1021 = vpop.f32.mrb[0].mxu0
      %v1022 = vadd.f32 0.0, %v1021
      %v1023 = vpop.f32.mrb[0].mxu0
      %1024 = vmatprep.mubr.bf16.mxu0 0
      %1025 = vmatmul.mubr.bf16.gmra.mrb[0].mxu0 %v971
      %v1026 = vpop.f32.mrb[0].mxu0
      %v1027 = vadd.f32 0.0, %v1026
      %v1028 = vpop.f32.mrb[0].mxu0
      %v1029 = vpop.f32.mrb[0].mxu0
      %v1030 = vadd.f32 0.0, %v1029
      %v1031 = vpop.f32.mrb[0].mxu0
      %1032 = vmatprep.mubr.bf16.mxu0 0
      %1033 = vmatmul.mubr.bf16.gmra.mrb[0].mxu0 %v974
      %v1034 = vpop.f32.mrb[0].mxu0
      %v1035 = vadd.f32 0.0, %v1034
      %v1036 = vpop.f32.mrb[0].mxu0
      %v1037 = vpop.f32.mrb[0].mxu0
      %v1038 = vadd.f32 0.0, %v1037
      %v1039 = vpop.f32.mrb[0].mxu0
      %1040 = vdwg.mxu0
      %v1041 = vadd.f32 %v910, %v1011
      %v1042 = vadd.f32 %v911, %v1014
      %v1043 = vadd.f32 %v912, %v1019
      %v1044 = vadd.f32 %v913, %v1022
      %v1045 = vadd.f32 %v914, %v1027
      %v1046 = vadd.f32 %v915, %v1030
      %v1047 = vadd.f32 %v916, %v1035
      %v1048 = vadd.f32 %v917, %v1038
      %v1049 = vld [vmem:[%s273 + $0x4] sm:$0xf]
      %v1050 = vld [vmem:[%s273 + $0x8] sm:$0xf]
      %v1051 = vld [vmem:[%s273 + $0xc] sm:$0xf]
      %v1052 = vld [vmem:[%s273 + $0x10] sm:$0xf]
      %v1053 = vld [vmem:[%s273 + $0x14] sm:$0xf]
      %v1054 = vld [vmem:[%s273 + $0x18] sm:$0xf]
      %v1055 = vld [vmem:[%s273 + $0x1c] sm:$0xf]
      %v1056 = vld [vmem:[%s273 + $0x20] sm:$0xf]
      %s1057 = scalar_lea.vmem %s1, 96
      %v1058 = vld [vmem:[%s1057] sm:$0xf]
      %v1059 = vld [vmem:[%s1057 + $0x4] sm:$0xf]
      %v1060 = vld [vmem:[%s1057 + $0x8] sm:$0xf]
      %v1061 = vld [vmem:[%s1057 + $0xc] sm:$0xf]
      %v1070 = vunpack.c.l.b16 %v1049
      %v1071 = vunpack.c.l.b16 %v1050
      %v1072 = vunpack.c.l.b16 %v1051
      %v1073 = vunpack.c.l.b16 %v1052
      %v1074 = vunpack.c.l.b16 %v1053
      %v1075 = vunpack.c.l.b16 %v1054
      %v1076 = vunpack.c.l.b16 %v1055
      %v1077 = vunpack.c.l.b16 %v1056
      %v1078 = vpack.c.b16 %v1071, %v1070
      %v1079 = vpack.c.b16 %v1073, %v1072
      %v1080 = vpack.c.b16 %v1075, %v1074
      %v1081 = vpack.c.b16 %v1077, %v1076
      %v1086 = vunpack.c.l.b16 %v1058
      %v1087 = vunpack.c.l.b16 %v1059
      %v1088 = vunpack.c.l.b16 %v1060
      %v1089 = vunpack.c.l.b16 %v1061
      %v1090 = vpack.c.b16 %v1087, %v1086
      %v1091 = vpack.c.b16 %v1089, %v1088
      %v1095 = vsel %vm338, %v1078, 0
      %v1098 = vsel %vm338, %v1079, 0
      %v1101 = vsel %vm338, %v1080, 0
      %v1104 = vsel %vm338, %v1081, 0
      %1106 = vmatprep.subr.bf16.mxu0 0
      %1107 = vmatpush1.bf16.msra.mxu0 %v1090
      %1108 = vmatprep.subr.bf16.mxu0 0
      %1109 = vmatpush1.bf16.msra.mxu0 %v1091
      %1110 = vmatprep.subr.bf16.mxu0 0
      %1111 = vmatpush1.bf16.msra.mxu0 0
      %1112 = vmatprep.subr.bf16.mxu0 0
      %1113 = vmatpush1.bf16.msra.mxu0 0
      %1114 = vmatprep.subr.bf16.mxu0 0
      %1115 = vmatpush1.bf16.msra.mxu0 0
      %1116 = vmatprep.subr.bf16.mxu0 0
      %1117 = vmatpush1.bf16.msra.mxu0 0
      %1118 = vmatprep.subr.bf16.mxu0 0
      %1119 = vmatpush1.bf16.msra.mxu0 0
      %1120 = vmatprep.subr.bf16.mxu0 0
      %1121 = vmatpush1.bf16.msra.mxu0 0
      %1122 = vmatprep.subr.bf16.mxu0 0
      %1123 = vmatpush1.bf16.msra.mxu0 0
      %1124 = vmatprep.subr.bf16.mxu0 0
      %1125 = vmatpush1.bf16.msra.mxu0 0
      %1126 = vmatprep.subr.bf16.mxu0 0
      %1127 = vmatpush1.bf16.msra.mxu0 0
      %1128 = vmatprep.subr.bf16.mxu0 0
      %1129 = vmatpush1.bf16.msra.mxu0 0
      %1130 = vmatprep.subr.bf16.mxu0 0
      %1131 = vmatpush1.bf16.msra.mxu0 0
      %1132 = vmatprep.subr.bf16.mxu0 0
      %1133 = vmatpush1.bf16.msra.mxu0 0
      %1134 = vmatprep.subr.bf16.mxu0 0
      %1135 = vmatpush1.bf16.msra.mxu0 0
      %1136 = vmatprep.subr.bf16.mxu0 0
      %1137 = vmatpush1.bf16.msra.mxu0 0
      %1138 = vmatprep.mubr.bf16.mxu0 0
      %1139 = vmatmul.mubr.bf16.gmra.mrb[0].mxu0 %v1095
      %v1140 = vpop.f32.mrb[0].mxu0
      %v1141 = vadd.f32 0.0, %v1140
      %v1142 = vpop.f32.mrb[0].mxu0
      %v1143 = vpop.f32.mrb[0].mxu0
      %v1144 = vadd.f32 0.0, %v1143
      %v1145 = vpop.f32.mrb[0].mxu0
      %1146 = vmatprep.mubr.bf16.mxu0 0
      %1147 = vmatmul.mubr.bf16.gmra.mrb[0].mxu0 %v1098
      %v1148 = vpop.f32.mrb[0].mxu0
      %v1149 = vadd.f32 0.0, %v1148
      %v1150 = vpop.f32.mrb[0].mxu0
      %v1151 = vpop.f32.mrb[0].mxu0
      %v1152 = vadd.f32 0.0, %v1151
      %v1153 = vpop.f32.mrb[0].mxu0
      %1154 = vmatprep.mubr.bf16.mxu0 0
      %1155 = vmatmul.mubr.bf16.gmra.mrb[0].mxu0 %v1101
      %v1156 = vpop.f32.mrb[0].mxu0
      %v1157 = vadd.f32 0.0, %v1156
      %v1158 = vpop.f32.mrb[0].mxu0
      %v1159 = vpop.f32.mrb[0].mxu0
      %v1160 = vadd.f32 0.0, %v1159
      %v1161 = vpop.f32.mrb[0].mxu0
      %1162 = vmatprep.mubr.bf16.mxu0 0
      %1163 = vmatmul.mubr.bf16.gmra.mrb[0].mxu0 %v1104
      %v1164 = vpop.f32.mrb[0].mxu0
      %v1165 = vadd.f32 0.0, %v1164
      %v1166 = vpop.f32.mrb[0].mxu0
      %v1167 = vpop.f32.mrb[0].mxu0
      %v1168 = vadd.f32 0.0, %v1167
      %v1169 = vpop.f32.mrb[0].mxu0
      %1170 = vdwg.mxu0
      %v1171 = vadd.f32 %v1041, %v1141
      %v1172 = vadd.f32 %v1042, %v1144
      %v1173 = vadd.f32 %v1043, %v1149
      %v1174 = vadd.f32 %v1044, %v1152
      %v1175 = vadd.f32 %v1045, %v1157
      %v1176 = vadd.f32 %v1046, %v1160
      %v1177 = vadd.f32 %v1047, %v1165
      %v1178 = vadd.f32 %v1048, %v1168
      %v1179 = vld [vmem:[%s292 + $0x4] sm:$0xf]
      %v1180 = vld [vmem:[%s292 + $0x8] sm:$0xf]
      %v1181 = vld [vmem:[%s292 + $0xc] sm:$0xf]
      %v1182 = vld [vmem:[%s292 + $0x10] sm:$0xf]
      %v1183 = vld [vmem:[%s292 + $0x14] sm:$0xf]
      %v1184 = vld [vmem:[%s292 + $0x18] sm:$0xf]
      %v1185 = vld [vmem:[%s292 + $0x1c] sm:$0xf]
      %v1186 = vld [vmem:[%s292 + $0x20] sm:$0xf]
      %s1187 = scalar_lea.vmem %s1, 112
      %v1188 = vld [vmem:[%s1187] sm:$0xf]
      %v1189 = vld [vmem:[%s1187 + $0x4] sm:$0xf]
      %v1190 = vld [vmem:[%s1187 + $0x8] sm:$0xf]
      %v1191 = vld [vmem:[%s1187 + $0xc] sm:$0xf]
      %v1200 = vunpack.c.l.b16 %v1179
      %v1201 = vunpack.c.l.b16 %v1180
      %v1202 = vunpack.c.l.b16 %v1181
      %v1203 = vunpack.c.l.b16 %v1182
      %v1204 = vunpack.c.l.b16 %v1183
      %v1205 = vunpack.c.l.b16 %v1184
      %v1206 = vunpack.c.l.b16 %v1185
      %v1207 = vunpack.c.l.b16 %v1186
      %v1208 = vpack.c.b16 %v1201, %v1200
      %v1209 = vpack.c.b16 %v1203, %v1202
      %v1210 = vpack.c.b16 %v1205, %v1204
      %v1211 = vpack.c.b16 %v1207, %v1206
      %v1216 = vunpack.c.l.b16 %v1188
      %v1217 = vunpack.c.l.b16 %v1189
      %v1218 = vunpack.c.l.b16 %v1190
      %v1219 = vunpack.c.l.b16 %v1191
      %v1220 = vpack.c.b16 %v1217, %v1216
      %v1221 = vpack.c.b16 %v1219, %v1218
      %v1225 = vsel %vm338, %v1208, 0
      %v1228 = vsel %vm338, %v1209, 0
      %v1231 = vsel %vm338, %v1210, 0
      %v1234 = vsel %vm338, %v1211, 0
      %1236 = vmatprep.subr.bf16.mxu0 0
      %1237 = vmatpush1.bf16.msra.mxu0 %v1220
      %1238 = vmatprep.subr.bf16.mxu0 0
      %1239 = vmatpush1.bf16.msra.mxu0 %v1221
      %1240 = vmatprep.subr.bf16.mxu0 0
      %1241 = vmatpush1.bf16.msra.mxu0 0
      %1242 = vmatprep.subr.bf16.mxu0 0
      %1243 = vmatpush1.bf16.msra.mxu0 0
      %1244 = vmatprep.subr.bf16.mxu0 0
      %1245 = vmatpush1.bf16.msra.mxu0 0
      %1246 = vmatprep.subr.bf16.mxu0 0
      %1247 = vmatpush1.bf16.msra.mxu0 0
      %1248 = vmatprep.subr.bf16.mxu0 0
      %1249 = vmatpush1.bf16.msra.mxu0 0
      %1250 = vmatprep.subr.bf16.mxu0 0
      %1251 = vmatpush1.bf16.msra.mxu0 0
      %1252 = vmatprep.subr.bf16.mxu0 0
      %1253 = vmatpush1.bf16.msra.mxu0 0
      %1254 = vmatprep.subr.bf16.mxu0 0
      %1255 = vmatpush1.bf16.msra.mxu0 0
      %1256 = vmatprep.subr.bf16.mxu0 0
      %1257 = vmatpush1.bf16.msra.mxu0 0
      %1258 = vmatprep.subr.bf16.mxu0 0
      %1259 = vmatpush1.bf16.msra.mxu0 0
      %1260 = vmatprep.subr.bf16.mxu0 0
      %1261 = vmatpush1.bf16.msra.mxu0 0
      %1262 = vmatprep.subr.bf16.mxu0 0
      %1263 = vmatpush1.bf16.msra.mxu0 0
      %1264 = vmatprep.subr.bf16.mxu0 0
      %1265 = vmatpush1.bf16.msra.mxu0 0
      %1266 = vmatprep.subr.bf16.mxu0 0
      %1267 = vmatpush1.bf16.msra.mxu0 0
      %1268 = vmatprep.mubr.bf16.mxu0 0
      %1269 = vmatmul.mubr.bf16.gmra.mrb[0].mxu0 %v1225
      %v1270 = vpop.f32.mrb[0].mxu0
      %v1271 = vadd.f32 0.0, %v1270
      %v1272 = vpop.f32.mrb[0].mxu0
      %v1273 = vpop.f32.mrb[0].mxu0
      %v1274 = vadd.f32 0.0, %v1273
      %v1275 = vpop.f32.mrb[0].mxu0
      %1276 = vmatprep.mubr.bf16.mxu0 0
      %1277 = vmatmul.mubr.bf16.gmra.mrb[0].mxu0 %v1228
      %v1278 = vpop.f32.mrb[0].mxu0
      %v1279 = vadd.f32 0.0, %v1278
      %v1280 = vpop.f32.mrb[0].mxu0
      %v1281 = vpop.f32.mrb[0].mxu0
      %v1282 = vadd.f32 0.0, %v1281
      %v1283 = vpop.f32.mrb[0].mxu0
      %1284 = vmatprep.mubr.bf16.mxu0 0
      %1285 = vmatmul.mubr.bf16.gmra.mrb[0].mxu0 %v1231
      %v1286 = vpop.f32.mrb[0].mxu0
      %v1287 = vadd.f32 0.0, %v1286
      %v1288 = vpop.f32.mrb[0].mxu0
      %v1289 = vpop.f32.mrb[0].mxu0
      %v1290 = vadd.f32 0.0, %v1289
      %v1291 = vpop.f32.mrb[0].mxu0
      %1292 = vmatprep.mubr.bf16.mxu0 0
      %1293 = vmatmul.mubr.bf16.gmra.mrb[0].mxu0 %v1234
      %v1294 = vpop.f32.mrb[0].mxu0
      %v1295 = vadd.f32 0.0, %v1294
      %v1296 = vpop.f32.mrb[0].mxu0
      %v1297 = vpop.f32.mrb[0].mxu0
      %v1298 = vadd.f32 0.0, %v1297
      %v1299 = vpop.f32.mrb[0].mxu0
      %1300 = vdwg.mxu0
      %v1301 = vadd.f32 %v1171, %v1271
      %v1302 = vadd.f32 %v1172, %v1274
      %v1303 = vadd.f32 %v1173, %v1279
      %v1304 = vadd.f32 %v1174, %v1282
      %v1305 = vadd.f32 %v1175, %v1287
      %v1306 = vadd.f32 %v1176, %v1290
      %v1307 = vadd.f32 %v1177, %v1295
      %v1308 = vadd.f32 %v1178, %v1298
      %v1309 = vld [vmem:[%s525 + $0x4] sm:$0xf]
      %v1310 = vld [vmem:[%s525 + $0x8] sm:$0xf]
      %v1311 = vld [vmem:[%s525 + $0xc] sm:$0xf]
      %v1312 = vld [vmem:[%s525 + $0x10] sm:$0xf]
      %v1313 = vld [vmem:[%s525 + $0x14] sm:$0xf]
      %v1314 = vld [vmem:[%s525 + $0x18] sm:$0xf]
      %v1315 = vld [vmem:[%s525 + $0x1c] sm:$0xf]
      %v1316 = vld [vmem:[%s525 + $0x20] sm:$0xf]
      %s1317 = scalar_lea.vmem %s1, 128
      %v1318 = vld [vmem:[%s1317] sm:$0xf]
      %v1319 = vld [vmem:[%s1317 + $0x4] sm:$0xf]
      %v1320 = vld [vmem:[%s1317 + $0x8] sm:$0xf]
      %v1321 = vld [vmem:[%s1317 + $0xc] sm:$0xf]
      %v1330 = vunpack.c.l.b16 %v1309
      %v1331 = vunpack.c.l.b16 %v1310
      %v1332 = vunpack.c.l.b16 %v1311
      %v1333 = vunpack.c.l.b16 %v1312
      %v1334 = vunpack.c.l.b16 %v1313
      %v1335 = vunpack.c.l.b16 %v1314
      %v1336 = vunpack.c.l.b16 %v1315
      %v1337 = vunpack.c.l.b16 %v1316
      %v1338 = vpack.c.b16 %v1331, %v1330
      %v1339 = vpack.c.b16 %v1333, %v1332
      %v1340 = vpack.c.b16 %v1335, %v1334
      %v1341 = vpack.c.b16 %v1337, %v1336
      %v1346 = vunpack.c.l.b16 %v1318
      %v1347 = vunpack.c.l.b16 %v1319
      %v1348 = vunpack.c.l.b16 %v1320
      %v1349 = vunpack.c.l.b16 %v1321
      %v1350 = vpack.c.b16 %v1347, %v1346
      %v1351 = vpack.c.b16 %v1349, %v1348
      %v1355 = vsel %vm338, %v1338, 0
      %v1358 = vsel %vm338, %v1339, 0
      %v1361 = vsel %vm338, %v1340, 0
      %v1364 = vsel %vm338, %v1341, 0
      %1366 = vmatprep.subr.bf16.mxu0 0
      %1367 = vmatpush1.bf16.msra.mxu0 %v1350
      %1368 = vmatprep.subr.bf16.mxu0 0
      %1369 = vmatpush1.bf16.msra.mxu0 %v1351
      %1370 = vmatprep.subr.bf16.mxu0 0
      %1371 = vmatpush1.bf16.msra.mxu0 0
      %1372 = vmatprep.subr.bf16.mxu0 0
      %1373 = vmatpush1.bf16.msra.mxu0 0
      %1374 = vmatprep.subr.bf16.mxu0 0
      %1375 = vmatpush1.bf16.msra.mxu0 0
      %1376 = vmatprep.subr.bf16.mxu0 0
      %1377 = vmatpush1.bf16.msra.mxu0 0
      %1378 = vmatprep.subr.bf16.mxu0 0
      %1379 = vmatpush1.bf16.msra.mxu0 0
      %1380 = vmatprep.subr.bf16.mxu0 0
      %1381 = vmatpush1.bf16.msra.mxu0 0
      %1382 = vmatprep.subr.bf16.mxu0 0
      %1383 = vmatpush1.bf16.msra.mxu0 0
      %1384 = vmatprep.subr.bf16.mxu0 0
      %1385 = vmatpush1.bf16.msra.mxu0 0
      %1386 = vmatprep.subr.bf16.mxu0 0
      %1387 = vmatpush1.bf16.msra.mxu0 0
      %1388 = vmatprep.subr.bf16.mxu0 0
      %1389 = vmatpush1.bf16.msra.mxu0 0
      %1390 = vmatprep.subr.bf16.mxu0 0
      %1391 = vmatpush1.bf16.msra.mxu0 0
      %1392 = vmatprep.subr.bf16.mxu0 0
      %1393 = vmatpush1.bf16.msra.mxu0 0
      %1394 = vmatprep.subr.bf16.mxu0 0
      %1395 = vmatpush1.bf16.msra.mxu0 0
      %1396 = vmatprep.subr.bf16.mxu0 0
      %1397 = vmatpush1.bf16.msra.mxu0 0
      %1398 = vmatprep.mubr.bf16.mxu0 0
      %1399 = vmatmul.mubr.bf16.gmra.mrb[0].mxu0 %v1355
      %v1400 = vpop.f32.mrb[0].mxu0
      %v1401 = vadd.f32 0.0, %v1400
      %v1402 = vpop.f32.mrb[0].mxu0
      %v1403 = vpop.f32.mrb[0].mxu0
      %v1404 = vadd.f32 0.0, %v1403
      %v1405 = vpop.f32.mrb[0].mxu0
      %1406 = vmatprep.mubr.bf16.mxu0 0
      %1407 = vmatmul.mubr.bf16.gmra.mrb[0].mxu0 %v1358
      %v1408 = vpop.f32.mrb[0].mxu0
      %v1409 = vadd.f32 0.0, %v1408
      %v1410 = vpop.f32.mrb[0].mxu0
      %v1411 = vpop.f32.mrb[0].mxu0
      %v1412 = vadd.f32 0.0, %v1411
      %v1413 = vpop.f32.mrb[0].mxu0
      %1414 = vmatprep.mubr.bf16.mxu0 0
      %1415 = vmatmul.mubr.bf16.gmra.mrb[0].mxu0 %v1361
      %v1416 = vpop.f32.mrb[0].mxu0
      %v1417 = vadd.f32 0.0, %v1416
      %v1418 = vpop.f32.mrb[0].mxu0
      %v1419 = vpop.f32.mrb[0].mxu0
      %v1420 = vadd.f32 0.0, %v1419
      %v1421 = vpop.f32.mrb[0].mxu0
      %1422 = vmatprep.mubr.bf16.mxu0 0
      %1423 = vmatmul.mubr.bf16.gmra.mrb[0].mxu0 %v1364
      %v1424 = vpop.f32.mrb[0].mxu0
      %v1425 = vadd.f32 0.0, %v1424
      %v1426 = vpop.f32.mrb[0].mxu0
      %v1427 = vpop.f32.mrb[0].mxu0
      %v1428 = vadd.f32 0.0, %v1427
      %v1429 = vpop.f32.mrb[0].mxu0
      %1430 = vdwg.mxu0
      %v1431 = vadd.f32 %v1301, %v1401
      %v1432 = vadd.f32 %v1302, %v1404
      %v1433 = vadd.f32 %v1303, %v1409
      %v1434 = vadd.f32 %v1304, %v1412
      %v1435 = vadd.f32 %v1305, %v1417
      %v1436 = vadd.f32 %v1306, %v1420
      %v1437 = vadd.f32 %v1307, %v1425
      %v1438 = vadd.f32 %v1308, %v1428
      %v1439 = vld [vmem:[%s2] sm:$0x1]
      %v1441 = vlaneseq
      %v1442 = vshrl.u32 %v1441, 7
      %v1443 = vsub.s32 0, %v1442
      %v1444 = vrot.slane %v1439, %v1443
      %v1446 = vadd.f32 %v1431, %v1444
      %v1447 = vadd.f32 %v1432, %v1444
      %v1448 = vadd.f32 %v1433, %v1444
      %v1449 = vadd.f32 %v1434, %v1444
      %v1450 = vadd.f32 %v1435, %v1444
      %v1451 = vadd.f32 %v1436, %v1444
      %v1452 = vadd.f32 %v1437, %v1444
      %v1453 = vadd.f32 %v1438, %v1444
      %v1454 = vld [vmem:[%s3] sm:$0x1]
      %v1455 = vld [vmem:[%s4] sm:$0x1]
      %v1456 = vld [vmem:[%s5] sm:$0xff]
      %v1457 = vld [vmem:[%s5 + $0x8] sm:$0xff]
      %v1458 = vld [vmem:[%s5 + $0x10] sm:$0xff]
      %v1459 = vld [vmem:[%s5 + $0x18] sm:$0xff]
      %v1460 = vld [vmem:[%s6] sm:$0xff]
      %v1461 = vld [vmem:[%s6 + $0x8] sm:$0xff]
      %v1462 = vsel %vm338, %v1446, 0.0
      %v1463 = vsel %vm338, %v1447, 0.0
      %v1464 = vadd.f32 %v1462, %v1463
      %v1465 = vsel %vm338, %v1448, 0.0
      %v1466 = vadd.f32 %v1464, %v1465
      %v1467 = vsel %vm338, %v1449, 0.0
      %v1468 = vadd.f32 %v1466, %v1467
      %v1469 = vsel %vm338, %v1450, 0.0
      %v1470 = vadd.f32 %v1468, %v1469
      %v1471 = vsel %vm338, %v1451, 0.0
      %v1472 = vadd.f32 %v1470, %v1471
      %v1473 = vsel %vm338, %v1452, 0.0
      %v1474 = vadd.f32 %v1472, %v1473
      %v1475 = vsel %vm338, %v1453, 0.0
      %v1476 = vadd.f32 %v1474, %v1475
      %v1477 = vrot.slane %v1476, 4
      %v1478 = vadd.f32 %v1476, %v1477
      %v1479 = vrot.slane %v1478, 2
      %v1480 = vadd.f32 %v1478, %v1479
      %v1481 = vrot.slane %v1480, 1
      %v1482 = vadd.f32 %v1480, %v1481
      %v1483 = vmul.f32 %v1446, %v1446
      %v1484 = vmul.f32 %v1447, %v1447
      %v1485 = vmul.f32 %v1448, %v1448
      %v1486 = vmul.f32 %v1449, %v1449
      %v1487 = vmul.f32 %v1450, %v1450
      %v1488 = vmul.f32 %v1451, %v1451
      %v1489 = vmul.f32 %v1452, %v1452
      %v1490 = vmul.f32 %v1453, %v1453
      %v1491 = vsel %vm338, %v1483, 0.0
      %v1492 = vsel %vm338, %v1484, 0.0
      %v1493 = vadd.f32 %v1491, %v1492
      %v1494 = vsel %vm338, %v1485, 0.0
      %v1495 = vadd.f32 %v1493, %v1494
      %v1496 = vsel %vm338, %v1486, 0.0
      %v1497 = vadd.f32 %v1495, %v1496
      %v1498 = vsel %vm338, %v1487, 0.0
      %v1499 = vadd.f32 %v1497, %v1498
      %v1500 = vsel %vm338, %v1488, 0.0
      %v1501 = vadd.f32 %v1499, %v1500
      %v1502 = vsel %vm338, %v1489, 0.0
      %v1503 = vadd.f32 %v1501, %v1502
      %v1504 = vsel %vm338, %v1490, 0.0
      %v1505 = vadd.f32 %v1503, %v1504
      %v1506 = vrot.slane %v1505, 4
      %v1507 = vadd.f32 %v1505, %v1506
      %v1508 = vrot.slane %v1507, 2
      %v1509 = vadd.f32 %v1507, %v1508
      %v1510 = vrot.slane %v1509, 1
      %v1511 = vadd.f32 %v1509, %v1510
      %v1513 = vsel %vm338, %v1482, 0
      %1515 = vmatprep.subr.mxu0 0.0
      %1516 = vmatpush1.msra.mxu0 %v1456
      %1517 = vmatprep.subr.mxu0 0.0
      %1518 = vmatpush1.msra.mxu0 %v1457
      %1519 = vmatprep.subr.mxu0 0.0
      %1520 = vmatpush1.msra.mxu0 %v1458
      %1521 = vmatprep.subr.mxu0 0.0
      %1522 = vmatpush1.msra.mxu0 %v1459
      %1523 = vmatprep.subr.mxu0 0.0
      %1524 = vmatpush1.msra.mxu0 0.0
      %1525 = vmatprep.subr.mxu0 0.0
      %1526 = vmatpush1.msra.mxu0 0.0
      %1527 = vmatprep.subr.mxu0 0.0
      %1528 = vmatpush1.msra.mxu0 0.0
      %1529 = vmatprep.subr.mxu0 0.0
      %1530 = vmatpush1.msra.mxu0 0.0
      %1531 = vmatprep.subr.mxu0 0.0
      %1532 = vmatpush1.msra.mxu0 0.0
      %1533 = vmatprep.subr.mxu0 0.0
      %1534 = vmatpush1.msra.mxu0 0.0
      %1535 = vmatprep.subr.mxu0 0.0
      %1536 = vmatpush1.msra.mxu0 0.0
      %1537 = vmatprep.subr.mxu0 0.0
      %1538 = vmatpush1.msra.mxu0 0.0
      %1539 = vmatprep.subr.mxu0 0.0
      %1540 = vmatpush1.msra.mxu0 0.0
      %1541 = vmatprep.subr.mxu0 0.0
      %1542 = vmatpush1.msra.mxu0 0.0
      %1543 = vmatprep.subr.mxu0 0.0
      %1544 = vmatpush1.msra.mxu0 0.0
      %1545 = vmatprep.subr.mxu0 0.0
      %1546 = vmatpush1.msra.mxu0 0.0
      %1547 = vmatprep.subr.mxu0 0.0
      %1548 = vmatpush1.msra.mxu0 0.0
      %1549 = vmatprep.subr.mxu0 0.0
      %1550 = vmatpush1.msra.mxu0 0.0
      %1551 = vmatprep.subr.mxu0 0.0
      %1552 = vmatpush1.msra.mxu0 0.0
      %1553 = vmatprep.subr.mxu0 0.0
      %1554 = vmatpush1.msra.mxu0 0.0
      %1555 = vmatprep.subr.mxu0 0.0
      %1556 = vmatpush1.msra.mxu0 0.0
      %1557 = vmatprep.subr.mxu0 0.0
      %1558 = vmatpush1.msra.mxu0 0.0
      %1559 = vmatprep.subr.mxu0 0.0
      %1560 = vmatpush1.msra.mxu0 0.0
      %1561 = vmatprep.subr.mxu0 0.0
      %1562 = vmatpush1.msra.mxu0 0.0
      %1563 = vmatprep.subr.mxu0 0.0
      %1564 = vmatpush1.msra.mxu0 0.0
      %1565 = vmatprep.subr.mxu0 0.0
      %1566 = vmatpush1.msra.mxu0 0.0
      %1567 = vmatprep.subr.mxu0 0.0
      %1568 = vmatpush1.msra.mxu0 0.0
      %1569 = vmatprep.subr.mxu0 0.0
      %1570 = vmatpush1.msra.mxu0 0.0
      %1571 = vmatprep.subr.mxu0 0.0
      %1572 = vmatpush1.msra.mxu0 0.0
      %1573 = vmatprep.subr.mxu0 0.0
      %1574 = vmatpush1.msra.mxu0 0.0
      %1575 = vmatprep.subr.mxu0 0.0
      %1576 = vmatpush1.msra.mxu0 0.0
      %1577 = vmatprep.subr.mxu0 0.0
      %1578 = vmatpush1.msra.mxu0 0.0
      %1579 = vmatprep.mubr.f32.mxu0 0.0
      %1580 = vmatmul.mubr.f32.gmra.mrb[0].mxu0 %v1513
      %v1581 = vpop.f32.mrb[0].mxu0
      %v1582 = vadd.f32 0.0, %v1581
      %v1583 = vpop.f32.mrb[0].mxu0
      %1584 = vdwg.mxu0
      %v1586 = vsel %vm338, %v1511, 0
      %1588 = vmatprep.subr.mxu0 0.0
      %1589 = vmatpush1.msra.mxu0 %v1456
      %1590 = vmatprep.subr.mxu0 0.0
      %1591 = vmatpush1.msra.mxu0 %v1457
      %1592 = vmatprep.subr.mxu0 0.0
      %1593 = vmatpush1.msra.mxu0 %v1458
      %1594 = vmatprep.subr.mxu0 0.0
      %1595 = vmatpush1.msra.mxu0 %v1459
      %1596 = vmatprep.subr.mxu0 0.0
      %1597 = vmatpush1.msra.mxu0 0.0
      %1598 = vmatprep.subr.mxu0 0.0
      %1599 = vmatpush1.msra.mxu0 0.0
      %1600 = vmatprep.subr.mxu0 0.0
      %1601 = vmatpush1.msra.mxu0 0.0
      %1602 = vmatprep.subr.mxu0 0.0
      %1603 = vmatpush1.msra.mxu0 0.0
      %1604 = vmatprep.subr.mxu0 0.0
      %1605 = vmatpush1.msra.mxu0 0.0
      %1606 = vmatprep.subr.mxu0 0.0
      %1607 = vmatpush1.msra.mxu0 0.0
      %1608 = vmatprep.subr.mxu0 0.0
      %1609 = vmatpush1.msra.mxu0 0.0
      %1610 = vmatprep.subr.mxu0 0.0
      %1611 = vmatpush1.msra.mxu0 0.0
      %1612 = vmatprep.subr.mxu0 0.0
      %1613 = vmatpush1.msra.mxu0 0.0
      %1614 = vmatprep.subr.mxu0 0.0
      %1615 = vmatpush1.msra.mxu0 0.0
      %1616 = vmatprep.subr.mxu0 0.0
      %1617 = vmatpush1.msra.mxu0 0.0
      %1618 = vmatprep.subr.mxu0 0.0
      %1619 = vmatpush1.msra.mxu0 0.0
      %1620 = vmatprep.subr.mxu0 0.0
      %1621 = vmatpush1.msra.mxu0 0.0
      %1622 = vmatprep.subr.mxu0 0.0
      %1623 = vmatpush1.msra.mxu0 0.0
      %1624 = vmatprep.subr.mxu0 0.0
      %1625 = vmatpush1.msra.mxu0 0.0
      %1626 = vmatprep.subr.mxu0 0.0
      %1627 = vmatpush1.msra.mxu0 0.0
      %1628 = vmatprep.subr.mxu0 0.0
      %1629 = vmatpush1.msra.mxu0 0.0
      %1630 = vmatprep.subr.mxu0 0.0
      %1631 = vmatpush1.msra.mxu0 0.0
      %1632 = vmatprep.subr.mxu0 0.0
      %1633 = vmatpush1.msra.mxu0 0.0
      %1634 = vmatprep.subr.mxu0 0.0
      %1635 = vmatpush1.msra.mxu0 0.0
      %1636 = vmatprep.subr.mxu0 0.0
      %1637 = vmatpush1.msra.mxu0 0.0
      %1638 = vmatprep.subr.mxu0 0.0
      %1639 = vmatpush1.msra.mxu0 0.0
      %1640 = vmatprep.subr.mxu0 0.0
      %1641 = vmatpush1.msra.mxu0 0.0
      %1642 = vmatprep.subr.mxu0 0.0
      %1643 = vmatpush1.msra.mxu0 0.0
      %1644 = vmatprep.subr.mxu0 0.0
      %1645 = vmatpush1.msra.mxu0 0.0
      %1646 = vmatprep.subr.mxu0 0.0
      %1647 = vmatpush1.msra.mxu0 0.0
      %1648 = vmatprep.subr.mxu0 0.0
      %1649 = vmatpush1.msra.mxu0 0.0
      %1650 = vmatprep.subr.mxu0 0.0
      %1651 = vmatpush1.msra.mxu0 0.0
      %1652 = vmatprep.mubr.f32.mxu0 0.0
      %1653 = vmatmul.mubr.f32.gmra.mrb[0].mxu0 %v1586
      %v1654 = vpop.f32.mrb[0].mxu0
      %v1655 = vadd.f32 0.0, %v1654
      %v1656 = vpop.f32.mrb[0].mxu0
      %1657 = vdwg.mxu0
      %vm1658 = vcmask 130048
      %v1660 = vsel %vm1658, %v1582, 0
      %1662 = vmatprep.subr.mxu0 0.0
      %1663 = vmatpush1.msra.mxu0 %v1460
      %1664 = vmatprep.subr.mxu0 0.0
      %1665 = vmatpush1.msra.mxu0 %v1461
      %1666 = vmatprep.subr.mxu0 0.0
      %1667 = vmatpush1.msra.mxu0 0.0
      %1668 = vmatprep.subr.mxu0 0.0
      %1669 = vmatpush1.msra.mxu0 0.0
      %1670 = vmatprep.subr.mxu0 0.0
      %1671 = vmatpush1.msra.mxu0 0.0
      %1672 = vmatprep.subr.mxu0 0.0
      %1673 = vmatpush1.msra.mxu0 0.0
      %1674 = vmatprep.subr.mxu0 0.0
      %1675 = vmatpush1.msra.mxu0 0.0
      %1676 = vmatprep.subr.mxu0 0.0
      %1677 = vmatpush1.msra.mxu0 0.0
      %1678 = vmatprep.subr.mxu0 0.0
      %1679 = vmatpush1.msra.mxu0 0.0
      %1680 = vmatprep.subr.mxu0 0.0
      %1681 = vmatpush1.msra.mxu0 0.0
      %1682 = vmatprep.subr.mxu0 0.0
      %1683 = vmatpush1.msra.mxu0 0.0
      %1684 = vmatprep.subr.mxu0 0.0
      %1685 = vmatpush1.msra.mxu0 0.0
      %1686 = vmatprep.subr.mxu0 0.0
      %1687 = vmatpush1.msra.mxu0 0.0
      %1688 = vmatprep.subr.mxu0 0.0
      %1689 = vmatpush1.msra.mxu0 0.0
      %1690 = vmatprep.subr.mxu0 0.0
      %1691 = vmatpush1.msra.mxu0 0.0
      %1692 = vmatprep.subr.mxu0 0.0
      %1693 = vmatpush1.msra.mxu0 0.0
      %1694 = vmatprep.subr.mxu0 0.0
      %1695 = vmatpush1.msra.mxu0 0.0
      %1696 = vmatprep.subr.mxu0 0.0
      %1697 = vmatpush1.msra.mxu0 0.0
      %1698 = vmatprep.subr.mxu0 0.0
      %1699 = vmatpush1.msra.mxu0 0.0
      %1700 = vmatprep.subr.mxu0 0.0
      %1701 = vmatpush1.msra.mxu0 0.0
      %1702 = vmatprep.subr.mxu0 0.0
      %1703 = vmatpush1.msra.mxu0 0.0
      %1704 = vmatprep.subr.mxu0 0.0
      %1705 = vmatpush1.msra.mxu0 0.0
      %1706 = vmatprep.subr.mxu0 0.0
      %1707 = vmatpush1.msra.mxu0 0.0
      %1708 = vmatprep.subr.mxu0 0.0
      %1709 = vmatpush1.msra.mxu0 0.0
      %1710 = vmatprep.subr.mxu0 0.0
      %1711 = vmatpush1.msra.mxu0 0.0
      %1712 = vmatprep.subr.mxu0 0.0
      %1713 = vmatpush1.msra.mxu0 0.0
      %1714 = vmatprep.subr.mxu0 0.0
      %1715 = vmatpush1.msra.mxu0 0.0
      %1716 = vmatprep.subr.mxu0 0.0
      %1717 = vmatpush1.msra.mxu0 0.0
      %1718 = vmatprep.subr.mxu0 0.0
      %1719 = vmatpush1.msra.mxu0 0.0
      %1720 = vmatprep.subr.mxu0 0.0
      %1721 = vmatpush1.msra.mxu0 0.0
      %1722 = vmatprep.subr.mxu0 0.0
      %1723 = vmatpush1.msra.mxu0 0.0
      %1724 = vmatprep.subr.mxu0 0.0
      %1725 = vmatpush1.msra.mxu0 0.0
      %1726 = vmatprep.mubr.f32.mxu0 0.0
      %1727 = vmatmul.mubr.f32.gmra.mrb[0].mxu0 %v1660
      %v1728 = vpop.f32.mrb[0].mxu0
      %v1729 = vadd.f32 0.0, %v1728
      %v1730 = vpop.f32.mrb[0].mxu0
      %1731 = vdwg.mxu0
      %v1733 = vsel %vm1658, %v1655, 0
      %1735 = vmatprep.subr.mxu0 0.0
      %1736 = vmatpush1.msra.mxu0 %v1460
      %1737 = vmatprep.subr.mxu0 0.0
      %1738 = vmatpush1.msra.mxu0 %v1461
      %1739 = vmatprep.subr.mxu0 0.0
      %1740 = vmatpush1.msra.mxu0 0.0
      %1741 = vmatprep.subr.mxu0 0.0
      %1742 = vmatpush1.msra.mxu0 0.0
      %1743 = vmatprep.subr.mxu0 0.0
      %1744 = vmatpush1.msra.mxu0 0.0
      %1745 = vmatprep.subr.mxu0 0.0
      %1746 = vmatpush1.msra.mxu0 0.0
      %1747 = vmatprep.subr.mxu0 0.0
      %1748 = vmatpush1.msra.mxu0 0.0
      %1749 = vmatprep.subr.mxu0 0.0
      %1750 = vmatpush1.msra.mxu0 0.0
      %1751 = vmatprep.subr.mxu0 0.0
      %1752 = vmatpush1.msra.mxu0 0.0
      %1753 = vmatprep.subr.mxu0 0.0
      %1754 = vmatpush1.msra.mxu0 0.0
      %1755 = vmatprep.subr.mxu0 0.0
      %1756 = vmatpush1.msra.mxu0 0.0
      %1757 = vmatprep.subr.mxu0 0.0
      %1758 = vmatpush1.msra.mxu0 0.0
      %1759 = vmatprep.subr.mxu0 0.0
      %1760 = vmatpush1.msra.mxu0 0.0
      %1761 = vmatprep.subr.mxu0 0.0
      %1762 = vmatpush1.msra.mxu0 0.0
      %1763 = vmatprep.subr.mxu0 0.0
      %1764 = vmatpush1.msra.mxu0 0.0
      %1765 = vmatprep.subr.mxu0 0.0
      %1766 = vmatpush1.msra.mxu0 0.0
      %1767 = vmatprep.subr.mxu0 0.0
      %1768 = vmatpush1.msra.mxu0 0.0
      %1769 = vmatprep.subr.mxu0 0.0
      %1770 = vmatpush1.msra.mxu0 0.0
      %1771 = vmatprep.subr.mxu0 0.0
      %1772 = vmatpush1.msra.mxu0 0.0
      %1773 = vmatprep.subr.mxu0 0.0
      %1774 = vmatpush1.msra.mxu0 0.0
      %1775 = vmatprep.subr.mxu0 0.0
      %1776 = vmatpush1.msra.mxu0 0.0
      %1777 = vmatprep.subr.mxu0 0.0
      %1778 = vmatpush1.msra.mxu0 0.0
      %1779 = vmatprep.subr.mxu0 0.0
      %1780 = vmatpush1.msra.mxu0 0.0
      %1781 = vmatprep.subr.mxu0 0.0
      %1782 = vmatpush1.msra.mxu0 0.0
      %1783 = vmatprep.subr.mxu0 0.0
      %1784 = vmatpush1.msra.mxu0 0.0
      %1785 = vmatprep.subr.mxu0 0.0
      %1786 = vmatpush1.msra.mxu0 0.0
      %1787 = vmatprep.subr.mxu0 0.0
      %1788 = vmatpush1.msra.mxu0 0.0
      %1789 = vmatprep.subr.mxu0 0.0
      %1790 = vmatpush1.msra.mxu0 0.0
      %1791 = vmatprep.subr.mxu0 0.0
      %1792 = vmatpush1.msra.mxu0 0.0
      %1793 = vmatprep.subr.mxu0 0.0
      %1794 = vmatpush1.msra.mxu0 0.0
      %1795 = vmatprep.subr.mxu0 0.0
      %1796 = vmatpush1.msra.mxu0 0.0
      %1797 = vmatprep.subr.mxu0 0.0
      %1798 = vmatpush1.msra.mxu0 0.0
      %1799 = vmatprep.mubr.f32.mxu0 0.0
      %1800 = vmatmul.mubr.f32.gmra.mrb[0].mxu0 %v1733
      %v1801 = vpop.f32.mrb[0].mxu0
      %v1802 = vadd.f32 0.0, %v1801
      %v1803 = vpop.f32.mrb[0].mxu0
      %1804 = vdwg.mxu0
      %v1805 = vmul.f32 %v1729, %v1729
      %v1806 = vsub.f32 %v1802, %v1805
      %v1807 = vadd.f32 %v1806, 1e-05
      %v1808 = vrsqrt.pop %v1807
      %v1809 = vmul.f32 %v1808, %v1454
      %v1810 = vmul.f32 %v1729, %v1809
      %v1811 = vsub.f32 %v1455, %v1810
      %v1812 = vlaneseq
      %v1813 = vshrl.u32 %v1812, 7
      %v1814 = vsub.s32 0, %v1813
      %v1815 = vrot.slane %v1809, %v1814
      %v1816 = vmul.f32 %v1446, %v1815
      %v1817 = vmul.f32 %v1447, %v1815
      %v1818 = vmul.f32 %v1448, %v1815
      %v1819 = vmul.f32 %v1449, %v1815
      %v1820 = vmul.f32 %v1450, %v1815
      %v1821 = vmul.f32 %v1451, %v1815
      %v1822 = vmul.f32 %v1452, %v1815
      %v1823 = vmul.f32 %v1453, %v1815
      %v1825 = vlaneseq
      %v1826 = vshrl.u32 %v1825, 7
      %v1827 = vsub.s32 0, %v1826
      %v1828 = vrot.slane %v1811, %v1827
      %v1830 = vadd.f32 %v1816, %v1828
      %v1831 = vadd.f32 %v1817, %v1828
      %v1832 = vadd.f32 %v1818, %v1828
      %v1833 = vadd.f32 %v1819, %v1828
      %v1834 = vadd.f32 %v1820, %v1828
      %v1835 = vadd.f32 %v1821, %v1828
      %v1836 = vadd.f32 %v1822, %v1828
      %v1837 = vadd.f32 %v1823, %v1828
      %v1838 = vmax.f32 %v1830, 0.0
      %v1839 = vmax.f32 %v1831, 0.0
      %v1840 = vmax.f32 %v1832, 0.0
      %v1841 = vmax.f32 %v1833, 0.0
      %v1842 = vmax.f32 %v1834, 0.0
      %v1843 = vmax.f32 %v1835, 0.0
      %v1844 = vmax.f32 %v1836, 0.0
      %v1845 = vmax.f32 %v1837, 0.0
      %1846 = vst.msk [vmem:[%s278] sm:$0xff] %vm338, %v1838
      %1847 = vst.msk [vmem:[%s278 + $0x8] sm:$0xff] %vm338, %v1839
      %1848 = vst.msk [vmem:[%s278 + $0x10] sm:$0xff] %vm338, %v1840
      %1849 = vst.msk [vmem:[%s278 + $0x18] sm:$0xff] %vm338, %v1841
      %1850 = vst.msk [vmem:[%s278 + $0x20] sm:$0xff] %vm338, %v1842
      %1851 = vst.msk [vmem:[%s278 + $0x28] sm:$0xff] %vm338, %v1843
      %1852 = vst.msk [vmem:[%s278 + $0x30] sm:$0xff] %vm338, %v1844
      %1853 = vst.msk [vmem:[%s278 + $0x38] sm:$0xff] %vm338, %v1845
      %p1854 = scmp.lt.s32.totalorder %s18, 1
      %s1855 = scalar_select %p1854, %s18, 1
      %s1856 = smul.addr %s1855, 8
      %s1857 = smul.addr %s1856, 8
      %s1858 = scalar_lea.vmem %s7, %s1857
      // Predicated region
      $region49: #{eco_depth_encoder_forward.8} parent=47 // pred_check
        %p1859 = pneg %p188
      $region50: #{eco_depth_encoder_forward.8} parent=47 // pred_check_branch
        %1861 = sbr.rel (%p1859) target = $region52
      $region51: #{eco_depth_encoder_forward.8} parent=47 // pred_region
        _
      $region52: #{eco_depth_encoder_forward.8} parent=47 // pred_fallthru
        _
    $region48: #{eco_depth_encoder_forward.8} parent=5 // pred_fallthru
      _
    %p1862 = scmp.le.s32.totalorder 2, %s13
    // Predicated region
    $region53: #{eco_depth_encoder_forward.8} parent=5 // pred_check
      %p1863 = pneg %p1862
    $region54: #{eco_depth_encoder_forward.8} parent=5 // pred_check_branch
      %1865 = sbr.rel (%p1863) target = $region56
    $region55: #{eco_depth_encoder_forward.8} parent=5 // pred_region
      %s1866 = ssub.s32 %s13, 2
      // Predicated region
      $region57: #{eco_depth_encoder_forward.8} parent=55 // pred_check
        %p1867 = pneg %p194
      $region58: #{eco_depth_encoder_forward.8} parent=55 // pred_check_branch
        %1869 = sbr.rel (%p1867) target = $region60
      $region59: #{eco_depth_encoder_forward.8} parent=55 // pred_region
        %p1870 = scmp.lt.s32.totalorder %s19, 1
        %s1871 = scalar_select %p1870, %s19, 1
        %s1872 = smul.addr %s1871, 8
        %s1873 = smul.addr %s1872, 8
        %s1874 = scalar_lea.vmem %s7, %s1873
      $region60: #{eco_depth_encoder_forward.8} parent=55 // pred_fallthru
        _
    $region56: #{eco_depth_encoder_forward.8} parent=5 // pred_fallthru
      _
  $region6: #{eco_depth_encoder_forward.8} parent=0 // loop_footer
    %s17 = sadd.s32 1, %s13
  $region7: #{eco_depth_encoder_forward.8} parent=0 // loop_footer_branch
    %12 = sbr.rel target = $region3
  $region8: #{eco_depth_encoder_forward.8} parent=0 // loop_exit
    _

// kernel: eco_depth_encoder_forward.10
$region0: #{eco_depth_encoder_forward.10}
  #allocation0 [shape = 'u32[]', space=smem, size = 0x4, offset = 0x4, fixed_abs, tag = 'smem constant byte address 0x4 - core index']
  #allocation1 [shape = 'u32[144,128]{1,0:T(1,128)}', space=vmem, size = 0x12000, scoped, tag = 'internal scratch']
  %s0 = inlined_call_operand.vmem [shape: bf16[2,3,2,20,64], index: 0, kind: input, shape index: {}]
  %s1 = inlined_call_operand.vmem [shape: bf16[3,3,64,64], index: 1, kind: input, shape index: {}]
  %s2 = inlined_call_operand.vmem [shape: f32[1,64], index: 2, kind: input, shape index: {}]
  %s3 = inlined_call_operand.vmem [shape: f32[2,16,64], index: 3, kind: output, shape index: {}]
  %s4 = sld [smem:[#allocation0]]
  $region45: #{eco_depth_encoder_forward.10} parent=0
    _
  %s6 = ssub.s32 1, %s4
  %s7 = scalar_select 0, %s6, %s4
  loop: start=0, step=1, limit=4
  $region2: #{eco_depth_encoder_forward.10} parent=0 // loop_pre_header
    _
  $region3: #{eco_depth_encoder_forward.10} parent=0 // loop_header
    %s9 = sphi 0, %s13
    %p10 = scmp.ge.s32.totalorder %s9, 4
    %s19 = sphi 0, %s21
    %s22 = sphi 0, %s19
    %s23 = sphi 0, %s22
    %s39 = sphi 0, %s23
    %s43 = sphi 0, %s43
    %s45 = sphi 0, %s43
    %s46 = sphi 0, %s45
    %s60 = sphi 0, %s46
    %s64 = sphi 0, %s64
    %s66 = sphi 0, %s64
    %s67 = sphi 0, %s66
    %s81 = sphi 0, %s67
    %s87 = sphi 0, %s89
    %s90 = sphi 0, %s87
    %s91 = sphi 0, %s90
    %s107 = sphi 0, %s91
  $region4: #{eco_depth_encoder_forward.10} parent=0 // loop_header_branch
    %12 = sbr.rel (%p10) target = $region8
  $region5: #{eco_depth_encoder_forward.10} parent=0 // loop_body
    %s14 = ssub.s32 %s9, 1
    %s15 = ssub.s32 %s9, 2
    %s16 = sadd.s32 %s9, 1
    %s17 = ssub.s32 %s9, %s16
    %p18 = scmp.eq.s32.totalorder %s17, 0
    %s20 = sadd.s32 %s19, 1
    %s21 = scalar_select %p18, %s19, %s20
    %p24 = pneg %p18
    %p25 = scmp.eq.s32.totalorder %s9, 1
    %p26 = por %p24, %p25
    %p27 = scmp.ne.s32.totalorder %s19, %s22
    %p28 = scmp.eq.s32.totalorder %s9, 0
    %p29 = por %p27, %p28
    %p30 = scmp.ne.s32.totalorder %s19, %s22
    %p31 = scmp.eq.s32.totalorder %s14, 1
    %p32 = por %p30, %p31
    %p33 = scmp.ne.s32.totalorder %s22, %s23
    %p34 = scmp.eq.s32.totalorder %s14, 0
    %p35 = por %p33, %p34
    %p36 = scmp.ne.s32.totalorder %s22, %s23
    %p37 = scmp.eq.s32.totalorder %s15, 1
    %p38 = por %p36, %p37
    %p40 = scmp.ne.s32.totalorder %s23, %s39
    %p41 = scmp.eq.s32.totalorder %s15, 0
    %p42 = por %p40, %p41
    %s44 = sadd.s32 %s43, 1
    %p47 = scmp.eq.s32.totalorder %s9, 1
    %p48 = scmp.ne.s32.totalorder %s43, %s45
    %p49 = scmp.eq.s32.totalorder %s9, 0
    %p50 = por %p48, %p49
    %p51 = scmp.ne.s32.totalorder %s43, %s45
    %p52 = scmp.eq.s32.totalorder %s14, 1
    %p53 = por %p51, %p52
    %p54 = scmp.ne.s32.totalorder %s45, %s46
    %p55 = scmp.eq.s32.totalorder %s14, 0
    %p56 = por %p54, %p55
    %p57 = scmp.ne.s32.totalorder %s45, %s46
    %p58 = scmp.eq.s32.totalorder %s15, 1
    %p59 = por %p57, %p58
    %p61 = scmp.ne.s32.totalorder %s46, %s60
    %p62 = scmp.eq.s32.totalorder %s15, 0
    %p63 = por %p61, %p62
    %s65 = sadd.s32 %s64, 1
    %p68 = scmp.eq.s32.totalorder %s9, 1
    %p69 = scmp.ne.s32.totalorder %s64, %s66
    %p70 = scmp.eq.s32.totalorder %s9, 0
    %p71 = por %p69, %p70
    %p72 = scmp.ne.s32.totalorder %s64, %s66
    %p73 = scmp.eq.s32.totalorder %s14, 1
    %p74 = por %p72, %p73
    %p75 = scmp.ne.s32.totalorder %s66, %s67
    %p76 = scmp.eq.s32.totalorder %s14, 0
    %p77 = por %p75, %p76
    %p78 = scmp.ne.s32.totalorder %s66, %s67
    %p79 = scmp.eq.s32.totalorder %s15, 1
    %p80 = por %p78, %p79
    %p82 = scmp.ne.s32.totalorder %s67, %s81
    %p83 = scmp.eq.s32.totalorder %s15, 0
    %p84 = por %p82, %p83
    %s85 = ssub.s32 %s9, %s16
    %p86 = scmp.eq.s32.totalorder %s85, 0
    %s88 = sadd.s32 %s87, 1
    %s89 = scalar_select %p86, %s87, %s88
    %p92 = pneg %p86
    %p93 = scmp.eq.s32.totalorder %s9, 1
    %p94 = por %p92, %p93
    %p95 = scmp.ne.s32.totalorder %s87, %s90
    %p96 = scmp.eq.s32.totalorder %s9, 0
    %p97 = por %p95, %p96
    %p98 = scmp.ne.s32.totalorder %s87, %s90
    %p99 = scmp.eq.s32.totalorder %s14, 1
    %p100 = por %p98, %p99
    %p101 = scmp.ne.s32.totalorder %s90, %s91
    %p102 = scmp.eq.s32.totalorder %s14, 0
    %p103 = por %p101, %p102
    %p104 = scmp.ne.s32.totalorder %s90, %s91
    %p105 = scmp.eq.s32.totalorder %s15, 1
    %p106 = por %p104, %p105
    %p108 = scmp.ne.s32.totalorder %s91, %s107
    %p109 = scmp.eq.s32.totalorder %s15, 0
    %p110 = por %p108, %p109
    %p111 = scmp.le.s32.totalorder 1, %s9
    %p112 = scmp.lt.s32.totalorder %s9, 3
    %p113 = pnand %p111, %p112
    %p114 = pneg %p113
    // Predicated region
    $region9: #{eco_depth_encoder_forward.10} parent=5 // pred_check
      _
    $region10: #{eco_depth_encoder_forward.10} parent=5 // pred_check_branch
      %116 = sbr.rel (%p113) target = $region12
    $region11: #{eco_depth_encoder_forward.10} parent=5 // pred_region
      %s117 = ssub.s32 %s9, 1
      // Predicated region
      $region13: #{eco_depth_encoder_forward.10} parent=11 // pred_check
        %p118 = pneg %p56
      $region14: #{eco_depth_encoder_forward.10} parent=11 // pred_check_branch
        %120 = sbr.rel (%p118) target = $region16
      $region15: #{eco_depth_encoder_forward.10} parent=11 // pred_region
        _
      $region16: #{eco_depth_encoder_forward.10} parent=11 // pred_fallthru
        _
      // Predicated region
      $region17: #{eco_depth_encoder_forward.10} parent=11 // pred_check
        %p121 = pneg %p77
      $region18: #{eco_depth_encoder_forward.10} parent=11 // pred_check_branch
        %123 = sbr.rel (%p121) target = $region20
      $region19: #{eco_depth_encoder_forward.10} parent=11 // pred_region
        _
      $region20: #{eco_depth_encoder_forward.10} parent=11 // pred_fallthru
        _
    $region12: #{eco_depth_encoder_forward.10} parent=5 // pred_fallthru
      _
    %p124 = scmp.lt.s32.totalorder %s9, 2
    // Predicated region
    $region21: #{eco_depth_encoder_forward.10} parent=5 // pred_check
      %p125 = pneg %p124
    $region22: #{eco_depth_encoder_forward.10} parent=5 // pred_check_branch
      %127 = sbr.rel (%p125) target = $region24
    $region23: #{eco_depth_encoder_forward.10} parent=5 // pred_region
      // Predicated region
      $region25: #{eco_depth_encoder_forward.10} parent=23 // pred_check
        %p128 = pneg %p29
      $region26: #{eco_depth_encoder_forward.10} parent=23 // pred_check_branch
        %130 = sbr.rel (%p128) target = $region28
      $region27: #{eco_depth_encoder_forward.10} parent=23 // pred_region
        %p131 = scmp.lt.s32.totalorder %s9, 1
        %s132 = scalar_select %p131, %s9, 1
        %s133 = smul.addr %s132, 18
        %s134 = smul.addr %s133, 4
        %s135 = scalar_lea.vmem %s0, %s134
      $region28: #{eco_depth_encoder_forward.10} parent=23 // pred_fallthru
        _
    $region24: #{eco_depth_encoder_forward.10} parent=5 // pred_fallthru
      _
    %p136 = scmp.le.s32.totalorder 1, %s9
    %p137 = scmp.lt.s32.totalorder %s9, 3
    %p138 = pnand %p136, %p137
    %p139 = pneg %p138
    // Predicated region
    $region29: #{eco_depth_encoder_forward.10} parent=5 // pred_check
      _
    $region30: #{eco_depth_encoder_forward.10} parent=5 // pred_check_branch
      %141 = sbr.rel (%p138) target = $region32
    $region31: #{eco_depth_encoder_forward.10} parent=5 // pred_region
      %s142 = ssub.s32 %s9, 1
      %p143 = scmp.lt.s32.totalorder %s14, 1
      %s144 = scalar_select %p143, %s14, 1
      %s145 = smul.addr %s144, 18
      %s146 = smul.addr %s145, 4
      %s147 = scalar_lea.vmem %s0, %s146
      %p148 = pneg %p35
      %p149 = pneg %p32
      %p150 = pneg %p56
      %p151 = pneg %p53
      %p152 = pneg %p77
      %p153 = pneg %p74
      %p154 = pneg %p103
      %p155 = pneg %p100
      %p156 = scmp.lt.s32.totalorder %s14, 1
      %s157 = scalar_select %p156, %s14, 1
      %s158 = smul.addr %s157, 2
      %s159 = smul.addr %s158, 8
      %s160 = scalar_lea.vmem %s3, %s159
      %p161 = scmp.lt.s32.totalorder %s14, 1
      %s162 = scalar_select %p161, %s14, 1
      %s163 = smul.addr %s162, 18
      %s164 = smul.addr %s163, 4
      %s165 = scalar_lea.vmem %s0, %s164
      %p166 = scmp.lt.s32.totalorder %s14, 1
      %s167 = scalar_select %p166, %s14, 1
      %s168 = smul.addr %s167, 2
      %s169 = smul.addr %s168, 8
      %s170 = scalar_lea.vmem %s3, %s169
      %v172 = vld [vmem:[%s165] sm:$0xf]
      %v173 = vld [vmem:[%s165 + $0x4] sm:$0xf]
      %v174 = vld [vmem:[%s1] sm:$0xf]
      %v175 = vld [vmem:[%s1 + $0x4] sm:$0xf]
      %v176 = vld [vmem:[%s1 + $0x8] sm:$0xf]
      %v177 = vld [vmem:[%s1 + $0xc] sm:$0xf]
      %v178 = vld [vmem:[%s1 + $0x10] sm:$0xf]
      %v179 = vld [vmem:[%s1 + $0x14] sm:$0xf]
      %v180 = vld [vmem:[%s1 + $0x18] sm:$0xf]
      %v181 = vld [vmem:[%s1 + $0x1c] sm:$0xf]
      %s182 = scalar_lea.vmem %s165, 24
      %v183 = vld [vmem:[%s182] sm:$0xf]
      %v184 = vld [vmem:[%s182 + $0x4] sm:$0xf]
      %s185 = scalar_lea.vmem %s1, 32
      %v186 = vld [vmem:[%s185] sm:$0xf]
      %v187 = vld [vmem:[%s185 + $0x4] sm:$0xf]
      %v188 = vld [vmem:[%s185 + $0x8] sm:$0xf]
      %v189 = vld [vmem:[%s185 + $0xc] sm:$0xf]
      %v190 = vld [vmem:[%s185 + $0x10] sm:$0xf]
      %v191 = vld [vmem:[%s185 + $0x14] sm:$0xf]
      %v192 = vld [vmem:[%s185 + $0x18] sm:$0xf]
      %v193 = vld [vmem:[%s185 + $0x1c] sm:$0xf]
      %v196 = vunpack.c.l.b16 %v183
      %v197 = vunpack.c.l.b16 %v184
      %v198 = vpack.c.b16 %v197, %v196
      %v207 = vunpack.c.l.b16 %v186
      %v208 = vunpack.c.l.b16 %v187
      %v209 = vunpack.c.l.b16 %v188
      %v210 = vunpack.c.l.b16 %v189
      %v211 = vunpack.c.l.b16 %v190
      %v212 = vunpack.c.l.b16 %v191
      %v213 = vunpack.c.l.b16 %v192
      %v214 = vunpack.c.l.b16 %v193
      %v215 = vpack.c.b16 %v208, %v207
      %v216 = vpack.c.b16 %v210, %v209
      %v217 = vpack.c.b16 %v212, %v211
      %v218 = vpack.c.b16 %v214, %v213
      %vm223 = vcmask 523264
      %v225 = vsel %vm223, %v198, 0
      %227 = vmatprep.subr.bf16.mxu0 0
      %228 = vmatpush1.bf16.msra.mxu0 %v215
      %229 = vmatprep.subr.bf16.mxu0 0
      %230 = vmatpush1.bf16.msra.mxu0 %v216
      %231 = vmatprep.subr.bf16.mxu0 0
      %232 = vmatpush1.bf16.msra.mxu0 %v217
      %233 = vmatprep.subr.bf16.mxu0 0
      %234 = vmatpush1.bf16.msra.mxu0 %v218
      %235 = vmatprep.subr.bf16.mxu0 0
      %236 = vmatpush1.bf16.msra.mxu0 0
      %237 = vmatprep.subr.bf16.mxu0 0
      %238 = vmatpush1.bf16.msra.mxu0 0
      %239 = vmatprep.subr.bf16.mxu0 0
      %240 = vmatpush1.bf16.msra.mxu0 0
      %241 = vmatprep.subr.bf16.mxu0 0
      %242 = vmatpush1.bf16.msra.mxu0 0
      %243 = vmatprep.subr.bf16.mxu0 0
      %244 = vmatpush1.bf16.msra.mxu0 0
      %245 = vmatprep.subr.bf16.mxu0 0
      %246 = vmatpush1.bf16.msra.mxu0 0
      %247 = vmatprep.subr.bf16.mxu0 0
      %248 = vmatpush1.bf16.msra.mxu0 0
      %249 = vmatprep.subr.bf16.mxu0 0
      %250 = vmatpush1.bf16.msra.mxu0 0
      %251 = vmatprep.subr.bf16.mxu0 0
      %252 = vmatpush1.bf16.msra.mxu0 0
      %253 = vmatprep.subr.bf16.mxu0 0
      %254 = vmatpush1.bf16.msra.mxu0 0
      %255 = vmatprep.subr.bf16.mxu0 0
      %256 = vmatpush1.bf16.msra.mxu0 0
      %257 = vmatprep.subr.bf16.mxu0 0
      %258 = vmatpush1.bf16.msra.mxu0 0
      %259 = vmatprep.mubr.bf16.mxu0 0
      %260 = vmatmul.mubr.bf16.gmra.mrb[0].mxu0 %v225
      %v261 = vpop.f32.mrb[0].mxu0
      %v262 = vadd.f32 0.0, %v261
      %v263 = vpop.f32.mrb[0].mxu0
      %v264 = vpop.f32.mrb[0].mxu0
      %v265 = vadd.f32 0.0, %v264
      %v266 = vpop.f32.mrb[0].mxu0
      %267 = vdwg.mxu0
      %v270 = vunpack.c.l.b16 %v172
      %v271 = vunpack.c.l.b16 %v173
      %v272 = vpack.c.b16 %v271, %v270
      %v281 = vunpack.c.l.b16 %v174
      %v282 = vunpack.c.l.b16 %v175
      %v283 = vunpack.c.l.b16 %v176
      %v284 = vunpack.c.l.b16 %v177
      %v285 = vunpack.c.l.b16 %v178
      %v286 = vunpack.c.l.b16 %v179
      %v287 = vunpack.c.l.b16 %v180
      %v288 = vunpack.c.l.b16 %v181
      %v289 = vpack.c.b16 %v282, %v281
      %v290 = vpack.c.b16 %v284, %v283
      %v291 = vpack.c.b16 %v286, %v285
      %v292 = vpack.c.b16 %v288, %v287
      %v298 = vsel %vm223, %v272, 0
      %300 = vmatprep.subr.bf16.mxu0 0
      %301 = vmatpush1.bf16.msra.mxu0 %v289
      %302 = vmatprep.subr.bf16.mxu0 0
      %303 = vmatpush1.bf16.msra.mxu0 %v290
      %304 = vmatprep.subr.bf16.mxu0 0
      %305 = vmatpush1.bf16.msra.mxu0 %v291
      %306 = vmatprep.subr.bf16.mxu0 0
      %307 = vmatpush1.bf16.msra.mxu0 %v292
      %308 = vmatprep.subr.bf16.mxu0 0
      %309 = vmatpush1.bf16.msra.mxu0 0
      %310 = vmatprep.subr.bf16.mxu0 0
      %311 = vmatpush1.bf16.msra.mxu0 0
      %312 = vmatprep.subr.bf16.mxu0 0
      %313 = vmatpush1.bf16.msra.mxu0 0
      %314 = vmatprep.subr.bf16.mxu0 0
      %315 = vmatpush1.bf16.msra.mxu0 0
      %316 = vmatprep.subr.bf16.mxu0 0
      %317 = vmatpush1.bf16.msra.mxu0 0
      %318 = vmatprep.subr.bf16.mxu0 0
      %319 = vmatpush1.bf16.msra.mxu0 0
      %320 = vmatprep.subr.bf16.mxu0 0
      %321 = vmatpush1.bf16.msra.mxu0 0
      %322 = vmatprep.subr.bf16.mxu0 0
      %323 = vmatpush1.bf16.msra.mxu0 0
      %324 = vmatprep.subr.bf16.mxu0 0
      %325 = vmatpush1.bf16.msra.mxu0 0
      %326 = vmatprep.subr.bf16.mxu0 0
      %327 = vmatpush1.bf16.msra.mxu0 0
      %328 = vmatprep.subr.bf16.mxu0 0
      %329 = vmatpush1.bf16.msra.mxu0 0
      %330 = vmatprep.subr.bf16.mxu0 0
      %331 = vmatpush1.bf16.msra.mxu0 0
      %332 = vmatprep.mubr.bf16.mxu0 0
      %333 = vmatmul.mubr.bf16.gmra.mrb[0].mxu0 %v298
      %v334 = vpop.f32.mrb[0].mxu0
      %v335 = vadd.f32 %v262, %v334
      %v336 = vpop.f32.mrb[0].mxu0
      %v337 = vpop.f32.mrb[0].mxu0
      %v338 = vadd.f32 %v265, %v337
      %v339 = vpop.f32.mrb[0].mxu0
      %340 = vdwg.mxu0
      %s341 = scalar_lea.vmem %s165, 48
      %v342 = vld [vmem:[%s341] sm:$0xf]
      %v343 = vld [vmem:[%s341 + $0x4] sm:$0xf]
      %s344 = scalar_lea.vmem %s1, 64
      %v345 = vld [vmem:[%s344] sm:$0xf]
      %v346 = vld [vmem:[%s344 + $0x4] sm:$0xf]
      %v347 = vld [vmem:[%s344 + $0x8] sm:$0xf]
      %v348 = vld [vmem:[%s344 + $0xc] sm:$0xf]
      %v349 = vld [vmem:[%s344 + $0x10] sm:$0xf]
      %v350 = vld [vmem:[%s344 + $0x14] sm:$0xf]
      %v351 = vld [vmem:[%s344 + $0x18] sm:$0xf]
      %v352 = vld [vmem:[%s344 + $0x1c] sm:$0xf]
      %v355 = vunpack.c.l.b16 %v342
      %v356 = vunpack.c.l.b16 %v343
      %v357 = vpack.c.b16 %v356, %v355
      %v366 = vunpack.c.l.b16 %v345
      %v367 = vunpack.c.l.b16 %v346
      %v368 = vunpack.c.l.b16 %v347
      %v369 = vunpack.c.l.b16 %v348
      %v370 = vunpack.c.l.b16 %v349
      %v371 = vunpack.c.l.b16 %v350
      %v372 = vunpack.c.l.b16 %v351
      %v373 = vunpack.c.l.b16 %v352
      %v374 = vpack.c.b16 %v367, %v366
      %v375 = vpack.c.b16 %v369, %v368
      %v376 = vpack.c.b16 %v371, %v370
      %v377 = vpack.c.b16 %v373, %v372
      %v383 = vsel %vm223, %v357, 0
      %385 = vmatprep.subr.bf16.mxu0 0
      %386 = vmatpush1.bf16.msra.mxu0 %v374
      %387 = vmatprep.subr.bf16.mxu0 0
      %388 = vmatpush1.bf16.msra.mxu0 %v375
      %389 = vmatprep.subr.bf16.mxu0 0
      %390 = vmatpush1.bf16.msra.mxu0 %v376
      %391 = vmatprep.subr.bf16.mxu0 0
      %392 = vmatpush1.bf16.msra.mxu0 %v377
      %393 = vmatprep.subr.bf16.mxu0 0
      %394 = vmatpush1.bf16.msra.mxu0 0
      %395 = vmatprep.subr.bf16.mxu0 0
      %396 = vmatpush1.bf16.msra.mxu0 0
      %397 = vmatprep.subr.bf16.mxu0 0
      %398 = vmatpush1.bf16.msra.mxu0 0
      %399 = vmatprep.subr.bf16.mxu0 0
      %400 = vmatpush1.bf16.msra.mxu0 0
      %401 = vmatprep.subr.bf16.mxu0 0
      %402 = vmatpush1.bf16.msra.mxu0 0
      %403 = vmatprep.subr.bf16.mxu0 0
      %404 = vmatpush1.bf16.msra.mxu0 0
      %405 = vmatprep.subr.bf16.mxu0 0
      %406 = vmatpush1.bf16.msra.mxu0 0
      %407 = vmatprep.subr.bf16.mxu0 0
      %408 = vmatpush1.bf16.msra.mxu0 0
      %409 = vmatprep.subr.bf16.mxu0 0
      %410 = vmatpush1.bf16.msra.mxu0 0
      %411 = vmatprep.subr.bf16.mxu0 0
      %412 = vmatpush1.bf16.msra.mxu0 0
      %413 = vmatprep.subr.bf16.mxu0 0
      %414 = vmatpush1.bf16.msra.mxu0 0
      %415 = vmatprep.subr.bf16.mxu0 0
      %416 = vmatpush1.bf16.msra.mxu0 0
      %417 = vmatprep.mubr.bf16.mxu0 0
      %418 = vmatmul.mubr.bf16.gmra.mrb[0].mxu0 %v383
      %v419 = vpop.f32.mrb[0].mxu0
      %v420 = vadd.f32 0.0, %v419
      %v421 = vpop.f32.mrb[0].mxu0
      %v422 = vpop.f32.mrb[0].mxu0
      %v423 = vadd.f32 0.0, %v422
      %v424 = vpop.f32.mrb[0].mxu0
      %425 = vdwg.mxu0
      %v426 = vadd.f32 %v335, %v420
      %v427 = vadd.f32 %v338, %v423
      %s428 = scalar_lea.vmem %s165, 12
      %v429 = vld [vmem:[%s428] sm:$0xf]
      %v430 = vld [vmem:[%s428 + $0x4] sm:$0xf]
      %s431 = scalar_lea.vmem %s1, 96
      %v432 = vld [vmem:[%s431] sm:$0xf]
      %v433 = vld [vmem:[%s431 + $0x4] sm:$0xf]
      %v434 = vld [vmem:[%s431 + $0x8] sm:$0xf]
      %v435 = vld [vmem:[%s431 + $0xc] sm:$0xf]
      %v436 = vld [vmem:[%s431 + $0x10] sm:$0xf]
      %v437 = vld [vmem:[%s431 + $0x14] sm:$0xf]
      %v438 = vld [vmem:[%s431 + $0x18] sm:$0xf]
      %v439 = vld [vmem:[%s431 + $0x1c] sm:$0xf]
      %v442 = vunpack.c.l.b16 %v429
      %v443 = vunpack.c.l.b16 %v430
      %v444 = vpack.c.b16 %v443, %v442
      %v453 = vunpack.c.l.b16 %v432
      %v454 = vunpack.c.l.b16 %v433
      %v455 = vunpack.c.l.b16 %v434
      %v456 = vunpack.c.l.b16 %v435
      %v457 = vunpack.c.l.b16 %v436
      %v458 = vunpack.c.l.b16 %v437
      %v459 = vunpack.c.l.b16 %v438
      %v460 = vunpack.c.l.b16 %v439
      %v461 = vpack.c.b16 %v454, %v453
      %v462 = vpack.c.b16 %v456, %v455
      %v463 = vpack.c.b16 %v458, %v457
      %v464 = vpack.c.b16 %v460, %v459
      %v470 = vsel %vm223, %v444, 0
      %472 = vmatprep.subr.bf16.mxu0 0
      %473 = vmatpush1.bf16.msra.mxu0 %v461
      %474 = vmatprep.subr.bf16.mxu0 0
      %475 = vmatpush1.bf16.msra.mxu0 %v462
      %476 = vmatprep.subr.bf16.mxu0 0
      %477 = vmatpush1.bf16.msra.mxu0 %v463
      %478 = vmatprep.subr.bf16.mxu0 0
      %479 = vmatpush1.bf16.msra.mxu0 %v464
      %480 = vmatprep.subr.bf16.mxu0 0
      %481 = vmatpush1.bf16.msra.mxu0 0
      %482 = vmatprep.subr.bf16.mxu0 0
      %483 = vmatpush1.bf16.msra.mxu0 0
      %484 = vmatprep.subr.bf16.mxu0 0
      %485 = vmatpush1.bf16.msra.mxu0 0
      %486 = vmatprep.subr.bf16.mxu0 0
      %487 = vmatpush1.bf16.msra.mxu0 0
      %488 = vmatprep.subr.bf16.mxu0 0
      %489 = vmatpush1.bf16.msra.mxu0 0
      %490 = vmatprep.subr.bf16.mxu0 0
      %491 = vmatpush1.bf16.msra.mxu0 0
      %492 = vmatprep.subr.bf16.mxu0 0
      %493 = vmatpush1.bf16.msra.mxu0 0
      %494 = vmatprep.subr.bf16.mxu0 0
      %495 = vmatpush1.bf16.msra.mxu0 0
      %496 = vmatprep.subr.bf16.mxu0 0
      %497 = vmatpush1.bf16.msra.mxu0 0
      %498 = vmatprep.subr.bf16.mxu0 0
      %499 = vmatpush1.bf16.msra.mxu0 0
      %500 = vmatprep.subr.bf16.mxu0 0
      %501 = vmatpush1.bf16.msra.mxu0 0
      %502 = vmatprep.subr.bf16.mxu0 0
      %503 = vmatpush1.bf16.msra.mxu0 0
      %504 = vmatprep.mubr.bf16.mxu0 0
      %505 = vmatmul.mubr.bf16.gmra.mrb[0].mxu0 %v470
      %v506 = vpop.f32.mrb[0].mxu0
      %v507 = vadd.f32 0.0, %v506
      %v508 = vpop.f32.mrb[0].mxu0
      %v509 = vpop.f32.mrb[0].mxu0
      %v510 = vadd.f32 0.0, %v509
      %v511 = vpop.f32.mrb[0].mxu0
      %512 = vdwg.mxu0
      %v513 = vadd.f32 %v426, %v507
      %v514 = vadd.f32 %v427, %v510
      %s515 = scalar_lea.vmem %s165, 36
      %v516 = vld [vmem:[%s515] sm:$0xf]
      %v517 = vld [vmem:[%s515 + $0x4] sm:$0xf]
      %s518 = scalar_lea.vmem %s1, 128
      %v519 = vld [vmem:[%s518] sm:$0xf]
      %v520 = vld [vmem:[%s518 + $0x4] sm:$0xf]
      %v521 = vld [vmem:[%s518 + $0x8] sm:$0xf]
      %v522 = vld [vmem:[%s518 + $0xc] sm:$0xf]
      %v523 = vld [vmem:[%s518 + $0x10] sm:$0xf]
      %v524 = vld [vmem:[%s518 + $0x14] sm:$0xf]
      %v525 = vld [vmem:[%s518 + $0x18] sm:$0xf]
      %v526 = vld [vmem:[%s518 + $0x1c] sm:$0xf]
      %v529 = vunpack.c.l.b16 %v516
      %v530 = vunpack.c.l.b16 %v517
      %v531 = vpack.c.b16 %v530, %v529
      %v540 = vunpack.c.l.b16 %v519
      %v541 = vunpack.c.l.b16 %v520
      %v542 = vunpack.c.l.b16 %v521
      %v543 = vunpack.c.l.b16 %v522
      %v544 = vunpack.c.l.b16 %v523
      %v545 = vunpack.c.l.b16 %v524
      %v546 = vunpack.c.l.b16 %v525
      %v547 = vunpack.c.l.b16 %v526
      %v548 = vpack.c.b16 %v541, %v540
      %v549 = vpack.c.b16 %v543, %v542
      %v550 = vpack.c.b16 %v545, %v544
      %v551 = vpack.c.b16 %v547, %v546
      %v557 = vsel %vm223, %v531, 0
      %559 = vmatprep.subr.bf16.mxu0 0
      %560 = vmatpush1.bf16.msra.mxu0 %v548
      %561 = vmatprep.subr.bf16.mxu0 0
      %562 = vmatpush1.bf16.msra.mxu0 %v549
      %563 = vmatprep.subr.bf16.mxu0 0
      %564 = vmatpush1.bf16.msra.mxu0 %v550
      %565 = vmatprep.subr.bf16.mxu0 0
      %566 = vmatpush1.bf16.msra.mxu0 %v551
      %567 = vmatprep.subr.bf16.mxu0 0
      %568 = vmatpush1.bf16.msra.mxu0 0
      %569 = vmatprep.subr.bf16.mxu0 0
      %570 = vmatpush1.bf16.msra.mxu0 0
      %571 = vmatprep.subr.bf16.mxu0 0
      %572 = vmatpush1.bf16.msra.mxu0 0
      %573 = vmatprep.subr.bf16.mxu0 0
      %574 = vmatpush1.bf16.msra.mxu0 0
      %575 = vmatprep.subr.bf16.mxu0 0
      %576 = vmatpush1.bf16.msra.mxu0 0
      %577 = vmatprep.subr.bf16.mxu0 0
      %578 = vmatpush1.bf16.msra.mxu0 0
      %579 = vmatprep.subr.bf16.mxu0 0
      %580 = vmatpush1.bf16.msra.mxu0 0
      %581 = vmatprep.subr.bf16.mxu0 0
      %582 = vmatpush1.bf16.msra.mxu0 0
      %583 = vmatprep.subr.bf16.mxu0 0
      %584 = vmatpush1.bf16.msra.mxu0 0
      %585 = vmatprep.subr.bf16.mxu0 0
      %586 = vmatpush1.bf16.msra.mxu0 0
      %587 = vmatprep.subr.bf16.mxu0 0
      %588 = vmatpush1.bf16.msra.mxu0 0
      %589 = vmatprep.subr.bf16.mxu0 0
      %590 = vmatpush1.bf16.msra.mxu0 0
      %591 = vmatprep.mubr.bf16.mxu0 0
      %592 = vmatmul.mubr.bf16.gmra.mrb[0].mxu0 %v557
      %v593 = vpop.f32.mrb[0].mxu0
      %v594 = vadd.f32 0.0, %v593
      %v595 = vpop.f32.mrb[0].mxu0
      %v596 = vpop.f32.mrb[0].mxu0
      %v597 = vadd.f32 0.0, %v596
      %v598 = vpop.f32.mrb[0].mxu0
      %599 = vdwg.mxu0
      %v600 = vadd.f32 %v513, %v594
      %v601 = vadd.f32 %v514, %v597
      %s602 = scalar_lea.vmem %s165, 60
      %v603 = vld [vmem:[%s602] sm:$0xf]
      %v604 = vld [vmem:[%s602 + $0x4] sm:$0xf]
      %s605 = scalar_lea.vmem %s1, 160
      %v606 = vld [vmem:[%s605] sm:$0xf]
      %v607 = vld [vmem:[%s605 + $0x4] sm:$0xf]
      %v608 = vld [vmem:[%s605 + $0x8] sm:$0xf]
      %v609 = vld [vmem:[%s605 + $0xc] sm:$0xf]
      %v610 = vld [vmem:[%s605 + $0x10] sm:$0xf]
      %v611 = vld [vmem:[%s605 + $0x14] sm:$0xf]
      %v612 = vld [vmem:[%s605 + $0x18] sm:$0xf]
      %v613 = vld [vmem:[%s605 + $0x1c] sm:$0xf]
      %v616 = vunpack.c.l.b16 %v603
      %v617 = vunpack.c.l.b16 %v604
      %v618 = vpack.c.b16 %v617, %v616
      %v627 = vunpack.c.l.b16 %v606
      %v628 = vunpack.c.l.b16 %v607
      %v629 = vunpack.c.l.b16 %v608
      %v630 = vunpack.c.l.b16 %v609
      %v631 = vunpack.c.l.b16 %v610
      %v632 = vunpack.c.l.b16 %v611
      %v633 = vunpack.c.l.b16 %v612
      %v634 = vunpack.c.l.b16 %v613
      %v635 = vpack.c.b16 %v628, %v627
      %v636 = vpack.c.b16 %v630, %v629
      %v637 = vpack.c.b16 %v632, %v631
      %v638 = vpack.c.b16 %v634, %v633
      %v644 = vsel %vm223, %v618, 0
      %646 = vmatprep.subr.bf16.mxu0 0
      %647 = vmatpush1.bf16.msra.mxu0 %v635
      %648 = vmatprep.subr.bf16.mxu0 0
      %649 = vmatpush1.bf16.msra.mxu0 %v636
      %650 = vmatprep.subr.bf16.mxu0 0
      %651 = vmatpush1.bf16.msra.mxu0 %v637
      %652 = vmatprep.subr.bf16.mxu0 0
      %653 = vmatpush1.bf16.msra.mxu0 %v638
      %654 = vmatprep.subr.bf16.mxu0 0
      %655 = vmatpush1.bf16.msra.mxu0 0
      %656 = vmatprep.subr.bf16.mxu0 0
      %657 = vmatpush1.bf16.msra.mxu0 0
      %658 = vmatprep.subr.bf16.mxu0 0
      %659 = vmatpush1.bf16.msra.mxu0 0
      %660 = vmatprep.subr.bf16.mxu0 0
      %661 = vmatpush1.bf16.msra.mxu0 0
      %662 = vmatprep.subr.bf16.mxu0 0
      %663 = vmatpush1.bf16.msra.mxu0 0
      %664 = vmatprep.subr.bf16.mxu0 0
      %665 = vmatpush1.bf16.msra.mxu0 0
      %666 = vmatprep.subr.bf16.mxu0 0
      %667 = vmatpush1.bf16.msra.mxu0 0
      %668 = vmatprep.subr.bf16.mxu0 0
      %669 = vmatpush1.bf16.msra.mxu0 0
      %670 = vmatprep.subr.bf16.mxu0 0
      %671 = vmatpush1.bf16.msra.mxu0 0
      %672 = vmatprep.subr.bf16.mxu0 0
      %673 = vmatpush1.bf16.msra.mxu0 0
      %674 = vmatprep.subr.bf16.mxu0 0
      %675 = vmatpush1.bf16.msra.mxu0 0
      %676 = vmatprep.subr.bf16.mxu0 0
      %677 = vmatpush1.bf16.msra.mxu0 0
      %678 = vmatprep.mubr.bf16.mxu0 0
      %679 = vmatmul.mubr.bf16.gmra.mrb[0].mxu0 %v644
      %v680 = vpop.f32.mrb[0].mxu0
      %v681 = vadd.f32 0.0, %v680
      %v682 = vpop.f32.mrb[0].mxu0
      %v683 = vpop.f32.mrb[0].mxu0
      %v684 = vadd.f32 0.0, %v683
      %v685 = vpop.f32.mrb[0].mxu0
      %686 = vdwg.mxu0
      %v687 = vadd.f32 %v600, %v681
      %v688 = vadd.f32 %v601, %v684
      %v689 = vld [vmem:[%s165] sm:$0xc]
      %v690 = vld [vmem:[%s165 + $0x4] sm:$0xf]
      %v691 = vld [vmem:[%s165 + $0x8] sm:$0x3]
      %s692 = scalar_lea.vmem %s1, 192
      %v693 = vld [vmem:[%s692] sm:$0xf]
      %v694 = vld [vmem:[%s692 + $0x4] sm:$0xf]
      %v695 = vld [vmem:[%s692 + $0x8] sm:$0xf]
      %v696 = vld [vmem:[%s692 + $0xc] sm:$0xf]
      %v697 = vld [vmem:[%s692 + $0x10] sm:$0xf]
      %v698 = vld [vmem:[%s692 + $0x14] sm:$0xf]
      %v699 = vld [vmem:[%s692 + $0x18] sm:$0xf]
      %v700 = vld [vmem:[%s692 + $0x1c] sm:$0xf]
      %v704 = vunpack.c.l.b16 %v689
      %v705 = vunpack.c.l.b16 %v690
      %v706 = vunpack.c.l.b16 %v691
      %v707 = vpack.c.b16 %v705, %v704
      %v708 = vpack.c.b16 %v706, %v706
      %vm709 = vcmask 1045504
      %v710 = vrot.slane %v707, 2
      %v711 = vrot.slane %v708, 2
      %v712 = vsel %vm709, %v710, %v711
      %v721 = vunpack.c.l.b16 %v693
      %v722 = vunpack.c.l.b16 %v694
      %v723 = vunpack.c.l.b16 %v695
      %v724 = vunpack.c.l.b16 %v696
      %v725 = vunpack.c.l.b16 %v697
      %v726 = vunpack.c.l.b16 %v698
      %v727 = vunpack.c.l.b16 %v699
      %v728 = vunpack.c.l.b16 %v700
      %v729 = vpack.c.b16 %v722, %v721
      %v730 = vpack.c.b16 %v724, %v723
      %v731 = vpack.c.b16 %v726, %v725
      %v732 = vpack.c.b16 %v728, %v727
      %v738 = vsel %vm223, %v712, 0
      %740 = vmatprep.subr.bf16.mxu0 0
      %741 = vmatpush1.bf16.msra.mxu0 %v729
      %742 = vmatprep.subr.bf16.mxu0 0
      %743 = vmatpush1.bf16.msra.mxu0 %v730
      %744 = vmatprep.subr.bf16.mxu0 0
      %745 = vmatpush1.bf16.msra.mxu0 %v731
      %746 = vmatprep.subr.bf16.mxu0 0
      %747 = vmatpush1.bf16.msra.mxu0 %v732
      %748 = vmatprep.subr.bf16.mxu0 0
      %749 = vmatpush1.bf16.msra.mxu0 0
      %750 = vmatprep.subr.bf16.mxu0 0
      %751 = vmatpush1.bf16.msra.mxu0 0
      %752 = vmatprep.subr.bf16.mxu0 0
      %753 = vmatpush1.bf16.msra.mxu0 0
      %754 = vmatprep.subr.bf16.mxu0 0
      %755 = vmatpush1.bf16.msra.mxu0 0
      %756 = vmatprep.subr.bf16.mxu0 0
      %757 = vmatpush1.bf16.msra.mxu0 0
      %758 = vmatprep.subr.bf16.mxu0 0
      %759 = vmatpush1.bf16.msra.mxu0 0
      %760 = vmatprep.subr.bf16.mxu0 0
      %761 = vmatpush1.bf16.msra.mxu0 0
      %762 = vmatprep.subr.bf16.mxu0 0
      %763 = vmatpush1.bf16.msra.mxu0 0
      %764 = vmatprep.subr.bf16.mxu0 0
      %765 = vmatpush1.bf16.msra.mxu0 0
      %766 = vmatprep.subr.bf16.mxu0 0
      %767 = vmatpush1.bf16.msra.mxu0 0
      %768 = vmatprep.subr.bf16.mxu0 0
      %769 = vmatpush1.bf16.msra.mxu0 0
      %770 = vmatprep.subr.bf16.mxu0 0
      %771 = vmatpush1.bf16.msra.mxu0 0
      %772 = vmatprep.mubr.bf16.mxu0 0
      %773 = vmatmul.mubr.bf16.gmra.mrb[0].mxu0 %v738
      %v774 = vpop.f32.mrb[0].mxu0
      %v775 = vadd.f32 0.0, %v774
      %v776 = vpop.f32.mrb[0].mxu0
      %v777 = vpop.f32.mrb[0].mxu0
      %v778 = vadd.f32 0.0, %v777
      %v779 = vpop.f32.mrb[0].mxu0
      %780 = vdwg.mxu0
      %v781 = vadd.f32 %v687, %v775
      %v782 = vadd.f32 %v688, %v778
      %v783 = vld [vmem:[%s182] sm:$0xc]
      %v784 = vld [vmem:[%s182 + $0x4] sm:$0xf]
      %v785 = vld [vmem:[%s182 + $0x8] sm:$0x3]
      %s786 = scalar_lea.vmem %s1, 224
      %v787 = vld [vmem:[%s786] sm:$0xf]
      %v788 = vld [vmem:[%s786 + $0x4] sm:$0xf]
      %v789 = vld [vmem:[%s786 + $0x8] sm:$0xf]
      %v790 = vld [vmem:[%s786 + $0xc] sm:$0xf]
      %v791 = vld [vmem:[%s786 + $0x10] sm:$0xf]
      %v792 = vld [vmem:[%s786 + $0x14] sm:$0xf]
      %v793 = vld [vmem:[%s786 + $0x18] sm:$0xf]
      %v794 = vld [vmem:[%s786 + $0x1c] sm:$0xf]
      %v798 = vunpack.c.l.b16 %v783
      %v799 = vunpack.c.l.b16 %v784
      %v800 = vunpack.c.l.b16 %v785
      %v801 = vpack.c.b16 %v799, %v798
      %v802 = vpack.c.b16 %v800, %v800
      %v803 = vrot.slane %v801, 2
      %v804 = vrot.slane %v802, 2
      %v805 = vsel %vm709, %v803, %v804
      %v814 = vunpack.c.l.b16 %v787
      %v815 = vunpack.c.l.b16 %v788
      %v816 = vunpack.c.l.b16 %v789
      %v817 = vunpack.c.l.b16 %v790
      %v818 = vunpack.c.l.b16 %v791
      %v819 = vunpack.c.l.b16 %v792
      %v820 = vunpack.c.l.b16 %v793
      %v821 = vunpack.c.l.b16 %v794
      %v822 = vpack.c.b16 %v815, %v814
      %v823 = vpack.c.b16 %v817, %v816
      %v824 = vpack.c.b16 %v819, %v818
      %v825 = vpack.c.b16 %v821, %v820
      %v831 = vsel %vm223, %v805, 0
      %833 = vmatprep.subr.bf16.mxu0 0
      %834 = vmatpush1.bf16.msra.mxu0 %v822
      %835 = vmatprep.subr.bf16.mxu0 0
      %836 = vmatpush1.bf16.msra.mxu0 %v823
      %837 = vmatprep.subr.bf16.mxu0 0
      %838 = vmatpush1.bf16.msra.mxu0 %v824
      %839 = vmatprep.subr.bf16.mxu0 0
      %840 = vmatpush1.bf16.msra.mxu0 %v825
      %841 = vmatprep.subr.bf16.mxu0 0
      %842 = vmatpush1.bf16.msra.mxu0 0
      %843 = vmatprep.subr.bf16.mxu0 0
      %844 = vmatpush1.bf16.msra.mxu0 0
      %845 = vmatprep.subr.bf16.mxu0 0
      %846 = vmatpush1.bf16.msra.mxu0 0
      %847 = vmatprep.subr.bf16.mxu0 0
      %848 = vmatpush1.bf16.msra.mxu0 0
      %849 = vmatprep.subr.bf16.mxu0 0
      %850 = vmatpush1.bf16.msra.mxu0 0
      %851 = vmatprep.subr.bf16.mxu0 0
      %852 = vmatpush1.bf16.msra.mxu0 0
      %853 = vmatprep.subr.bf16.mxu0 0
      %854 = vmatpush1.bf16.msra.mxu0 0
      %855 = vmatprep.subr.bf16.mxu0 0
      %856 = vmatpush1.bf16.msra.mxu0 0
      %857 = vmatprep.subr.bf16.mxu0 0
      %858 = vmatpush1.bf16.msra.mxu0 0
      %859 = vmatprep.subr.bf16.mxu0 0
      %860 = vmatpush1.bf16.msra.mxu0 0
      %861 = vmatprep.subr.bf16.mxu0 0
      %862 = vmatpush1.bf16.msra.mxu0 0
      %863 = vmatprep.subr.bf16.mxu0 0
      %864 = vmatpush1.bf16.msra.mxu0 0
      %865 = vmatprep.mubr.bf16.mxu0 0
      %866 = vmatmul.mubr.bf16.gmra.mrb[0].mxu0 %v831
      %v867 = vpop.f32.mrb[0].mxu0
      %v868 = vadd.f32 0.0, %v867
      %v869 = vpop.f32.mrb[0].mxu0
      %v870 = vpop.f32.mrb[0].mxu0
      %v871 = vadd.f32 0.0, %v870
      %v872 = vpop.f32.mrb[0].mxu0
      %873 = vdwg.mxu0
      %v874 = vadd.f32 %v781, %v868
      %v875 = vadd.f32 %v782, %v871
      %v876 = vld [vmem:[%s341] sm:$0xc]
      %v877 = vld [vmem:[%s341 + $0x4] sm:$0xf]
      %v878 = vld [vmem:[%s341 + $0x8] sm:$0x3]
      %s879 = scalar_lea.vmem %s1, 256
      %v880 = vld [vmem:[%s879] sm:$0xf]
      %v881 = vld [vmem:[%s879 + $0x4] sm:$0xf]
      %v882 = vld [vmem:[%s879 + $0x8] sm:$0xf]
      %v883 = vld [vmem:[%s879 + $0xc] sm:$0xf]
      %v884 = vld [vmem:[%s879 + $0x10] sm:$0xf]
      %v885 = vld [vmem:[%s879 + $0x14] sm:$0xf]
      %v886 = vld [vmem:[%s879 + $0x18] sm:$0xf]
      %v887 = vld [vmem:[%s879 + $0x1c] sm:$0xf]
      %v891 = vunpack.c.l.b16 %v876
      %v892 = vunpack.c.l.b16 %v877
      %v893 = vunpack.c.l.b16 %v878
      %v894 = vpack.c.b16 %v892, %v891
      %v895 = vpack.c.b16 %v893, %v893
      %v896 = vrot.slane %v894, 2
      %v897 = vrot.slane %v895, 2
      %v898 = vsel %vm709, %v896, %v897
      %v907 = vunpack.c.l.b16 %v880
      %v908 = vunpack.c.l.b16 %v881
      %v909 = vunpack.c.l.b16 %v882
      %v910 = vunpack.c.l.b16 %v883
      %v911 = vunpack.c.l.b16 %v884
      %v912 = vunpack.c.l.b16 %v885
      %v913 = vunpack.c.l.b16 %v886
      %v914 = vunpack.c.l.b16 %v887
      %v915 = vpack.c.b16 %v908, %v907
      %v916 = vpack.c.b16 %v910, %v909
      %v917 = vpack.c.b16 %v912, %v911
      %v918 = vpack.c.b16 %v914, %v913
      %v924 = vsel %vm223, %v898, 0
      %926 = vmatprep.subr.bf16.mxu0 0
      %927 = vmatpush1.bf16.msra.mxu0 %v915
      %928 = vmatprep.subr.bf16.mxu0 0
      %929 = vmatpush1.bf16.msra.mxu0 %v916
      %930 = vmatprep.subr.bf16.mxu0 0
      %931 = vmatpush1.bf16.msra.mxu0 %v917
      %932 = vmatprep.subr.bf16.mxu0 0
      %933 = vmatpush1.bf16.msra.mxu0 %v918
      %934 = vmatprep.subr.bf16.mxu0 0
      %935 = vmatpush1.bf16.msra.mxu0 0
      %936 = vmatprep.subr.bf16.mxu0 0
      %937 = vmatpush1.bf16.msra.mxu0 0
      %938 = vmatprep.subr.bf16.mxu0 0
      %939 = vmatpush1.bf16.msra.mxu0 0
      %940 = vmatprep.subr.bf16.mxu0 0
      %941 = vmatpush1.bf16.msra.mxu0 0
      %942 = vmatprep.subr.bf16.mxu0 0
      %943 = vmatpush1.bf16.msra.mxu0 0
      %944 = vmatprep.subr.bf16.mxu0 0
      %945 = vmatpush1.bf16.msra.mxu0 0
      %946 = vmatprep.subr.bf16.mxu0 0
      %947 = vmatpush1.bf16.msra.mxu0 0
      %948 = vmatprep.subr.bf16.mxu0 0
      %949 = vmatpush1.bf16.msra.mxu0 0
      %950 = vmatprep.subr.bf16.mxu0 0
      %951 = vmatpush1.bf16.msra.mxu0 0
      %952 = vmatprep.subr.bf16.mxu0 0
      %953 = vmatpush1.bf16.msra.mxu0 0
      %954 = vmatprep.subr.bf16.mxu0 0
      %955 = vmatpush1.bf16.msra.mxu0 0
      %956 = vmatprep.subr.bf16.mxu0 0
      %957 = vmatpush1.bf16.msra.mxu0 0
      %958 = vmatprep.mubr.bf16.mxu0 0
      %959 = vmatmul.mubr.bf16.gmra.mrb[0].mxu0 %v924
      %v960 = vpop.f32.mrb[0].mxu0
      %v961 = vadd.f32 0.0, %v960
      %v962 = vpop.f32.mrb[0].mxu0
      %v963 = vpop.f32.mrb[0].mxu0
      %v964 = vadd.f32 0.0, %v963
      %v965 = vpop.f32.mrb[0].mxu0
      %966 = vdwg.mxu0
      %v967 = vadd.f32 %v874, %v961
      %v968 = vadd.f32 %v875, %v964
      %v969 = vld [vmem:[%s2] sm:$0x1]
      %v971 = vlaneseq
      %v972 = vshrl.u32 %v971, 7
      %v973 = vsub.s32 0, %v972
      %v974 = vrot.slane %v969, %v973
      %v976 = vadd.f32 %v967, %v974
      %v977 = vadd.f32 %v968, %v974
      %978 = vst.msk [vmem:[%s170] sm:$0xff] %vm223, %v976
      %979 = vst.msk [vmem:[%s170 + $0x8] sm:$0xff] %vm223, %v977
      %p980 = scmp.lt.s32.totalorder %s14, 1
      %s981 = scalar_select %p980, %s14, 1
      %s982 = smul.addr %s981, 2
      %s983 = smul.addr %s982, 8
      %s984 = scalar_lea.vmem %s3, %s983
      // Predicated region
      $region33: #{eco_depth_encoder_forward.10} parent=31 // pred_check
        %p985 = pneg %p100
      $region34: #{eco_depth_encoder_forward.10} parent=31 // pred_check_branch
        %987 = sbr.rel (%p985) target = $region36
      $region35: #{eco_depth_encoder_forward.10} parent=31 // pred_region
        _
      $region36: #{eco_depth_encoder_forward.10} parent=31 // pred_fallthru
        _
    $region32: #{eco_depth_encoder_forward.10} parent=5 // pred_fallthru
      _
    %p988 = scmp.le.s32.totalorder 2, %s9
    // Predicated region
    $region37: #{eco_depth_encoder_forward.10} parent=5 // pred_check
      %p989 = pneg %p988
    $region38: #{eco_depth_encoder_forward.10} parent=5 // pred_check_branch
      %991 = sbr.rel (%p989) target = $region40
    $region39: #{eco_depth_encoder_forward.10} parent=5 // pred_region
      %s992 = ssub.s32 %s9, 2
      // Predicated region
      $region41: #{eco_depth_encoder_forward.10} parent=39 // pred_check
        %p993 = pneg %p106
      $region42: #{eco_depth_encoder_forward.10} parent=39 // pred_check_branch
        %995 = sbr.rel (%p993) target = $region44
      $region43: #{eco_depth_encoder_forward.10} parent=39 // pred_region
        %p996 = scmp.lt.s32.totalorder %s15, 1
        %s997 = scalar_select %p996, %s15, 1
        %s998 = smul.addr %s997, 2
        %s999 = smul.addr %s998, 8
        %s1000 = scalar_lea.vmem %s3, %s999
      $region44: #{eco_depth_encoder_forward.10} parent=39 // pred_fallthru
        _
    $region40: #{eco_depth_encoder_forward.10} parent=5 // pred_fallthru
      _
  $region6: #{eco_depth_encoder_forward.10} parent=0 // loop_footer
    %s13 = sadd.s32 1, %s9
  $region7: #{eco_depth_encoder_forward.10} parent=0 // loop_footer_branch
    %8 = sbr.rel target = $region3
  $region8: #{eco_depth_encoder_forward.10} parent=0 // loop_exit
    _

// kernel: eco_depth_encoder_forward.11
$region0: #{eco_depth_encoder_forward.11}
  #allocation0 [shape = 'u32[]', space=smem, size = 0x4, offset = 0x4, fixed_abs, tag = 'smem constant byte address 0x4 - core index']
  #allocation1 [shape = 'u32[144,128]{1,0:T(1,128)}', space=vmem, size = 0x12000, scoped, tag = 'internal scratch']
  %s0 = inlined_call_operand.vmem [shape: bf16[2,16,352], index: 0, kind: input, shape index: {}]
  %s1 = inlined_call_operand.vmem [shape: bf16[352,128], index: 1, kind: input, shape index: {}]
  %s2 = inlined_call_operand.vmem [shape: f32[1,128], index: 2, kind: input, shape index: {}]
  %s3 = inlined_call_operand.vmem [shape: f32[1,128], index: 3, kind: input, shape index: {}]
  %s4 = inlined_call_operand.vmem [shape: f32[1,128], index: 4, kind: input, shape index: {}]
  %s5 = inlined_call_operand.vmem [shape: f32[128,16], index: 5, kind: input, shape index: {}]
  %s6 = inlined_call_operand.vmem [shape: f32[16,128], index: 6, kind: input, shape index: {}]
  %s7 = inlined_call_operand.hbm [shape: f32[2,16,128], index: 7, kind: output, shape index: {}]
  %s8 = sld [smem:[#allocation0]]
  $region61: #{eco_depth_encoder_forward.11} parent=0
    _
  %s10 = ssub.s32 1, %s8
  %s11 = scalar_select 0, %s10, %s8
  $region1: #{eco_depth_encoder_forward.11} parent=0
    #allocation2 [shape = 'u8[16384]{0}', space=vmem, size = 0x4000, scoped, tag = 'output window, operand 0']
    #allocation3 [shape = 's32[2]{0}', space=sflag, size = 0x8, scoped, tag = 'scoped memory for eco_depth_encoder_forward.11']
    %12 = vsyncpa [#allocation3], 0
    %s13 = scalar_lea.sflag [#allocation3], 1
    %14 = vsyncpa %s13, 0
    loop: start=0, step=1, limit=4
    $region2: #{eco_depth_encoder_forward.11} parent=1 // loop_pre_header
      _
    $region3: #{eco_depth_encoder_forward.11} parent=1 // loop_header
      %s16 = sphi 0, %s20
      %p17 = scmp.ge.s32.totalorder %s16, 4
      %s26 = sphi 0, %s28
      %s29 = sphi 0, %s26
      %s30 = sphi 0, %s29
      %s46 = sphi 0, %s30
      %s50 = sphi 0, %s50
      %s52 = sphi 0, %s50
      %s53 = sphi 0, %s52
      %s67 = sphi 0, %s53
      %s71 = sphi 0, %s71
      %s73 = sphi 0, %s71
      %s74 = sphi 0, %s73
      %s88 = sphi 0, %s74
      %s92 = sphi 0, %s92
      %s94 = sphi 0, %s92
      %s95 = sphi 0, %s94
      %s109 = sphi 0, %s95
      %s113 = sphi 0, %s113
      %s115 = sphi 0, %s113
      %s116 = sphi 0, %s115
      %s130 = sphi 0, %s116
      %s134 = sphi 0, %s134
      %s136 = sphi 0, %s134
      %s137 = sphi 0, %s136
      %s151 = sphi 0, %s137
      %s155 = sphi 0, %s155
      %s157 = sphi 0, %s155
      %s158 = sphi 0, %s157
      %s172 = sphi 0, %s158
      %s178 = sphi 0, %s180
      %s181 = sphi 0, %s178
      %s182 = sphi 0, %s181
      %s198 = sphi 0, %s182
    $region4: #{eco_depth_encoder_forward.11} parent=1 // loop_header_branch
      %19 = sbr.rel (%p17) target = $region8
    $region5: #{eco_depth_encoder_forward.11} parent=1 // loop_body
      %s21 = ssub.s32 %s16, 1
      %s22 = ssub.s32 %s16, 2
      %s23 = sadd.s32 %s16, 1
      %s24 = ssub.s32 %s16, %s23
      %p25 = scmp.eq.s32.totalorder %s24, 0
      %s27 = sadd.s32 %s26, 1
      %s28 = scalar_select %p25, %s26, %s27
      %p31 = pneg %p25
      %p32 = scmp.eq.s32.totalorder %s16, 1
      %p33 = por %p31, %p32
      %p34 = scmp.ne.s32.totalorder %s26, %s29
      %p35 = scmp.eq.s32.totalorder %s16, 0
      %p36 = por %p34, %p35
      %p37 = scmp.ne.s32.totalorder %s26, %s29
      %p38 = scmp.eq.s32.totalorder %s21, 1
      %p39 = por %p37, %p38
      %p40 = scmp.ne.s32.totalorder %s29, %s30
      %p41 = scmp.eq.s32.totalorder %s21, 0
      %p42 = por %p40, %p41
      %p43 = scmp.ne.s32.totalorder %s29, %s30
      %p44 = scmp.eq.s32.totalorder %s22, 1
      %p45 = por %p43, %p44
      %p47 = scmp.ne.s32.totalorder %s30, %s46
      %p48 = scmp.eq.s32.totalorder %s22, 0
      %p49 = por %p47, %p48
      %s51 = sadd.s32 %s50, 1
      %p54 = scmp.eq.s32.totalorder %s16, 1
      %p55 = scmp.ne.s32.totalorder %s50, %s52
      %p56 = scmp.eq.s32.totalorder %s16, 0
      %p57 = por %p55, %p56
      %p58 = scmp.ne.s32.totalorder %s50, %s52
      %p59 = scmp.eq.s32.totalorder %s21, 1
      %p60 = por %p58, %p59
      %p61 = scmp.ne.s32.totalorder %s52, %s53
      %p62 = scmp.eq.s32.totalorder %s21, 0
      %p63 = por %p61, %p62
      %p64 = scmp.ne.s32.totalorder %s52, %s53
      %p65 = scmp.eq.s32.totalorder %s22, 1
      %p66 = por %p64, %p65
      %p68 = scmp.ne.s32.totalorder %s53, %s67
      %p69 = scmp.eq.s32.totalorder %s22, 0
      %p70 = por %p68, %p69
      %s72 = sadd.s32 %s71, 1
      %p75 = scmp.eq.s32.totalorder %s16, 1
      %p76 = scmp.ne.s32.totalorder %s71, %s73
      %p77 = scmp.eq.s32.totalorder %s16, 0
      %p78 = por %p76, %p77
      %p79 = scmp.ne.s32.totalorder %s71, %s73
      %p80 = scmp.eq.s32.totalorder %s21, 1
      %p81 = por %p79, %p80
      %p82 = scmp.ne.s32.totalorder %s73, %s74
      %p83 = scmp.eq.s32.totalorder %s21, 0
      %p84 = por %p82, %p83
      %p85 = scmp.ne.s32.totalorder %s73, %s74
      %p86 = scmp.eq.s32.totalorder %s22, 1
      %p87 = por %p85, %p86
      %p89 = scmp.ne.s32.totalorder %s74, %s88
      %p90 = scmp.eq.s32.totalorder %s22, 0
      %p91 = por %p89, %p90
      %s93 = sadd.s32 %s92, 1
      %p96 = scmp.eq.s32.totalorder %s16, 1
      %p97 = scmp.ne.s32.totalorder %s92, %s94
      %p98 = scmp.eq.s32.totalorder %s16, 0
      %p99 = por %p97, %p98
      %p100 = scmp.ne.s32.totalorder %s92, %s94
      %p101 = scmp.eq.s32.totalorder %s21, 1
      %p102 = por %p100, %p101
      %p103 = scmp.ne.s32.totalorder %s94, %s95
      %p104 = scmp.eq.s32.totalorder %s21, 0
      %p105 = por %p103, %p104
      %p106 = scmp.ne.s32.totalorder %s94, %s95
      %p107 = scmp.eq.s32.totalorder %s22, 1
      %p108 = por %p106, %p107
      %p110 = scmp.ne.s32.totalorder %s95, %s109
      %p111 = scmp.eq.s32.totalorder %s22, 0
      %p112 = por %p110, %p111
      %s114 = sadd.s32 %s113, 1
      %p117 = scmp.eq.s32.totalorder %s16, 1
      %p118 = scmp.ne.s32.totalorder %s113, %s115
      %p119 = scmp.eq.s32.totalorder %s16, 0
      %p120 = por %p118, %p119
      %p121 = scmp.ne.s32.totalorder %s113, %s115
      %p122 = scmp.eq.s32.totalorder %s21, 1
      %p123 = por %p121, %p122
      %p124 = scmp.ne.s32.totalorder %s115, %s116
      %p125 = scmp.eq.s32.totalorder %s21, 0
      %p126 = por %p124, %p125
      %p127 = scmp.ne.s32.totalorder %s115, %s116
      %p128 = scmp.eq.s32.totalorder %s22, 1
      %p129 = por %p127, %p128
      %p131 = scmp.ne.s32.totalorder %s116, %s130
      %p132 = scmp.eq.s32.totalorder %s22, 0
      %p133 = por %p131, %p132
      %s135 = sadd.s32 %s134, 1
      %p138 = scmp.eq.s32.totalorder %s16, 1
      %p139 = scmp.ne.s32.totalorder %s134, %s136
      %p140 = scmp.eq.s32.totalorder %s16, 0
      %p141 = por %p139, %p140
      %p142 = scmp.ne.s32.totalorder %s134, %s136
      %p143 = scmp.eq.s32.totalorder %s21, 1
      %p144 = por %p142, %p143
      %p145 = scmp.ne.s32.totalorder %s136, %s137
      %p146 = scmp.eq.s32.totalorder %s21, 0
      %p147 = por %p145, %p146
      %p148 = scmp.ne.s32.totalorder %s136, %s137
      %p149 = scmp.eq.s32.totalorder %s22, 1
      %p150 = por %p148, %p149
      %p152 = scmp.ne.s32.totalorder %s137, %s151
      %p153 = scmp.eq.s32.totalorder %s22, 0
      %p154 = por %p152, %p153
      %s156 = sadd.s32 %s155, 1
      %p159 = scmp.eq.s32.totalorder %s16, 1
      %p160 = scmp.ne.s32.totalorder %s155, %s157
      %p161 = scmp.eq.s32.totalorder %s16, 0
      %p162 = por %p160, %p161
      %p163 = scmp.ne.s32.totalorder %s155, %s157
      %p164 = scmp.eq.s32.totalorder %s21, 1
      %p165 = por %p163, %p164
      %p166 = scmp.ne.s32.totalorder %s157, %s158
      %p167 = scmp.eq.s32.totalorder %s21, 0
      %p168 = por %p166, %p167
      %p169 = scmp.ne.s32.totalorder %s157, %s158
      %p170 = scmp.eq.s32.totalorder %s22, 1
      %p171 = por %p169, %p170
      %p173 = scmp.ne.s32.totalorder %s158, %s172
      %p174 = scmp.eq.s32.totalorder %s22, 0
      %p175 = por %p173, %p174
      %s176 = ssub.s32 %s16, %s23
      %p177 = scmp.eq.s32.totalorder %s176, 0
      %s179 = sadd.s32 %s178, 1
      %s180 = scalar_select %p177, %s178, %s179
      %p183 = pneg %p177
      %p184 = scmp.eq.s32.totalorder %s16, 1
      %p185 = por %p183, %p184
      %p186 = scmp.ne.s32.totalorder %s178, %s181
      %p187 = scmp.eq.s32.totalorder %s16, 0
      %p188 = por %p186, %p187
      %p189 = scmp.ne.s32.totalorder %s178, %s181
      %p190 = scmp.eq.s32.totalorder %s21, 1
      %p191 = por %p189, %p190
      %p192 = scmp.ne.s32.totalorder %s181, %s182
      %p193 = scmp.eq.s32.totalorder %s21, 0
      %p194 = por %p192, %p193
      %p195 = scmp.ne.s32.totalorder %s181, %s182
      %p196 = scmp.eq.s32.totalorder %s22, 1
      %p197 = por %p195, %p196
      %p199 = scmp.ne.s32.totalorder %s182, %s198
      %p200 = scmp.eq.s32.totalorder %s22, 0
      %p201 = por %p199, %p200
      %p202 = scmp.le.s32.totalorder 1, %s16
      %p203 = scmp.lt.s32.totalorder %s16, 3
      %p204 = pnand %p202, %p203
      %p205 = pneg %p204
      // Predicated region
      $region9: #{eco_depth_encoder_forward.11} parent=5 // pred_check
        _
      $region10: #{eco_depth_encoder_forward.11} parent=5 // pred_check_branch
        %207 = sbr.rel (%p204) target = $region12
      $region11: #{eco_depth_encoder_forward.11} parent=5 // pred_region
        %s208 = ssub.s32 %s16, 1
        // Predicated region
        $region13: #{eco_depth_encoder_forward.11} parent=11 // pred_check
          %p209 = pneg %p63
        $region14: #{eco_depth_encoder_forward.11} parent=11 // pred_check_branch
          %211 = sbr.rel (%p209) target = $region16
        $region15: #{eco_depth_encoder_forward.11} parent=11 // pred_region
          _
        $region16: #{eco_depth_encoder_forward.11} parent=11 // pred_fallthru
          _
        // Predicated region
        $region17: #{eco_depth_encoder_forward.11} parent=11 // pred_check
          %p212 = pneg %p84
        $region18: #{eco_depth_encoder_forward.11} parent=11 // pred_check_branch
          %214 = sbr.rel (%p212) target = $region20
        $region19: #{eco_depth_encoder_forward.11} parent=11 // pred_region
          _
        $region20: #{eco_depth_encoder_forward.11} parent=11 // pred_fallthru
          _
        // Predicated region
        $region21: #{eco_depth_encoder_forward.11} parent=11 // pred_check
          %p215 = pneg %p105
        $region22: #{eco_depth_encoder_forward.11} parent=11 // pred_check_branch
          %217 = sbr.rel (%p215) target = $region24
        $region23: #{eco_depth_encoder_forward.11} parent=11 // pred_region
          _
        $region24: #{eco_depth_encoder_forward.11} parent=11 // pred_fallthru
          _
        // Predicated region
        $region25: #{eco_depth_encoder_forward.11} parent=11 // pred_check
          %p218 = pneg %p126
        $region26: #{eco_depth_encoder_forward.11} parent=11 // pred_check_branch
          %220 = sbr.rel (%p218) target = $region28
        $region27: #{eco_depth_encoder_forward.11} parent=11 // pred_region
          _
        $region28: #{eco_depth_encoder_forward.11} parent=11 // pred_fallthru
          _
        // Predicated region
        $region29: #{eco_depth_encoder_forward.11} parent=11 // pred_check
          %p221 = pneg %p147
        $region30: #{eco_depth_encoder_forward.11} parent=11 // pred_check_branch
          %223 = sbr.rel (%p221) target = $region32
        $region31: #{eco_depth_encoder_forward.11} parent=11 // pred_region
          _
        $region32: #{eco_depth_encoder_forward.11} parent=11 // pred_fallthru
          _
        // Predicated region
        $region33: #{eco_depth_encoder_forward.11} parent=11 // pred_check
          %p224 = pneg %p168
        $region34: #{eco_depth_encoder_forward.11} parent=11 // pred_check_branch
          %226 = sbr.rel (%p224) target = $region36
        $region35: #{eco_depth_encoder_forward.11} parent=11 // pred_region
          _
        $region36: #{eco_depth_encoder_forward.11} parent=11 // pred_fallthru
          _
      $region12: #{eco_depth_encoder_forward.11} parent=5 // pred_fallthru
        _
      %p227 = scmp.lt.s32.totalorder %s16, 2
      // Predicated region
      $region37: #{eco_depth_encoder_forward.11} parent=5 // pred_check
        %p228 = pneg %p227
      $region38: #{eco_depth_encoder_forward.11} parent=5 // pred_check_branch
        %230 = sbr.rel (%p228) target = $region40
      $region39: #{eco_depth_encoder_forward.11} parent=5 // pred_region
        // Predicated region
        $region41: #{eco_depth_encoder_forward.11} parent=39 // pred_check
          %p231 = pneg %p36
        $region42: #{eco_depth_encoder_forward.11} parent=39 // pred_check_branch
          %233 = sbr.rel (%p231) target = $region44
        $region43: #{eco_depth_encoder_forward.11} parent=39 // pred_region
          %p234 = scmp.lt.s32.totalorder %s16, 1
          %s235 = scalar_select %p234, %s16, 1
          %s236 = smul.addr %s235, 6
          %s237 = smul.addr %s236, 4
          %s238 = scalar_lea.vmem %s0, %s237
        $region44: #{eco_depth_encoder_forward.11} parent=39 // pred_fallthru
          _
      $region40: #{eco_depth_encoder_forward.11} parent=5 // pred_fallthru
        _
      %p239 = scmp.le.s32.totalorder 1, %s16
      %p240 = scmp.lt.s32.totalorder %s16, 3
      %p241 = pnand %p239, %p240
      %p242 = pneg %p241
      // Predicated region
      $region45: #{eco_depth_encoder_forward.11} parent=5 // pred_check
        _
      $region46: #{eco_depth_encoder_forward.11} parent=5 // pred_check_branch
        %244 = sbr.rel (%p241) target = $region48
      $region47: #{eco_depth_encoder_forward.11} parent=5 // pred_region
        %s245 = ssub.s32 %s16, 1
        %p246 = scmp.lt.s32.totalorder %s21, 1
        %s247 = scalar_select %p246, %s21, 1
        %s248 = smul.addr %s247, 6
        %s249 = smul.addr %s248, 4
        %s250 = scalar_lea.vmem %s0, %s249
        %p251 = pneg %p42
        %p252 = pneg %p39
        %p253 = pneg %p63
        %p254 = pneg %p60
        %p255 = pneg %p84
        %p256 = pneg %p81
        %p257 = pneg %p105
        %p258 = pneg %p102
        %p259 = pneg %p126
        %p260 = pneg %p123
        %p261 = pneg %p147
        %p262 = pneg %p144
        %p263 = pneg %p168
        %p264 = pneg %p165
        %p265 = pneg %p194
        %p266 = pneg %p191
        %s267 = sand.u32 %s181, 1
        %s268 = scalar_lea.sflag [#allocation3], %s267
        %s269 = sand.u32 %s181, 1
        %s270 = smul.addr %s269, 16
        %s271 = scalar_lea.vmem [#allocation2], %s270
        %p272 = scmp.lt.s32.totalorder %s21, 1
        %s273 = scalar_select %p272, %s21, 1
        %s274 = smul.addr %s273, 6
        %s275 = smul.addr %s274, 4
        %s276 = scalar_lea.vmem %s0, %s275
        %v278 = vld [vmem:[%s276] sm:$0xff]
        %v279 = vld [vmem:[%s276 + $0x8] sm:$0xf]
        %v280 = vld [vmem:[%s276 + $0xc] sm:$0xff]
        %v281 = vld [vmem:[%s276 + $0x14] sm:$0xf]
        %v282 = vld [vmem:[%s1] sm:$0xf]
        %v283 = vld [vmem:[%s1 + $0x4] sm:$0xf]
        %v284 = vld [vmem:[%s1 + $0x8] sm:$0xf]
        %v285 = vld [vmem:[%s1 + $0xc] sm:$0xf]
        %v286 = vld [vmem:[%s1 + $0x10] sm:$0xf]
        %v287 = vld [vmem:[%s1 + $0x14] sm:$0xf]
        %v288 = vld [vmem:[%s1 + $0x18] sm:$0xf]
        %v289 = vld [vmem:[%s1 + $0x1c] sm:$0xf]
        %v290 = vld [vmem:[%s1 + $0x20] sm:$0xf]
        %v291 = vld [vmem:[%s1 + $0x24] sm:$0xf]
        %v292 = vld [vmem:[%s1 + $0x28] sm:$0xf]
        %v293 = vld [vmem:[%s1 + $0x2c] sm:$0xf]
        %v294 = vld [vmem:[%s1 + $0x30] sm:$0xf]
        %v295 = vld [vmem:[%s1 + $0x34] sm:$0xf]
        %v296 = vld [vmem:[%s1 + $0x38] sm:$0xf]
        %v297 = vld [vmem:[%s1 + $0x3c] sm:$0xf]
        %v298 = vld [vmem:[%s1 + $0x40] sm:$0xf]
        %v299 = vld [vmem:[%s1 + $0x44] sm:$0xf]
        %v300 = vld [vmem:[%s1 + $0x48] sm:$0xf]
        %v301 = vld [vmem:[%s1 + $0x4c] sm:$0xf]
        %v302 = vld [vmem:[%s1 + $0x50] sm:$0xf]
        %v303 = vld [vmem:[%s1 + $0x54] sm:$0xf]
        %v304 = vld [vmem:[%s1 + $0x58] sm:$0xf]
        %v305 = vld [vmem:[%s1 + $0x5c] sm:$0xf]
        %v306 = vld [vmem:[%s1 + $0x60] sm:$0xf]
        %v307 = vld [vmem:[%s1 + $0x64] sm:$0xf]
        %v308 = vld [vmem:[%s1 + $0x68] sm:$0xf]
        %v309 = vld [vmem:[%s1 + $0x6c] sm:$0xf]
        %v310 = vld [vmem:[%s1 + $0x70] sm:$0xf]
        %v311 = vld [vmem:[%s1 + $0x74] sm:$0xf]
        %v312 = vld [vmem:[%s1 + $0x78] sm:$0xf]
        %v313 = vld [vmem:[%s1 + $0x7c] sm:$0xf]
        %v314 = vld [vmem:[%s1 + $0x80] sm:$0xf]
        %v315 = vld [vmem:[%s1 + $0x84] sm:$0xf]
        %v316 = vld [vmem:[%s1 + $0x88] sm:$0xf]
        %v317 = vld [vmem:[%s1 + $0x8c] sm:$0xf]
        %v318 = vld [vmem:[%s1 + $0x90] sm:$0xf]
        %v319 = vld [vmem:[%s1 + $0x94] sm:$0xf]
        %v320 = vld [vmem:[%s1 + $0x98] sm:$0xf]
        %v321 = vld [vmem:[%s1 + $0x9c] sm:$0xf]
        %v322 = vld [vmem:[%s1 + $0xa0] sm:$0xf]
        %v323 = vld [vmem:[%s1 + $0xa4] sm:$0xf]
        %v324 = vld [vmem:[%s1 + $0xa8] sm:$0xf]
        %v325 = vld [vmem:[%s1 + $0xac] sm:$0xf]
        %v326 = vld [vmem:[%s2] sm:$0x1]
        %v328 = vlaneseq
        %v329 = vshrl.u32 %v328, 7
        %v330 = vsub.s32 0, %v329
        %v331 = vrot.slane %v326, %v330
        %v337 = vunpack.c.l.b16 %v278
        %v338 = vunpack.c.h.b16 %v278
        %v339 = vunpack.c.l.b16 %v279
        %v340 = vunpack.c.l.b16 %v280
        %v341 = vunpack.c.h.b16 %v280
        %v342 = vunpack.c.l.b16 %v281
        %v343 = vpack.c.b16 %v340, %v337
        %v344 = vpack.c.b16 %v341, %v338
        %v345 = vpack.c.b16 %v342, %v339
        %v392 = vunpack.c.l.b16 %v282
        %v393 = vunpack.c.l.b16 %v283
        %v394 = vunpack.c.l.b16 %v284
        %v395 = vunpack.c.l.b16 %v285
        %v396 = vunpack.c.l.b16 %v286
        %v397 = vunpack.c.l.b16 %v287
        %v398 = vunpack.c.l.b16 %v288
        %v399 = vunpack.c.l.b16 %v289
        %v400 = vunpack.c.l.b16 %v290
        %v401 = vunpack.c.l.b16 %v291
        %v402 = vunpack.c.l.b16 %v292
        %v403 = vunpack.c.l.b16 %v293
        %v404 = vunpack.c.l.b16 %v294
        %v405 = vunpack.c.l.b16 %v295
        %v406 = vunpack.c.l.b16 %v296
        %v407 = vunpack.c.l.b16 %v297
        %v408 = vunpack.c.l.b16 %v298
        %v409 = vunpack.c.l.b16 %v299
        %v410 = vunpack.c.l.b16 %v300
        %v411 = vunpack.c.l.b16 %v301
        %v412 = vunpack.c.l.b16 %v302
        %v413 = vunpack.c.l.b16 %v303
        %v414 = vunpack.c.l.b16 %v304
        %v415 = vunpack.c.l.b16 %v305
        %v416 = vunpack.c.l.b16 %v306
        %v417 = vunpack.c.l.b16 %v307
        %v418 = vunpack.c.l.b16 %v308
        %v419 = vunpack.c.l.b16 %v309
        %v420 = vunpack.c.l.b16 %v310
        %v421 = vunpack.c.l.b16 %v311
        %v422 = vunpack.c.l.b16 %v312
        %v423 = vunpack.c.l.b16 %v313
        %v424 = vunpack.c.l.b16 %v314
        %v425 = vunpack.c.l.b16 %v315
        %v426 = vunpack.c.l.b16 %v316
        %v427 = vunpack.c.l.b16 %v317
        %v428 = vunpack.c.l.b16 %v318
        %v429 = vunpack.c.l.b16 %v319
        %v430 = vunpack.c.l.b16 %v320
        %v431 = vunpack.c.l.b16 %v321
        %v432 = vunpack.c.l.b16 %v322
        %v433 = vunpack.c.l.b16 %v323
        %v434 = vunpack.c.l.b16 %v324
        %v435 = vunpack.c.l.b16 %v325
        %v436 = vpack.c.b16 %v393, %v392
        %v437 = vpack.c.b16 %v395, %v394
        %v438 = vpack.c.b16 %v397, %v396
        %v439 = vpack.c.b16 %v399, %v398
        %v440 = vpack.c.b16 %v401, %v400
        %v441 = vpack.c.b16 %v403, %v402
        %v442 = vpack.c.b16 %v405, %v404
        %v443 = vpack.c.b16 %v407, %v406
        %v444 = vpack.c.b16 %v409, %v408
        %v445 = vpack.c.b16 %v411, %v410
        %v446 = vpack.c.b16 %v413, %v412
        %v447 = vpack.c.b16 %v415, %v414
        %v448 = vpack.c.b16 %v417, %v416
        %v449 = vpack.c.b16 %v419, %v418
        %v450 = vpack.c.b16 %v421, %v420
        %v451 = vpack.c.b16 %v423, %v422
        %v452 = vpack.c.b16 %v425, %v424
        %v453 = vpack.c.b16 %v427, %v426
        %v454 = vpack.c.b16 %v429, %v428
        %v455 = vpack.c.b16 %v431, %v430
        %v456 = vpack.c.b16 %v433, %v432
        %v457 = vpack.c.b16 %v435, %v434
        %vm480 = vcmask 785408
        %v482 = vsel %vm480, %v345, 0
        %484 = vmatprep.subr.bf16.mxu0 0
        %485 = vmatpush1.bf16.msra.mxu0 %v436
        %486 = vmatprep.subr.bf16.mxu0 0
        %487 = vmatpush1.bf16.msra.mxu0 %v437
        %488 = vmatprep.subr.bf16.mxu0 0
        %489 = vmatpush1.bf16.msra.mxu0 %v438
        %490 = vmatprep.subr.bf16.mxu0 0
        %491 = vmatpush1.bf16.msra.mxu0 %v439
        %492 = vmatprep.subr.bf16.mxu0 0
        %493 = vmatpush1.bf16.msra.mxu0 %v440
        %494 = vmatprep.subr.bf16.mxu0 0
        %495 = vmatpush1.bf16.msra.mxu0 %v441
        %496 = vmatprep.subr.bf16.mxu0 0
        %497 = vmatpush1.bf16.msra.mxu0 %v442
        %498 = vmatprep.subr.bf16.mxu0 0
        %499 = vmatpush1.bf16.msra.mxu0 %v443
        %500 = vmatprep.subr.bf16.mxu0 0
        %501 = vmatpush1.bf16.msra.mxu0 %v444
        %502 = vmatprep.subr.bf16.mxu0 0
        %503 = vmatpush1.bf16.msra.mxu0 %v445
        %504 = vmatprep.subr.bf16.mxu0 0
        %505 = vmatpush1.bf16.msra.mxu0 %v446
        %506 = vmatprep.subr.bf16.mxu0 0
        %507 = vmatpush1.bf16.msra.mxu0 %v447
        %508 = vmatprep.subr.bf16.mxu0 0
        %509 = vmatpush1.bf16.msra.mxu0 %v448
        %510 = vmatprep.subr.bf16.mxu0 0
        %511 = vmatpush1.bf16.msra.mxu0 %v449
        %512 = vmatprep.subr.bf16.mxu0 0
        %513 = vmatpush1.bf16.msra.mxu0 %v450
        %514 = vmatprep.subr.bf16.mxu0 0
        %515 = vmatpush1.bf16.msra.mxu0 %v451
        %516 = vmatprep.mubr.bf16.mxu0 %v344
        %517 = vmatmul.mubr.bf16.gmra.mrb[0].mxu0 %v343
        %v518 = vpop.f32.mrb[0].mxu0
        %v519 = vadd.f32 %v331, %v518
        %v520 = vpop.f32.mrb[0].mxu0
        %v521 = vpop.f32.mrb[0].mxu0
        %v522 = vadd.f32 %v331, %v521
        %v523 = vpop.f32.mrb[0].mxu0
        %524 = vdwg.mxu0
        %525 = vmatprep.subr.bf16.mxu0 0
        %526 = vmatpush1.bf16.msra.mxu0 %v452
        %527 = vmatprep.subr.bf16.mxu0 0
        %528 = vmatpush1.bf16.msra.mxu0 %v453
        %529 = vmatprep.subr.bf16.mxu0 0
        %530 = vmatpush1.bf16.msra.mxu0 %v454
        %531 = vmatprep.subr.bf16.mxu0 0
        %532 = vmatpush1.bf16.msra.mxu0 %v455
        %533 = vmatprep.subr.bf16.mxu0 0
        %534 = vmatpush1.bf16.msra.mxu0 %v456
        %535 = vmatprep.subr.bf16.mxu0 0
        %536 = vmatpush1.bf16.msra.mxu0 %v457
        %537 = vmatprep.subr.bf16.mxu0 0
        %538 = vmatpush1.bf16.msra.mxu0 0
        %539 = vmatprep.subr.bf16.mxu0 0
        %540 = vmatpush1.bf16.msra.mxu0 0
        %541 = vmatprep.subr.bf16.mxu0 0
        %542 = vmatpush1.bf16.msra.mxu0 0
        %543 = vmatprep.subr.bf16.mxu0 0
        %544 = vmatpush1.bf16.msra.mxu0 0
        %545 = vmatprep.subr.bf16.mxu0 0
        %546 = vmatpush1.bf16.msra.mxu0 0
        %547 = vmatprep.subr.bf16.mxu0 0
        %548 = vmatpush1.bf16.msra.mxu0 0
        %549 = vmatprep.subr.bf16.mxu0 0
        %550 = vmatpush1.bf16.msra.mxu0 0
        %551 = vmatprep.subr.bf16.mxu0 0
        %552 = vmatpush1.bf16.msra.mxu0 0
        %553 = vmatprep.subr.bf16.mxu0 0
        %554 = vmatpush1.bf16.msra.mxu0 0
        %555 = vmatprep.subr.bf16.mxu0 0
        %556 = vmatpush1.bf16.msra.mxu0 0
        %557 = vmatprep.mubr.bf16.mxu0 0
        %558 = vmatmul.mubr.bf16.gmra.mrb[0].mxu0 %v482
        %v559 = vpop.f32.mrb[0].mxu0
        %v560 = vadd.f32 %v519, %v559
        %v561 = vpop.f32.mrb[0].mxu0
        %v562 = vpop.f32.mrb[0].mxu0
        %v563 = vadd.f32 %v522, %v562
        %v564 = vpop.f32.mrb[0].mxu0
        %565 = vdwg.mxu0
        %v566 = vld [vmem:[%s3] sm:$0x1]
        %v567 = vld [vmem:[%s4] sm:$0x1]
        %v568 = vld [vmem:[%s5] sm:$0xff]
        %v569 = vld [vmem:[%s5 + $0x8] sm:$0xff]
        %v570 = vld [vmem:[%s5 + $0x10] sm:$0xff]
        %v571 = vld [vmem:[%s5 + $0x18] sm:$0xff]
        %v572 = vld [vmem:[%s5 + $0x20] sm:$0xff]
        %v573 = vld [vmem:[%s5 + $0x28] sm:$0xff]
        %v574 = vld [vmem:[%s5 + $0x30] sm:$0xff]
        %v575 = vld [vmem:[%s5 + $0x38] sm:$0xff]
        %v576 = vld [vmem:[%s5 + $0x40] sm:$0xff]
        %v577 = vld [vmem:[%s5 + $0x48] sm:$0xff]
        %v578 = vld [vmem:[%s5 + $0x50] sm:$0xff]
        %v579 = vld [vmem:[%s5 + $0x58] sm:$0xff]
        %v580 = vld [vmem:[%s5 + $0x60] sm:$0xff]
        %v581 = vld [vmem:[%s5 + $0x68] sm:$0xff]
        %v582 = vld [vmem:[%s5 + $0x70] sm:$0xff]
        %v583 = vld [vmem:[%s5 + $0x78] sm:$0xff]
        %v584 = vld [vmem:[%s6] sm:$0xff]
        %v585 = vld [vmem:[%s6 + $0x8] sm:$0xff]
        %v586 = vadd.f32 %v560, %v563
        %v587 = vrot.slane %v586, 4
        %v588 = vadd.f32 %v586, %v587
        %v589 = vrot.slane %v588, 2
        %v590 = vadd.f32 %v588, %v589
        %v591 = vrot.slane %v590, 1
        %v592 = vadd.f32 %v590, %v591
        %v593 = vmul.f32 %v560, %v560
        %v594 = vmul.f32 %v563, %v563
        %v595 = vadd.f32 %v593, %v594
        %v596 = vrot.slane %v595, 4
        %v597 = vadd.f32 %v595, %v596
        %v598 = vrot.slane %v597, 2
        %v599 = vadd.f32 %v597, %v598
        %v600 = vrot.slane %v599, 1
        %v601 = vadd.f32 %v599, %v600
        %602 = vmatprep.subr.mxu0 0.0
        %603 = vmatpush1.msra.mxu0 %v568
        %604 = vmatprep.subr.mxu0 0.0
        %605 = vmatpush1.msra.mxu0 %v569
        %606 = vmatprep.subr.mxu0 0.0
        %607 = vmatpush1.msra.mxu0 %v570
        %608 = vmatprep.subr.mxu0 0.0
        %609 = vmatpush1.msra.mxu0 %v571
        %610 = vmatprep.subr.mxu0 0.0
        %611 = vmatpush1.msra.mxu0 %v572
        %612 = vmatprep.subr.mxu0 0.0
        %613 = vmatpush1.msra.mxu0 %v573
        %614 = vmatprep.subr.mxu0 0.0
        %615 = vmatpush1.msra.mxu0 %v574
        %616 = vmatprep.subr.mxu0 0.0
        %617 = vmatpush1.msra.mxu0 %v575
        %618 = vmatprep.subr.mxu0 0.0
        %619 = vmatpush1.msra.mxu0 %v576
        %620 = vmatprep.subr.mxu0 0.0
        %621 = vmatpush1.msra.mxu0 %v577
        %622 = vmatprep.subr.mxu0 0.0
        %623 = vmatpush1.msra.mxu0 %v578
        %624 = vmatprep.subr.mxu0 0.0
        %625 = vmatpush1.msra.mxu0 %v579
        %626 = vmatprep.subr.mxu0 0.0
        %627 = vmatpush1.msra.mxu0 %v580
        %628 = vmatprep.subr.mxu0 0.0
        %629 = vmatpush1.msra.mxu0 %v581
        %630 = vmatprep.subr.mxu0 0.0
        %631 = vmatpush1.msra.mxu0 %v582
        %632 = vmatprep.subr.mxu0 0.0
        %633 = vmatpush1.msra.mxu0 %v583
        %634 = vmatprep.subr.mxu0 0.0
        %635 = vmatpush1.msra.mxu0 0.0
        %636 = vmatprep.subr.mxu0 0.0
        %637 = vmatpush1.msra.mxu0 0.0
        %638 = vmatprep.subr.mxu0 0.0
        %639 = vmatpush1.msra.mxu0 0.0
        %640 = vmatprep.subr.mxu0 0.0
        %641 = vmatpush1.msra.mxu0 0.0
        %642 = vmatprep.subr.mxu0 0.0
        %643 = vmatpush1.msra.mxu0 0.0
        %644 = vmatprep.subr.mxu0 0.0
        %645 = vmatpush1.msra.mxu0 0.0
        %646 = vmatprep.subr.mxu0 0.0
        %647 = vmatpush1.msra.mxu0 0.0
        %648 = vmatprep.subr.mxu0 0.0
        %649 = vmatpush1.msra.mxu0 0.0
        %650 = vmatprep.subr.mxu0 0.0
        %651 = vmatpush1.msra.mxu0 0.0
        %652 = vmatprep.subr.mxu0 0.0
        %653 = vmatpush1.msra.mxu0 0.0
        %654 = vmatprep.subr.mxu0 0.0
        %655 = vmatpush1.msra.mxu0 0.0
        %656 = vmatprep.subr.mxu0 0.0
        %657 = vmatpush1.msra.mxu0 0.0
        %658 = vmatprep.subr.mxu0 0.0
        %659 = vmatpush1.msra.mxu0 0.0
        %660 = vmatprep.subr.mxu0 0.0
        %661 = vmatpush1.msra.mxu0 0.0
        %662 = vmatprep.subr.mxu0 0.0
        %663 = vmatpush1.msra.mxu0 0.0
        %664 = vmatprep.subr.mxu0 0.0
        %665 = vmatpush1.msra.mxu0 0.0
        %666 = vmatprep.mubr.f32.mxu0 0.0
        %667 = vmatmul.mubr.f32.gmra.mrb[0].mxu0 %v592
        %v668 = vpop.f32.mrb[0].mxu0
        %v669 = vadd.f32 0.0, %v668
        %v670 = vpop.f32.mrb[0].mxu0
        %671 = vdwg.mxu0
        %672 = vmatprep.subr.mxu0 0.0
        %673 = vmatpush1.msra.mxu0 %v568
        %674 = vmatprep.subr.mxu0 0.0
        %675 = vmatpush1.msra.mxu0 %v569
        %676 = vmatprep.subr.mxu0 0.0
        %677 = vmatpush1.msra.mxu0 %v570
        %678 = vmatprep.subr.mxu0 0.0
        %679 = vmatpush1.msra.mxu0 %v571
        %680 = vmatprep.subr.mxu0 0.0
        %681 = vmatpush1.msra.mxu0 %v572
        %682 = vmatprep.subr.mxu0 0.0
        %683 = vmatpush1.msra.mxu0 %v573
        %684 = vmatprep.subr.mxu0 0.0
        %685 = vmatpush1.msra.mxu0 %v574
        %686 = vmatprep.subr.mxu0 0.0
        %687 = vmatpush1.msra.mxu0 %v575
        %688 = vmatprep.subr.mxu0 0.0
        %689 = vmatpush1.msra.mxu0 %v576
        %690 = vmatprep.subr.mxu0 0.0
        %691 = vmatpush1.msra.mxu0 %v577
        %692 = vmatprep.subr.mxu0 0.0
        %693 = vmatpush1.msra.mxu0 %v578
        %694 = vmatprep.subr.mxu0 0.0
        %695 = vmatpush1.msra.mxu0 %v579
        %696 = vmatprep.subr.mxu0 0.0
        %697 = vmatpush1.msra.mxu0 %v580
        %698 = vmatprep.subr.mxu0 0.0
        %699 = vmatpush1.msra.mxu0 %v581
        %700 = vmatprep.subr.mxu0 0.0
        %701 = vmatpush1.msra.mxu0 %v582
        %702 = vmatprep.subr.mxu0 0.0
        %703 = vmatpush1.msra.mxu0 %v583
        %704 = vmatprep.subr.mxu0 0.0
        %705 = vmatpush1.msra.mxu0 0.0
        %706 = vmatprep.subr.mxu0 0.0
        %707 = vmatpush1.msra.mxu0 0.0
        %708 = vmatprep.subr.mxu0 0.0
        %709 = vmatpush1.msra.mxu0 0.0
        %710 = vmatprep.subr.mxu0 0.0
        %711 = vmatpush1.msra.mxu0 0.0
        %712 = vmatprep.subr.mxu0 0.0
        %713 = vmatpush1.msra.mxu0 0.0
        %714 = vmatprep.subr.mxu0 0.0
        %715 = vmatpush1.msra.mxu0 0.0
        %716 = vmatprep.subr.mxu0 0.0
        %717 = vmatpush1.msra.mxu0 0.0
        %718 = vmatprep.subr.mxu0 0.0
        %719 = vmatpush1.msra.mxu0 0.0
        %720 = vmatprep.subr.mxu0 0.0
        %721 = vmatpush1.msra.mxu0 0.0
        %722 = vmatprep.subr.mxu0 0.0
        %723 = vmatpush1.msra.mxu0 0.0
        %724 = vmatprep.subr.mxu0 0.0
        %725 = vmatpush1.msra.mxu0 0.0
        %726 = vmatprep.subr.mxu0 0.0
        %727 = vmatpush1.msra.mxu0 0.0
        %728 = vmatprep.subr.mxu0 0.0
        %729 = vmatpush1.msra.mxu0 0.0
        %730 = vmatprep.subr.mxu0 0.0
        %731 = vmatpush1.msra.mxu0 0.0
        %732 = vmatprep.subr.mxu0 0.0
        %733 = vmatpush1.msra.mxu0 0.0
        %734 = vmatprep.subr.mxu0 0.0
        %735 = vmatpush1.msra.mxu0 0.0
        %736 = vmatprep.mubr.f32.mxu0 0.0
        %737 = vmatmul.mubr.f32.gmra.mrb[0].mxu0 %v601
        %v738 = vpop.f32.mrb[0].mxu0
        %v739 = vadd.f32 0.0, %v738
        %v740 = vpop.f32.mrb[0].mxu0
        %741 = vdwg.mxu0
        %vm742 = vcmask 130048
        %v744 = vsel %vm742, %v669, 0
        %746 = vmatprep.subr.mxu0 0.0
        %747 = vmatpush1.msra.mxu0 %v584
        %748 = vmatprep.subr.mxu0 0.0
        %749 = vmatpush1.msra.mxu0 %v585
        %750 = vmatprep.subr.mxu0 0.0
        %751 = vmatpush1.msra.mxu0 0.0
        %752 = vmatprep.subr.mxu0 0.0
        %753 = vmatpush1.msra.mxu0 0.0
        %754 = vmatprep.subr.mxu0 0.0
        %755 = vmatpush1.msra.mxu0 0.0
        %756 = vmatprep.subr.mxu0 0.0
        %757 = vmatpush1.msra.mxu0 0.0
        %758 = vmatprep.subr.mxu0 0.0
        %759 = vmatpush1.msra.mxu0 0.0
        %760 = vmatprep.subr.mxu0 0.0
        %761 = vmatpush1.msra.mxu0 0.0
        %762 = vmatprep.subr.mxu0 0.0
        %763 = vmatpush1.msra.mxu0 0.0
        %764 = vmatprep.subr.mxu0 0.0
        %765 = vmatpush1.msra.mxu0 0.0
        %766 = vmatprep.subr.mxu0 0.0
        %767 = vmatpush1.msra.mxu0 0.0
        %768 = vmatprep.subr.mxu0 0.0
        %769 = vmatpush1.msra.mxu0 0.0
        %770 = vmatprep.subr.mxu0 0.0
        %771 = vmatpush1.msra.mxu0 0.0
        %772 = vmatprep.subr.mxu0 0.0
        %773 = vmatpush1.msra.mxu0 0.0
        %774 = vmatprep.subr.mxu0 0.0
        %775 = vmatpush1.msra.mxu0 0.0
        %776 = vmatprep.subr.mxu0 0.0
        %777 = vmatpush1.msra.mxu0 0.0
        %778 = vmatprep.subr.mxu0 0.0
        %779 = vmatpush1.msra.mxu0 0.0
        %780 = vmatprep.subr.mxu0 0.0
        %781 = vmatpush1.msra.mxu0 0.0
        %782 = vmatprep.subr.mxu0 0.0
        %783 = vmatpush1.msra.mxu0 0.0
        %784 = vmatprep.subr.mxu0 0.0
        %785 = vmatpush1.msra.mxu0 0.0
        %786 = vmatprep.subr.mxu0 0.0
        %787 = vmatpush1.msra.mxu0 0.0
        %788 = vmatprep.subr.mxu0 0.0
        %789 = vmatpush1.msra.mxu0 0.0
        %790 = vmatprep.subr.mxu0 0.0
        %791 = vmatpush1.msra.mxu0 0.0
        %792 = vmatprep.subr.mxu0 0.0
        %793 = vmatpush1.msra.mxu0 0.0
        %794 = vmatprep.subr.mxu0 0.0
        %795 = vmatpush1.msra.mxu0 0.0
        %796 = vmatprep.subr.mxu0 0.0
        %797 = vmatpush1.msra.mxu0 0.0
        %798 = vmatprep.subr.mxu0 0.0
        %799 = vmatpush1.msra.mxu0 0.0
        %800 = vmatprep.subr.mxu0 0.0
        %801 = vmatpush1.msra.mxu0 0.0
        %802 = vmatprep.subr.mxu0 0.0
        %803 = vmatpush1.msra.mxu0 0.0
        %804 = vmatprep.subr.mxu0 0.0
        %805 = vmatpush1.msra.mxu0 0.0
        %806 = vmatprep.subr.mxu0 0.0
        %807 = vmatpush1.msra.mxu0 0.0
        %808 = vmatprep.subr.mxu0 0.0
        %809 = vmatpush1.msra.mxu0 0.0
        %810 = vmatprep.mubr.f32.mxu0 0.0
        %811 = vmatmul.mubr.f32.gmra.mrb[0].mxu0 %v744
        %v812 = vpop.f32.mrb[0].mxu0
        %v813 = vadd.f32 0.0, %v812
        %v814 = vpop.f32.mrb[0].mxu0
        %815 = vdwg.mxu0
        %v817 = vsel %vm742, %v739, 0
        %819 = vmatprep.subr.mxu0 0.0
        %820 = vmatpush1.msra.mxu0 %v584
        %821 = vmatprep.subr.mxu0 0.0
        %822 = vmatpush1.msra.mxu0 %v585
        %823 = vmatprep.subr.mxu0 0.0
        %824 = vmatpush1.msra.mxu0 0.0
        %825 = vmatprep.subr.mxu0 0.0
        %826 = vmatpush1.msra.mxu0 0.0
        %827 = vmatprep.subr.mxu0 0.0
        %828 = vmatpush1.msra.mxu0 0.0
        %829 = vmatprep.subr.mxu0 0.0
        %830 = vmatpush1.msra.mxu0 0.0
        %831 = vmatprep.subr.mxu0 0.0
        %832 = vmatpush1.msra.mxu0 0.0
        %833 = vmatprep.subr.mxu0 0.0
        %834 = vmatpush1.msra.mxu0 0.0
        %835 = vmatprep.subr.mxu0 0.0
        %836 = vmatpush1.msra.mxu0 0.0
        %837 = vmatprep.subr.mxu0 0.0
        %838 = vmatpush1.msra.mxu0 0.0
        %839 = vmatprep.subr.mxu0 0.0
        %840 = vmatpush1.msra.mxu0 0.0
        %841 = vmatprep.subr.mxu0 0.0
        %842 = vmatpush1.msra.mxu0 0.0
        %843 = vmatprep.subr.mxu0 0.0
        %844 = vmatpush1.msra.mxu0 0.0
        %845 = vmatprep.subr.mxu0 0.0
        %846 = vmatpush1.msra.mxu0 0.0
        %847 = vmatprep.subr.mxu0 0.0
        %848 = vmatpush1.msra.mxu0 0.0
        %849 = vmatprep.subr.mxu0 0.0
        %850 = vmatpush1.msra.mxu0 0.0
        %851 = vmatprep.subr.mxu0 0.0
        %852 = vmatpush1.msra.mxu0 0.0
        %853 = vmatprep.subr.mxu0 0.0
        %854 = vmatpush1.msra.mxu0 0.0
        %855 = vmatprep.subr.mxu0 0.0
        %856 = vmatpush1.msra.mxu0 0.0
        %857 = vmatprep.subr.mxu0 0.0
        %858 = vmatpush1.msra.mxu0 0.0
        %859 = vmatprep.subr.mxu0 0.0
        %860 = vmatpush1.msra.mxu0 0.0
        %861 = vmatprep.subr.mxu0 0.0
        %862 = vmatpush1.msra.mxu0 0.0
        %863 = vmatprep.subr.mxu0 0.0
        %864 = vmatpush1.msra.mxu0 0.0
        %865 = vmatprep.subr.mxu0 0.0
        %866 = vmatpush1.msra.mxu0 0.0
        %867 = vmatprep.subr.mxu0 0.0
        %868 = vmatpush1.msra.mxu0 0.0
        %869 = vmatprep.subr.mxu0 0.0
        %870 = vmatpush1.msra.mxu0 0.0
        %871 = vmatprep.subr.mxu0 0.0
        %872 = vmatpush1.msra.mxu0 0.0
        %873 = vmatprep.subr.mxu0 0.0
        %874 = vmatpush1.msra.mxu0 0.0
        %875 = vmatprep.subr.mxu0 0.0
        %876 = vmatpush1.msra.mxu0 0.0
        %877 = vmatprep.subr.mxu0 0.0
        %878 = vmatpush1.msra.mxu0 0.0
        %879 = vmatprep.subr.mxu0 0.0
        %880 = vmatpush1.msra.mxu0 0.0
        %881 = vmatprep.subr.mxu0 0.0
        %882 = vmatpush1.msra.mxu0 0.0
        %883 = vmatprep.mubr.f32.mxu0 0.0
        %884 = vmatmul.mubr.f32.gmra.mrb[0].mxu0 %v817
        %v885 = vpop.f32.mrb[0].mxu0
        %v886 = vadd.f32 0.0, %v885
        %v887 = vpop.f32.mrb[0].mxu0
        %888 = vdwg.mxu0
        %v889 = vmul.f32 %v813, %v813
        %v890 = vsub.f32 %v886, %v889
        %v891 = vadd.f32 %v890, 1e-05
        %v892 = vrsqrt.pop %v891
        %v893 = vmul.f32 %v892, %v566
        %v894 = vmul.f32 %v813, %v893
        %v895 = vsub.f32 %v567, %v894
        %v896 = vlaneseq
        %v897 = vshrl.u32 %v896, 7
        %v898 = vsub.s32 0, %v897
        %v899 = vrot.slane %v893, %v898
        %v900 = vmul.f32 %v560, %v899
        %v901 = vmul.f32 %v563, %v899
        %v903 = vlaneseq
        %v904 = vshrl.u32 %v903, 7
        %v905 = vsub.s32 0, %v904
        %v906 = vrot.slane %v895, %v905
        %v908 = vadd.f32 %v900, %v906
        %v909 = vadd.f32 %v901, %v906
        %v910 = vmax.f32 %v908, 0.0
        %v911 = vmax.f32 %v909, 0.0
        %912 = vst [vmem:[%s271] sm:$0xff] %v910
        %913 = vst [vmem:[%s271 + $0x8] sm:$0xff] %v911
        %s914 = sand.u32 %s181, 1
        %s915 = scalar_lea.sflag [#allocation3], %s914
        %s916 = sand.u32 %s181, 1
        %s917 = smul.addr %s916, 16
        %s918 = scalar_lea.vmem [#allocation2], %s917
        // Predicated region
        $region49: #{eco_depth_encoder_forward.11} parent=47 // pred_check
          %p919 = pneg %p191
        $region50: #{eco_depth_encoder_forward.11} parent=47 // pred_check_branch
          %921 = sbr.rel (%p919) target = $region52
        $region51: #{eco_depth_encoder_forward.11} parent=47 // pred_region
          %s923 = ssub.s32 256, 256
          %924 = vsyncadd %s915, %s923
          %s925 = smul.addr %s21, 2
          %s926 = smul.addr %s925, 128
          %s927 = scalar_lea.hbm %s7, %s926
          %s928 = sshll.u32 %s918, 4
          %s929 = int_to_ptr.vmem [resolvable:$true] %s928
          %934 = dma.vmem_to_hbm [thread:$0]  %s929, 256, %s927, %s915, 128, 128, 8
        $region52: #{eco_depth_encoder_forward.11} parent=47 // pred_fallthru
          _
      $region48: #{eco_depth_encoder_forward.11} parent=5 // pred_fallthru
        _
      %p935 = scmp.le.s32.totalorder 2, %s16
      // Predicated region
      $region53: #{eco_depth_encoder_forward.11} parent=5 // pred_check
        %p936 = pneg %p935
      $region54: #{eco_depth_encoder_forward.11} parent=5 // pred_check_branch
        %938 = sbr.rel (%p936) target = $region56
      $region55: #{eco_depth_encoder_forward.11} parent=5 // pred_region
        %s939 = ssub.s32 %s16, 2
        // Predicated region
        $region57: #{eco_depth_encoder_forward.11} parent=55 // pred_check
          %p940 = pneg %p197
        $region58: #{eco_depth_encoder_forward.11} parent=55 // pred_check_branch
          %942 = sbr.rel (%p940) target = $region60
        $region59: #{eco_depth_encoder_forward.11} parent=55 // pred_region
          %s943 = sand.u32 %s182, 1
          %s944 = scalar_lea.sflag [#allocation3], %s943
          %s945 = sand.u32 %s182, 1
          %s946 = smul.addr %s945, 16
          %s947 = scalar_lea.vmem [#allocation2], %s946
          %948 = dma.done %s944, 256
        $region60: #{eco_depth_encoder_forward.11} parent=55 // pred_fallthru
          _
      $region56: #{eco_depth_encoder_forward.11} parent=5 // pred_fallthru
        _
    $region6: #{eco_depth_encoder_forward.11} parent=1 // loop_footer
      %s20 = sadd.s32 1, %s16
    $region7: #{eco_depth_encoder_forward.11} parent=1 // loop_footer_branch
      %15 = sbr.rel target = $region3
    $region8: #{eco_depth_encoder_forward.11} parent=1 // loop_exit
      _
    %949 = vsyncpa [#allocation3], 1
    %s950 = scalar_lea.sflag [#allocation3], 1
    %951 = vsyncpa %s950, 1

// kernel: eco_depth_encoder_forward.6
$region0: #{eco_depth_encoder_forward.6}
  #allocation0 [shape = 'u32[]', space=smem, size = 0x4, offset = 0x4, fixed_abs, tag = 'smem constant byte address 0x4 - core index']
  #allocation1 [shape = 'u32[144,128]{1,0:T(1,128)}', space=vmem, size = 0x12000, scoped, tag = 'internal scratch']
  %s0 = inlined_call_operand.vmem [shape: f32[2,1024], index: 0, kind: input, shape index: {}]
  %s1 = inlined_call_operand.vmem [shape: s32[2,1024], index: 1, kind: output, shape index: {}]
  %s2 = sld [smem:[#allocation0]]
  $region14: #{eco_depth_encoder_forward.6} parent=0
    _
  %s4 = ssub.s32 1, %s2
  %s5 = scalar_select 0, %s4, %s2
  // Predicated region
  $region2: #{eco_depth_encoder_forward.6} parent=0 // pred_check
    _
  $region3: #{eco_depth_encoder_forward.6} parent=0 // pred_check_branch
    %7 = sbr.rel (0) target = $region5
  $region4: #{eco_depth_encoder_forward.6} parent=0 // pred_region
    _
  $region5: #{eco_depth_encoder_forward.6} parent=0 // pred_fallthru
    _
  %v8 = vld [vmem:[%s0] sm:$0xff]
  %v9 = vld [vmem:[%s0 + $0x8] sm:$0xff]
  %v10 = vmul.f32 %v8, 127.5
  %v11 = vmul.f32 %v9, 127.5
  %v12 = vadd.f32 %v10, 127.5
  %v13 = vadd.f32 %v11, 127.5
  %v14 = vcvt.f32.s32.to.zero.pseudo %v12
  %v15 = vcvt.f32.s32.to.zero.pseudo %v13
  %16 = vst [vmem:[%s1] sm:$0xff] %v14
  %17 = vst [vmem:[%s1 + $0x8] sm:$0xff] %v15
  // Predicated region
  $region6: #{eco_depth_encoder_forward.6} parent=0 // pred_check
    _
  $region7: #{eco_depth_encoder_forward.6} parent=0 // pred_check_branch
    %19 = sbr.rel (0) target = $region9
  $region8: #{eco_depth_encoder_forward.6} parent=0 // pred_region
    _
  $region9: #{eco_depth_encoder_forward.6} parent=0 // pred_fallthru
    _
  // Predicated region
  $region10: #{eco_depth_encoder_forward.6} parent=0 // pred_check
    _
  $region11: #{eco_depth_encoder_forward.6} parent=0 // pred_check_branch
    %21 = sbr.rel (0) target = $region13
  $region12: #{eco_depth_encoder_forward.6} parent=0 // pred_region
    _
  $region13: #{eco_depth_encoder_forward.6} parent=0 // pred_fallthru
    _

// kernel: eco_depth_encoder_forward.7
$region0: #{eco_depth_encoder_forward.7}
  #allocation0 [shape = 'u32[]', space=smem, size = 0x4, offset = 0x4, fixed_abs, tag = 'smem constant byte address 0x4 - core index']
  #allocation1 [shape = 'u32[144,128]{1,0:T(1,128)}', space=vmem, size = 0x12000, scoped, tag = 'internal scratch']
  %s0 = inlined_call_operand.vmem [shape: bf16[2,1000], index: 0, kind: input, shape index: {}]
  %s1 = inlined_call_operand.vmem [shape: bf16[1000,400], index: 1, kind: input, shape index: {}]
  %s2 = inlined_call_operand.vmem [shape: f32[1,400], index: 2, kind: input, shape index: {}]
  %s3 = inlined_call_operand.vmem [shape: bf16[400,100], index: 3, kind: input, shape index: {}]
  %s4 = inlined_call_operand.vmem [shape: f32[1,100], index: 4, kind: input, shape index: {}]
  %s5 = inlined_call_operand.vmem [shape: bf16[100,768], index: 5, kind: input, shape index: {}]
  %s6 = inlined_call_operand.hbm [shape: f32[2,768], index: 6, kind: output, shape index: {}]
  %s7 = sld [smem:[#allocation0]]
  $region34: #{eco_depth_encoder_forward.7} parent=0
    _
  %s9 = ssub.s32 1, %s7
  %s10 = scalar_select 0, %s9, %s7
  $region1: #{eco_depth_encoder_forward.7} parent=0
    #allocation2 [shape = 'u8[6144]{0}', space=vmem, size = 0x1800, scoped, tag = 'output window, operand 0, single buffered']
    #allocation3 [shape = 's32[1]{0}', space=sflag, size = 0x4, scoped, tag = 'scoped memory for eco_depth_encoder_forward.7']
    %11 = vsyncpa [#allocation3], 0
    // Predicated region
    $region2: #{eco_depth_encoder_forward.7} parent=1 // pred_check
      _
    $region3: #{eco_depth_encoder_forward.7} parent=1 // pred_check_branch
      %13 = sbr.rel (0) target = $region5
    $region4: #{eco_depth_encoder_forward.7} parent=1 // pred_region
      _
    $region5: #{eco_depth_encoder_forward.7} parent=1 // pred_fallthru
      _
    // Predicated region
    $region6: #{eco_depth_encoder_forward.7} parent=1 // pred_check
      _
    $region7: #{eco_depth_encoder_forward.7} parent=1 // pred_check_branch
      %15 = sbr.rel (0) target = $region9
    $region8: #{eco_depth_encoder_forward.7} parent=1 // pred_region
      _
    $region9: #{eco_depth_encoder_forward.7} parent=1 // pred_fallthru
      _
    // Predicated region
    $region10: #{eco_depth_encoder_forward.7} parent=1 // pred_check
      _
    $region11: #{eco_depth_encoder_forward.7} parent=1 // pred_check_branch
      %17 = sbr.rel (0) target = $region13
    $region12: #{eco_depth_encoder_forward.7} parent=1 // pred_region
      _
    $region13: #{eco_depth_encoder_forward.7} parent=1 // pred_fallthru
      _
    // Predicated region
    $region14: #{eco_depth_encoder_forward.7} parent=1 // pred_check
      _
    $region15: #{eco_depth_encoder_forward.7} parent=1 // pred_check_branch
      %19 = sbr.rel (0) target = $region17
    $region16: #{eco_depth_encoder_forward.7} parent=1 // pred_region
      _
    $region17: #{eco_depth_encoder_forward.7} parent=1 // pred_fallthru
      _
    // Predicated region
    $region18: #{eco_depth_encoder_forward.7} parent=1 // pred_check
      _
    $region19: #{eco_depth_encoder_forward.7} parent=1 // pred_check_branch
      %21 = sbr.rel (0) target = $region21
    $region20: #{eco_depth_encoder_forward.7} parent=1 // pred_region
      _
    $region21: #{eco_depth_encoder_forward.7} parent=1 // pred_fallthru
      _
    // Predicated region
    $region22: #{eco_depth_encoder_forward.7} parent=1 // pred_check
      _
    $region23: #{eco_depth_encoder_forward.7} parent=1 // pred_check_branch
      %23 = sbr.rel (0) target = $region25
    $region24: #{eco_depth_encoder_forward.7} parent=1 // pred_region
      _
    $region25: #{eco_depth_encoder_forward.7} parent=1 // pred_fallthru
      _
    %v25 = vld [vmem:[%s0] sm:$0xff]
    %v26 = vld [vmem:[%s1] sm:$0xff]
    %v27 = vld [vmem:[%s1 + $0x8] sm:$0xff]
    %v28 = vld [vmem:[%s1 + $0x10] sm:$0xff]
    %v29 = vld [vmem:[%s1 + $0x18] sm:$0xff]
    %v30 = vld [vmem:[%s1 + $0x20] sm:$0xff]
    %v31 = vld [vmem:[%s1 + $0x28] sm:$0xff]
    %v32 = vld [vmem:[%s1 + $0x30] sm:$0xff]
    %v33 = vld [vmem:[%s1 + $0x38] sm:$0xff]
    %v34 = vld [vmem:[%s1 + $0x40] sm:$0xff]
    %v35 = vld [vmem:[%s1 + $0x48] sm:$0xff]
    %v36 = vld [vmem:[%s1 + $0x50] sm:$0xff]
    %v37 = vld [vmem:[%s1 + $0x58] sm:$0xff]
    %v38 = vld [vmem:[%s1 + $0x60] sm:$0xff]
    %v39 = vld [vmem:[%s1 + $0x68] sm:$0xff]
    %v40 = vld [vmem:[%s1 + $0x70] sm:$0xff]
    %v41 = vld [vmem:[%s1 + $0x78] sm:$0xff]
    %v42 = vld [vmem:[%s1 + $0x80] sm:$0xff]
    %v43 = vld [vmem:[%s1 + $0x88] sm:$0xff]
    %v44 = vld [vmem:[%s1 + $0x90] sm:$0xff]
    %v45 = vld [vmem:[%s1 + $0x98] sm:$0xff]
    %v46 = vld [vmem:[%s1 + $0xa0] sm:$0xff]
    %v47 = vld [vmem:[%s1 + $0xa8] sm:$0xff]
    %v48 = vld [vmem:[%s1 + $0xb0] sm:$0xff]
    %v49 = vld [vmem:[%s1 + $0xb8] sm:$0xff]
    %v50 = vld [vmem:[%s1 + $0xc0] sm:$0xff]
    %v51 = vld [vmem:[%s1 + $0xc8] sm:$0xff]
    %v52 = vld [vmem:[%s1 + $0xd0] sm:$0xff]
    %v53 = vld [vmem:[%s1 + $0xd8] sm:$0xff]
    %v54 = vld [vmem:[%s1 + $0xe0] sm:$0xff]
    %v55 = vld [vmem:[%s1 + $0xe8] sm:$0xff]
    %v56 = vld [vmem:[%s1 + $0xf0] sm:$0xff]
    %v57 = vld [vmem:[%s1 + $0xf8] sm:$0xff]
    %v58 = vld [vmem:[%s1 + $0x100] sm:$0xff]
    %v59 = vld [vmem:[%s1 + $0x108] sm:$0xff]
    %v60 = vld [vmem:[%s1 + $0x110] sm:$0xff]
    %v61 = vld [vmem:[%s1 + $0x118] sm:$0xff]
    %v62 = vld [vmem:[%s1 + $0x120] sm:$0xff]
    %v63 = vld [vmem:[%s1 + $0x128] sm:$0xff]
    %v64 = vld [vmem:[%s1 + $0x130] sm:$0xff]
    %v65 = vld [vmem:[%s1 + $0x138] sm:$0xff]
    %v66 = vld [vmem:[%s1 + $0x140] sm:$0xff]
    %v67 = vld [vmem:[%s1 + $0x148] sm:$0xff]
    %v68 = vld [vmem:[%s1 + $0x150] sm:$0xff]
    %v69 = vld [vmem:[%s1 + $0x158] sm:$0xff]
    %v70 = vld [vmem:[%s1 + $0x160] sm:$0xff]
    %v71 = vld [vmem:[%s1 + $0x168] sm:$0xff]
    %v72 = vld [vmem:[%s1 + $0x170] sm:$0xff]
    %v73 = vld [vmem:[%s1 + $0x178] sm:$0xff]
    %v74 = vld [vmem:[%s1 + $0x180] sm:$0xff]
    %v75 = vld [vmem:[%s1 + $0x188] sm:$0xff]
    %v76 = vld [vmem:[%s1 + $0x190] sm:$0xff]
    %v77 = vld [vmem:[%s1 + $0x198] sm:$0xff]
    %v78 = vld [vmem:[%s1 + $0x1a0] sm:$0xff]
    %v79 = vld [vmem:[%s1 + $0x1a8] sm:$0xff]
    %v80 = vld [vmem:[%s1 + $0x1b0] sm:$0xff]
    %v81 = vld [vmem:[%s1 + $0x1b8] sm:$0xff]
    %v82 = vld [vmem:[%s1 + $0x1c0] sm:$0xff]
    %v83 = vld [vmem:[%s1 + $0x1c8] sm:$0xff]
    %v84 = vld [vmem:[%s1 + $0x1d0] sm:$0xff]
    %v85 = vld [vmem:[%s1 + $0x1d8] sm:$0xff]
    %v86 = vld [vmem:[%s1 + $0x1e0] sm:$0xff]
    %v87 = vld [vmem:[%s1 + $0x1e8] sm:$0xff]
    %v88 = vld [vmem:[%s1 + $0x1f0] sm:$0xff]
    %v89 = vld [vmem:[%s1 + $0x1f8] sm:$0xff]
    %v90 = vld [vmem:[%s1 + $0x200] sm:$0xff]
    %v91 = vld [vmem:[%s1 + $0x208] sm:$0xff]
    %v92 = vld [vmem:[%s1 + $0x210] sm:$0xff]
    %v93 = vld [vmem:[%s1 + $0x218] sm:$0xff]
    %v94 = vld [vmem:[%s1 + $0x220] sm:$0xff]
    %v95 = vld [vmem:[%s1 + $0x228] sm:$0xff]
    %v96 = vld [vmem:[%s1 + $0x230] sm:$0xff]
    %v97 = vld [vmem:[%s1 + $0x238] sm:$0xff]
    %v98 = vld [vmem:[%s1 + $0x240] sm:$0xff]
    %v99 = vld [vmem:[%s1 + $0x248] sm:$0xff]
    %v100 = vld [vmem:[%s1 + $0x250] sm:$0xff]
    %v101 = vld [vmem:[%s1 + $0x258] sm:$0xff]
    %v102 = vld [vmem:[%s1 + $0x260] sm:$0xff]
    %v103 = vld [vmem:[%s1 + $0x268] sm:$0xff]
    %v104 = vld [vmem:[%s1 + $0x270] sm:$0xff]
    %v105 = vld [vmem:[%s1 + $0x278] sm:$0xff]
    %v106 = vld [vmem:[%s1 + $0x280] sm:$0xff]
    %v107 = vld [vmem:[%s1 + $0x288] sm:$0xff]
    %v108 = vld [vmem:[%s1 + $0x290] sm:$0xff]
    %v109 = vld [vmem:[%s1 + $0x298] sm:$0xff]
    %v110 = vld [vmem:[%s1 + $0x2a0] sm:$0xff]
    %v111 = vld [vmem:[%s1 + $0x2a8] sm:$0xff]
    %v112 = vld [vmem:[%s1 + $0x2b0] sm:$0xff]
    %v113 = vld [vmem:[%s1 + $0x2b8] sm:$0xff]
    %v114 = vld [vmem:[%s1 + $0x2c0] sm:$0xff]
    %v115 = vld [vmem:[%s1 + $0x2c8] sm:$0xff]
    %v116 = vld [vmem:[%s1 + $0x2d0] sm:$0xff]
    %v117 = vld [vmem:[%s1 + $0x2d8] sm:$0xff]
    %v118 = vld [vmem:[%s1 + $0x2e0] sm:$0xff]
    %v119 = vld [vmem:[%s1 + $0x2e8] sm:$0xff]
    %v120 = vld [vmem:[%s1 + $0x2f0] sm:$0xff]
    %v121 = vld [vmem:[%s1 + $0x2f8] sm:$0xff]
    %v122 = vld [vmem:[%s1 + $0x300] sm:$0xff]
    %v123 = vld [vmem:[%s1 + $0x308] sm:$0xff]
    %v124 = vld [vmem:[%s1 + $0x310] sm:$0xff]
    %v125 = vld [vmem:[%s1 + $0x318] sm:$0xff]
    %v126 = vld [vmem:[%s1 + $0x320] sm:$0xff]
    %v127 = vld [vmem:[%s1 + $0x328] sm:$0xff]
    %v128 = vld [vmem:[%s1 + $0x330] sm:$0xff]
    %v129 = vld [vmem:[%s1 + $0x338] sm:$0xff]
    %v130 = vld [vmem:[%s1 + $0x340] sm:$0xff]
    %v131 = vld [vmem:[%s1 + $0x348] sm:$0xff]
    %v132 = vld [vmem:[%s1 + $0x350] sm:$0xff]
    %v133 = vld [vmem:[%s1 + $0x358] sm:$0xff]
    %v134 = vld [vmem:[%s1 + $0x360] sm:$0xff]
    %v135 = vld [vmem:[%s1 + $0x368] sm:$0xff]
    %v136 = vld [vmem:[%s1 + $0x370] sm:$0xff]
    %v137 = vld [vmem:[%s1 + $0x378] sm:$0xff]
    %v138 = vld [vmem:[%s1 + $0x380] sm:$0xff]
    %v139 = vld [vmem:[%s1 + $0x388] sm:$0xff]
    %v140 = vld [vmem:[%s1 + $0x390] sm:$0xff]
    %v141 = vld [vmem:[%s1 + $0x398] sm:$0xff]
    %v142 = vld [vmem:[%s1 + $0x3a0] sm:$0xff]
    %v143 = vld [vmem:[%s1 + $0x3a8] sm:$0xff]
    %v144 = vld [vmem:[%s1 + $0x3b0] sm:$0xff]
    %v145 = vld [vmem:[%s1 + $0x3b8] sm:$0xff]
    %v146 = vld [vmem:[%s1 + $0x3c0] sm:$0xff]
    %v147 = vld [vmem:[%s1 + $0x3c8] sm:$0xff]
    %v148 = vld [vmem:[%s1 + $0x3d0] sm:$0xff]
    %v149 = vld [vmem:[%s1 + $0x3d8] sm:$0xff]
    %v150 = vld [vmem:[%s1 + $0x3e0] sm:$0xff]
    %v151 = vld [vmem:[%s1 + $0x3e8] sm:$0xff]
    %v152 = vld [vmem:[%s1 + $0x3f0] sm:$0xff]
    %v153 = vld [vmem:[%s1 + $0x3f8] sm:$0xff]
    %v154 = vld [vmem:[%s1 + $0x400] sm:$0xff]
    %v155 = vld [vmem:[%s1 + $0x408] sm:$0xff]
    %v156 = vld [vmem:[%s1 + $0x410] sm:$0xff]
    %v157 = vld [vmem:[%s1 + $0x418] sm:$0xff]
    %v158 = vld [vmem:[%s1 + $0x420] sm:$0xff]
    %v159 = vld [vmem:[%s1 + $0x428] sm:$0xff]
    %v160 = vld [vmem:[%s1 + $0x430] sm:$0xff]
    %v161 = vld [vmem:[%s1 + $0x438] sm:$0xff]
    %v162 = vld [vmem:[%s1 + $0x440] sm:$0xff]
    %v163 = vld [vmem:[%s1 + $0x448] sm:$0xff]
    %v164 = vld [vmem:[%s1 + $0x450] sm:$0xff]
    %v165 = vld [vmem:[%s1 + $0x458] sm:$0xff]
    %v166 = vld [vmem:[%s1 + $0x460] sm:$0xff]
    %v167 = vld [vmem:[%s1 + $0x468] sm:$0xff]
    %v168 = vld [vmem:[%s1 + $0x470] sm:$0xff]
    %v169 = vld [vmem:[%s1 + $0x478] sm:$0xff]
    %v170 = vld [vmem:[%s1 + $0x480] sm:$0xff]
    %v171 = vld [vmem:[%s1 + $0x488] sm:$0xff]
    %v172 = vld [vmem:[%s1 + $0x490] sm:$0xff]
    %v173 = vld [vmem:[%s1 + $0x498] sm:$0xff]
    %v174 = vld [vmem:[%s1 + $0x4a0] sm:$0xff]
    %v175 = vld [vmem:[%s1 + $0x4a8] sm:$0xff]
    %v176 = vld [vmem:[%s1 + $0x4b0] sm:$0xff]
    %v177 = vld [vmem:[%s1 + $0x4b8] sm:$0xff]
    %v178 = vld [vmem:[%s1 + $0x4c0] sm:$0xff]
    %v179 = vld [vmem:[%s1 + $0x4c8] sm:$0xff]
    %v180 = vld [vmem:[%s1 + $0x4d0] sm:$0xff]
    %v181 = vld [vmem:[%s1 + $0x4d8] sm:$0xff]
    %v182 = vld [vmem:[%s1 + $0x4e0] sm:$0xff]
    %v183 = vld [vmem:[%s1 + $0x4e8] sm:$0xff]
    %v184 = vld [vmem:[%s1 + $0x4f0] sm:$0xff]
    %v185 = vld [vmem:[%s1 + $0x4f8] sm:$0xff]
    %v186 = vld [vmem:[%s1 + $0x500] sm:$0xff]
    %v187 = vld [vmem:[%s1 + $0x508] sm:$0xff]
    %v188 = vld [vmem:[%s1 + $0x510] sm:$0xff]
    %v189 = vld [vmem:[%s1 + $0x518] sm:$0xff]
    %v190 = vld [vmem:[%s1 + $0x520] sm:$0xff]
    %v191 = vld [vmem:[%s1 + $0x528] sm:$0xff]
    %v192 = vld [vmem:[%s1 + $0x530] sm:$0xff]
    %v193 = vld [vmem:[%s1 + $0x538] sm:$0xff]
    %v194 = vld [vmem:[%s1 + $0x540] sm:$0xff]
    %v195 = vld [vmem:[%s1 + $0x548] sm:$0xff]
    %v196 = vld [vmem:[%s1 + $0x550] sm:$0xff]
    %v197 = vld [vmem:[%s1 + $0x558] sm:$0xff]
    %v198 = vld [vmem:[%s1 + $0x560] sm:$0xff]
    %v199 = vld [vmem:[%s1 + $0x568] sm:$0xff]
    %v200 = vld [vmem:[%s1 + $0x570] sm:$0xff]
    %v201 = vld [vmem:[%s1 + $0x578] sm:$0xff]
    %v202 = vld [vmem:[%s1 + $0x580] sm:$0xff]
    %v203 = vld [vmem:[%s1 + $0x588] sm:$0xff]
    %v204 = vld [vmem:[%s1 + $0x590] sm:$0xff]
    %v205 = vld [vmem:[%s1 + $0x598] sm:$0xff]
    %v206 = vld [vmem:[%s1 + $0x5a0] sm:$0xff]
    %v207 = vld [vmem:[%s1 + $0x5a8] sm:$0xff]
    %v208 = vld [vmem:[%s1 + $0x5b0] sm:$0xff]
    %v209 = vld [vmem:[%s1 + $0x5b8] sm:$0xff]
    %v210 = vld [vmem:[%s1 + $0x5c0] sm:$0xff]
    %v211 = vld [vmem:[%s1 + $0x5c8] sm:$0xff]
    %v212 = vld [vmem:[%s1 + $0x5d0] sm:$0xff]
    %v213 = vld [vmem:[%s1 + $0x5d8] sm:$0xff]
    %v214 = vld [vmem:[%s1 + $0x5e0] sm:$0xff]
    %v215 = vld [vmem:[%s1 + $0x5e8] sm:$0xff]
    %v216 = vld [vmem:[%s1 + $0x5f0] sm:$0xff]
    %v217 = vld [vmem:[%s1 + $0x5f8] sm:$0xff]
    %v218 = vld [vmem:[%s1 + $0x600] sm:$0xff]
    %v219 = vld [vmem:[%s1 + $0x608] sm:$0xff]
    %v220 = vld [vmem:[%s1 + $0x610] sm:$0xff]
    %v221 = vld [vmem:[%s1 + $0x618] sm:$0xff]
    %v222 = vld [vmem:[%s1 + $0x620] sm:$0xff]
    %v223 = vld [vmem:[%s1 + $0x628] sm:$0xff]
    %v224 = vld [vmem:[%s1 + $0x630] sm:$0xff]
    %v225 = vld [vmem:[%s1 + $0x638] sm:$0xff]
    %v226 = vld [vmem:[%s1 + $0x640] sm:$0xff]
    %v227 = vld [vmem:[%s1 + $0x648] sm:$0xff]
    %v228 = vld [vmem:[%s1 + $0x650] sm:$0xff]
    %v229 = vld [vmem:[%s1 + $0x658] sm:$0xff]
    %v230 = vld [vmem:[%s1 + $0x660] sm:$0xff]
    %v231 = vld [vmem:[%s1 + $0x668] sm:$0xff]
    %v232 = vld [vmem:[%s1 + $0x670] sm:$0xff]
    %v233 = vld [vmem:[%s1 + $0x678] sm:$0xff]
    %v234 = vld [vmem:[%s1 + $0x680] sm:$0xff]
    %v235 = vld [vmem:[%s1 + $0x688] sm:$0xff]
    %v236 = vld [vmem:[%s1 + $0x690] sm:$0xff]
    %v237 = vld [vmem:[%s1 + $0x698] sm:$0xff]
    %v238 = vld [vmem:[%s1 + $0x6a0] sm:$0xff]
    %v239 = vld [vmem:[%s1 + $0x6a8] sm:$0xff]
    %v240 = vld [vmem:[%s1 + $0x6b0] sm:$0xff]
    %v241 = vld [vmem:[%s1 + $0x6b8] sm:$0xff]
    %v242 = vld [vmem:[%s1 + $0x6c0] sm:$0xff]
    %v243 = vld [vmem:[%s1 + $0x6c8] sm:$0xff]
    %v244 = vld [vmem:[%s1 + $0x6d0] sm:$0xff]
    %v245 = vld [vmem:[%s1 + $0x6d8] sm:$0xff]
    %v246 = vld [vmem:[%s1 + $0x6e0] sm:$0xff]
    %v247 = vld [vmem:[%s1 + $0x6e8] sm:$0xff]
    %v248 = vld [vmem:[%s1 + $0x6f0] sm:$0xff]
    %v249 = vld [vmem:[%s1 + $0x6f8] sm:$0xff]
    %v250 = vld [vmem:[%s1 + $0x700] sm:$0xff]
    %v251 = vld [vmem:[%s1 + $0x708] sm:$0xff]
    %v252 = vld [vmem:[%s1 + $0x710] sm:$0xff]
    %v253 = vld [vmem:[%s1 + $0x718] sm:$0xff]
    %v254 = vld [vmem:[%s1 + $0x720] sm:$0xff]
    %v255 = vld [vmem:[%s1 + $0x728] sm:$0xff]
    %v256 = vld [vmem:[%s1 + $0x730] sm:$0xff]
    %v257 = vld [vmem:[%s1 + $0x738] sm:$0xff]
    %v258 = vld [vmem:[%s1 + $0x740] sm:$0xff]
    %v259 = vld [vmem:[%s1 + $0x748] sm:$0xff]
    %v260 = vld [vmem:[%s1 + $0x750] sm:$0xff]
    %v261 = vld [vmem:[%s1 + $0x758] sm:$0xff]
    %v262 = vld [vmem:[%s1 + $0x760] sm:$0xff]
    %v263 = vld [vmem:[%s1 + $0x768] sm:$0xff]
    %v264 = vld [vmem:[%s1 + $0x770] sm:$0xff]
    %v265 = vld [vmem:[%s1 + $0x778] sm:$0xff]
    %v266 = vld [vmem:[%s1 + $0x780] sm:$0xff]
    %v267 = vld [vmem:[%s1 + $0x788] sm:$0xff]
    %v268 = vld [vmem:[%s1 + $0x790] sm:$0xff]
    %v269 = vld [vmem:[%s1 + $0x798] sm:$0xff]
    %v270 = vld [vmem:[%s1 + $0x7a0] sm:$0xff]
    %v271 = vld [vmem:[%s1 + $0x7a8] sm:$0xff]
    %v272 = vld [vmem:[%s1 + $0x7b0] sm:$0xff]
    %v273 = vld [vmem:[%s1 + $0x7b8] sm:$0xff]
    %v274 = vld [vmem:[%s1 + $0x7c0] sm:$0xff]
    %v275 = vld [vmem:[%s1 + $0x7c8] sm:$0xff]
    %v276 = vld [vmem:[%s2] sm:$0xf]
    %v278 = vlaneseq
    %v279 = vshrl.u32 %v278, 7
    %v280 = vsub.s32 0, %v279
    %v281 = vrot.slane %v276, %v280
    %v282 = vlaneseq
    %v283 = vshrl.u32 %v282, 7
    %v284 = vsub.s32 1, %v283
    %v285 = vrot.slane %v276, %v284
    %v286 = vlaneseq
    %v287 = vshrl.u32 %v286, 7
    %v288 = vsub.s32 2, %v287
    %v289 = vrot.slane %v276, %v288
    %v290 = vlaneseq
    %v291 = vshrl.u32 %v290, 7
    %v292 = vsub.s32 3, %v291
    %v293 = vrot.slane %v276, %v292
    %v299 = vcombine.high %v25, %v25
    %v301 = vunpack.c.l.s4 1966171168
    %v302 = vunpack.c.0.s8 %v301
    %v303 = vlaneseq
    %v304 = vshrl.u32 %v303, 7
    %v305 = vsub.s32 %v302, %v304
    %v306 = vrot.slane %v25, %v305
    %v308 = vunpack.c.l.s4 1966171168
    %v309 = vunpack.c.0.s8 %v308
    %v310 = vlaneseq
    %v311 = vshrl.u32 %v310, 7
    %v312 = vsub.s32 %v309, %v311
    %v313 = vrot.slane %v299, %v312
    %v314 = vcombine.high %v306, %v306
    %v315 = vcombine.high %v313, %v313
    %v317 = vunpack.c.l.s4 1966171168
    %v318 = vunpack.c.0.s8 %v317
    %v319 = vlaneseq
    %v320 = vshrl.u32 %v319, 7
    %v321 = vsub.s32 %v318, %v320
    %v322 = vrot.slane %v306, %v321
    %v324 = vunpack.c.l.s4 1966171168
    %v325 = vunpack.c.0.s8 %v324
    %v326 = vlaneseq
    %v327 = vshrl.u32 %v326, 7
    %v328 = vsub.s32 %v325, %v327
    %v329 = vrot.slane %v313, %v328
    %v331 = vunpack.c.l.s4 1966171168
    %v332 = vunpack.c.0.s8 %v331
    %v333 = vlaneseq
    %v334 = vshrl.u32 %v333, 7
    %v335 = vsub.s32 %v332, %v334
    %v336 = vrot.slane %v314, %v335
    %v338 = vunpack.c.l.s4 1966171168
    %v339 = vunpack.c.0.s8 %v338
    %v340 = vlaneseq
    %v341 = vshrl.u32 %v340, 7
    %v342 = vsub.s32 %v339, %v341
    %v343 = vrot.slane %v315, %v342
    %v344 = vcombine.high %v322, %v322
    %v345 = vcombine.high %v329, %v329
    %v346 = vcombine.high %v336, %v336
    %v347 = vcombine.high %v343, %v343
    %v605 = vunpack.c.l.b16 %v26
    %v606 = vunpack.c.h.b16 %v26
    %v607 = vunpack.c.l.b16 %v27
    %v608 = vunpack.c.h.b16 %v27
    %v609 = vunpack.c.l.b16 %v28
    %v610 = vunpack.c.h.b16 %v28
    %v611 = vunpack.c.l.b16 %v29
    %v612 = vunpack.c.h.b16 %v29
    %v613 = vunpack.c.l.b16 %v30
    %v614 = vunpack.c.h.b16 %v30
    %v615 = vunpack.c.l.b16 %v31
    %v616 = vunpack.c.h.b16 %v31
    %v617 = vunpack.c.l.b16 %v32
    %v618 = vunpack.c.h.b16 %v32
    %v619 = vunpack.c.l.b16 %v33
    %v620 = vunpack.c.h.b16 %v33
    %v621 = vunpack.c.l.b16 %v34
    %v622 = vunpack.c.h.b16 %v34
    %v623 = vunpack.c.l.b16 %v35
    %v624 = vunpack.c.h.b16 %v35
    %v625 = vunpack.c.l.b16 %v36
    %v626 = vunpack.c.h.b16 %v36
    %v627 = vunpack.c.l.b16 %v37
    %v628 = vunpack.c.h.b16 %v37
    %v629 = vunpack.c.l.b16 %v38
    %v630 = vunpack.c.h.b16 %v38
    %v631 = vunpack.c.l.b16 %v39
    %v632 = vunpack.c.h.b16 %v39
    %v633 = vunpack.c.l.b16 %v40
    %v634 = vunpack.c.h.b16 %v40
    %v635 = vunpack.c.l.b16 %v41
    %v636 = vunpack.c.h.b16 %v41
    %v637 = vunpack.c.l.b16 %v42
    %v638 = vunpack.c.h.b16 %v42
    %v639 = vunpack.c.l.b16 %v43
    %v640 = vunpack.c.h.b16 %v43
    %v641 = vunpack.c.l.b16 %v44
    %v642 = vunpack.c.h.b16 %v44
    %v643 = vunpack.c.l.b16 %v45
    %v644 = vunpack.c.h.b16 %v45
    %v645 = vunpack.c.l.b16 %v46
    %v646 = vunpack.c.h.b16 %v46
    %v647 = vunpack.c.l.b16 %v47
    %v648 = vunpack.c.h.b16 %v47
    %v649 = vunpack.c.l.b16 %v48
    %v650 = vunpack.c.h.b16 %v48
    %v651 = vunpack.c.l.b16 %v49
    %v652 = vunpack.c.h.b16 %v49
    %v653 = vunpack.c.l.b16 %v50
    %v654 = vunpack.c.h.b16 %v50
    %v655 = vunpack.c.l.b16 %v51
    %v656 = vunpack.c.h.b16 %v51
    %v657 = vunpack.c.l.b16 %v52
    %v658 = vunpack.c.h.b16 %v52
    %v659 = vunpack.c.l.b16 %v53
    %v660 = vunpack.c.h.b16 %v53
    %v661 = vunpack.c.l.b16 %v54
    %v662 = vunpack.c.h.b16 %v54
    %v663 = vunpack.c.l.b16 %v55
    %v664 = vunpack.c.h.b16 %v55
    %v665 = vunpack.c.l.b16 %v56
    %v666 = vunpack.c.h.b16 %v56
    %v667 = vunpack.c.l.b16 %v57
    %v668 = vunpack.c.h.b16 %v57
    %v669 = vunpack.c.l.b16 %v58
    %v670 = vunpack.c.h.b16 %v58
    %v671 = vunpack.c.l.b16 %v59
    %v672 = vunpack.c.h.b16 %v59
    %v673 = vunpack.c.l.b16 %v60
    %v674 = vunpack.c.h.b16 %v60
    %v675 = vunpack.c.l.b16 %v61
    %v676 = vunpack.c.h.b16 %v61
    %v677 = vunpack.c.l.b16 %v62
    %v678 = vunpack.c.h.b16 %v62
    %v679 = vunpack.c.l.b16 %v63
    %v680 = vunpack.c.h.b16 %v63
    %v681 = vunpack.c.l.b16 %v64
    %v682 = vunpack.c.h.b16 %v64
    %v683 = vunpack.c.l.b16 %v65
    %v684 = vunpack.c.h.b16 %v65
    %v685 = vunpack.c.l.b16 %v66
    %v686 = vunpack.c.h.b16 %v66
    %v687 = vunpack.c.l.b16 %v67
    %v688 = vunpack.c.h.b16 %v67
    %v689 = vunpack.c.l.b16 %v68
    %v690 = vunpack.c.h.b16 %v68
    %v691 = vunpack.c.l.b16 %v69
    %v692 = vunpack.c.h.b16 %v69
    %v693 = vunpack.c.l.b16 %v70
    %v694 = vunpack.c.h.b16 %v70
    %v695 = vunpack.c.l.b16 %v71
    %v696 = vunpack.c.h.b16 %v71
    %v697 = vunpack.c.l.b16 %v72
    %v698 = vunpack.c.h.b16 %v72
    %v699 = vunpack.c.l.b16 %v73
    %v700 = vunpack.c.h.b16 %v73
    %v701 = vunpack.c.l.b16 %v74
    %v702 = vunpack.c.h.b16 %v74
    %v703 = vunpack.c.l.b16 %v75
    %v704 = vunpack.c.h.b16 %v75
    %v705 = vunpack.c.l.b16 %v76
    %v706 = vunpack.c.h.b16 %v76
    %v707 = vunpack.c.l.b16 %v77
    %v708 = vunpack.c.h.b16 %v77
    %v709 = vunpack.c.l.b16 %v78
    %v710 = vunpack.c.h.b16 %v78
    %v711 = vunpack.c.l.b16 %v79
    %v712 = vunpack.c.h.b16 %v79
    %v713 = vunpack.c.l.b16 %v80
    %v714 = vunpack.c.h.b16 %v80
    %v715 = vunpack.c.l.b16 %v81
    %v716 = vunpack.c.h.b16 %v81
    %v717 = vunpack.c.l.b16 %v82
    %v718 = vunpack.c.h.b16 %v82
    %v719 = vunpack.c.l.b16 %v83
    %v720 = vunpack.c.h.b16 %v83
    %v721 = vunpack.c.l.b16 %v84
    %v722 = vunpack.c.h.b16 %v84
    %v723 = vunpack.c.l.b16 %v85
    %v724 = vunpack.c.h.b16 %v85
    %v725 = vunpack.c.l.b16 %v86
    %v726 = vunpack.c.h.b16 %v86
    %v727 = vunpack.c.l.b16 %v87
    %v728 = vunpack.c.h.b16 %v87
    %v729 = vunpack.c.l.b16 %v88
    %v730 = vunpack.c.h.b16 %v88
    %v731 = vunpack.c.l.b16 %v89
    %v732 = vunpack.c.h.b16 %v89
    %v733 = vunpack.c.l.b16 %v90
    %v734 = vunpack.c.h.b16 %v90
    %v735 = vunpack.c.l.b16 %v91
    %v736 = vunpack.c.h.b16 %v91
    %v737 = vunpack.c.l.b16 %v92
    %v738 = vunpack.c.h.b16 %v92
    %v739 = vunpack.c.l.b16 %v93
    %v740 = vunpack.c.h.b16 %v93
    %v741 = vunpack.c.l.b16 %v94
    %v742 = vunpack.c.h.b16 %v94
    %v743 = vunpack.c.l.b16 %v95
    %v744 = vunpack.c.h.b16 %v95
    %v745 = vunpack.c.l.b16 %v96
    %v746 = vunpack.c.h.b16 %v96
    %v747 = vunpack.c.l.b16 %v97
    %v748 = vunpack.c.h.b16 %v97
    %v749 = vunpack.c.l.b16 %v98
    %v750 = vunpack.c.h.b16 %v98
    %v751 = vunpack.c.l.b16 %v99
    %v752 = vunpack.c.h.b16 %v99
    %v753 = vunpack.c.l.b16 %v100
    %v754 = vunpack.c.h.b16 %v100
    %v755 = vunpack.c.l.b16 %v101
    %v756 = vunpack.c.h.b16 %v101
    %v757 = vunpack.c.l.b16 %v102
    %v758 = vunpack.c.h.b16 %v102
    %v759 = vunpack.c.l.b16 %v103
    %v760 = vunpack.c.h.b16 %v103
    %v761 = vunpack.c.l.b16 %v104
    %v762 = vunpack.c.h.b16 %v104
    %v763 = vunpack.c.l.b16 %v105
    %v764 = vunpack.c.h.b16 %v105
    %v765 = vunpack.c.l.b16 %v106
    %v766 = vunpack.c.h.b16 %v106
    %v767 = vunpack.c.l.b16 %v107
    %v768 = vunpack.c.h.b16 %v107
    %v769 = vunpack.c.l.b16 %v108
    %v770 = vunpack.c.h.b16 %v108
    %v771 = vunpack.c.l.b16 %v109
    %v772 = vunpack.c.h.b16 %v109
    %v773 = vunpack.c.l.b16 %v110
    %v774 = vunpack.c.h.b16 %v110
    %v775 = vunpack.c.l.b16 %v111
    %v776 = vunpack.c.h.b16 %v111
    %v777 = vunpack.c.l.b16 %v112
    %v778 = vunpack.c.h.b16 %v112
    %v779 = vunpack.c.l.b16 %v113
    %v780 = vunpack.c.h.b16 %v113
    %v781 = vunpack.c.l.b16 %v114
    %v782 = vunpack.c.h.b16 %v114
    %v783 = vunpack.c.l.b16 %v115
    %v784 = vunpack.c.h.b16 %v115
    %v785 = vunpack.c.l.b16 %v116
    %v786 = vunpack.c.h.b16 %v116
    %v787 = vunpack.c.l.b16 %v117
    %v788 = vunpack.c.h.b16 %v117
    %v789 = vunpack.c.l.b16 %v118
    %v790 = vunpack.c.h.b16 %v118
    %v791 = vunpack.c.l.b16 %v119
    %v792 = vunpack.c.h.b16 %v119
    %v793 = vunpack.c.l.b16 %v120
    %v794 = vunpack.c.h.b16 %v120
    %v795 = vunpack.c.l.b16 %v121
    %v796 = vunpack.c.h.b16 %v121
    %v797 = vunpack.c.l.b16 %v122
    %v798 = vunpack.c.h.b16 %v122
    %v799 = vunpack.c.l.b16 %v123
    %v800 = vunpack.c.h.b16 %v123
    %v801 = vunpack.c.l.b16 %v124
    %v802 = vunpack.c.h.b16 %v124
    %v803 = vunpack.c.l.b16 %v125
    %v804 = vunpack.c.h.b16 %v125
    %v805 = vunpack.c.l.b16 %v126
    %v806 = vunpack.c.h.b16 %v126
    %v807 = vunpack.c.l.b16 %v127
    %v808 = vunpack.c.h.b16 %v127
    %v809 = vunpack.c.l.b16 %v128
    %v810 = vunpack.c.h.b16 %v128
    %v811 = vunpack.c.l.b16 %v129
    %v812 = vunpack.c.h.b16 %v129
    %v813 = vunpack.c.l.b16 %v130
    %v814 = vunpack.c.h.b16 %v130
    %v815 = vunpack.c.l.b16 %v131
    %v816 = vunpack.c.h.b16 %v131
    %v817 = vunpack.c.l.b16 %v132
    %v818 = vunpack.c.h.b16 %v132
    %v819 = vunpack.c.l.b16 %v133
    %v820 = vunpack.c.h.b16 %v133
    %v821 = vunpack.c.l.b16 %v134
    %v822 = vunpack.c.h.b16 %v134
    %v823 = vunpack.c.l.b16 %v135
    %v824 = vunpack.c.h.b16 %v135
    %v825 = vunpack.c.l.b16 %v136
    %v826 = vunpack.c.h.b16 %v136
    %v827 = vunpack.c.l.b16 %v137
    %v828 = vunpack.c.h.b16 %v137
    %v829 = vunpack.c.l.b16 %v138
    %v830 = vunpack.c.h.b16 %v138
    %v831 = vunpack.c.l.b16 %v139
    %v832 = vunpack.c.h.b16 %v139
    %v833 = vunpack.c.l.b16 %v140
    %v834 = vunpack.c.h.b16 %v140
    %v835 = vunpack.c.l.b16 %v141
    %v836 = vunpack.c.h.b16 %v141
    %v837 = vunpack.c.l.b16 %v142
    %v838 = vunpack.c.h.b16 %v142
    %v839 = vunpack.c.l.b16 %v143
    %v840 = vunpack.c.h.b16 %v143
    %v841 = vunpack.c.l.b16 %v144
    %v842 = vunpack.c.h.b16 %v144
    %v843 = vunpack.c.l.b16 %v145
    %v844 = vunpack.c.h.b16 %v145
    %v845 = vunpack.c.l.b16 %v146
    %v846 = vunpack.c.h.b16 %v146
    %v847 = vunpack.c.l.b16 %v147
    %v848 = vunpack.c.h.b16 %v147
    %v849 = vunpack.c.l.b16 %v148
    %v850 = vunpack.c.h.b16 %v148
    %v851 = vunpack.c.l.b16 %v149
    %v852 = vunpack.c.h.b16 %v149
    %v853 = vunpack.c.l.b16 %v150
    %v854 = vunpack.c.h.b16 %v150
    %v855 = vunpack.c.l.b16 %v151
    %v856 = vunpack.c.h.b16 %v151
    %v857 = vunpack.c.l.b16 %v152
    %v858 = vunpack.c.h.b16 %v152
    %v859 = vunpack.c.l.b16 %v153
    %v860 = vunpack.c.h.b16 %v153
    %v861 = vunpack.c.l.b16 %v154
    %v862 = vunpack.c.h.b16 %v154
    %v863 = vunpack.c.l.b16 %v155
    %v864 = vunpack.c.h.b16 %v155
    %v865 = vunpack.c.l.b16 %v156
    %v866 = vunpack.c.h.b16 %v156
    %v867 = vunpack.c.l.b16 %v157
    %v868 = vunpack.c.h.b16 %v157
    %v869 = vunpack.c.l.b16 %v158
    %v870 = vunpack.c.h.b16 %v158
    %v871 = vunpack.c.l.b16 %v159
    %v872 = vunpack.c.h.b16 %v159
    %v873 = vunpack.c.l.b16 %v160
    %v874 = vunpack.c.h.b16 %v160
    %v875 = vunpack.c.l.b16 %v161
    %v876 = vunpack.c.h.b16 %v161
    %v877 = vunpack.c.l.b16 %v162
    %v878 = vunpack.c.h.b16 %v162
    %v879 = vunpack.c.l.b16 %v163
    %v880 = vunpack.c.h.b16 %v163
    %v881 = vunpack.c.l.b16 %v164
    %v882 = vunpack.c.h.b16 %v164
    %v883 = vunpack.c.l.b16 %v165
    %v884 = vunpack.c.h.b16 %v165
    %v885 = vunpack.c.l.b16 %v166
    %v886 = vunpack.c.h.b16 %v166
    %v887 = vunpack.c.l.b16 %v167
    %v888 = vunpack.c.h.b16 %v167
    %v889 = vunpack.c.l.b16 %v168
    %v890 = vunpack.c.h.b16 %v168
    %v891 = vunpack.c.l.b16 %v169
    %v892 = vunpack.c.h.b16 %v169
    %v893 = vunpack.c.l.b16 %v170
    %v894 = vunpack.c.h.b16 %v170
    %v895 = vunpack.c.l.b16 %v171
    %v896 = vunpack.c.h.b16 %v171
    %v897 = vunpack.c.l.b16 %v172
    %v898 = vunpack.c.h.b16 %v172
    %v899 = vunpack.c.l.b16 %v173
    %v900 = vunpack.c.h.b16 %v173
    %v901 = vunpack.c.l.b16 %v174
    %v902 = vunpack.c.h.b16 %v174
    %v903 = vunpack.c.l.b16 %v175
    %v904 = vunpack.c.h.b16 %v175
    %v905 = vunpack.c.l.b16 %v176
    %v906 = vunpack.c.h.b16 %v176
    %v907 = vunpack.c.l.b16 %v177
    %v908 = vunpack.c.h.b16 %v177
    %v909 = vunpack.c.l.b16 %v178
    %v910 = vunpack.c.h.b16 %v178
    %v911 = vunpack.c.l.b16 %v179
    %v912 = vunpack.c.h.b16 %v179
    %v913 = vunpack.c.l.b16 %v180
    %v914 = vunpack.c.h.b16 %v180
    %v915 = vunpack.c.l.b16 %v181
    %v916 = vunpack.c.h.b16 %v181
    %v917 = vunpack.c.l.b16 %v182
    %v918 = vunpack.c.h.b16 %v182
    %v919 = vunpack.c.l.b16 %v183
    %v920 = vunpack.c.h.b16 %v183
    %v921 = vunpack.c.l.b16 %v184
    %v922 = vunpack.c.h.b16 %v184
    %v923 = vunpack.c.l.b16 %v185
    %v924 = vunpack.c.h.b16 %v185
    %v925 = vunpack.c.l.b16 %v186
    %v926 = vunpack.c.h.b16 %v186
    %v927 = vunpack.c.l.b16 %v187
    %v928 = vunpack.c.h.b16 %v187
    %v929 = vunpack.c.l.b16 %v188
    %v930 = vunpack.c.h.b16 %v188
    %v931 = vunpack.c.l.b16 %v189
    %v932 = vunpack.c.h.b16 %v189
    %v933 = vunpack.c.l.b16 %v190
    %v934 = vunpack.c.h.b16 %v190
    %v935 = vunpack.c.l.b16 %v191
    %v936 = vunpack.c.h.b16 %v191
    %v937 = vunpack.c.l.b16 %v192
    %v938 = vunpack.c.h.b16 %v192
    %v939 = vunpack.c.l.b16 %v193
    %v940 = vunpack.c.h.b16 %v193
    %v941 = vunpack.c.l.b16 %v194
    %v942 = vunpack.c.h.b16 %v194
    %v943 = vunpack.c.l.b16 %v195
    %v944 = vunpack.c.h.b16 %v195
    %v945 = vunpack.c.l.b16 %v196
    %v946 = vunpack.c.h.b16 %v196
    %v947 = vunpack.c.l.b16 %v197
    %v948 = vunpack.c.h.b16 %v197
    %v949 = vunpack.c.l.b16 %v198
    %v950 = vunpack.c.h.b16 %v198
    %v951 = vunpack.c.l.b16 %v199
    %v952 = vunpack.c.h.b16 %v199
    %v953 = vunpack.c.l.b16 %v200
    %v954 = vunpack.c.h.b16 %v200
    %v955 = vunpack.c.l.b16 %v201
    %v956 = vunpack.c.h.b16 %v201
    %v957 = vunpack.c.l.b16 %v202
    %v958 = vunpack.c.h.b16 %v202
    %v959 = vunpack.c.l.b16 %v203
    %v960 = vunpack.c.h.b16 %v203
    %v961 = vunpack.c.l.b16 %v204
    %v962 = vunpack.c.h.b16 %v204
    %v963 = vunpack.c.l.b16 %v205
    %v964 = vunpack.c.h.b16 %v205
    %v965 = vunpack.c.l.b16 %v206
    %v966 = vunpack.c.h.b16 %v206
    %v967 = vunpack.c.l.b16 %v207
    %v968 = vunpack.c.h.b16 %v207
    %v969 = vunpack.c.l.b16 %v208
    %v970 = vunpack.c.h.b16 %v208
    %v971 = vunpack.c.l.b16 %v209
    %v972 = vunpack.c.h.b16 %v209
    %v973 = vunpack.c.l.b16 %v210
    %v974 = vunpack.c.h.b16 %v210
    %v975 = vunpack.c.l.b16 %v211
    %v976 = vunpack.c.h.b16 %v211
    %v977 = vunpack.c.l.b16 %v212
    %v978 = vunpack.c.h.b16 %v212
    %v979 = vunpack.c.l.b16 %v213
    %v980 = vunpack.c.h.b16 %v213
    %v981 = vunpack.c.l.b16 %v214
    %v982 = vunpack.c.h.b16 %v214
    %v983 = vunpack.c.l.b16 %v215
    %v984 = vunpack.c.h.b16 %v215
    %v985 = vunpack.c.l.b16 %v216
    %v986 = vunpack.c.h.b16 %v216
    %v987 = vunpack.c.l.b16 %v217
    %v988 = vunpack.c.h.b16 %v217
    %v989 = vunpack.c.l.b16 %v218
    %v990 = vunpack.c.h.b16 %v218
    %v991 = vunpack.c.l.b16 %v219
    %v992 = vunpack.c.h.b16 %v219
    %v993 = vunpack.c.l.b16 %v220
    %v994 = vunpack.c.h.b16 %v220
    %v995 = vunpack.c.l.b16 %v221
    %v996 = vunpack.c.h.b16 %v221
    %v997 = vunpack.c.l.b16 %v222
    %v998 = vunpack.c.h.b16 %v222
    %v999 = vunpack.c.l.b16 %v223
    %v1000 = vunpack.c.h.b16 %v223
    %v1001 = vunpack.c.l.b16 %v224
    %v1002 = vunpack.c.h.b16 %v224
    %v1003 = vunpack.c.l.b16 %v225
    %v1004 = vunpack.c.h.b16 %v225
    %v1005 = vunpack.c.l.b16 %v226
    %v1006 = vunpack.c.h.b16 %v226
    %v1007 = vunpack.c.l.b16 %v227
    %v1008 = vunpack.c.h.b16 %v227
    %v1009 = vunpack.c.l.b16 %v228
    %v1010 = vunpack.c.h.b16 %v228
    %v1011 = vunpack.c.l.b16 %v229
    %v1012 = vunpack.c.h.b16 %v229
    %v1013 = vunpack.c.l.b16 %v230
    %v1014 = vunpack.c.h.b16 %v230
    %v1015 = vunpack.c.l.b16 %v231
    %v1016 = vunpack.c.h.b16 %v231
    %v1017 = vunpack.c.l.b16 %v232
    %v1018 = vunpack.c.h.b16 %v232
    %v1019 = vunpack.c.l.b16 %v233
    %v1020 = vunpack.c.h.b16 %v233
    %v1021 = vunpack.c.l.b16 %v234
    %v1022 = vunpack.c.h.b16 %v234
    %v1023 = vunpack.c.l.b16 %v235
    %v1024 = vunpack.c.h.b16 %v235
    %v1025 = vunpack.c.l.b16 %v236
    %v1026 = vunpack.c.h.b16 %v236
    %v1027 = vunpack.c.l.b16 %v237
    %v1028 = vunpack.c.h.b16 %v237
    %v1029 = vunpack.c.l.b16 %v238
    %v1030 = vunpack.c.h.b16 %v238
    %v1031 = vunpack.c.l.b16 %v239
    %v1032 = vunpack.c.h.b16 %v239
    %v1033 = vunpack.c.l.b16 %v240
    %v1034 = vunpack.c.h.b16 %v240
    %v1035 = vunpack.c.l.b16 %v241
    %v1036 = vunpack.c.h.b16 %v241
    %v1037 = vunpack.c.l.b16 %v242
    %v1038 = vunpack.c.h.b16 %v242
    %v1039 = vunpack.c.l.b16 %v243
    %v1040 = vunpack.c.h.b16 %v243
    %v1041 = vunpack.c.l.b16 %v244
    %v1042 = vunpack.c.h.b16 %v244
    %v1043 = vunpack.c.l.b16 %v245
    %v1044 = vunpack.c.h.b16 %v245
    %v1045 = vunpack.c.l.b16 %v246
    %v1046 = vunpack.c.h.b16 %v246
    %v1047 = vunpack.c.l.b16 %v247
    %v1048 = vunpack.c.h.b16 %v247
    %v1049 = vunpack.c.l.b16 %v248
    %v1050 = vunpack.c.h.b16 %v248
    %v1051 = vunpack.c.l.b16 %v249
    %v1052 = vunpack.c.h.b16 %v249
    %v1053 = vunpack.c.l.b16 %v250
    %v1054 = vunpack.c.h.b16 %v250
    %v1055 = vunpack.c.l.b16 %v251
    %v1056 = vunpack.c.h.b16 %v251
    %v1057 = vunpack.c.l.b16 %v252
    %v1058 = vunpack.c.h.b16 %v252
    %v1059 = vunpack.c.l.b16 %v253
    %v1060 = vunpack.c.h.b16 %v253
    %v1061 = vunpack.c.l.b16 %v254
    %v1062 = vunpack.c.h.b16 %v254
    %v1063 = vunpack.c.l.b16 %v255
    %v1064 = vunpack.c.h.b16 %v255
    %v1065 = vunpack.c.l.b16 %v256
    %v1066 = vunpack.c.h.b16 %v256
    %v1067 = vunpack.c.l.b16 %v257
    %v1068 = vunpack.c.h.b16 %v257
    %v1069 = vunpack.c.l.b16 %v258
    %v1070 = vunpack.c.h.b16 %v258
    %v1071 = vunpack.c.l.b16 %v259
    %v1072 = vunpack.c.h.b16 %v259
    %v1073 = vunpack.c.l.b16 %v260
    %v1074 = vunpack.c.h.b16 %v260
    %v1075 = vunpack.c.l.b16 %v261
    %v1076 = vunpack.c.h.b16 %v261
    %v1077 = vunpack.c.l.b16 %v262
    %v1078 = vunpack.c.h.b16 %v262
    %v1079 = vunpack.c.l.b16 %v263
    %v1080 = vunpack.c.h.b16 %v263
    %v1081 = vunpack.c.l.b16 %v264
    %v1082 = vunpack.c.h.b16 %v264
    %v1083 = vunpack.c.l.b16 %v265
    %v1084 = vunpack.c.h.b16 %v265
    %v1085 = vunpack.c.l.b16 %v266
    %v1086 = vunpack.c.h.b16 %v266
    %v1087 = vunpack.c.l.b16 %v267
    %v1088 = vunpack.c.h.b16 %v267
    %v1089 = vunpack.c.l.b16 %v268
    %v1090 = vunpack.c.h.b16 %v268
    %v1091 = vunpack.c.l.b16 %v269
    %v1092 = vunpack.c.h.b16 %v269
    %v1093 = vunpack.c.l.b16 %v270
    %v1094 = vunpack.c.h.b16 %v270
    %v1095 = vunpack.c.l.b16 %v271
    %v1096 = vunpack.c.h.b16 %v271
    %v1097 = vunpack.c.l.b16 %v272
    %v1098 = vunpack.c.h.b16 %v272
    %v1099 = vunpack.c.l.b16 %v273
    %v1100 = vunpack.c.h.b16 %v273
    %v1101 = vunpack.c.l.b16 %v274
    %v1102 = vunpack.c.h.b16 %v274
    %v1103 = vunpack.c.l.b16 %v275
    %v1104 = vunpack.c.h.b16 %v275
    %v1105 = vpack.c.b16 %v609, %v605
    %v1106 = vpack.c.b16 %v610, %v606
    %v1107 = vpack.c.b16 %v611, %v607
    %v1108 = vpack.c.b16 %v612, %v608
    %v1109 = vpack.c.b16 %v617, %v613
    %v1110 = vpack.c.b16 %v618, %v614
    %v1111 = vpack.c.b16 %v619, %v615
    %v1112 = vpack.c.b16 %v620, %v616
    %v1113 = vpack.c.b16 %v625, %v621
    %v1114 = vpack.c.b16 %v626, %v622
    %v1115 = vpack.c.b16 %v627, %v623
    %v1116 = vpack.c.b16 %v628, %v624
    %v1117 = vpack.c.b16 %v633, %v629
    %v1118 = vpack.c.b16 %v634, %v630
    %v1119 = vpack.c.b16 %v635, %v631
    %v1120 = vpack.c.b16 %v636, %v632
    %v1121 = vpack.c.b16 %v641, %v637
    %v1122 = vpack.c.b16 %v642, %v638
    %v1123 = vpack.c.b16 %v643, %v639
    %v1124 = vpack.c.b16 %v644, %v640
    %v1125 = vpack.c.b16 %v649, %v645
    %v1126 = vpack.c.b16 %v650, %v646
    %v1127 = vpack.c.b16 %v651, %v647
    %v1128 = vpack.c.b16 %v652, %v648
    %v1129 = vpack.c.b16 %v657, %v653
    %v1130 = vpack.c.b16 %v658, %v654
    %v1131 = vpack.c.b16 %v659, %v655
    %v1132 = vpack.c.b16 %v660, %v656
    %v1133 = vpack.c.b16 %v665, %v661
    %v1134 = vpack.c.b16 %v666, %v662
    %v1135 = vpack.c.b16 %v667, %v663
    %v1136 = vpack.c.b16 %v668, %v664
    %v1137 = vpack.c.b16 %v673, %v669
    %v1138 = vpack.c.b16 %v674, %v670
    %v1139 = vpack.c.b16 %v675, %v671
    %v1140 = vpack.c.b16 %v676, %v672
    %v1141 = vpack.c.b16 %v681, %v677
    %v1142 = vpack.c.b16 %v682, %v678
    %v1143 = vpack.c.b16 %v683, %v679
    %v1144 = vpack.c.b16 %v684, %v680
    %v1145 = vpack.c.b16 %v689, %v685
    %v1146 = vpack.c.b16 %v690, %v686
    %v1147 = vpack.c.b16 %v691, %v687
    %v1148 = vpack.c.b16 %v692, %v688
    %v1149 = vpack.c.b16 %v697, %v693
    %v1150 = vpack.c.b16 %v698, %v694
    %v1151 = vpack.c.b16 %v699, %v695
    %v1152 = vpack.c.b16 %v700, %v696
    %v1153 = vpack.c.b16 %v705, %v701
    %v1154 = vpack.c.b16 %v706, %v702
    %v1155 = vpack.c.b16 %v707, %v703
    %v1156 = vpack.c.b16 %v708, %v704
    %v1157 = vpack.c.b16 %v713, %v709
    %v1158 = vpack.c.b16 %v714, %v710
    %v1159 = vpack.c.b16 %v715, %v711
    %v1160 = vpack.c.b16 %v716, %v712
    %v1161 = vpack.c.b16 %v721, %v717
    %v1162 = vpack.c.b16 %v722, %v718
    %v1163 = vpack.c.b16 %v723, %v719
    %v1164 = vpack.c.b16 %v724, %v720
    %v1165 = vpack.c.b16 %v729, %v725
    %v1166 = vpack.c.b16 %v730, %v726
    %v1167 = vpack.c.b16 %v731, %v727
    %v1168 = vpack.c.b16 %v732, %v728
    %v1169 = vpack.c.b16 %v737, %v733
    %v1170 = vpack.c.b16 %v738, %v734
    %v1171 = vpack.c.b16 %v739, %v735
    %v1172 = vpack.c.b16 %v740, %v736
    %v1173 = vpack.c.b16 %v745, %v741
    %v1174 = vpack.c.b16 %v746, %v742
    %v1175 = vpack.c.b16 %v747, %v743
    %v1176 = vpack.c.b16 %v748, %v744
    %v1177 = vpack.c.b16 %v753, %v749
    %v1178 = vpack.c.b16 %v754, %v750
    %v1179 = vpack.c.b16 %v755, %v751
    %v1180 = vpack.c.b16 %v756, %v752
    %v1181 = vpack.c.b16 %v761, %v757
    %v1182 = vpack.c.b16 %v762, %v758
    %v1183 = vpack.c.b16 %v763, %v759
    %v1184 = vpack.c.b16 %v764, %v760
    %v1185 = vpack.c.b16 %v769, %v765
    %v1186 = vpack.c.b16 %v770, %v766
    %v1187 = vpack.c.b16 %v771, %v767
    %v1188 = vpack.c.b16 %v772, %v768
    %v1189 = vpack.c.b16 %v777, %v773
    %v1190 = vpack.c.b16 %v778, %v774
    %v1191 = vpack.c.b16 %v779, %v775
    %v1192 = vpack.c.b16 %v780, %v776
    %v1193 = vpack.c.b16 %v785, %v781
    %v1194 = vpack.c.b16 %v786, %v782
    %v1195 = vpack.c.b16 %v787, %v783
    %v1196 = vpack.c.b16 %v788, %v784
    %v1197 = vpack.c.b16 %v793, %v789
    %v1198 = vpack.c.b16 %v794, %v790
    %v1199 = vpack.c.b16 %v795, %v791
    %v1200 = vpack.c.b16 %v796, %v792
    %v1201 = vpack.c.b16 %v801, %v797
    %v1202 = vpack.c.b16 %v802, %v798
    %v1203 = vpack.c.b16 %v803, %v799
    %v1204 = vpack.c.b16 %v804, %v800
    %v1205 = vpack.c.b16 %v809, %v805
    %v1206 = vpack.c.b16 %v810, %v806
    %v1207 = vpack.c.b16 %v811, %v807
    %v1208 = vpack.c.b16 %v812, %v808
    %v1209 = vpack.c.b16 %v817, %v813
    %v1210 = vpack.c.b16 %v818, %v814
    %v1211 = vpack.c.b16 %v819, %v815
    %v1212 = vpack.c.b16 %v820, %v816
    %v1213 = vpack.c.b16 %v825, %v821
    %v1214 = vpack.c.b16 %v826, %v822
    %v1215 = vpack.c.b16 %v827, %v823
    %v1216 = vpack.c.b16 %v828, %v824
    %v1217 = vpack.c.b16 %v833, %v829
    %v1218 = vpack.c.b16 %v834, %v830
    %v1219 = vpack.c.b16 %v835, %v831
    %v1220 = vpack.c.b16 %v836, %v832
    %v1221 = vpack.c.b16 %v841, %v837
    %v1222 = vpack.c.b16 %v842, %v838
    %v1223 = vpack.c.b16 %v843, %v839
    %v1224 = vpack.c.b16 %v844, %v840
    %v1225 = vpack.c.b16 %v849, %v845
    %v1226 = vpack.c.b16 %v850, %v846
    %v1227 = vpack.c.b16 %v851, %v847
    %v1228 = vpack.c.b16 %v852, %v848
    %v1229 = vpack.c.b16 %v857, %v853
    %v1230 = vpack.c.b16 %v858, %v854
    %v1231 = vpack.c.b16 %v859, %v855
    %v1232 = vpack.c.b16 %v860, %v856
    %v1233 = vpack.c.b16 %v865, %v861
    %v1234 = vpack.c.b16 %v866, %v862
    %v1235 = vpack.c.b16 %v867, %v863
    %v1236 = vpack.c.b16 %v868, %v864
    %v1237 = vpack.c.b16 %v873, %v869
    %v1238 = vpack.c.b16 %v874, %v870
    %v1239 = vpack.c.b16 %v875, %v871
    %v1240 = vpack.c.b16 %v876, %v872
    %v1241 = vpack.c.b16 %v881, %v877
    %v1242 = vpack.c.b16 %v882, %v878
    %v1243 = vpack.c.b16 %v883, %v879
    %v1244 = vpack.c.b16 %v884, %v880
    %v1245 = vpack.c.b16 %v889, %v885
    %v1246 = vpack.c.b16 %v890, %v886
    %v1247 = vpack.c.b16 %v891, %v887
    %v1248 = vpack.c.b16 %v892, %v888
    %v1249 = vpack.c.b16 %v897, %v893
    %v1250 = vpack.c.b16 %v898, %v894
    %v1251 = vpack.c.b16 %v899, %v895
    %v1252 = vpack.c.b16 %v900, %v896
    %v1253 = vpack.c.b16 %v905, %v901
    %v1254 = vpack.c.b16 %v906, %v902
    %v1255 = vpack.c.b16 %v907, %v903
    %v1256 = vpack.c.b16 %v908, %v904
    %v1257 = vpack.c.b16 %v913, %v909
    %v1258 = vpack.c.b16 %v914, %v910
    %v1259 = vpack.c.b16 %v915, %v911
    %v1260 = vpack.c.b16 %v916, %v912
    %v1261 = vpack.c.b16 %v921, %v917
    %v1262 = vpack.c.b16 %v922, %v918
    %v1263 = vpack.c.b16 %v923, %v919
    %v1264 = vpack.c.b16 %v924, %v920
    %v1265 = vpack.c.b16 %v929, %v925
    %v1266 = vpack.c.b16 %v930, %v926
    %v1267 = vpack.c.b16 %v931, %v927
    %v1268 = vpack.c.b16 %v932, %v928
    %v1269 = vpack.c.b16 %v937, %v933
    %v1270 = vpack.c.b16 %v938, %v934
    %v1271 = vpack.c.b16 %v939, %v935
    %v1272 = vpack.c.b16 %v940, %v936
    %v1273 = vpack.c.b16 %v945, %v941
    %v1274 = vpack.c.b16 %v946, %v942
    %v1275 = vpack.c.b16 %v947, %v943
    %v1276 = vpack.c.b16 %v948, %v944
    %v1277 = vpack.c.b16 %v953, %v949
    %v1278 = vpack.c.b16 %v954, %v950
    %v1279 = vpack.c.b16 %v955, %v951
    %v1280 = vpack.c.b16 %v956, %v952
    %v1281 = vpack.c.b16 %v961, %v957
    %v1282 = vpack.c.b16 %v962, %v958
    %v1283 = vpack.c.b16 %v963, %v959
    %v1284 = vpack.c.b16 %v964, %v960
    %v1285 = vpack.c.b16 %v969, %v965
    %v1286 = vpack.c.b16 %v970, %v966
    %v1287 = vpack.c.b16 %v971, %v967
    %v1288 = vpack.c.b16 %v972, %v968
    %v1289 = vpack.c.b16 %v977, %v973
    %v1290 = vpack.c.b16 %v978, %v974
    %v1291 = vpack.c.b16 %v979, %v975
    %v1292 = vpack.c.b16 %v980, %v976
    %v1293 = vpack.c.b16 %v985, %v981
    %v1294 = vpack.c.b16 %v986, %v982
    %v1295 = vpack.c.b16 %v987, %v983
    %v1296 = vpack.c.b16 %v988, %v984
    %v1297 = vpack.c.b16 %v993, %v989
    %v1298 = vpack.c.b16 %v994, %v990
    %v1299 = vpack.c.b16 %v995, %v991
    %v1300 = vpack.c.b16 %v996, %v992
    %v1301 = vpack.c.b16 %v1001, %v997
    %v1302 = vpack.c.b16 %v1002, %v998
    %v1303 = vpack.c.b16 %v1003, %v999
    %v1304 = vpack.c.b16 %v1004, %v1000
    %v1305 = vpack.c.b16 %v1009, %v1005
    %v1306 = vpack.c.b16 %v1010, %v1006
    %v1307 = vpack.c.b16 %v1011, %v1007
    %v1308 = vpack.c.b16 %v1012, %v1008
    %v1309 = vpack.c.b16 %v1017, %v1013
    %v1310 = vpack.c.b16 %v1018, %v1014
    %v1311 = vpack.c.b16 %v1019, %v1015
    %v1312 = vpack.c.b16 %v1020, %v1016
    %v1313 = vpack.c.b16 %v1025, %v1021
    %v1314 = vpack.c.b16 %v1026, %v1022
    %v1315 = vpack.c.b16 %v1027, %v1023
    %v1316 = vpack.c.b16 %v1028, %v1024
    %v1317 = vpack.c.b16 %v1033, %v1029
    %v1318 = vpack.c.b16 %v1034, %v1030
    %v1319 = vpack.c.b16 %v1035, %v1031
    %v1320 = vpack.c.b16 %v1036, %v1032
    %v1321 = vpack.c.b16 %v1041, %v1037
    %v1322 = vpack.c.b16 %v1042, %v1038
    %v1323 = vpack.c.b16 %v1043, %v1039
    %v1324 = vpack.c.b16 %v1044, %v1040
    %v1325 = vpack.c.b16 %v1049, %v1045
    %v1326 = vpack.c.b16 %v1050, %v1046
    %v1327 = vpack.c.b16 %v1051, %v1047
    %v1328 = vpack.c.b16 %v1052, %v1048
    %v1329 = vpack.c.b16 %v1057, %v1053
    %v1330 = vpack.c.b16 %v1058, %v1054
    %v1331 = vpack.c.b16 %v1059, %v1055
    %v1332 = vpack.c.b16 %v1060, %v1056
    %v1333 = vpack.c.b16 %v1065, %v1061
    %v1334 = vpack.c.b16 %v1066, %v1062
    %v1335 = vpack.c.b16 %v1067, %v1063
    %v1336 = vpack.c.b16 %v1068, %v1064
    %v1337 = vpack.c.b16 %v1073, %v1069
    %v1338 = vpack.c.b16 %v1074, %v1070
    %v1339 = vpack.c.b16 %v1075, %v1071
    %v1340 = vpack.c.b16 %v1076, %v1072
    %v1341 = vpack.c.b16 %v1081, %v1077
    %v1342 = vpack.c.b16 %v1082, %v1078
    %v1343 = vpack.c.b16 %v1083, %v1079
    %v1344 = vpack.c.b16 %v1084, %v1080
    %v1345 = vpack.c.b16 %v1089, %v1085
    %v1346 = vpack.c.b16 %v1090, %v1086
    %v1347 = vpack.c.b16 %v1091, %v1087
    %v1348 = vpack.c.b16 %v1092, %v1088
    %v1349 = vpack.c.b16 %v1097, %v1093
    %v1350 = vpack.c.b16 %v1098, %v1094
    %v1351 = vpack.c.b16 %v1099, %v1095
    %v1352 = vpack.c.b16 %v1100, %v1096
    %v1353 = vpack.c.b16 %v1101, %v1101
    %v1354 = vpack.c.b16 %v1102, %v1102
    %v1355 = vpack.c.b16 %v1103, %v1103
    %v1356 = vpack.c.b16 %v1104, %v1104
    %vm1605 = vcmask 850944
    %v1607 = vsel %vm1605, %v347, 0
    %vm1609 = vcmask 1043456
    %v1611 = vsel %vm1609, %v1353, 0
    %v1614 = vsel %vm1609, %v1354, 0
    %v1617 = vsel %vm1609, %v1355, 0
    %v1620 = vsel %vm1609, %v1356, 0
    %1622 = vmatprep.subr.bf16.mxu0 %v1106
    %1623 = vmatpush1.bf16.msra.mxu0 %v1105
    %1624 = vmatprep.subr.bf16.mxu0 %v1110
    %1625 = vmatpush1.bf16.msra.mxu0 %v1109
    %1626 = vmatprep.subr.bf16.mxu0 %v1114
    %1627 = vmatpush1.bf16.msra.mxu0 %v1113
    %1628 = vmatprep.subr.bf16.mxu0 %v1118
    %1629 = vmatpush1.bf16.msra.mxu0 %v1117
    %1630 = vmatprep.subr.bf16.mxu0 %v1122
    %1631 = vmatpush1.bf16.msra.mxu0 %v1121
    %1632 = vmatprep.subr.bf16.mxu0 %v1126
    %1633 = vmatpush1.bf16.msra.mxu0 %v1125
    %1634 = vmatprep.subr.bf16.mxu0 %v1130
    %1635 = vmatpush1.bf16.msra.mxu0 %v1129
    %1636 = vmatprep.subr.bf16.mxu0 %v1134
    %1637 = vmatpush1.bf16.msra.mxu0 %v1133
    %1638 = vmatprep.subr.bf16.mxu0 %v1138
    %1639 = vmatpush1.bf16.msra.mxu0 %v1137
    %1640 = vmatprep.subr.bf16.mxu0 %v1142
    %1641 = vmatpush1.bf16.msra.mxu0 %v1141
    %1642 = vmatprep.subr.bf16.mxu0 %v1146
    %1643 = vmatpush1.bf16.msra.mxu0 %v1145
    %1644 = vmatprep.subr.bf16.mxu0 %v1150
    %1645 = vmatpush1.bf16.msra.mxu0 %v1149
    %1646 = vmatprep.subr.bf16.mxu0 %v1154
    %1647 = vmatpush1.bf16.msra.mxu0 %v1153
    %1648 = vmatprep.subr.bf16.mxu0 %v1158
    %1649 = vmatpush1.bf16.msra.mxu0 %v1157
    %1650 = vmatprep.subr.bf16.mxu0 %v1162
    %1651 = vmatpush1.bf16.msra.mxu0 %v1161
    %1652 = vmatprep.subr.bf16.mxu0 %v1166
    %1653 = vmatpush1.bf16.msra.mxu0 %v1165
    %1654 = vmatprep.mubr.bf16.mxu0 %v336
    %1655 = vmatmul.mubr.bf16.gmra.mrb[0].mxu0 %v322
    %v1656 = vpop.f32.mrb[0].mxu0
    %v1657 = vadd.f32 %v281, %v1656
    %v1658 = vpop.f32.mrb[0].mxu0
    %v1659 = vadd.f32 %v285, %v1658
    %v1660 = vpop.f32.mrb[0].mxu0
    %v1661 = vpop.f32.mrb[0].mxu0
    %1662 = vdwg.mxu0
    %1663 = vmatprep.subr.bf16.mxu0 %v1170
    %1664 = vmatpush1.bf16.msra.mxu0 %v1169
    %1665 = vmatprep.subr.bf16.mxu0 %v1174
    %1666 = vmatpush1.bf16.msra.mxu0 %v1173
    %1667 = vmatprep.subr.bf16.mxu0 %v1178
    %1668 = vmatpush1.bf16.msra.mxu0 %v1177
    %1669 = vmatprep.subr.bf16.mxu0 %v1182
    %1670 = vmatpush1.bf16.msra.mxu0 %v1181
    %1671 = vmatprep.subr.bf16.mxu0 %v1186
    %1672 = vmatpush1.bf16.msra.mxu0 %v1185
    %1673 = vmatprep.subr.bf16.mxu0 %v1190
    %1674 = vmatpush1.bf16.msra.mxu0 %v1189
    %1675 = vmatprep.subr.bf16.mxu0 %v1194
    %1676 = vmatpush1.bf16.msra.mxu0 %v1193
    %1677 = vmatprep.subr.bf16.mxu0 %v1198
    %1678 = vmatpush1.bf16.msra.mxu0 %v1197
    %1679 = vmatprep.subr.bf16.mxu0 %v1202
    %1680 = vmatpush1.bf16.msra.mxu0 %v1201
    %1681 = vmatprep.subr.bf16.mxu0 %v1206
    %1682 = vmatpush1.bf16.msra.mxu0 %v1205
    %1683 = vmatprep.subr.bf16.mxu0 %v1210
    %1684 = vmatpush1.bf16.msra.mxu0 %v1209
    %1685 = vmatprep.subr.bf16.mxu0 %v1214
    %1686 = vmatpush1.bf16.msra.mxu0 %v1213
    %1687 = vmatprep.subr.bf16.mxu0 %v1218
    %1688 = vmatpush1.bf16.msra.mxu0 %v1217
    %1689 = vmatprep.subr.bf16.mxu0 %v1222
    %1690 = vmatpush1.bf16.msra.mxu0 %v1221
    %1691 = vmatprep.subr.bf16.mxu0 %v1226
    %1692 = vmatpush1.bf16.msra.mxu0 %v1225
    %1693 = vmatprep.subr.bf16.mxu0 %v1230
    %1694 = vmatpush1.bf16.msra.mxu0 %v1229
    %1695 = vmatprep.mubr.bf16.mxu0 %v346
    %1696 = vmatmul.mubr.bf16.gmra.mrb[0].mxu0 %v344
    %v1697 = vpop.f32.mrb[0].mxu0
    %v1698 = vadd.f32 %v1657, %v1697
    %v1699 = vpop.f32.mrb[0].mxu0
    %v1700 = vadd.f32 %v1659, %v1699
    %v1701 = vpop.f32.mrb[0].mxu0
    %v1702 = vpop.f32.mrb[0].mxu0
    %1703 = vdwg.mxu0
    %1704 = vmatprep.subr.bf16.mxu0 %v1234
    %1705 = vmatpush1.bf16.msra.mxu0 %v1233
    %1706 = vmatprep.subr.bf16.mxu0 %v1238
    %1707 = vmatpush1.bf16.msra.mxu0 %v1237
    %1708 = vmatprep.subr.bf16.mxu0 %v1242
    %1709 = vmatpush1.bf16.msra.mxu0 %v1241
    %1710 = vmatprep.subr.bf16.mxu0 %v1246
    %1711 = vmatpush1.bf16.msra.mxu0 %v1245
    %1712 = vmatprep.subr.bf16.mxu0 %v1250
    %1713 = vmatpush1.bf16.msra.mxu0 %v1249
    %1714 = vmatprep.subr.bf16.mxu0 %v1254
    %1715 = vmatpush1.bf16.msra.mxu0 %v1253
    %1716 = vmatprep.subr.bf16.mxu0 %v1258
    %1717 = vmatpush1.bf16.msra.mxu0 %v1257
    %1718 = vmatprep.subr.bf16.mxu0 %v1262
    %1719 = vmatpush1.bf16.msra.mxu0 %v1261
    %1720 = vmatprep.subr.bf16.mxu0 %v1266
    %1721 = vmatpush1.bf16.msra.mxu0 %v1265
    %1722 = vmatprep.subr.bf16.mxu0 %v1270
    %1723 = vmatpush1.bf16.msra.mxu0 %v1269
    %1724 = vmatprep.subr.bf16.mxu0 %v1274
    %1725 = vmatpush1.bf16.msra.mxu0 %v1273
    %1726 = vmatprep.subr.bf16.mxu0 %v1278
    %1727 = vmatpush1.bf16.msra.mxu0 %v1277
    %1728 = vmatprep.subr.bf16.mxu0 %v1282
    %1729 = vmatpush1.bf16.msra.mxu0 %v1281
    %1730 = vmatprep.subr.bf16.mxu0 %v1286
    %1731 = vmatpush1.bf16.msra.mxu0 %v1285
    %1732 = vmatprep.subr.bf16.mxu0 %v1290
    %1733 = vmatpush1.bf16.msra.mxu0 %v1289
    %1734 = vmatprep.subr.bf16.mxu0 %v1294
    %1735 = vmatpush1.bf16.msra.mxu0 %v1293
    %1736 = vmatprep.mubr.bf16.mxu0 %v343
    %1737 = vmatmul.mubr.bf16.gmra.mrb[0].mxu0 %v329
    %v1738 = vpop.f32.mrb[0].mxu0
    %v1739 = vadd.f32 %v1698, %v1738
    %v1740 = vpop.f32.mrb[0].mxu0
    %v1741 = vadd.f32 %v1700, %v1740
    %v1742 = vpop.f32.mrb[0].mxu0
    %v1743 = vpop.f32.mrb[0].mxu0
    %1744 = vdwg.mxu0
    %1745 = vmatprep.subr.bf16.mxu0 %v1298
    %1746 = vmatpush1.bf16.msra.mxu0 %v1297
    %1747 = vmatprep.subr.bf16.mxu0 %v1302
    %1748 = vmatpush1.bf16.msra.mxu0 %v1301
    %1749 = vmatprep.subr.bf16.mxu0 %v1306
    %1750 = vmatpush1.bf16.msra.mxu0 %v1305
    %1751 = vmatprep.subr.bf16.mxu0 %v1310
    %1752 = vmatpush1.bf16.msra.mxu0 %v1309
    %1753 = vmatprep.subr.bf16.mxu0 %v1314
    %1754 = vmatpush1.bf16.msra.mxu0 %v1313
    %1755 = vmatprep.subr.bf16.mxu0 %v1318
    %1756 = vmatpush1.bf16.msra.mxu0 %v1317
    %1757 = vmatprep.subr.bf16.mxu0 %v1322
    %1758 = vmatpush1.bf16.msra.mxu0 %v1321
    %1759 = vmatprep.subr.bf16.mxu0 %v1326
    %1760 = vmatpush1.bf16.msra.mxu0 %v1325
    %1761 = vmatprep.subr.bf16.mxu0 %v1330
    %1762 = vmatpush1.bf16.msra.mxu0 %v1329
    %1763 = vmatprep.subr.bf16.mxu0 %v1334
    %1764 = vmatpush1.bf16.msra.mxu0 %v1333
    %1765 = vmatprep.subr.bf16.mxu0 %v1338
    %1766 = vmatpush1.bf16.msra.mxu0 %v1337
    %1767 = vmatprep.subr.bf16.mxu0 %v1342
    %1768 = vmatpush1.bf16.msra.mxu0 %v1341
    %1769 = vmatprep.subr.bf16.mxu0 %v1346
    %1770 = vmatpush1.bf16.msra.mxu0 %v1345
    %1771 = vmatprep.subr.bf16.mxu0 %v1350
    %1772 = vmatpush1.bf16.msra.mxu0 %v1349
    %1773 = vmatprep.subr.bf16.mxu0 %v1614
    %1774 = vmatpush1.bf16.msra.mxu0 %v1611
    %1775 = vmatprep.subr.bf16.mxu0 0
    %1776 = vmatpush1.bf16.msra.mxu0 0
    %1777 = vmatprep.mubr.bf16.mxu0 %v1607
    %1778 = vmatmul.mubr.bf16.gmra.mrb[0].mxu0 %v345
    %v1779 = vpop.f32.mrb[0].mxu0
    %v1780 = vadd.f32 %v1739, %v1779
    %v1781 = vpop.f32.mrb[0].mxu0
    %v1782 = vadd.f32 %v1741, %v1781
    %v1783 = vpop.f32.mrb[0].mxu0
    %v1784 = vpop.f32.mrb[0].mxu0
    %1785 = vdwg.mxu0
    %1786 = vmatprep.subr.bf16.mxu0 %v1108
    %1787 = vmatpush1.bf16.msra.mxu0 %v1107
    %1788 = vmatprep.subr.bf16.mxu0 %v1112
    %1789 = vmatpush1.bf16.msra.mxu0 %v1111
    %1790 = vmatprep.subr.bf16.mxu0 %v1116
    %1791 = vmatpush1.bf16.msra.mxu0 %v1115
    %1792 = vmatprep.subr.bf16.mxu0 %v1120
    %1793 = vmatpush1.bf16.msra.mxu0 %v1119
    %1794 = vmatprep.subr.bf16.mxu0 %v1124
    %1795 = vmatpush1.bf16.msra.mxu0 %v1123
    %1796 = vmatprep.subr.bf16.mxu0 %v1128
    %1797 = vmatpush1.bf16.msra.mxu0 %v1127
    %1798 = vmatprep.subr.bf16.mxu0 %v1132
    %1799 = vmatpush1.bf16.msra.mxu0 %v1131
    %1800 = vmatprep.subr.bf16.mxu0 %v1136
    %1801 = vmatpush1.bf16.msra.mxu0 %v1135
    %1802 = vmatprep.subr.bf16.mxu0 %v1140
    %1803 = vmatpush1.bf16.msra.mxu0 %v1139
    %1804 = vmatprep.subr.bf16.mxu0 %v1144
    %1805 = vmatpush1.bf16.msra.mxu0 %v1143
    %1806 = vmatprep.subr.bf16.mxu0 %v1148
    %1807 = vmatpush1.bf16.msra.mxu0 %v1147
    %1808 = vmatprep.subr.bf16.mxu0 %v1152
    %1809 = vmatpush1.bf16.msra.mxu0 %v1151
    %1810 = vmatprep.subr.bf16.mxu0 %v1156
    %1811 = vmatpush1.bf16.msra.mxu0 %v1155
    %1812 = vmatprep.subr.bf16.mxu0 %v1160
    %1813 = vmatpush1.bf16.msra.mxu0 %v1159
    %1814 = vmatprep.subr.bf16.mxu0 %v1164
    %1815 = vmatpush1.bf16.msra.mxu0 %v1163
    %1816 = vmatprep.subr.bf16.mxu0 %v1168
    %1817 = vmatpush1.bf16.msra.mxu0 %v1167
    %1818 = vmatprep.mubr.bf16.mxu0 %v336
    %1819 = vmatmul.mubr.bf16.gmra.mrb[0].mxu0 %v322
    %v1820 = vpop.f32.mrb[0].mxu0
    %v1821 = vadd.f32 %v289, %v1820
    %v1822 = vpop.f32.mrb[0].mxu0
    %v1823 = vadd.f32 %v293, %v1822
    %v1824 = vpop.f32.mrb[0].mxu0
    %v1825 = vpop.f32.mrb[0].mxu0
    %1826 = vdwg.mxu0
    %1827 = vmatprep.subr.bf16.mxu0 %v1172
    %1828 = vmatpush1.bf16.msra.mxu0 %v1171
    %1829 = vmatprep.subr.bf16.mxu0 %v1176
    %1830 = vmatpush1.bf16.msra.mxu0 %v1175
    %1831 = vmatprep.subr.bf16.mxu0 %v1180
    %1832 = vmatpush1.bf16.msra.mxu0 %v1179
    %1833 = vmatprep.subr.bf16.mxu0 %v1184
    %1834 = vmatpush1.bf16.msra.mxu0 %v1183
    %1835 = vmatprep.subr.bf16.mxu0 %v1188
    %1836 = vmatpush1.bf16.msra.mxu0 %v1187
    %1837 = vmatprep.subr.bf16.mxu0 %v1192
    %1838 = vmatpush1.bf16.msra.mxu0 %v1191
    %1839 = vmatprep.subr.bf16.mxu0 %v1196
    %1840 = vmatpush1.bf16.msra.mxu0 %v1195
    %1841 = vmatprep.subr.bf16.mxu0 %v1200
    %1842 = vmatpush1.bf16.msra.mxu0 %v1199
    %1843 = vmatprep.subr.bf16.mxu0 %v1204
    %1844 = vmatpush1.bf16.msra.mxu0 %v1203
    %1845 = vmatprep.subr.bf16.mxu0 %v1208
    %1846 = vmatpush1.bf16.msra.mxu0 %v1207
    %1847 = vmatprep.subr.bf16.mxu0 %v1212
    %1848 = vmatpush1.bf16.msra.mxu0 %v1211
    %1849 = vmatprep.subr.bf16.mxu0 %v1216
    %1850 = vmatpush1.bf16.msra.mxu0 %v1215
    %1851 = vmatprep.subr.bf16.mxu0 %v1220
    %1852 = vmatpush1.bf16.msra.mxu0 %v1219
    %1853 = vmatprep.subr.bf16.mxu0 %v1224
    %1854 = vmatpush1.bf16.msra.mxu0 %v1223
    %1855 = vmatprep.subr.bf16.mxu0 %v1228
    %1856 = vmatpush1.bf16.msra.mxu0 %v1227
    %1857 = vmatprep.subr.bf16.mxu0 %v1232
    %1858 = vmatpush1.bf16.msra.mxu0 %v1231
    %1859 = vmatprep.mubr.bf16.mxu0 %v346
    %1860 = vmatmul.mubr.bf16.gmra.mrb[0].mxu0 %v344
    %v1861 = vpop.f32.mrb[0].mxu0
    %v1862 = vadd.f32 %v1821, %v1861
    %v1863 = vpop.f32.mrb[0].mxu0
    %v1864 = vadd.f32 %v1823, %v1863
    %v1865 = vpop.f32.mrb[0].mxu0
    %v1866 = vpop.f32.mrb[0].mxu0
    %1867 = vdwg.mxu0
    %1868 = vmatprep.subr.bf16.mxu0 %v1236
    %1869 = vmatpush1.bf16.msra.mxu0 %v1235
    %1870 = vmatprep.subr.bf16.mxu0 %v1240
    %1871 = vmatpush1.bf16.msra.mxu0 %v1239
    %1872 = vmatprep.subr.bf16.mxu0 %v1244
    %1873 = vmatpush1.bf16.msra.mxu0 %v1243
    %1874 = vmatprep.subr.bf16.mxu0 %v1248
    %1875 = vmatpush1.bf16.msra.mxu0 %v1247
    %1876 = vmatprep.subr.bf16.mxu0 %v1252
    %1877 = vmatpush1.bf16.msra.mxu0 %v1251
    %1878 = vmatprep.subr.bf16.mxu0 %v1256
    %1879 = vmatpush1.bf16.msra.mxu0 %v1255
    %1880 = vmatprep.subr.bf16.mxu0 %v1260
    %1881 = vmatpush1.bf16.msra.mxu0 %v1259
    %1882 = vmatprep.subr.bf16.mxu0 %v1264
    %1883 = vmatpush1.bf16.msra.mxu0 %v1263
    %1884 = vmatprep.subr.bf16.mxu0 %v1268
    %1885 = vmatpush1.bf16.msra.mxu0 %v1267
    %1886 = vmatprep.subr.bf16.mxu0 %v1272
    %1887 = vmatpush1.bf16.msra.mxu0 %v1271
    %1888 = vmatprep.subr.bf16.mxu0 %v1276
    %1889 = vmatpush1.bf16.msra.mxu0 %v1275
    %1890 = vmatprep.subr.bf16.mxu0 %v1280
    %1891 = vmatpush1.bf16.msra.mxu0 %v1279
    %1892 = vmatprep.subr.bf16.mxu0 %v1284
    %1893 = vmatpush1.bf16.msra.mxu0 %v1283
    %1894 = vmatprep.subr.bf16.mxu0 %v1288
    %1895 = vmatpush1.bf16.msra.mxu0 %v1287
    %1896 = vmatprep.subr.bf16.mxu0 %v1292
    %1897 = vmatpush1.bf16.msra.mxu0 %v1291
    %1898 = vmatprep.subr.bf16.mxu0 %v1296
    %1899 = vmatpush1.bf16.msra.mxu0 %v1295
    %1900 = vmatprep.mubr.bf16.mxu0 %v343
    %1901 = vmatmul.mubr.bf16.gmra.mrb[0].mxu0 %v329
    %v1902 = vpop.f32.mrb[0].mxu0
    %v1903 = vadd.f32 %v1862, %v1902
    %v1904 = vpop.f32.mrb[0].mxu0
    %v1905 = vadd.f32 %v1864, %v1904
    %v1906 = vpop.f32.mrb[0].mxu0
    %v1907 = vpop.f32.mrb[0].mxu0
    %1908 = vdwg.mxu0
    %1909 = vmatprep.subr.bf16.mxu0 %v1300
    %1910 = vmatpush1.bf16.msra.mxu0 %v1299
    %1911 = vmatprep.subr.bf16.mxu0 %v1304
    %1912 = vmatpush1.bf16.msra.mxu0 %v1303
    %1913 = vmatprep.subr.bf16.mxu0 %v1308
    %1914 = vmatpush1.bf16.msra.mxu0 %v1307
    %1915 = vmatprep.subr.bf16.mxu0 %v1312
    %1916 = vmatpush1.bf16.msra.mxu0 %v1311
    %1917 = vmatprep.subr.bf16.mxu0 %v1316
    %1918 = vmatpush1.bf16.msra.mxu0 %v1315
    %1919 = vmatprep.subr.bf16.mxu0 %v1320
    %1920 = vmatpush1.bf16.msra.mxu0 %v1319
    %1921 = vmatprep.subr.bf16.mxu0 %v1324
    %1922 = vmatpush1.bf16.msra.mxu0 %v1323
    %1923 = vmatprep.subr.bf16.mxu0 %v1328
    %1924 = vmatpush1.bf16.msra.mxu0 %v1327
    %1925 = vmatprep.subr.bf16.mxu0 %v1332
    %1926 = vmatpush1.bf16.msra.mxu0 %v1331
    %1927 = vmatprep.subr.bf16.mxu0 %v1336
    %1928 = vmatpush1.bf16.msra.mxu0 %v1335
    %1929 = vmatprep.subr.bf16.mxu0 %v1340
    %1930 = vmatpush1.bf16.msra.mxu0 %v1339
    %1931 = vmatprep.subr.bf16.mxu0 %v1344
    %1932 = vmatpush1.bf16.msra.mxu0 %v1343
    %1933 = vmatprep.subr.bf16.mxu0 %v1348
    %1934 = vmatpush1.bf16.msra.mxu0 %v1347
    %1935 = vmatprep.subr.bf16.mxu0 %v1352
    %1936 = vmatpush1.bf16.msra.mxu0 %v1351
    %1937 = vmatprep.subr.bf16.mxu0 %v1620
    %1938 = vmatpush1.bf16.msra.mxu0 %v1617
    %1939 = vmatprep.subr.bf16.mxu0 0
    %1940 = vmatpush1.bf16.msra.mxu0 0
    %1941 = vmatprep.mubr.bf16.mxu0 %v1607
    %1942 = vmatmul.mubr.bf16.gmra.mrb[0].mxu0 %v345
    %v1943 = vpop.f32.mrb[0].mxu0
    %v1944 = vadd.f32 %v1903, %v1943
    %v1945 = vpop.f32.mrb[0].mxu0
    %v1946 = vadd.f32 %v1905, %v1945
    %v1947 = vpop.f32.mrb[0].mxu0
    %v1948 = vpop.f32.mrb[0].mxu0
    %1949 = vdwg.mxu0
    %v1950 = vmul.f32 %v1780, 0.5
    %v1951 = vmul.f32 %v1782, 0.5
    %v1952 = vmul.f32 %v1944, 0.5
    %v1953 = vmul.f32 %v1946, 0.5
    %v1954 = vmul.f32 %v1780, 0.044715
    %v1955 = vmul.f32 %v1782, 0.044715
    %v1956 = vmul.f32 %v1944, 0.044715
    %v1957 = vmul.f32 %v1946, 0.044715
    %v1958 = vmul.f32 %v1954, %v1780
    %v1959 = vmul.f32 %v1955, %v1782
    %v1960 = vmul.f32 %v1956, %v1944
    %v1961 = vmul.f32 %v1957, %v1946
    %v1962 = vmul.f32 %v1958, %v1780
    %v1963 = vmul.f32 %v1959, %v1782
    %v1964 = vmul.f32 %v1960, %v1944
    %v1965 = vmul.f32 %v1961, %v1946
    %v1966 = vadd.f32 %v1780, %v1962
    %v1967 = vadd.f32 %v1782, %v1963
    %v1968 = vadd.f32 %v1944, %v1964
    %v1969 = vadd.f32 %v1946, %v1965
    %v1970 = vmul.f32 %v1966, 0.7978846
    %v1971 = vmul.f32 %v1967, 0.7978846
    %v1972 = vmul.f32 %v1968, 0.7978846
    %v1973 = vmul.f32 %v1969, 0.7978846
    %v1974 = vtanh.pop %v1970
    %v1975 = vtanh.pop %v1971
    %v1976 = vtanh.pop %v1972
    %v1977 = vtanh.pop %v1973
    %v1978 = vadd.f32 %v1974, 1.0
    %v1979 = vadd.f32 %v1975, 1.0
    %v1980 = vadd.f32 %v1976, 1.0
    %v1981 = vadd.f32 %v1977, 1.0
    %v1982 = vmul.f32 %v1950, %v1978
    %v1983 = vmul.f32 %v1951, %v1979
    %v1984 = vmul.f32 %v1952, %v1980
    %v1985 = vmul.f32 %v1953, %v1981
    %v1986 = vpack.c.bf16 %v1982, %v1982
    %v1987 = vpack.c.bf16 %v1983, %v1983
    %v1988 = vpack.c.bf16 %v1984, %v1984
    %v1989 = vpack.c.bf16 %v1985, %v1985
    %v1990 = vld [vmem:[%s3] sm:$0xf]
    %v1991 = vld [vmem:[%s3 + $0x4] sm:$0xf]
    %v1992 = vld [vmem:[%s3 + $0x8] sm:$0xf]
    %v1993 = vld [vmem:[%s3 + $0xc] sm:$0xf]
    %v1994 = vld [vmem:[%s3 + $0x10] sm:$0xf]
    %v1995 = vld [vmem:[%s3 + $0x14] sm:$0xf]
    %v1996 = vld [vmem:[%s3 + $0x18] sm:$0xf]
    %v1997 = vld [vmem:[%s3 + $0x1c] sm:$0xf]
    %v1998 = vld [vmem:[%s3 + $0x20] sm:$0xf]
    %v1999 = vld [vmem:[%s3 + $0x24] sm:$0xf]
    %v2000 = vld [vmem:[%s3 + $0x28] sm:$0xf]
    %v2001 = vld [vmem:[%s3 + $0x2c] sm:$0xf]
    %v2002 = vld [vmem:[%s3 + $0x30] sm:$0xf]
    %v2003 = vld [vmem:[%s3 + $0x34] sm:$0xf]
    %v2004 = vld [vmem:[%s3 + $0x38] sm:$0xf]
    %v2005 = vld [vmem:[%s3 + $0x3c] sm:$0xf]
    %v2006 = vld [vmem:[%s3 + $0x40] sm:$0xf]
    %v2007 = vld [vmem:[%s3 + $0x44] sm:$0xf]
    %v2008 = vld [vmem:[%s3 + $0x48] sm:$0xf]
    %v2009 = vld [vmem:[%s3 + $0x4c] sm:$0xf]
    %v2010 = vld [vmem:[%s3 + $0x50] sm:$0xf]
    %v2011 = vld [vmem:[%s3 + $0x54] sm:$0xf]
    %v2012 = vld [vmem:[%s3 + $0x58] sm:$0xf]
    %v2013 = vld [vmem:[%s3 + $0x5c] sm:$0xf]
    %v2014 = vld [vmem:[%s3 + $0x60] sm:$0xf]
    %v2015 = vld [vmem:[%s3 + $0x64] sm:$0xf]
    %v2016 = vld [vmem:[%s3 + $0x68] sm:$0xf]
    %v2017 = vld [vmem:[%s3 + $0x6c] sm:$0xf]
    %v2018 = vld [vmem:[%s3 + $0x70] sm:$0xf]
    %v2019 = vld [vmem:[%s3 + $0x74] sm:$0xf]
    %v2020 = vld [vmem:[%s3 + $0x78] sm:$0xf]
    %v2021 = vld [vmem:[%s3 + $0x7c] sm:$0xf]
    %v2022 = vld [vmem:[%s3 + $0x80] sm:$0xf]
    %v2023 = vld [vmem:[%s3 + $0x84] sm:$0xf]
    %v2024 = vld [vmem:[%s3 + $0x88] sm:$0xf]
    %v2025 = vld [vmem:[%s3 + $0x8c] sm:$0xf]
    %v2026 = vld [vmem:[%s3 + $0x90] sm:$0xf]
    %v2027 = vld [vmem:[%s3 + $0x94] sm:$0xf]
    %v2028 = vld [vmem:[%s3 + $0x98] sm:$0xf]
    %v2029 = vld [vmem:[%s3 + $0x9c] sm:$0xf]
    %v2030 = vld [vmem:[%s3 + $0xa0] sm:$0xf]
    %v2031 = vld [vmem:[%s3 + $0xa4] sm:$0xf]
    %v2032 = vld [vmem:[%s3 + $0xa8] sm:$0xf]
    %v2033 = vld [vmem:[%s3 + $0xac] sm:$0xf]
    %v2034 = vld [vmem:[%s3 + $0xb0] sm:$0xf]
    %v2035 = vld [vmem:[%s3 + $0xb4] sm:$0xf]
    %v2036 = vld [vmem:[%s3 + $0xb8] sm:$0xf]
    %v2037 = vld [vmem:[%s3 + $0xbc] sm:$0xf]
    %v2038 = vld [vmem:[%s3 + $0xc0] sm:$0xf]
    %v2039 = vld [vmem:[%s3 + $0xc4] sm:$0xf]
    %v2040 = vld [vmem:[%s4] sm:$0x1]
    %v2042 = vlaneseq
    %v2043 = vshrl.u32 %v2042, 7
    %v2044 = vsub.s32 0, %v2043
    %v2045 = vrot.slane %v2040, %v2044
    %v2097 = vunpack.c.l.b16 %v1990
    %v2098 = vunpack.c.l.b16 %v1991
    %v2099 = vunpack.c.l.b16 %v1992
    %v2100 = vunpack.c.l.b16 %v1993
    %v2101 = vunpack.c.l.b16 %v1994
    %v2102 = vunpack.c.l.b16 %v1995
    %v2103 = vunpack.c.l.b16 %v1996
    %v2104 = vunpack.c.l.b16 %v1997
    %v2105 = vunpack.c.l.b16 %v1998
    %v2106 = vunpack.c.l.b16 %v1999
    %v2107 = vunpack.c.l.b16 %v2000
    %v2108 = vunpack.c.l.b16 %v2001
    %v2109 = vunpack.c.l.b16 %v2002
    %v2110 = vunpack.c.l.b16 %v2003
    %v2111 = vunpack.c.l.b16 %v2004
    %v2112 = vunpack.c.l.b16 %v2005
    %v2113 = vunpack.c.l.b16 %v2006
    %v2114 = vunpack.c.l.b16 %v2007
    %v2115 = vunpack.c.l.b16 %v2008
    %v2116 = vunpack.c.l.b16 %v2009
    %v2117 = vunpack.c.l.b16 %v2010
    %v2118 = vunpack.c.l.b16 %v2011
    %v2119 = vunpack.c.l.b16 %v2012
    %v2120 = vunpack.c.l.b16 %v2013
    %v2121 = vunpack.c.l.b16 %v2014
    %v2122 = vunpack.c.l.b16 %v2015
    %v2123 = vunpack.c.l.b16 %v2016
    %v2124 = vunpack.c.l.b16 %v2017
    %v2125 = vunpack.c.l.b16 %v2018
    %v2126 = vunpack.c.l.b16 %v2019
    %v2127 = vunpack.c.l.b16 %v2020
    %v2128 = vunpack.c.l.b16 %v2021
    %v2129 = vunpack.c.l.b16 %v2022
    %v2130 = vunpack.c.l.b16 %v2023
    %v2131 = vunpack.c.l.b16 %v2024
    %v2132 = vunpack.c.l.b16 %v2025
    %v2133 = vunpack.c.l.b16 %v2026
    %v2134 = vunpack.c.l.b16 %v2027
    %v2135 = vunpack.c.l.b16 %v2028
    %v2136 = vunpack.c.l.b16 %v2029
    %v2137 = vunpack.c.l.b16 %v2030
    %v2138 = vunpack.c.l.b16 %v2031
    %v2139 = vunpack.c.l.b16 %v2032
    %v2140 = vunpack.c.l.b16 %v2033
    %v2141 = vunpack.c.l.b16 %v2034
    %v2142 = vunpack.c.l.b16 %v2035
    %v2143 = vunpack.c.l.b16 %v2036
    %v2144 = vunpack.c.l.b16 %v2037
    %v2145 = vunpack.c.l.b16 %v2038
    %v2146 = vunpack.c.l.b16 %v2039
    %v2147 = vpack.c.b16 %v2098, %v2097
    %v2148 = vpack.c.b16 %v2100, %v2099
    %v2149 = vpack.c.b16 %v2102, %v2101
    %v2150 = vpack.c.b16 %v2104, %v2103
    %v2151 = vpack.c.b16 %v2106, %v2105
    %v2152 = vpack.c.b16 %v2108, %v2107
    %v2153 = vpack.c.b16 %v2110, %v2109
    %v2154 = vpack.c.b16 %v2112, %v2111
    %v2155 = vpack.c.b16 %v2114, %v2113
    %v2156 = vpack.c.b16 %v2116, %v2115
    %v2157 = vpack.c.b16 %v2118, %v2117
    %v2158 = vpack.c.b16 %v2120, %v2119
    %v2159 = vpack.c.b16 %v2122, %v2121
    %v2160 = vpack.c.b16 %v2124, %v2123
    %v2161 = vpack.c.b16 %v2126, %v2125
    %v2162 = vpack.c.b16 %v2128, %v2127
    %v2163 = vpack.c.b16 %v2130, %v2129
    %v2164 = vpack.c.b16 %v2132, %v2131
    %v2165 = vpack.c.b16 %v2134, %v2133
    %v2166 = vpack.c.b16 %v2136, %v2135
    %v2167 = vpack.c.b16 %v2138, %v2137
    %v2168 = vpack.c.b16 %v2140, %v2139
    %v2169 = vpack.c.b16 %v2142, %v2141
    %v2170 = vpack.c.b16 %v2144, %v2143
    %v2171 = vpack.c.b16 %v2146, %v2145
    %vm2197 = vcmask 130048
    %v2199 = vsel %vm2197, %v1989, 0
    %2201 = vmatprep.subr.bf16.mxu0 0
    %2202 = vmatpush1.bf16.msra.mxu0 %v2147
    %2203 = vmatprep.subr.bf16.mxu0 0
    %2204 = vmatpush1.bf16.msra.mxu0 %v2148
    %2205 = vmatprep.subr.bf16.mxu0 0
    %2206 = vmatpush1.bf16.msra.mxu0 %v2149
    %2207 = vmatprep.subr.bf16.mxu0 0
    %2208 = vmatpush1.bf16.msra.mxu0 %v2150
    %2209 = vmatprep.subr.bf16.mxu0 0
    %2210 = vmatpush1.bf16.msra.mxu0 %v2151
    %2211 = vmatprep.subr.bf16.mxu0 0
    %2212 = vmatpush1.bf16.msra.mxu0 %v2152
    %2213 = vmatprep.subr.bf16.mxu0 0
    %2214 = vmatpush1.bf16.msra.mxu0 %v2153
    %2215 = vmatprep.subr.bf16.mxu0 0
    %2216 = vmatpush1.bf16.msra.mxu0 %v2154
    %2217 = vmatprep.subr.bf16.mxu0 0
    %2218 = vmatpush1.bf16.msra.mxu0 %v2155
    %2219 = vmatprep.subr.bf16.mxu0 0
    %2220 = vmatpush1.bf16.msra.mxu0 %v2156
    %2221 = vmatprep.subr.bf16.mxu0 0
    %2222 = vmatpush1.bf16.msra.mxu0 %v2157
    %2223 = vmatprep.subr.bf16.mxu0 0
    %2224 = vmatpush1.bf16.msra.mxu0 %v2158
    %2225 = vmatprep.subr.bf16.mxu0 0
    %2226 = vmatpush1.bf16.msra.mxu0 %v2159
    %2227 = vmatprep.subr.bf16.mxu0 0
    %2228 = vmatpush1.bf16.msra.mxu0 %v2160
    %2229 = vmatprep.subr.bf16.mxu0 0
    %2230 = vmatpush1.bf16.msra.mxu0 %v2161
    %2231 = vmatprep.subr.bf16.mxu0 0
    %2232 = vmatpush1.bf16.msra.mxu0 %v2162
    %2233 = vmatprep.mubr.bf16.mxu0 %v1987
    %2234 = vmatmul.mubr.bf16.gmra.mrb[0].mxu0 %v1986
    %v2235 = vpop.f32.mrb[0].mxu0
    %v2236 = vadd.f32 %v2045, %v2235
    %v2237 = vpop.f32.mrb[0].mxu0
    %v2238 = vpop.f32.mrb[0].mxu0
    %v2239 = vpop.f32.mrb[0].mxu0
    %2240 = vdwg.mxu0
    %2241 = vmatprep.subr.bf16.mxu0 0
    %2242 = vmatpush1.bf16.msra.mxu0 %v2163
    %2243 = vmatprep.subr.bf16.mxu0 0
    %2244 = vmatpush1.bf16.msra.mxu0 %v2164
    %2245 = vmatprep.subr.bf16.mxu0 0
    %2246 = vmatpush1.bf16.msra.mxu0 %v2165
    %2247 = vmatprep.subr.bf16.mxu0 0
    %2248 = vmatpush1.bf16.msra.mxu0 %v2166
    %2249 = vmatprep.subr.bf16.mxu0 0
    %2250 = vmatpush1.bf16.msra.mxu0 %v2167
    %2251 = vmatprep.subr.bf16.mxu0 0
    %2252 = vmatpush1.bf16.msra.mxu0 %v2168
    %2253 = vmatprep.subr.bf16.mxu0 0
    %2254 = vmatpush1.bf16.msra.mxu0 %v2169
    %2255 = vmatprep.subr.bf16.mxu0 0
    %2256 = vmatpush1.bf16.msra.mxu0 %v2170
    %2257 = vmatprep.subr.bf16.mxu0 0
    %2258 = vmatpush1.bf16.msra.mxu0 %v2171
    %2259 = vmatprep.subr.bf16.mxu0 0
    %2260 = vmatpush1.bf16.msra.mxu0 0
    %2261 = vmatprep.subr.bf16.mxu0 0
    %2262 = vmatpush1.bf16.msra.mxu0 0
    %2263 = vmatprep.subr.bf16.mxu0 0
    %2264 = vmatpush1.bf16.msra.mxu0 0
    %2265 = vmatprep.subr.bf16.mxu0 0
    %2266 = vmatpush1.bf16.msra.mxu0 0
    %2267 = vmatprep.subr.bf16.mxu0 0
    %2268 = vmatpush1.bf16.msra.mxu0 0
    %2269 = vmatprep.subr.bf16.mxu0 0
    %2270 = vmatpush1.bf16.msra.mxu0 0
    %2271 = vmatprep.subr.bf16.mxu0 0
    %2272 = vmatpush1.bf16.msra.mxu0 0
    %2273 = vmatprep.mubr.bf16.mxu0 %v2199
    %2274 = vmatmul.mubr.bf16.gmra.mrb[0].mxu0 %v1988
    %v2275 = vpop.f32.mrb[0].mxu0
    %v2276 = vadd.f32 %v2236, %v2275
    %v2277 = vpop.f32.mrb[0].mxu0
    %v2278 = vpop.f32.mrb[0].mxu0
    %v2279 = vpop.f32.mrb[0].mxu0
    %2280 = vdwg.mxu0
    %vm2281 = vcmask 812032
    %v2282 = vsel %vm2281, %v2276, -inf
    %2283 = vmax.xlane.f32.xlu0 %v2282
    %v2284 = vpop.xlane.xlu0 %2283
    %v2285 = vsub.f32 %v2276, %v2284
    %v2286 = vmul.f32 %v2285, 1.442695
    %v2287 = vpow.pop %v2286
    %v2288 = vsel %vm2281, %v2287, 0.0
    %2289 = vadd.xlane.f32.xlu0 %v2288
    %v2290 = vpop.xlane.xlu0 %2289
    %v2291 = vrcp.pop %v2290
    %v2292 = vmul.f32 %v2287, %v2291
    %v2293 = vpack.c.bf16 %v2292, %v2292
    %v2294 = vld [vmem:[%s5] sm:$0xff]
    %v2295 = vld [vmem:[%s5 + $0x8] sm:$0xff]
    %v2296 = vld [vmem:[%s5 + $0x10] sm:$0xff]
    %v2297 = vld [vmem:[%s5 + $0x18] sm:$0xff]
    %v2298 = vld [vmem:[%s5 + $0x20] sm:$0xff]
    %v2299 = vld [vmem:[%s5 + $0x28] sm:$0xff]
    %v2300 = vld [vmem:[%s5 + $0x30] sm:$0xff]
    %v2301 = vld [vmem:[%s5 + $0x38] sm:$0xff]
    %v2302 = vld [vmem:[%s5 + $0x40] sm:$0xff]
    %v2303 = vld [vmem:[%s5 + $0x48] sm:$0xff]
    %v2304 = vld [vmem:[%s5 + $0x50] sm:$0xff]
    %v2305 = vld [vmem:[%s5 + $0x58] sm:$0xff]
    %v2306 = vld [vmem:[%s5 + $0x60] sm:$0xff]
    %v2307 = vld [vmem:[%s5 + $0x68] sm:$0xff]
    %v2308 = vld [vmem:[%s5 + $0x70] sm:$0xff]
    %v2309 = vld [vmem:[%s5 + $0x78] sm:$0xff]
    %v2310 = vld [vmem:[%s5 + $0x80] sm:$0xff]
    %v2311 = vld [vmem:[%s5 + $0x88] sm:$0xff]
    %v2312 = vld [vmem:[%s5 + $0x90] sm:$0xff]
    %v2313 = vld [vmem:[%s5 + $0x98] sm:$0xff]
    %v2314 = vld [vmem:[%s5 + $0xa0] sm:$0xff]
    %v2315 = vld [vmem:[%s5 + $0xa8] sm:$0xff]
    %v2316 = vld [vmem:[%s5 + $0xb0] sm:$0xff]
    %v2317 = vld [vmem:[%s5 + $0xb8] sm:$0xff]
    %v2318 = vld [vmem:[%s5 + $0xc0] sm:$0xff]
    %v2319 = vld [vmem:[%s5 + $0xc8] sm:$0xff]
    %v2320 = vld [vmem:[%s5 + $0xd0] sm:$0xff]
    %v2321 = vld [vmem:[%s5 + $0xd8] sm:$0xff]
    %v2322 = vld [vmem:[%s5 + $0xe0] sm:$0xff]
    %v2323 = vld [vmem:[%s5 + $0xe8] sm:$0xff]
    %v2324 = vld [vmem:[%s5 + $0xf0] sm:$0xff]
    %v2325 = vld [vmem:[%s5 + $0xf8] sm:$0xff]
    %v2326 = vld [vmem:[%s5 + $0x100] sm:$0xff]
    %v2327 = vld [vmem:[%s5 + $0x108] sm:$0xff]
    %v2328 = vld [vmem:[%s5 + $0x110] sm:$0xff]
    %v2329 = vld [vmem:[%s5 + $0x118] sm:$0xff]
    %v2330 = vld [vmem:[%s5 + $0x120] sm:$0x33]
    %v2331 = vld [vmem:[%s5 + $0x128] sm:$0x33]
    %v2332 = vld [vmem:[%s5 + $0x130] sm:$0x33]
    %v2372 = vunpack.c.l.b16 %v2294
    %v2373 = vunpack.c.h.b16 %v2294
    %v2374 = vunpack.c.l.b16 %v2295
    %v2375 = vunpack.c.h.b16 %v2295
    %v2376 = vunpack.c.l.b16 %v2296
    %v2377 = vunpack.c.h.b16 %v2296
    %v2378 = vunpack.c.l.b16 %v2297
    %v2379 = vunpack.c.h.b16 %v2297
    %v2380 = vunpack.c.l.b16 %v2298
    %v2381 = vunpack.c.h.b16 %v2298
    %v2382 = vunpack.c.l.b16 %v2299
    %v2383 = vunpack.c.h.b16 %v2299
    %v2384 = vunpack.c.l.b16 %v2300
    %v2385 = vunpack.c.h.b16 %v2300
    %v2386 = vunpack.c.l.b16 %v2301
    %v2387 = vunpack.c.h.b16 %v2301
    %v2388 = vunpack.c.l.b16 %v2302
    %v2389 = vunpack.c.h.b16 %v2302
    %v2390 = vunpack.c.l.b16 %v2303
    %v2391 = vunpack.c.h.b16 %v2303
    %v2392 = vunpack.c.l.b16 %v2304
    %v2393 = vunpack.c.h.b16 %v2304
    %v2394 = vunpack.c.l.b16 %v2305
    %v2395 = vunpack.c.h.b16 %v2305
    %v2396 = vunpack.c.l.b16 %v2306
    %v2397 = vunpack.c.h.b16 %v2306
    %v2398 = vunpack.c.l.b16 %v2307
    %v2399 = vunpack.c.h.b16 %v2307
    %v2400 = vunpack.c.l.b16 %v2308
    %v2401 = vunpack.c.h.b16 %v2308
    %v2402 = vunpack.c.l.b16 %v2309
    %v2403 = vunpack.c.h.b16 %v2309
    %v2404 = vunpack.c.l.b16 %v2310
    %v2405 = vunpack.c.h.b16 %v2310
    %v2406 = vunpack.c.l.b16 %v2311
    %v2407 = vunpack.c.h.b16 %v2311
    %v2408 = vunpack.c.l.b16 %v2312
    %v2409 = vunpack.c.h.b16 %v2312
    %v2410 = vunpack.c.l.b16 %v2313
    %v2411 = vunpack.c.h.b16 %v2313
    %v2412 = vunpack.c.l.b16 %v2314
    %v2413 = vunpack.c.h.b16 %v2314
    %v2414 = vunpack.c.l.b16 %v2315
    %v2415 = vunpack.c.h.b16 %v2315
    %v2416 = vunpack.c.l.b16 %v2316
    %v2417 = vunpack.c.h.b16 %v2316
    %v2418 = vunpack.c.l.b16 %v2317
    %v2419 = vunpack.c.h.b16 %v2317
    %v2420 = vunpack.c.l.b16 %v2318
    %v2421 = vunpack.c.h.b16 %v2318
    %v2422 = vunpack.c.l.b16 %v2319
    %v2423 = vunpack.c.h.b16 %v2319
    %v2424 = vunpack.c.l.b16 %v2320
    %v2425 = vunpack.c.h.b16 %v2320
    %v2426 = vunpack.c.l.b16 %v2321
    %v2427 = vunpack.c.h.b16 %v2321
    %v2428 = vunpack.c.l.b16 %v2322
    %v2429 = vunpack.c.h.b16 %v2322
    %v2430 = vunpack.c.l.b16 %v2323
    %v2431 = vunpack.c.h.b16 %v2323
    %v2432 = vunpack.c.l.b16 %v2324
    %v2433 = vunpack.c.h.b16 %v2324
    %v2434 = vunpack.c.l.b16 %v2325
    %v2435 = vunpack.c.h.b16 %v2325
    %v2436 = vunpack.c.l.b16 %v2326
    %v2437 = vunpack.c.h.b16 %v2326
    %v2438 = vunpack.c.l.b16 %v2327
    %v2439 = vunpack.c.h.b16 %v2327
    %v2440 = vunpack.c.l.b16 %v2328
    %v2441 = vunpack.c.h.b16 %v2328
    %v2442 = vunpack.c.l.b16 %v2329
    %v2443 = vunpack.c.h.b16 %v2329
    %v2444 = vunpack.c.l.b16 %v2330
    %v2445 = vunpack.c.h.b16 %v2330
    %v2446 = vunpack.c.l.b16 %v2331
    %v2447 = vunpack.c.h.b16 %v2331
    %v2448 = vunpack.c.l.b16 %v2332
    %v2449 = vunpack.c.h.b16 %v2332
    %v2450 = vpack.c.b16 %v2378, %v2372
    %v2451 = vpack.c.b16 %v2379, %v2373
    %v2452 = vpack.c.b16 %v2380, %v2374
    %v2453 = vpack.c.b16 %v2381, %v2375
    %v2454 = vpack.c.b16 %v2382, %v2376
    %v2455 = vpack.c.b16 %v2383, %v2377
    %v2456 = vpack.c.b16 %v2390, %v2384
    %v2457 = vpack.c.b16 %v2391, %v2385
    %v2458 = vpack.c.b16 %v2392, %v2386
    %v2459 = vpack.c.b16 %v2393, %v2387
    %v2460 = vpack.c.b16 %v2394, %v2388
    %v2461 = vpack.c.b16 %v2395, %v2389
    %v2462 = vpack.c.b16 %v2402, %v2396
    %v2463 = vpack.c.b16 %v2403, %v2397
    %v2464 = vpack.c.b16 %v2404, %v2398
    %v2465 = vpack.c.b16 %v2405, %v2399
    %v2466 = vpack.c.b16 %v2406, %v2400
    %v2467 = vpack.c.b16 %v2407, %v2401
    %v2468 = vpack.c.b16 %v2414, %v2408
    %v2469 = vpack.c.b16 %v2415, %v2409
    %v2470 = vpack.c.b16 %v2416, %v2410
    %v2471 = vpack.c.b16 %v2417, %v2411
    %v2472 = vpack.c.b16 %v2418, %v2412
    %v2473 = vpack.c.b16 %v2419, %v2413
    %v2474 = vpack.c.b16 %v2426, %v2420
    %v2475 = vpack.c.b16 %v2427, %v2421
    %v2476 = vpack.c.b16 %v2428, %v2422
    %v2477 = vpack.c.b16 %v2429, %v2423
    %v2478 = vpack.c.b16 %v2430, %v2424
    %v2479 = vpack.c.b16 %v2431, %v2425
    %v2480 = vpack.c.b16 %v2438, %v2432
    %v2481 = vpack.c.b16 %v2439, %v2433
    %v2482 = vpack.c.b16 %v2440, %v2434
    %v2483 = vpack.c.b16 %v2441, %v2435
    %v2484 = vpack.c.b16 %v2442, %v2436
    %v2485 = vpack.c.b16 %v2443, %v2437
    %v2486 = vpack.c.b16 %v2444, %v2444
    %v2487 = vpack.c.b16 %v2445, %v2445
    %v2488 = vpack.c.b16 %v2446, %v2446
    %v2489 = vpack.c.b16 %v2447, %v2447
    %v2490 = vpack.c.b16 %v2448, %v2448
    %v2491 = vpack.c.b16 %v2449, %v2449
    %vm2528 = vcmask 818176
    %v2530 = vsel %vm2528, %v2293, 0
    %vm2532 = vcmask 1041408
    %v2534 = vsel %vm2532, %v2486, 0
    %v2537 = vsel %vm2532, %v2487, 0
    %v2540 = vsel %vm2532, %v2488, 0
    %v2543 = vsel %vm2532, %v2489, 0
    %v2546 = vsel %vm2532, %v2490, 0
    %v2549 = vsel %vm2532, %v2491, 0
    %2551 = vmatprep.subr.bf16.mxu0 %v2451
    %2552 = vmatpush1.bf16.msra.mxu0 %v2450
    %2553 = vmatprep.subr.bf16.mxu0 %v2457
    %2554 = vmatpush1.bf16.msra.mxu0 %v2456
    %2555 = vmatprep.subr.bf16.mxu0 %v2463
    %2556 = vmatpush1.bf16.msra.mxu0 %v2462
    %2557 = vmatprep.subr.bf16.mxu0 %v2469
    %2558 = vmatpush1.bf16.msra.mxu0 %v2468
    %2559 = vmatprep.subr.bf16.mxu0 %v2475
    %2560 = vmatpush1.bf16.msra.mxu0 %v2474
    %2561 = vmatprep.subr.bf16.mxu0 %v2481
    %2562 = vmatpush1.bf16.msra.mxu0 %v2480
    %2563 = vmatprep.subr.bf16.mxu0 %v2537
    %2564 = vmatpush1.bf16.msra.mxu0 %v2534
    %2565 = vmatprep.subr.bf16.mxu0 0
    %2566 = vmatpush1.bf16.msra.mxu0 0
    %2567 = vmatprep.subr.bf16.mxu0 0
    %2568 = vmatpush1.bf16.msra.mxu0 0
    %2569 = vmatprep.subr.bf16.mxu0 0
    %2570 = vmatpush1.bf16.msra.mxu0 0
    %2571 = vmatprep.subr.bf16.mxu0 0
    %2572 = vmatpush1.bf16.msra.mxu0 0
    %2573 = vmatprep.subr.bf16.mxu0 0
    %2574 = vmatpush1.bf16.msra.mxu0 0
    %2575 = vmatprep.subr.bf16.mxu0 0
    %2576 = vmatpush1.bf16.msra.mxu0 0
    %2577 = vmatprep.subr.bf16.mxu0 0
    %2578 = vmatpush1.bf16.msra.mxu0 0
    %2579 = vmatprep.subr.bf16.mxu0 0
    %2580 = vmatpush1.bf16.msra.mxu0 0
    %2581 = vmatprep.subr.bf16.mxu0 0
    %2582 = vmatpush1.bf16.msra.mxu0 0
    %2583 = vmatprep.mubr.bf16.mxu0 0
    %2584 = vmatmul.mubr.bf16.gmra.mrb[0].mxu0 %v2530
    %v2585 = vpop.f32.mrb[0].mxu0
    %v2586 = vadd.f32 0.0, %v2585
    %v2587 = vpop.f32.mrb[0].mxu0
    %v2588 = vadd.f32 0.0, %v2587
    %v2589 = vpop.f32.mrb[0].mxu0
    %v2590 = vpop.f32.mrb[0].mxu0
    %2591 = vdwg.mxu0
    %2592 = vmatprep.subr.bf16.mxu0 %v2453
    %2593 = vmatpush1.bf16.msra.mxu0 %v2452
    %2594 = vmatprep.subr.bf16.mxu0 %v2459
    %2595 = vmatpush1.bf16.msra.mxu0 %v2458
    %2596 = vmatprep.subr.bf16.mxu0 %v2465
    %2597 = vmatpush1.bf16.msra.mxu0 %v2464
    %2598 = vmatprep.subr.bf16.mxu0 %v2471
    %2599 = vmatpush1.bf16.msra.mxu0 %v2470
    %2600 = vmatprep.subr.bf16.mxu0 %v2477
    %2601 = vmatpush1.bf16.msra.mxu0 %v2476
    %2602 = vmatprep.subr.bf16.mxu0 %v2483
    %2603 = vmatpush1.bf16.msra.mxu0 %v2482
    %2604 = vmatprep.subr.bf16.mxu0 %v2543
    %2605 = vmatpush1.bf16.msra.mxu0 %v2540
    %2606 = vmatprep.subr.bf16.mxu0 0
    %2607 = vmatpush1.bf16.msra.mxu0 0
    %2608 = vmatprep.subr.bf16.mxu0 0
    %2609 = vmatpush1.bf16.msra.mxu0 0
    %2610 = vmatprep.subr.bf16.mxu0 0
    %2611 = vmatpush1.bf16.msra.mxu0 0
    %2612 = vmatprep.subr.bf16.mxu0 0
    %2613 = vmatpush1.bf16.msra.mxu0 0
    %2614 = vmatprep.subr.bf16.mxu0 0
    %2615 = vmatpush1.bf16.msra.mxu0 0
    %2616 = vmatprep.subr.bf16.mxu0 0
    %2617 = vmatpush1.bf16.msra.mxu0 0
    %2618 = vmatprep.subr.bf16.mxu0 0
    %2619 = vmatpush1.bf16.msra.mxu0 0
    %2620 = vmatprep.subr.bf16.mxu0 0
    %2621 = vmatpush1.bf16.msra.mxu0 0
    %2622 = vmatprep.subr.bf16.mxu0 0
    %2623 = vmatpush1.bf16.msra.mxu0 0
    %2624 = vmatprep.mubr.bf16.mxu0 0
    %2625 = vmatmul.mubr.bf16.gmra.mrb[0].mxu0 %v2530
    %v2626 = vpop.f32.mrb[0].mxu0
    %v2627 = vadd.f32 0.0, %v2626
    %v2628 = vpop.f32.mrb[0].mxu0
    %v2629 = vadd.f32 0.0, %v2628
    %v2630 = vpop.f32.mrb[0].mxu0
    %v2631 = vpop.f32.mrb[0].mxu0
    %2632 = vdwg.mxu0
    %2633 = vmatprep.subr.bf16.mxu0 %v2455
    %2634 = vmatpush1.bf16.msra.mxu0 %v2454
    %2635 = vmatprep.subr.bf16.mxu0 %v2461
    %2636 = vmatpush1.bf16.msra.mxu0 %v2460
    %2637 = vmatprep.subr.bf16.mxu0 %v2467
    %2638 = vmatpush1.bf16.msra.mxu0 %v2466
    %2639 = vmatprep.subr.bf16.mxu0 %v2473
    %2640 = vmatpush1.bf16.msra.mxu0 %v2472
    %2641 = vmatprep.subr.bf16.mxu0 %v2479
    %2642 = vmatpush1.bf16.msra.mxu0 %v2478
    %2643 = vmatprep.subr.bf16.mxu0 %v2485
    %2644 = vmatpush1.bf16.msra.mxu0 %v2484
    %2645 = vmatprep.subr.bf16.mxu0 %v2549
    %2646 = vmatpush1.bf16.msra.mxu0 %v2546
    %2647 = vmatprep.subr.bf16.mxu0 0
    %2648 = vmatpush1.bf16.msra.mxu0 0
    %2649 = vmatprep.subr.bf16.mxu0 0
    %2650 = vmatpush1.bf16.msra.mxu0 0
    %2651 = vmatprep.subr.bf16.mxu0 0
    %2652 = vmatpush1.bf16.msra.mxu0 0
    %2653 = vmatprep.subr.bf16.mxu0 0
    %2654 = vmatpush1.bf16.msra.mxu0 0
    %2655 = vmatprep.subr.bf16.mxu0 0
    %2656 = vmatpush1.bf16.msra.mxu0 0
    %2657 = vmatprep.subr.bf16.mxu0 0
    %2658 = vmatpush1.bf16.msra.mxu0 0
    %2659 = vmatprep.subr.bf16.mxu0 0
    %2660 = vmatpush1.bf16.msra.mxu0 0
    %2661 = vmatprep.subr.bf16.mxu0 0
    %2662 = vmatpush1.bf16.msra.mxu0 0
    %2663 = vmatprep.subr.bf16.mxu0 0
    %2664 = vmatpush1.bf16.msra.mxu0 0
    %2665 = vmatprep.mubr.bf16.mxu0 0
    %2666 = vmatmul.mubr.bf16.gmra.mrb[0].mxu0 %v2530
    %v2667 = vpop.f32.mrb[0].mxu0
    %v2668 = vadd.f32 0.0, %v2667
    %v2669 = vpop.f32.mrb[0].mxu0
    %v2670 = vadd.f32 0.0, %v2669
    %v2671 = vpop.f32.mrb[0].mxu0
    %v2672 = vpop.f32.mrb[0].mxu0
    %2673 = vdwg.mxu0
    %v2680 = vcombine.low %v2586, %v2588
    %v2681 = vcombine.low %v2627, %v2629
    %v2683 = vunpack.c.l.s4 1983009808
    %v2684 = vunpack.c.0.s8 %v2683
    %v2685 = vlaneseq
    %v2686 = vshrl.u32 %v2685, 7
    %v2687 = vsub.s32 %v2684, %v2686
    %v2688 = vrot.slane %v2680, %v2687
    %v2690 = vunpack.c.l.s4 1983009808
    %v2691 = vunpack.c.0.s8 %v2690
    %v2692 = vlaneseq
    %v2693 = vshrl.u32 %v2692, 7
    %v2694 = vsub.s32 %v2691, %v2693
    %v2695 = vrot.slane %v2681, %v2694
    %v2696 = vcombine.low %v2688, %v2695
    %v2697 = vcombine.low %v2668, %v2670
    %v2699 = vunpack.c.l.s4 1983009808
    %v2700 = vunpack.c.0.s8 %v2699
    %v2701 = vlaneseq
    %v2702 = vshrl.u32 %v2701, 7
    %v2703 = vsub.s32 %v2700, %v2702
    %v2704 = vrot.slane %v2697, %v2703
    %2707 = vst [vmem:[#allocation2] sm:$0xff] %v2696
    %2708 = vst [vmem:[#allocation2 + $0x8] sm:$0xf] %v2704
    // Predicated region
    $region26: #{eco_depth_encoder_forward.7} parent=1 // pred_check
      _
    $region27: #{eco_depth_encoder_forward.7} parent=1 // pred_check_branch
      %2710 = sbr.rel (0) target = $region29
    $region28: #{eco_depth_encoder_forward.7} parent=1 // pred_region
      %s2712 = ssub.s32 192, 192
      %2713 = vsyncadd [#allocation3], %s2712
      %s2715 = sshll.u32 [#allocation2], 4
      %s2716 = int_to_ptr.vmem [resolvable:$true] %s2715
      %2718 = dma.vmem_to_hbm [thread:$0]  %s2716, 192, %s6, [#allocation3]
    $region29: #{eco_depth_encoder_forward.7} parent=1 // pred_fallthru
      _
    // Predicated region
    $region30: #{eco_depth_encoder_forward.7} parent=1 // pred_check
      _
    $region31: #{eco_depth_encoder_forward.7} parent=1 // pred_check_branch
      %2720 = sbr.rel (0) target = $region33
    $region32: #{eco_depth_encoder_forward.7} parent=1 // pred_region
      %2721 = dma.done [#allocation3], 192
    $region33: #{eco_depth_encoder_forward.7} parent=1 // pred_fallthru
      _
    %2722 = vsyncpa [#allocation3], 1

</llo_original>
